<compile_context>
chip_gen: v5e
topology: v5e:2x2
jax: 0.10.0
libtpu: 0.0.40
codegen_flags: <defaults>
</compile_context>

<pallas_src>
import functools

import jax
import jax.numpy as jnp
from jax.experimental import pallas as pl
from jax.experimental.pallas import tpu as pltpu


# ---------------------------------------------------------------------------
# Fused forward kernel builder
# ---------------------------------------------------------------------------
def _build_fused_kernel(H, W, cin, c1, c2, c3, chead):
    """Returns (kernel_fn, scratch_shapes, (H2, W2, H3, W3)).  All static."""
    assert H % 4 == 0 and W % 4 == 0, "input spatial dims must be multiples of 4"
    H2, W2 = H // 2, W // 2          # feat1 spatial size (after stride-2 conv2)
    H3, W3 = H2 // 2, W2 // 2        # feat2 spatial size (after stride-2 conv3)

    def _zero_halo(pref):
        """Zero only the 1-pixel halo strips of a padded scratch buffer."""
        Hp, Wp, C = pref.shape
        pref[0:1, :, :] = jnp.zeros((1, Wp, C), pref.dtype)
        pref[Hp - 1:Hp, :, :] = jnp.zeros((1, Wp, C), pref.dtype)
        pref[:, 0:1, :] = jnp.zeros((Hp, 1, C), pref.dtype)
        pref[:, Wp - 1:Wp, :] = jnp.zeros((Hp, 1, C), pref.dtype)

    def _im2col(pref, Ho, Wo, stride):
        """(Ho*Wo, 9*Cin) bf16 im2col slab read from a zero-padded VMEM ref."""
        Cin = pref.shape[-1]
        taps = []
        for kh in range(3):
            for kw in range(3):
                if stride == 1:
                    tap = pref[kh:kh + Ho, kw:kw + Wo, :]
                else:
                    # W subsample: strided ref read (documented replacement for
                    # strided_load); H subsample: free leading-dim reshape.
                    rows = pref[kh:kh + stride * Ho,
                                pl.ds(kw, Wo, stride=stride), :]
                    tap = rows.reshape(Ho, stride, Wo, Cin)[:, 0]
                taps.append(tap)
        slab3 = jnp.concatenate(taps, axis=-1)            # (Ho, Wo, 9*Cin)
        if Wo % 8 == 0:
            # sublane-group preserving flatten -> free
            slab = slab3.reshape(Ho * Wo, 9 * Cin)
        else:
            # tiny 4x4 feature maps: stack the 4 rows (one sublane concat)
            slab = jnp.concatenate([slab3[r] for r in range(Ho)], axis=0)
        return slab.astype(jnp.bfloat16)                  # single cast per conv

    def _conv(pref, w_ref, b_ref, Ho, Wo, stride):
        """One 3x3 conv = one MXU matmul; f32 accumulation + f32 bias."""
        slab = _im2col(pref, Ho, Wo, stride)
        return (jnp.dot(slab, w_ref[...], preferred_element_type=jnp.float32)
                + b_ref[...])

    def _fill(pref, act2d, Ho, Wo):
        """Write an (Ho*Wo, C) activation into the interior of a padded ref."""
        C = pref.shape[-1]
        _zero_halo(pref)
        if Wo % 8 == 0:
            pref[1:Ho + 1, 1:Wo + 1, :] = (
                act2d.reshape(Ho, Wo, C).astype(pref.dtype))
        else:
            for r in range(Ho):
                pref[1 + r, 1:Wo + 1, :] = (
                    act2d[r * Wo:(r + 1) * Wo, :].astype(pref.dtype))

    def kernel(x_ref,
               w1, b1, w2, b2, wra, bra, wrb, brb, w3, b3, wh1, bh1, wh2, bh2,
               o1_ref, o2_ref,
               p0, p1, p2, p3, p4, p5):
        # Stage the (already NHWC) input into a zero-halo padded VMEM buffer.
        _zero_halo(p0)
        p0[1:H + 1, 1:W + 1, :] = x_ref[0]

        # conv1: 3x3 s1, cin->c1, ReLU
        a1 = jnp.maximum(_conv(p0, w1, b1, H, W, 1), 0.0)
        _fill(p1, a1, H, W)

        # conv2: 3x3 s2, c1->c2, ReLU  (trunk feature, kept in f32 for residual)
        h = jnp.maximum(_conv(p1, w2, b2, H2, W2, 2), 0.0)
        _fill(p2, h, H2, W2)

        # residual block: res_a (ReLU) -> res_b -> (+h) -> ReLU  => feat1
        ra = jnp.maximum(_conv(p2, wra, bra, H2, W2, 1), 0.0)
        _fill(p3, ra, H2, W2)
        feat1 = jnp.maximum(_conv(p3, wrb, brb, H2, W2, 1) + h, 0.0)
        _fill(p4, feat1, H2, W2)

        # merged loc||conf SSD head on feat1 (no activation)
        # TODO(synk): share one im2col slab of p4 between head1 and conv3.
        o1_ref[0] = _conv(p4, wh1, bh1, H2, W2, 1).astype(o1_ref.dtype)

        # conv3: 3x3 s2, c2->c3, ReLU  => feat2
        feat2 = jnp.maximum(_conv(p4, w3, b3, H3, W3, 2), 0.0)
        _fill(p5, feat2, H3, W3)

        # merged loc||conf SSD head on feat2
        o2_ref[0] = _conv(p5, wh2, bh2, H3, W3, 1).astype(o2_ref.dtype)

    scratch_shapes = [
        pltpu.VMEM((H + 2, W + 2, cin), jnp.float32),    # padded input
        pltpu.VMEM((H + 2, W + 2, c1), jnp.float32),     # padded conv1 out
        pltpu.VMEM((H2 + 2, W2 + 2, c2), jnp.float32),   # padded h (conv2 out)
        pltpu.VMEM((H2 + 2, W2 + 2, c2), jnp.float32),   # padded res_a out
        pltpu.VMEM((H2 + 2, W2 + 2, c2), jnp.float32),   # padded feat1
        pltpu.VMEM((H3 + 2, W3 + 2, c3), jnp.float32),   # padded feat2
    ]
    return kernel, scratch_shapes, (H2, W2, H3, W3)


def _fused_forward(x_nhwc, kparams):
    """Runs the fused backbone+heads kernel.  Returns two (N, H*W, chead) maps."""
    N, H, W, cin = x_nhwc.shape
    w1, b1 = kparams["conv1"]
    w2, b2 = kparams["conv2"]
    wra, bra = kparams["res_a"]
    wrb, brb = kparams["res_b"]
    w3, b3 = kparams["conv3"]
    wh1, bh1 = kparams["head1"]
    wh2, bh2 = kparams["head2"]
    c1, c2, c3 = w1.shape[-1], w2.shape[-1], w3.shape[-1]
    chead = wh1.shape[-1]

    kernel, scratch_shapes, (H2, W2, H3, W3) = _build_fused_kernel(
        H, W, cin, c1, c2, c3, chead)

    weights = (w1, b1, w2, b2, wra, bra, wrb, brb, w3, b3, wh1, bh1, wh2, bh2)

    def _const_spec(a):
        nd = a.ndim
        return pl.BlockSpec(a.shape, lambda n, _nd=nd: (0,) * _nd)

    in_specs = [pl.BlockSpec((1, H, W, cin), lambda n: (n, 0, 0, 0))]
    in_specs += [_const_spec(a) for a in weights]

    out_shape = (
        jax.ShapeDtypeStruct((N, H2 * W2, chead), jnp.float32),
        jax.ShapeDtypeStruct((N, H3 * W3, chead), jnp.float32),
    )
    out_specs = (
        pl.BlockSpec((1, H2 * W2, chead), lambda n: (n, 0, 0)),
        pl.BlockSpec((1, H3 * W3, chead), lambda n: (n, 0, 0)),
    )

    return pl.pallas_call(
        kernel,
        out_shape=out_shape,
        grid_spec=pltpu.PrefetchScalarGridSpec(
            num_scalar_prefetch=0,
            grid=(N,),                  # one grid step per image
            in_specs=in_specs,
            out_specs=out_specs,
            scratch_shapes=scratch_shapes,
        ),
        compiler_params=pltpu.CompilerParams(
            # "parallel" batch axis lets v7x shard images across its 2 TCs.
            dimension_semantics=("parallel",),
            vmem_limit_bytes=32 * 1024 * 1024,
        ),
    )(x_nhwc, *weights)


# ---------------------------------------------------------------------------
# Deterministic parameter init (synthetic; no checkpoint load)
# ---------------------------------------------------------------------------
def _init_conv(key, cin, cout):
    wk, bk = jax.random.split(key)
    fan_in = 9 * cin
    w = jax.random.normal(wk, (3, 3, cin, cout), jnp.float32) / jnp.sqrt(
        jnp.float32(fan_in))
    b = 0.01 * jax.random.normal(bk, (cout,), jnp.float32)
    return w, b


def init_params(key, num_classes, num_anchors, in_ch):
    """Raw f32 HWIO parameters (also used by the pure-JAX reference)."""
    ks = jax.random.split(key, 9)
    return {
        "conv1": _init_conv(ks[0], in_ch, 16),               # stride 1
        "conv2": _init_conv(ks[1], 16, 32),                  # stride 2 -> feat1
        "res_a": _init_conv(ks[2], 32, 32),
        "res_b": _init_conv(ks[3], 32, 32),
        "conv3": _init_conv(ks[4], 32, 64),                  # stride 2 -> feat2
        "loc1": _init_conv(ks[5], 32, 4 * num_anchors),
        "conf1": _init_conv(ks[6], 32, num_classes * num_anchors),
        "loc2": _init_conv(ks[7], 64, 4 * num_anchors),
        "conf2": _init_conv(ks[8], 64, num_classes * num_anchors),
    }


def prepare_kernel_params(raw, num_classes, num_anchors):
    """Reshape HWIO weights to (9*Cin, Cout) bf16, merge + pad the SSD heads."""

    def conv_w(w):
        kh, kw, ci, co = w.shape
        return w.reshape(kh * kw * ci, co).astype(jnp.bfloat16)

    def conv_b(b):
        return b.reshape(1, -1).astype(jnp.float32)

    raw_head = 4 * num_anchors + num_classes * num_anchors
    chead = ((raw_head + 7) // 8) * 8        # pad merged head Cout (28 -> 32)

    def merge_head(loc, conf):
        w = jnp.concatenate([loc[0], conf[0]], axis=-1)      # (3,3,Cin,28)
        b = jnp.concatenate([loc[1], conf[1]], axis=0)
        pad = chead - w.shape[-1]
        w = jnp.pad(w, ((0, 0), (0, 0), (0, 0), (0, pad)))
        b = jnp.pad(b, ((0, pad),))
        return conv_w(w), conv_b(b)

    kp = {name: (conv_w(raw[name][0]), conv_b(raw[name][1]))
          for name in ("conv1", "conv2", "res_a", "res_b", "conv3")}
    kp["head1"] = merge_head(raw["loc1"], raw["conf1"])
    kp["head2"] = merge_head(raw["loc2"], raw["conf2"])
    return kp


# ---------------------------------------------------------------------------
# SSDResNet forward (Pallas) and pure-JAX reference
# ---------------------------------------------------------------------------
def ssd_resnet_forward(x_nchw, kparams, num_classes, num_anchors):
    N = x_nchw.shape[0]
    x = jnp.transpose(x_nchw, (0, 2, 3, 1))        # NCHW -> NHWC (once)

    out1, out2 = _fused_forward(x, kparams)        # (N, H2*W2, 32), (N, H3*W3, 32)

    loc_ch = 4 * num_anchors
    conf_ch = num_classes * num_anchors
    locs = jnp.concatenate(
        [out1[..., :loc_ch].reshape(N, -1, 4),
         out2[..., :loc_ch].reshape(N, -1, 4)], axis=1)
    confs = jnp.concatenate(
        [out1[..., loc_ch:loc_ch + conf_ch].reshape(N, -1, num_classes),
         out2[..., loc_ch:loc_ch + conf_ch].reshape(N, -1, num_classes)], axis=1)
    return locs, confs


def ssd_resnet_reference(x_nchw, raw, num_classes):
    """Pure-JAX reference mirroring the kernel's numerics (bf16 conv inputs)."""
    x = jnp.transpose(x_nchw, (0, 2, 3, 1))

    def conv(inp, wb, stride):
        w, b = wb
        y = jax.lax.conv_general_dilated(
            inp.astype(jnp.bfloat16), w.astype(jnp.bfloat16),
            window_strides=(stride, stride), padding=((1, 1), (1, 1)),
            dimension_numbers=("NHWC", "HWIO", "NHWC"),
            preferred_element_type=jnp.float32)
        return y + b.reshape(1, 1, 1, -1)

    relu = jax.nn.relu
    a1 = relu(conv(x, raw["conv1"], 1))
    h = relu(conv(a1, raw["conv2"], 2))
    ra = relu(conv(h, raw["res_a"], 1))
    feat1 = relu(conv(ra, raw["res_b"], 1) + h)
    feat2 = relu(conv(feat1, raw["conv3"], 2))

    N = x.shape[0]
    locs = jnp.concatenate(
        [conv(feat1, raw["loc1"], 1).reshape(N, -1, 4),
         conv(feat2, raw["loc2"], 1).reshape(N, -1, 4)], axis=1)
    confs = jnp.concatenate(
        [conv(feat1, raw["conf1"], 1).reshape(N, -1, num_classes),
         conv(feat2, raw["conf2"], 1).reshape(N, -1, num_classes)], axis=1)
    return locs, confs


if __name__ == "__main__":
    num_classes = 3
    num_anchors = 4
    key = jax.random.PRNGKey(0)
    k_x, k_p = jax.random.split(key)

    x = jax.random.normal(k_x, (2, 4, 16, 16), jnp.float32)  # NCHW like PyTorch
    raw_params = init_params(k_p, num_classes, num_anchors, in_ch=4)
    kparams = prepare_kernel_params(raw_params, num_classes, num_anchors)

    fwd = jax.jit(functools.partial(
        ssd_resnet_forward, num_classes=num_classes, num_anchors=num_anchors))
    locs, confs = fwd(x, kparams)
    jax.block_until_ready((locs, confs))

    # feat1 = 8x8, feat2 = 4x4  ->  (8*8 + 4*4) * 4 anchors = 320 boxes
    assert locs.shape == (2, 320, 4), locs.shape
    assert confs.shape == (2, 320, num_classes), confs.shape
    assert bool(jnp.all(jnp.isfinite(locs))) and bool(jnp.all(jnp.isfinite(confs)))

    # Correctness vs. a pure-JAX reference with matching (bf16-input) numerics.
    ref_locs, ref_confs = jax.jit(functools.partial(
        ssd_resnet_reference, num_classes=num_classes))(x, raw_params)
    jax.block_until_ready((ref_locs, ref_confs))
    assert bool(jnp.allclose(locs, ref_locs, atol=2e-2, rtol=2e-2)), float(
        jnp.max(jnp.abs(locs - ref_locs)))
    assert bool(jnp.allclose(confs, ref_confs, atol=2e-2, rtol=2e-2)), float(
        jnp.max(jnp.abs(confs - ref_confs)))

    print("KERNEL_OK")
</pallas_src>

<mosaic_0001>
module attributes {stable_mosaic.version = 11 : i64} {
  func.func @kernel(%arg0: i32, %arg1: memref<1x16x16x4xf32, #tpu.memory_space<vmem>>, %arg2: memref<36x16xbf16, #tpu.memory_space<vmem>>, %arg3: memref<1x16xf32, #tpu.memory_space<vmem>>, %arg4: memref<144x32xbf16, #tpu.memory_space<vmem>>, %arg5: memref<1x32xf32, #tpu.memory_space<vmem>>, %arg6: memref<288x32xbf16, #tpu.memory_space<vmem>>, %arg7: memref<1x32xf32, #tpu.memory_space<vmem>>, %arg8: memref<288x32xbf16, #tpu.memory_space<vmem>>, %arg9: memref<1x32xf32, #tpu.memory_space<vmem>>, %arg10: memref<288x64xbf16, #tpu.memory_space<vmem>>, %arg11: memref<1x64xf32, #tpu.memory_space<vmem>>, %arg12: memref<288x32xbf16, #tpu.memory_space<vmem>>, %arg13: memref<1x32xf32, #tpu.memory_space<vmem>>, %arg14: memref<576x32xbf16, #tpu.memory_space<vmem>>, %arg15: memref<1x32xf32, #tpu.memory_space<vmem>>, %arg16: memref<1x64x32xf32, #tpu.memory_space<vmem>>, %arg17: memref<1x16x32xf32, #tpu.memory_space<vmem>>, %arg18: memref<18x18x4xf32, #tpu.memory_space<vmem>>, %arg19: memref<18x18x16xf32, #tpu.memory_space<vmem>>, %arg20: memref<10x10x32xf32, #tpu.memory_space<vmem>>, %arg21: memref<10x10x32xf32, #tpu.memory_space<vmem>>, %arg22: memref<10x10x32xf32, #tpu.memory_space<vmem>>, %arg23: memref<6x6x64xf32, #tpu.memory_space<vmem>>) attributes {dimension_semantics = [#tpu.dimension_semantics<parallel>], iteration_bounds = array<i64: 2>, scalar_prefetch = 0 : i64, scratch_operands = 6 : i64, tpu.core_type = #tpu.core_type<tc>, window_params = [{transform_indices = @transform_0, window_bounds = array<i64: 1, 16, 16, 4>}, {pipeline_mode = #tpu.pipeline_mode<synchronous>, transform_indices = @transform_1, window_bounds = array<i64: 36, 16>}, {pipeline_mode = #tpu.pipeline_mode<synchronous>, transform_indices = @transform_2, window_bounds = array<i64: 1, 16>}, {pipeline_mode = #tpu.pipeline_mode<synchronous>, transform_indices = @transform_3, window_bounds = array<i64: 144, 32>}, {pipeline_mode = #tpu.pipeline_mode<synchronous>, transform_indices = @transform_4, window_bounds = array<i64: 1, 32>}, {pipeline_mode = #tpu.pipeline_mode<synchronous>, transform_indices = @transform_5, window_bounds = array<i64: 288, 32>}, {pipeline_mode = #tpu.pipeline_mode<synchronous>, transform_indices = @transform_6, window_bounds = array<i64: 1, 32>}, {pipeline_mode = #tpu.pipeline_mode<synchronous>, transform_indices = @transform_7, window_bounds = array<i64: 288, 32>}, {pipeline_mode = #tpu.pipeline_mode<synchronous>, transform_indices = @transform_8, window_bounds = array<i64: 1, 32>}, {pipeline_mode = #tpu.pipeline_mode<synchronous>, transform_indices = @transform_9, window_bounds = array<i64: 288, 64>}, {pipeline_mode = #tpu.pipeline_mode<synchronous>, transform_indices = @transform_10, window_bounds = array<i64: 1, 64>}, {pipeline_mode = #tpu.pipeline_mode<synchronous>, transform_indices = @transform_11, window_bounds = array<i64: 288, 32>}, {pipeline_mode = #tpu.pipeline_mode<synchronous>, transform_indices = @transform_12, window_bounds = array<i64: 1, 32>}, {pipeline_mode = #tpu.pipeline_mode<synchronous>, transform_indices = @transform_13, window_bounds = array<i64: 576, 32>}, {pipeline_mode = #tpu.pipeline_mode<synchronous>, transform_indices = @transform_14, window_bounds = array<i64: 1, 32>}, {transform_indices = @transform_15, window_bounds = array<i64: 1, 64, 32>}, {transform_indices = @transform_16, window_bounds = array<i64: 1, 16, 32>}]} {
    %cst = arith.constant 0.000000e+00 : f32
    %0 = vector.broadcast %cst : f32 to vector<1x18x4xf32>
    %c0 = arith.constant 0 : index
    %c0_0 = arith.constant 0 : index
    %c0_1 = arith.constant 0 : index
    %1 = vector.load %arg18[%c0, %c0_0, %c0_1] : memref<18x18x4xf32, #tpu.memory_space<vmem>>, vector<1x18x4xf32>
    tpu.vector_store %arg18[%c0, %c0_0, %c0_1], %0 {strides = array<i32>} : memref<18x18x4xf32, #tpu.memory_space<vmem>>, vector<1x18x4xf32>,
    %cst_2 = arith.constant 0.000000e+00 : f32
    %2 = vector.broadcast %cst_2 : f32 to vector<1x18x4xf32>
    %c17 = arith.constant 17 : index
    %c0_3 = arith.constant 0 : index
    %c0_4 = arith.constant 0 : index
    %3 = vector.load %arg18[%c17, %c0_3, %c0_4] : memref<18x18x4xf32, #tpu.memory_space<vmem>>, vector<1x18x4xf32>
    tpu.vector_store %arg18[%c17, %c0_3, %c0_4], %2 {strides = array<i32>} : memref<18x18x4xf32, #tpu.memory_space<vmem>>, vector<1x18x4xf32>,
    %cst_5 = arith.constant 0.000000e+00 : f32
    %4 = vector.broadcast %cst_5 : f32 to vector<18x1x4xf32>
    %c0_6 = arith.constant 0 : index
    %c0_7 = arith.constant 0 : index
    %c0_8 = arith.constant 0 : index
    %5 = vector.load %arg18[%c0_6, %c0_7, %c0_8] : memref<18x18x4xf32, #tpu.memory_space<vmem>>, vector<18x1x4xf32>
    tpu.vector_store %arg18[%c0_6, %c0_7, %c0_8], %4 {strides = array<i32>} : memref<18x18x4xf32, #tpu.memory_space<vmem>>, vector<18x1x4xf32>,
    %cst_9 = arith.constant 0.000000e+00 : f32
    %6 = vector.broadcast %cst_9 : f32 to vector<18x1x4xf32>
    %c0_10 = arith.constant 0 : index
    %c17_11 = arith.constant 17 : index
    %c0_12 = arith.constant 0 : index
    %7 = vector.load %arg18[%c0_10, %c17_11, %c0_12] : memref<18x18x4xf32, #tpu.memory_space<vmem>>, vector<18x1x4xf32>
    tpu.vector_store %arg18[%c0_10, %c17_11, %c0_12], %6 {strides = array<i32>} : memref<18x18x4xf32, #tpu.memory_space<vmem>>, vector<18x1x4xf32>,
    %c0_13 = arith.constant 0 : index
    %c0_14 = arith.constant 0 : index
    %c0_15 = arith.constant 0 : index
    %c0_16 = arith.constant 0 : index
    %8 = vector.load %arg1[%c0_13, %c0_14, %c0_15, %c0_16] : memref<1x16x16x4xf32, #tpu.memory_space<vmem>>, vector<1x16x16x4xf32>
    %9 = vector.shape_cast %8 : vector<1x16x16x4xf32> to vector<16x16x4xf32>
    %c1 = arith.constant 1 : index
    %c1_17 = arith.constant 1 : index
    %c0_18 = arith.constant 0 : index
    %10 = vector.load %arg18[%c1, %c1_17, %c0_18] : memref<18x18x4xf32, #tpu.memory_space<vmem>>, vector<16x16x4xf32>
    tpu.vector_store %arg18[%c1, %c1_17, %c0_18], %9 {strides = array<i32>} : memref<18x18x4xf32, #tpu.memory_space<vmem>>, vector<16x16x4xf32>,
    %c0_19 = arith.constant 0 : index
    %c0_20 = arith.constant 0 : index
    %c0_21 = arith.constant 0 : index
    %11 = vector.load %arg18[%c0_19, %c0_20, %c0_21] : memref<18x18x4xf32, #tpu.memory_space<vmem>>, vector<16x16x4xf32>
    %c0_22 = arith.constant 0 : index
    %c1_23 = arith.constant 1 : index
    %c0_24 = arith.constant 0 : index
    %12 = vector.load %arg18[%c0_22, %c1_23, %c0_24] : memref<18x18x4xf32, #tpu.memory_space<vmem>>, vector<16x16x4xf32>
    %c0_25 = arith.constant 0 : index
    %c2 = arith.constant 2 : index
    %c0_26 = arith.constant 0 : index
    %13 = vector.load %arg18[%c0_25, %c2, %c0_26] : memref<18x18x4xf32, #tpu.memory_space<vmem>>, vector<16x16x4xf32>
    %c1_27 = arith.constant 1 : index
    %c0_28 = arith.constant 0 : index
    %c0_29 = arith.constant 0 : index
    %14 = vector.load %arg18[%c1_27, %c0_28, %c0_29] : memref<18x18x4xf32, #tpu.memory_space<vmem>>, vector<16x16x4xf32>
    %c1_30 = arith.constant 1 : index
    %c1_31 = arith.constant 1 : index
    %c0_32 = arith.constant 0 : index
    %15 = vector.load %arg18[%c1_30, %c1_31, %c0_32] : memref<18x18x4xf32, #tpu.memory_space<vmem>>, vector<16x16x4xf32>
    %c1_33 = arith.constant 1 : index
    %c2_34 = arith.constant 2 : index
    %c0_35 = arith.constant 0 : index
    %16 = vector.load %arg18[%c1_33, %c2_34, %c0_35] : memref<18x18x4xf32, #tpu.memory_space<vmem>>, vector<16x16x4xf32>
    %c2_36 = arith.constant 2 : index
    %c0_37 = arith.constant 0 : index
    %c0_38 = arith.constant 0 : index
    %17 = vector.load %arg18[%c2_36, %c0_37, %c0_38] : memref<18x18x4xf32, #tpu.memory_space<vmem>>, vector<16x16x4xf32>
    %c2_39 = arith.constant 2 : index
    %c1_40 = arith.constant 1 : index
    %c0_41 = arith.constant 0 : index
    %18 = vector.load %arg18[%c2_39, %c1_40, %c0_41] : memref<18x18x4xf32, #tpu.memory_space<vmem>>, vector<16x16x4xf32>
    %c2_42 = arith.constant 2 : index
    %c2_43 = arith.constant 2 : index
    %c0_44 = arith.constant 0 : index
    %19 = vector.load %arg18[%c2_42, %c2_43, %c0_44] : memref<18x18x4xf32, #tpu.memory_space<vmem>>, vector<16x16x4xf32>
    %20 = tpu.concatenate %11, %12, %13, %14, %15, %16, %17, %18, %19 in 2 : vector<16x16x4xf32>, vector<16x16x4xf32>, vector<16x16x4xf32>, vector<16x16x4xf32>, vector<16x16x4xf32>, vector<16x16x4xf32>, vector<16x16x4xf32>, vector<16x16x4xf32>, vector<16x16x4xf32> -> vector<16x16x36xf32>
    %21 = vector.shape_cast %20 : vector<16x16x36xf32> to vector<256x36xf32>
    %22 = arith.truncf %21 : vector<256x36xf32> to vector<256x36xbf16>
    %c0_45 = arith.constant 0 : index
    %c0_46 = arith.constant 0 : index
    %23 = vector.load %arg2[%c0_45, %c0_46] : memref<36x16xbf16, #tpu.memory_space<vmem>>, vector<36x16xbf16>
    %cst_47 = arith.constant dense<0.000000e+00> : vector<256x16xf32>
    %24 = tpu.matmul %22, %23, %cst_47 {dimension_numbers = #tpu.dot_dimension_numbers<[1], [0], [0], [1], [0, 0, 1, 1], [], []>} : vector<256x36xbf16>, vector<36x16xbf16>, vector<256x16xf32> -> vector<256x16xf32>
    %c0_48 = arith.constant 0 : index
    %c0_49 = arith.constant 0 : index
    %25 = vector.load %arg3[%c0_48, %c0_49] : memref<1x16xf32, #tpu.memory_space<vmem>>, vector<1x16xf32>
    %26 = vector.broadcast %25 : vector<1x16xf32> to vector<256x16xf32>
    %27 = arith.addf %24, %26 : vector<256x16xf32>
    %cst_50 = arith.constant 0.000000e+00 : f32
    %28 = vector.broadcast %cst_50 : f32 to vector<256x16xf32>
    %29 = arith.maximumf %27, %28 : vector<256x16xf32>
    %cst_51 = arith.constant 0.000000e+00 : f32
    %30 = vector.broadcast %cst_51 : f32 to vector<1x18x16xf32>
    %c0_52 = arith.constant 0 : index
    %c0_53 = arith.constant 0 : index
    %c0_54 = arith.constant 0 : index
    %31 = vector.load %arg19[%c0_52, %c0_53, %c0_54] : memref<18x18x16xf32, #tpu.memory_space<vmem>>, vector<1x18x16xf32>
    tpu.vector_store %arg19[%c0_52, %c0_53, %c0_54], %30 {strides = array<i32>} : memref<18x18x16xf32, #tpu.memory_space<vmem>>, vector<1x18x16xf32>,
    %cst_55 = arith.constant 0.000000e+00 : f32
    %32 = vector.broadcast %cst_55 : f32 to vector<1x18x16xf32>
    %c17_56 = arith.constant 17 : index
    %c0_57 = arith.constant 0 : index
    %c0_58 = arith.constant 0 : index
    %33 = vector.load %arg19[%c17_56, %c0_57, %c0_58] : memref<18x18x16xf32, #tpu.memory_space<vmem>>, vector<1x18x16xf32>
    tpu.vector_store %arg19[%c17_56, %c0_57, %c0_58], %32 {strides = array<i32>} : memref<18x18x16xf32, #tpu.memory_space<vmem>>, vector<1x18x16xf32>,
    %cst_59 = arith.constant 0.000000e+00 : f32
    %34 = vector.broadcast %cst_59 : f32 to vector<18x1x16xf32>
    %c0_60 = arith.constant 0 : index
    %c0_61 = arith.constant 0 : index
    %c0_62 = arith.constant 0 : index
    %35 = vector.load %arg19[%c0_60, %c0_61, %c0_62] : memref<18x18x16xf32, #tpu.memory_space<vmem>>, vector<18x1x16xf32>
    tpu.vector_store %arg19[%c0_60, %c0_61, %c0_62], %34 {strides = array<i32>} : memref<18x18x16xf32, #tpu.memory_space<vmem>>, vector<18x1x16xf32>,
    %cst_63 = arith.constant 0.000000e+00 : f32
    %36 = vector.broadcast %cst_63 : f32 to vector<18x1x16xf32>
    %c0_64 = arith.constant 0 : index
    %c17_65 = arith.constant 17 : index
    %c0_66 = arith.constant 0 : index
    %37 = vector.load %arg19[%c0_64, %c17_65, %c0_66] : memref<18x18x16xf32, #tpu.memory_space<vmem>>, vector<18x1x16xf32>
    tpu.vector_store %arg19[%c0_64, %c17_65, %c0_66], %36 {strides = array<i32>} : memref<18x18x16xf32, #tpu.memory_space<vmem>>, vector<18x1x16xf32>,
    %38 = vector.shape_cast %29 : vector<256x16xf32> to vector<16x16x16xf32>
    %c1_67 = arith.constant 1 : index
    %c1_68 = arith.constant 1 : index
    %c0_69 = arith.constant 0 : index
    %39 = vector.load %arg19[%c1_67, %c1_68, %c0_69] : memref<18x18x16xf32, #tpu.memory_space<vmem>>, vector<16x16x16xf32>
    tpu.vector_store %arg19[%c1_67, %c1_68, %c0_69], %38 {strides = array<i32>} : memref<18x18x16xf32, #tpu.memory_space<vmem>>, vector<16x16x16xf32>,
    %c0_70 = arith.constant 0 : index
    %c0_71 = arith.constant 0 : index
    %c0_72 = arith.constant 0 : index
    %40 = tpu.strided_load %arg19[%c0_70, %c0_71, %c0_72] {strides = array<i32: 1, 2, 1>} : memref<18x18x16xf32, #tpu.memory_space<vmem>>, vector<16x8x16xf32>
    %41 = vector.shape_cast %40 : vector<16x8x16xf32> to vector<8x2x8x16xf32>
    %42 = vector.extract_strided_slice %41 {offsets = [0, 0, 0, 0], sizes = [8, 1, 8, 16], strides = [1, 1, 1, 1]} : vector<8x2x8x16xf32> to vector<8x1x8x16xf32>
    %43 = vector.shape_cast %42 : vector<8x1x8x16xf32> to vector<8x8x16xf32>
    %c0_73 = arith.constant 0 : index
    %c1_74 = arith.constant 1 : index
    %c0_75 = arith.constant 0 : index
    %44 = tpu.strided_load %arg19[%c0_73, %c1_74, %c0_75] {strides = array<i32: 1, 2, 1>} : memref<18x18x16xf32, #tpu.memory_space<vmem>>, vector<16x8x16xf32>
    %45 = vector.shape_cast %44 : vector<16x8x16xf32> to vector<8x2x8x16xf32>
    %46 = vector.extract_strided_slice %45 {offsets = [0, 0, 0, 0], sizes = [8, 1, 8, 16], strides = [1, 1, 1, 1]} : vector<8x2x8x16xf32> to vector<8x1x8x16xf32>
    %47 = vector.shape_cast %46 : vector<8x1x8x16xf32> to vector<8x8x16xf32>
    %c0_76 = arith.constant 0 : index
    %c2_77 = arith.constant 2 : index
    %c0_78 = arith.constant 0 : index
    %48 = tpu.strided_load %arg19[%c0_76, %c2_77, %c0_78] {strides = array<i32: 1, 2, 1>} : memref<18x18x16xf32, #tpu.memory_space<vmem>>, vector<16x8x16xf32>
    %49 = vector.shape_cast %48 : vector<16x8x16xf32> to vector<8x2x8x16xf32>
    %50 = vector.extract_strided_slice %49 {offsets = [0, 0, 0, 0], sizes = [8, 1, 8, 16], strides = [1, 1, 1, 1]} : vector<8x2x8x16xf32> to vector<8x1x8x16xf32>
    %51 = vector.shape_cast %50 : vector<8x1x8x16xf32> to vector<8x8x16xf32>
    %c1_79 = arith.constant 1 : index
    %c0_80 = arith.constant 0 : index
    %c0_81 = arith.constant 0 : index
    %52 = tpu.strided_load %arg19[%c1_79, %c0_80, %c0_81] {strides = array<i32: 1, 2, 1>} : memref<18x18x16xf32, #tpu.memory_space<vmem>>, vector<16x8x16xf32>
    %53 = vector.shape_cast %52 : vector<16x8x16xf32> to vector<8x2x8x16xf32>
    %54 = vector.extract_strided_slice %53 {offsets = [0, 0, 0, 0], sizes = [8, 1, 8, 16], strides = [1, 1, 1, 1]} : vector<8x2x8x16xf32> to vector<8x1x8x16xf32>
    %55 = vector.shape_cast %54 : vector<8x1x8x16xf32> to vector<8x8x16xf32>
    %c1_82 = arith.constant 1 : index
    %c1_83 = arith.constant 1 : index
    %c0_84 = arith.constant 0 : index
    %56 = tpu.strided_load %arg19[%c1_82, %c1_83, %c0_84] {strides = array<i32: 1, 2, 1>} : memref<18x18x16xf32, #tpu.memory_space<vmem>>, vector<16x8x16xf32>
    %57 = vector.shape_cast %56 : vector<16x8x16xf32> to vector<8x2x8x16xf32>
    %58 = vector.extract_strided_slice %57 {offsets = [0, 0, 0, 0], sizes = [8, 1, 8, 16], strides = [1, 1, 1, 1]} : vector<8x2x8x16xf32> to vector<8x1x8x16xf32>
    %59 = vector.shape_cast %58 : vector<8x1x8x16xf32> to vector<8x8x16xf32>
    %c1_85 = arith.constant 1 : index
    %c2_86 = arith.constant 2 : index
    %c0_87 = arith.constant 0 : index
    %60 = tpu.strided_load %arg19[%c1_85, %c2_86, %c0_87] {strides = array<i32: 1, 2, 1>} : memref<18x18x16xf32, #tpu.memory_space<vmem>>, vector<16x8x16xf32>
    %61 = vector.shape_cast %60 : vector<16x8x16xf32> to vector<8x2x8x16xf32>
    %62 = vector.extract_strided_slice %61 {offsets = [0, 0, 0, 0], sizes = [8, 1, 8, 16], strides = [1, 1, 1, 1]} : vector<8x2x8x16xf32> to vector<8x1x8x16xf32>
    %63 = vector.shape_cast %62 : vector<8x1x8x16xf32> to vector<8x8x16xf32>
    %c2_88 = arith.constant 2 : index
    %c0_89 = arith.constant 0 : index
    %c0_90 = arith.constant 0 : index
    %64 = tpu.strided_load %arg19[%c2_88, %c0_89, %c0_90] {strides = array<i32: 1, 2, 1>} : memref<18x18x16xf32, #tpu.memory_space<vmem>>, vector<16x8x16xf32>
    %65 = vector.shape_cast %64 : vector<16x8x16xf32> to vector<8x2x8x16xf32>
    %66 = vector.extract_strided_slice %65 {offsets = [0, 0, 0, 0], sizes = [8, 1, 8, 16], strides = [1, 1, 1, 1]} : vector<8x2x8x16xf32> to vector<8x1x8x16xf32>
    %67 = vector.shape_cast %66 : vector<8x1x8x16xf32> to vector<8x8x16xf32>
    %c2_91 = arith.constant 2 : index
    %c1_92 = arith.constant 1 : index
    %c0_93 = arith.constant 0 : index
    %68 = tpu.strided_load %arg19[%c2_91, %c1_92, %c0_93] {strides = array<i32: 1, 2, 1>} : memref<18x18x16xf32, #tpu.memory_space<vmem>>, vector<16x8x16xf32>
    %69 = vector.shape_cast %68 : vector<16x8x16xf32> to vector<8x2x8x16xf32>
    %70 = vector.extract_strided_slice %69 {offsets = [0, 0, 0, 0], sizes = [8, 1, 8, 16], strides = [1, 1, 1, 1]} : vector<8x2x8x16xf32> to vector<8x1x8x16xf32>
    %71 = vector.shape_cast %70 : vector<8x1x8x16xf32> to vector<8x8x16xf32>
    %c2_94 = arith.constant 2 : index
    %c2_95 = arith.constant 2 : index
    %c0_96 = arith.constant 0 : index
    %72 = tpu.strided_load %arg19[%c2_94, %c2_95, %c0_96] {strides = array<i32: 1, 2, 1>} : memref<18x18x16xf32, #tpu.memory_space<vmem>>, vector<16x8x16xf32>
    %73 = vector.shape_cast %72 : vector<16x8x16xf32> to vector<8x2x8x16xf32>
    %74 = vector.extract_strided_slice %73 {offsets = [0, 0, 0, 0], sizes = [8, 1, 8, 16], strides = [1, 1, 1, 1]} : vector<8x2x8x16xf32> to vector<8x1x8x16xf32>
    %75 = vector.shape_cast %74 : vector<8x1x8x16xf32> to vector<8x8x16xf32>
    %76 = tpu.concatenate %43, %47, %51, %55, %59, %63, %67, %71, %75 in 2 : vector<8x8x16xf32>, vector<8x8x16xf32>, vector<8x8x16xf32>, vector<8x8x16xf32>, vector<8x8x16xf32>, vector<8x8x16xf32>, vector<8x8x16xf32>, vector<8x8x16xf32>, vector<8x8x16xf32> -> vector<8x8x144xf32>
    %77 = vector.shape_cast %76 : vector<8x8x144xf32> to vector<64x144xf32>
    %78 = arith.truncf %77 : vector<64x144xf32> to vector<64x144xbf16>
    %c0_97 = arith.constant 0 : index
    %c0_98 = arith.constant 0 : index
    %79 = vector.load %arg4[%c0_97, %c0_98] : memref<144x32xbf16, #tpu.memory_space<vmem>>, vector<144x32xbf16>
    %cst_99 = arith.constant dense<0.000000e+00> : vector<64x32xf32>
    %80 = tpu.matmul %78, %79, %cst_99 {dimension_numbers = #tpu.dot_dimension_numbers<[1], [0], [0], [1], [0, 0, 1, 1], [], []>} : vector<64x144xbf16>, vector<144x32xbf16>, vector<64x32xf32> -> vector<64x32xf32>
    %c0_100 = arith.constant 0 : index
    %c0_101 = arith.constant 0 : index
    %81 = vector.load %arg5[%c0_100, %c0_101] : memref<1x32xf32, #tpu.memory_space<vmem>>, vector<1x32xf32>
    %82 = vector.broadcast %81 : vector<1x32xf32> to vector<64x32xf32>
    %83 = arith.addf %80, %82 : vector<64x32xf32>
    %cst_102 = arith.constant 0.000000e+00 : f32
    %84 = vector.broadcast %cst_102 : f32 to vector<64x32xf32>
    %85 = arith.maximumf %83, %84 : vector<64x32xf32>
    %cst_103 = arith.constant 0.000000e+00 : f32
    %86 = vector.broadcast %cst_103 : f32 to vector<1x10x32xf32>
    %c0_104 = arith.constant 0 : index
    %c0_105 = arith.constant 0 : index
    %c0_106 = arith.constant 0 : index
    %87 = vector.load %arg20[%c0_104, %c0_105, %c0_106] : memref<10x10x32xf32, #tpu.memory_space<vmem>>, vector<1x10x32xf32>
    tpu.vector_store %arg20[%c0_104, %c0_105, %c0_106], %86 {strides = array<i32>} : memref<10x10x32xf32, #tpu.memory_space<vmem>>, vector<1x10x32xf32>,
    %cst_107 = arith.constant 0.000000e+00 : f32
    %88 = vector.broadcast %cst_107 : f32 to vector<1x10x32xf32>
    %c9 = arith.constant 9 : index
    %c0_108 = arith.constant 0 : index
    %c0_109 = arith.constant 0 : index
    %89 = vector.load %arg20[%c9, %c0_108, %c0_109] : memref<10x10x32xf32, #tpu.memory_space<vmem>>, vector<1x10x32xf32>
    tpu.vector_store %arg20[%c9, %c0_108, %c0_109], %88 {strides = array<i32>} : memref<10x10x32xf32, #tpu.memory_space<vmem>>, vector<1x10x32xf32>,
    %cst_110 = arith.constant 0.000000e+00 : f32
    %90 = vector.broadcast %cst_110 : f32 to vector<10x1x32xf32>
    %c0_111 = arith.constant 0 : index
    %c0_112 = arith.constant 0 : index
    %c0_113 = arith.constant 0 : index
    %91 = vector.load %arg20[%c0_111, %c0_112, %c0_113] : memref<10x10x32xf32, #tpu.memory_space<vmem>>, vector<10x1x32xf32>
    tpu.vector_store %arg20[%c0_111, %c0_112, %c0_113], %90 {strides = array<i32>} : memref<10x10x32xf32, #tpu.memory_space<vmem>>, vector<10x1x32xf32>,
    %cst_114 = arith.constant 0.000000e+00 : f32
    %92 = vector.broadcast %cst_114 : f32 to vector<10x1x32xf32>
    %c0_115 = arith.constant 0 : index
    %c9_116 = arith.constant 9 : index
    %c0_117 = arith.constant 0 : index
    %93 = vector.load %arg20[%c0_115, %c9_116, %c0_117] : memref<10x10x32xf32, #tpu.memory_space<vmem>>, vector<10x1x32xf32>
    tpu.vector_store %arg20[%c0_115, %c9_116, %c0_117], %92 {strides = array<i32>} : memref<10x10x32xf32, #tpu.memory_space<vmem>>, vector<10x1x32xf32>,
    %94 = vector.shape_cast %85 : vector<64x32xf32> to vector<8x8x32xf32>
    %c1_118 = arith.constant 1 : index
    %c1_119 = arith.constant 1 : index
    %c0_120 = arith.constant 0 : index
    %95 = vector.load %arg20[%c1_118, %c1_119, %c0_120] : memref<10x10x32xf32, #tpu.memory_space<vmem>>, vector<8x8x32xf32>
    tpu.vector_store %arg20[%c1_118, %c1_119, %c0_120], %94 {strides = array<i32>} : memref<10x10x32xf32, #tpu.memory_space<vmem>>, vector<8x8x32xf32>,
    %c0_121 = arith.constant 0 : index
    %c0_122 = arith.constant 0 : index
    %c0_123 = arith.constant 0 : index
    %96 = vector.load %arg20[%c0_121, %c0_122, %c0_123] : memref<10x10x32xf32, #tpu.memory_space<vmem>>, vector<8x8x32xf32>
    %c0_124 = arith.constant 0 : index
    %c1_125 = arith.constant 1 : index
    %c0_126 = arith.constant 0 : index
    %97 = vector.load %arg20[%c0_124, %c1_125, %c0_126] : memref<10x10x32xf32, #tpu.memory_space<vmem>>, vector<8x8x32xf32>
    %c0_127 = arith.constant 0 : index
    %c2_128 = arith.constant 2 : index
    %c0_129 = arith.constant 0 : index
    %98 = vector.load %arg20[%c0_127, %c2_128, %c0_129] : memref<10x10x32xf32, #tpu.memory_space<vmem>>, vector<8x8x32xf32>
    %c1_130 = arith.constant 1 : index
    %c0_131 = arith.constant 0 : index
    %c0_132 = arith.constant 0 : index
    %99 = vector.load %arg20[%c1_130, %c0_131, %c0_132] : memref<10x10x32xf32, #tpu.memory_space<vmem>>, vector<8x8x32xf32>
    %c1_133 = arith.constant 1 : index
    %c1_134 = arith.constant 1 : index
    %c0_135 = arith.constant 0 : index
    %100 = vector.load %arg20[%c1_133, %c1_134, %c0_135] : memref<10x10x32xf32, #tpu.memory_space<vmem>>, vector<8x8x32xf32>
    %c1_136 = arith.constant 1 : index
    %c2_137 = arith.constant 2 : index
    %c0_138 = arith.constant 0 : index
    %101 = vector.load %arg20[%c1_136, %c2_137, %c0_138] : memref<10x10x32xf32, #tpu.memory_space<vmem>>, vector<8x8x32xf32>
    %c2_139 = arith.constant 2 : index
    %c0_140 = arith.constant 0 : index
    %c0_141 = arith.constant 0 : index
    %102 = vector.load %arg20[%c2_139, %c0_140, %c0_141] : memref<10x10x32xf32, #tpu.memory_space<vmem>>, vector<8x8x32xf32>
    %c2_142 = arith.constant 2 : index
    %c1_143 = arith.constant 1 : index
    %c0_144 = arith.constant 0 : index
    %103 = vector.load %arg20[%c2_142, %c1_143, %c0_144] : memref<10x10x32xf32, #tpu.memory_space<vmem>>, vector<8x8x32xf32>
    %c2_145 = arith.constant 2 : index
    %c2_146 = arith.constant 2 : index
    %c0_147 = arith.constant 0 : index
    %104 = vector.load %arg20[%c2_145, %c2_146, %c0_147] : memref<10x10x32xf32, #tpu.memory_space<vmem>>, vector<8x8x32xf32>
    %105 = tpu.concatenate %96, %97, %98, %99, %100, %101, %102, %103, %104 in 2 : vector<8x8x32xf32>, vector<8x8x32xf32>, vector<8x8x32xf32>, vector<8x8x32xf32>, vector<8x8x32xf32>, vector<8x8x32xf32>, vector<8x8x32xf32>, vector<8x8x32xf32>, vector<8x8x32xf32> -> vector<8x8x288xf32>
    %106 = vector.shape_cast %105 : vector<8x8x288xf32> to vector<64x288xf32>
    %107 = arith.truncf %106 : vector<64x288xf32> to vector<64x288xbf16>
    %c0_148 = arith.constant 0 : index
    %c0_149 = arith.constant 0 : index
    %108 = vector.load %arg6[%c0_148, %c0_149] : memref<288x32xbf16, #tpu.memory_space<vmem>>, vector<288x32xbf16>
    %cst_150 = arith.constant dense<0.000000e+00> : vector<64x32xf32>
    %109 = tpu.matmul %107, %108, %cst_150 {dimension_numbers = #tpu.dot_dimension_numbers<[1], [0], [0], [1], [0, 0, 1, 1], [], []>} : vector<64x288xbf16>, vector<288x32xbf16>, vector<64x32xf32> -> vector<64x32xf32>
    %c0_151 = arith.constant 0 : index
    %c0_152 = arith.constant 0 : index
    %110 = vector.load %arg7[%c0_151, %c0_152] : memref<1x32xf32, #tpu.memory_space<vmem>>, vector<1x32xf32>
    %111 = vector.broadcast %110 : vector<1x32xf32> to vector<64x32xf32>
    %112 = arith.addf %109, %111 : vector<64x32xf32>
    %cst_153 = arith.constant 0.000000e+00 : f32
    %113 = vector.broadcast %cst_153 : f32 to vector<64x32xf32>
    %114 = arith.maximumf %112, %113 : vector<64x32xf32>
    %cst_154 = arith.constant 0.000000e+00 : f32
    %115 = vector.broadcast %cst_154 : f32 to vector<1x10x32xf32>
    %c0_155 = arith.constant 0 : index
    %c0_156 = arith.constant 0 : index
    %c0_157 = arith.constant 0 : index
    %116 = vector.load %arg21[%c0_155, %c0_156, %c0_157] : memref<10x10x32xf32, #tpu.memory_space<vmem>>, vector<1x10x32xf32>
    tpu.vector_store %arg21[%c0_155, %c0_156, %c0_157], %115 {strides = array<i32>} : memref<10x10x32xf32, #tpu.memory_space<vmem>>, vector<1x10x32xf32>,
    %cst_158 = arith.constant 0.000000e+00 : f32
    %117 = vector.broadcast %cst_158 : f32 to vector<1x10x32xf32>
    %c9_159 = arith.constant 9 : index
    %c0_160 = arith.constant 0 : index
    %c0_161 = arith.constant 0 : index
    %118 = vector.load %arg21[%c9_159, %c0_160, %c0_161] : memref<10x10x32xf32, #tpu.memory_space<vmem>>, vector<1x10x32xf32>
    tpu.vector_store %arg21[%c9_159, %c0_160, %c0_161], %117 {strides = array<i32>} : memref<10x10x32xf32, #tpu.memory_space<vmem>>, vector<1x10x32xf32>,
    %cst_162 = arith.constant 0.000000e+00 : f32
    %119 = vector.broadcast %cst_162 : f32 to vector<10x1x32xf32>
    %c0_163 = arith.constant 0 : index
    %c0_164 = arith.constant 0 : index
    %c0_165 = arith.constant 0 : index
    %120 = vector.load %arg21[%c0_163, %c0_164, %c0_165] : memref<10x10x32xf32, #tpu.memory_space<vmem>>, vector<10x1x32xf32>
    tpu.vector_store %arg21[%c0_163, %c0_164, %c0_165], %119 {strides = array<i32>} : memref<10x10x32xf32, #tpu.memory_space<vmem>>, vector<10x1x32xf32>,
    %cst_166 = arith.constant 0.000000e+00 : f32
    %121 = vector.broadcast %cst_166 : f32 to vector<10x1x32xf32>
    %c0_167 = arith.constant 0 : index
    %c9_168 = arith.constant 9 : index
    %c0_169 = arith.constant 0 : index
    %122 = vector.load %arg21[%c0_167, %c9_168, %c0_169] : memref<10x10x32xf32, #tpu.memory_space<vmem>>, vector<10x1x32xf32>
    tpu.vector_store %arg21[%c0_167, %c9_168, %c0_169], %121 {strides = array<i32>} : memref<10x10x32xf32, #tpu.memory_space<vmem>>, vector<10x1x32xf32>,
    %123 = vector.shape_cast %114 : vector<64x32xf32> to vector<8x8x32xf32>
    %c1_170 = arith.constant 1 : index
    %c1_171 = arith.constant 1 : index
    %c0_172 = arith.constant 0 : index
    %124 = vector.load %arg21[%c1_170, %c1_171, %c0_172] : memref<10x10x32xf32, #tpu.memory_space<vmem>>, vector<8x8x32xf32>
    tpu.vector_store %arg21[%c1_170, %c1_171, %c0_172], %123 {strides = array<i32>} : memref<10x10x32xf32, #tpu.memory_space<vmem>>, vector<8x8x32xf32>,
    %c0_173 = arith.constant 0 : index
    %c0_174 = arith.constant 0 : index
    %c0_175 = arith.constant 0 : index
    %125 = vector.load %arg21[%c0_173, %c0_174, %c0_175] : memref<10x10x32xf32, #tpu.memory_space<vmem>>, vector<8x8x32xf32>
    %c0_176 = arith.constant 0 : index
    %c1_177 = arith.constant 1 : index
    %c0_178 = arith.constant 0 : index
    %126 = vector.load %arg21[%c0_176, %c1_177, %c0_178] : memref<10x10x32xf32, #tpu.memory_space<vmem>>, vector<8x8x32xf32>
    %c0_179 = arith.constant 0 : index
    %c2_180 = arith.constant 2 : index
    %c0_181 = arith.constant 0 : index
    %127 = vector.load %arg21[%c0_179, %c2_180, %c0_181] : memref<10x10x32xf32, #tpu.memory_space<vmem>>, vector<8x8x32xf32>
    %c1_182 = arith.constant 1 : index
    %c0_183 = arith.constant 0 : index
    %c0_184 = arith.constant 0 : index
    %128 = vector.load %arg21[%c1_182, %c0_183, %c0_184] : memref<10x10x32xf32, #tpu.memory_space<vmem>>, vector<8x8x32xf32>
    %c1_185 = arith.constant 1 : index
    %c1_186 = arith.constant 1 : index
    %c0_187 = arith.constant 0 : index
    %129 = vector.load %arg21[%c1_185, %c1_186, %c0_187] : memref<10x10x32xf32, #tpu.memory_space<vmem>>, vector<8x8x32xf32>
    %c1_188 = arith.constant 1 : index
    %c2_189 = arith.constant 2 : index
    %c0_190 = arith.constant 0 : index
    %130 = vector.load %arg21[%c1_188, %c2_189, %c0_190] : memref<10x10x32xf32, #tpu.memory_space<vmem>>, vector<8x8x32xf32>
    %c2_191 = arith.constant 2 : index
    %c0_192 = arith.constant 0 : index
    %c0_193 = arith.constant 0 : index
    %131 = vector.load %arg21[%c2_191, %c0_192, %c0_193] : memref<10x10x32xf32, #tpu.memory_space<vmem>>, vector<8x8x32xf32>
    %c2_194 = arith.constant 2 : index
    %c1_195 = arith.constant 1 : index
    %c0_196 = arith.constant 0 : index
    %132 = vector.load %arg21[%c2_194, %c1_195, %c0_196] : memref<10x10x32xf32, #tpu.memory_space<vmem>>, vector<8x8x32xf32>
    %c2_197 = arith.constant 2 : index
    %c2_198 = arith.constant 2 : index
    %c0_199 = arith.constant 0 : index
    %133 = vector.load %arg21[%c2_197, %c2_198, %c0_199] : memref<10x10x32xf32, #tpu.memory_space<vmem>>, vector<8x8x32xf32>
    %134 = tpu.concatenate %125, %126, %127, %128, %129, %130, %131, %132, %133 in 2 : vector<8x8x32xf32>, vector<8x8x32xf32>, vector<8x8x32xf32>, vector<8x8x32xf32>, vector<8x8x32xf32>, vector<8x8x32xf32>, vector<8x8x32xf32>, vector<8x8x32xf32>, vector<8x8x32xf32> -> vector<8x8x288xf32>
    %135 = vector.shape_cast %134 : vector<8x8x288xf32> to vector<64x288xf32>
    %136 = arith.truncf %135 : vector<64x288xf32> to vector<64x288xbf16>
    %c0_200 = arith.constant 0 : index
    %c0_201 = arith.constant 0 : index
    %137 = vector.load %arg8[%c0_200, %c0_201] : memref<288x32xbf16, #tpu.memory_space<vmem>>, vector<288x32xbf16>
    %cst_202 = arith.constant dense<0.000000e+00> : vector<64x32xf32>
    %138 = tpu.matmul %136, %137, %cst_202 {dimension_numbers = #tpu.dot_dimension_numbers<[1], [0], [0], [1], [0, 0, 1, 1], [], []>} : vector<64x288xbf16>, vector<288x32xbf16>, vector<64x32xf32> -> vector<64x32xf32>
    %c0_203 = arith.constant 0 : index
    %c0_204 = arith.constant 0 : index
    %139 = vector.load %arg9[%c0_203, %c0_204] : memref<1x32xf32, #tpu.memory_space<vmem>>, vector<1x32xf32>
    %140 = vector.broadcast %139 : vector<1x32xf32> to vector<64x32xf32>
    %141 = arith.addf %138, %140 : vector<64x32xf32>
    %142 = arith.addf %141, %85 : vector<64x32xf32>
    %cst_205 = arith.constant 0.000000e+00 : f32
    %143 = vector.broadcast %cst_205 : f32 to vector<64x32xf32>
    %144 = arith.maximumf %142, %143 : vector<64x32xf32>
    %cst_206 = arith.constant 0.000000e+00 : f32
    %145 = vector.broadcast %cst_206 : f32 to vector<1x10x32xf32>
    %c0_207 = arith.constant 0 : index
    %c0_208 = arith.constant 0 : index
    %c0_209 = arith.constant 0 : index
    %146 = vector.load %arg22[%c0_207, %c0_208, %c0_209] : memref<10x10x32xf32, #tpu.memory_space<vmem>>, vector<1x10x32xf32>
    tpu.vector_store %arg22[%c0_207, %c0_208, %c0_209], %145 {strides = array<i32>} : memref<10x10x32xf32, #tpu.memory_space<vmem>>, vector<1x10x32xf32>,
    %cst_210 = arith.constant 0.000000e+00 : f32
    %147 = vector.broadcast %cst_210 : f32 to vector<1x10x32xf32>
    %c9_211 = arith.constant 9 : index
    %c0_212 = arith.constant 0 : index
    %c0_213 = arith.constant 0 : index
    %148 = vector.load %arg22[%c9_211, %c0_212, %c0_213] : memref<10x10x32xf32, #tpu.memory_space<vmem>>, vector<1x10x32xf32>
    tpu.vector_store %arg22[%c9_211, %c0_212, %c0_213], %147 {strides = array<i32>} : memref<10x10x32xf32, #tpu.memory_space<vmem>>, vector<1x10x32xf32>,
    %cst_214 = arith.constant 0.000000e+00 : f32
    %149 = vector.broadcast %cst_214 : f32 to vector<10x1x32xf32>
    %c0_215 = arith.constant 0 : index
    %c0_216 = arith.constant 0 : index
    %c0_217 = arith.constant 0 : index
    %150 = vector.load %arg22[%c0_215, %c0_216, %c0_217] : memref<10x10x32xf32, #tpu.memory_space<vmem>>, vector<10x1x32xf32>
    tpu.vector_store %arg22[%c0_215, %c0_216, %c0_217], %149 {strides = array<i32>} : memref<10x10x32xf32, #tpu.memory_space<vmem>>, vector<10x1x32xf32>,
    %cst_218 = arith.constant 0.000000e+00 : f32
    %151 = vector.broadcast %cst_218 : f32 to vector<10x1x32xf32>
    %c0_219 = arith.constant 0 : index
    %c9_220 = arith.constant 9 : index
    %c0_221 = arith.constant 0 : index
    %152 = vector.load %arg22[%c0_219, %c9_220, %c0_221] : memref<10x10x32xf32, #tpu.memory_space<vmem>>, vector<10x1x32xf32>
    tpu.vector_store %arg22[%c0_219, %c9_220, %c0_221], %151 {strides = array<i32>} : memref<10x10x32xf32, #tpu.memory_space<vmem>>, vector<10x1x32xf32>,
    %153 = vector.shape_cast %144 : vector<64x32xf32> to vector<8x8x32xf32>
    %c1_222 = arith.constant 1 : index
    %c1_223 = arith.constant 1 : index
    %c0_224 = arith.constant 0 : index
    %154 = vector.load %arg22[%c1_222, %c1_223, %c0_224] : memref<10x10x32xf32, #tpu.memory_space<vmem>>, vector<8x8x32xf32>
    tpu.vector_store %arg22[%c1_222, %c1_223, %c0_224], %153 {strides = array<i32>} : memref<10x10x32xf32, #tpu.memory_space<vmem>>, vector<8x8x32xf32>,
    %c0_225 = arith.constant 0 : index
    %c0_226 = arith.constant 0 : index
    %c0_227 = arith.constant 0 : index
    %155 = vector.load %arg22[%c0_225, %c0_226, %c0_227] : memref<10x10x32xf32, #tpu.memory_space<vmem>>, vector<8x8x32xf32>
    %c0_228 = arith.constant 0 : index
    %c1_229 = arith.constant 1 : index
    %c0_230 = arith.constant 0 : index
    %156 = vector.load %arg22[%c0_228, %c1_229, %c0_230] : memref<10x10x32xf32, #tpu.memory_space<vmem>>, vector<8x8x32xf32>
    %c0_231 = arith.constant 0 : index
    %c2_232 = arith.constant 2 : index
    %c0_233 = arith.constant 0 : index
    %157 = vector.load %arg22[%c0_231, %c2_232, %c0_233] : memref<10x10x32xf32, #tpu.memory_space<vmem>>, vector<8x8x32xf32>
    %c1_234 = arith.constant 1 : index
    %c0_235 = arith.constant 0 : index
    %c0_236 = arith.constant 0 : index
    %158 = vector.load %arg22[%c1_234, %c0_235, %c0_236] : memref<10x10x32xf32, #tpu.memory_space<vmem>>, vector<8x8x32xf32>
    %c1_237 = arith.constant 1 : index
    %c1_238 = arith.constant 1 : index
    %c0_239 = arith.constant 0 : index
    %159 = vector.load %arg22[%c1_237, %c1_238, %c0_239] : memref<10x10x32xf32, #tpu.memory_space<vmem>>, vector<8x8x32xf32>
    %c1_240 = arith.constant 1 : index
    %c2_241 = arith.constant 2 : index
    %c0_242 = arith.constant 0 : index
    %160 = vector.load %arg22[%c1_240, %c2_241, %c0_242] : memref<10x10x32xf32, #tpu.memory_space<vmem>>, vector<8x8x32xf32>
    %c2_243 = arith.constant 2 : index
    %c0_244 = arith.constant 0 : index
    %c0_245 = arith.constant 0 : index
    %161 = vector.load %arg22[%c2_243, %c0_244, %c0_245] : memref<10x10x32xf32, #tpu.memory_space<vmem>>, vector<8x8x32xf32>
    %c2_246 = arith.constant 2 : index
    %c1_247 = arith.constant 1 : index
    %c0_248 = arith.constant 0 : index
    %162 = vector.load %arg22[%c2_246, %c1_247, %c0_248] : memref<10x10x32xf32, #tpu.memory_space<vmem>>, vector<8x8x32xf32>
    %c2_249 = arith.constant 2 : index
    %c2_250 = arith.constant 2 : index
    %c0_251 = arith.constant 0 : index
    %163 = vector.load %arg22[%c2_249, %c2_250, %c0_251] : memref<10x10x32xf32, #tpu.memory_space<vmem>>, vector<8x8x32xf32>
    %164 = tpu.concatenate %155, %156, %157, %158, %159, %160, %161, %162, %163 in 2 : vector<8x8x32xf32>, vector<8x8x32xf32>, vector<8x8x32xf32>, vector<8x8x32xf32>, vector<8x8x32xf32>, vector<8x8x32xf32>, vector<8x8x32xf32>, vector<8x8x32xf32>, vector<8x8x32xf32> -> vector<8x8x288xf32>
    %165 = vector.shape_cast %164 : vector<8x8x288xf32> to vector<64x288xf32>
    %166 = arith.truncf %165 : vector<64x288xf32> to vector<64x288xbf16>
    %c0_252 = arith.constant 0 : index
    %c0_253 = arith.constant 0 : index
    %167 = vector.load %arg12[%c0_252, %c0_253] : memref<288x32xbf16, #tpu.memory_space<vmem>>, vector<288x32xbf16>
    %cst_254 = arith.constant dense<0.000000e+00> : vector<64x32xf32>
    %168 = tpu.matmul %166, %167, %cst_254 {dimension_numbers = #tpu.dot_dimension_numbers<[1], [0], [0], [1], [0, 0, 1, 1], [], []>} : vector<64x288xbf16>, vector<288x32xbf16>, vector<64x32xf32> -> vector<64x32xf32>
    %c0_255 = arith.constant 0 : index
    %c0_256 = arith.constant 0 : index
    %169 = vector.load %arg13[%c0_255, %c0_256] : memref<1x32xf32, #tpu.memory_space<vmem>>, vector<1x32xf32>
    %170 = vector.broadcast %169 : vector<1x32xf32> to vector<64x32xf32>
    %171 = arith.addf %168, %170 : vector<64x32xf32>
    %c0_257 = arith.constant 0 : index
    %c0_258 = arith.constant 0 : index
    %c0_259 = arith.constant 0 : index
    %172 = vector.load %arg16[%c0_257, %c0_258, %c0_259] : memref<1x64x32xf32, #tpu.memory_space<vmem>>, vector<1x64x32xf32>
    %173 = vector.shape_cast %172 : vector<1x64x32xf32> to vector<64x32xf32>
    %174 = vector.shape_cast %171 : vector<64x32xf32> to vector<1x64x32xf32>
    tpu.vector_store %arg16[%c0_257, %c0_258, %c0_259], %174 {strides = array<i32>} : memref<1x64x32xf32, #tpu.memory_space<vmem>>, vector<1x64x32xf32>,
    %c0_260 = arith.constant 0 : index
    %c0_261 = arith.constant 0 : index
    %c0_262 = arith.constant 0 : index
    %175 = tpu.strided_load %arg22[%c0_260, %c0_261, %c0_262] {strides = array<i32: 1, 2, 1>} : memref<10x10x32xf32, #tpu.memory_space<vmem>>, vector<8x4x32xf32>
    %176 = vector.shape_cast %175 : vector<8x4x32xf32> to vector<4x2x4x32xf32>
    %177 = vector.extract_strided_slice %176 {offsets = [0, 0, 0, 0], sizes = [4, 1, 4, 32], strides = [1, 1, 1, 1]} : vector<4x2x4x32xf32> to vector<4x1x4x32xf32>
    %178 = vector.shape_cast %177 : vector<4x1x4x32xf32> to vector<4x4x32xf32>
    %c0_263 = arith.constant 0 : index
    %c1_264 = arith.constant 1 : index
    %c0_265 = arith.constant 0 : index
    %179 = tpu.strided_load %arg22[%c0_263, %c1_264, %c0_265] {strides = array<i32: 1, 2, 1>} : memref<10x10x32xf32, #tpu.memory_space<vmem>>, vector<8x4x32xf32>
    %180 = vector.shape_cast %179 : vector<8x4x32xf32> to vector<4x2x4x32xf32>
    %181 = vector.extract_strided_slice %180 {offsets = [0, 0, 0, 0], sizes = [4, 1, 4, 32], strides = [1, 1, 1, 1]} : vector<4x2x4x32xf32> to vector<4x1x4x32xf32>
    %182 = vector.shape_cast %181 : vector<4x1x4x32xf32> to vector<4x4x32xf32>
    %c0_266 = arith.constant 0 : index
    %c2_267 = arith.constant 2 : index
    %c0_268 = arith.constant 0 : index
    %183 = tpu.strided_load %arg22[%c0_266, %c2_267, %c0_268] {strides = array<i32: 1, 2, 1>} : memref<10x10x32xf32, #tpu.memory_space<vmem>>, vector<8x4x32xf32>
    %184 = vector.shape_cast %183 : vector<8x4x32xf32> to vector<4x2x4x32xf32>
    %185 = vector.extract_strided_slice %184 {offsets = [0, 0, 0, 0], sizes = [4, 1, 4, 32], strides = [1, 1, 1, 1]} : vector<4x2x4x32xf32> to vector<4x1x4x32xf32>
    %186 = vector.shape_cast %185 : vector<4x1x4x32xf32> to vector<4x4x32xf32>
    %c1_269 = arith.constant 1 : index
    %c0_270 = arith.constant 0 : index
    %c0_271 = arith.constant 0 : index
    %187 = tpu.strided_load %arg22[%c1_269, %c0_270, %c0_271] {strides = array<i32: 1, 2, 1>} : memref<10x10x32xf32, #tpu.memory_space<vmem>>, vector<8x4x32xf32>
    %188 = vector.shape_cast %187 : vector<8x4x32xf32> to vector<4x2x4x32xf32>
    %189 = vector.extract_strided_slice %188 {offsets = [0, 0, 0, 0], sizes = [4, 1, 4, 32], strides = [1, 1, 1, 1]} : vector<4x2x4x32xf32> to vector<4x1x4x32xf32>
    %190 = vector.shape_cast %189 : vector<4x1x4x32xf32> to vector<4x4x32xf32>
    %c1_272 = arith.constant 1 : index
    %c1_273 = arith.constant 1 : index
    %c0_274 = arith.constant 0 : index
    %191 = tpu.strided_load %arg22[%c1_272, %c1_273, %c0_274] {strides = array<i32: 1, 2, 1>} : memref<10x10x32xf32, #tpu.memory_space<vmem>>, vector<8x4x32xf32>
    %192 = vector.shape_cast %191 : vector<8x4x32xf32> to vector<4x2x4x32xf32>
    %193 = vector.extract_strided_slice %192 {offsets = [0, 0, 0, 0], sizes = [4, 1, 4, 32], strides = [1, 1, 1, 1]} : vector<4x2x4x32xf32> to vector<4x1x4x32xf32>
    %194 = vector.shape_cast %193 : vector<4x1x4x32xf32> to vector<4x4x32xf32>
    %c1_275 = arith.constant 1 : index
    %c2_276 = arith.constant 2 : index
    %c0_277 = arith.constant 0 : index
    %195 = tpu.strided_load %arg22[%c1_275, %c2_276, %c0_277] {strides = array<i32: 1, 2, 1>} : memref<10x10x32xf32, #tpu.memory_space<vmem>>, vector<8x4x32xf32>
    %196 = vector.shape_cast %195 : vector<8x4x32xf32> to vector<4x2x4x32xf32>
    %197 = vector.extract_strided_slice %196 {offsets = [0, 0, 0, 0], sizes = [4, 1, 4, 32], strides = [1, 1, 1, 1]} : vector<4x2x4x32xf32> to vector<4x1x4x32xf32>
    %198 = vector.shape_cast %197 : vector<4x1x4x32xf32> to vector<4x4x32xf32>
    %c2_278 = arith.constant 2 : index
    %c0_279 = arith.constant 0 : index
    %c0_280 = arith.constant 0 : index
    %199 = tpu.strided_load %arg22[%c2_278, %c0_279, %c0_280] {strides = array<i32: 1, 2, 1>} : memref<10x10x32xf32, #tpu.memory_space<vmem>>, vector<8x4x32xf32>
    %200 = vector.shape_cast %199 : vector<8x4x32xf32> to vector<4x2x4x32xf32>
    %201 = vector.extract_strided_slice %200 {offsets = [0, 0, 0, 0], sizes = [4, 1, 4, 32], strides = [1, 1, 1, 1]} : vector<4x2x4x32xf32> to vector<4x1x4x32xf32>
    %202 = vector.shape_cast %201 : vector<4x1x4x32xf32> to vector<4x4x32xf32>
    %c2_281 = arith.constant 2 : index
    %c1_282 = arith.constant 1 : index
    %c0_283 = arith.constant 0 : index
    %203 = tpu.strided_load %arg22[%c2_281, %c1_282, %c0_283] {strides = array<i32: 1, 2, 1>} : memref<10x10x32xf32, #tpu.memory_space<vmem>>, vector<8x4x32xf32>
    %204 = vector.shape_cast %203 : vector<8x4x32xf32> to vector<4x2x4x32xf32>
    %205 = vector.extract_strided_slice %204 {offsets = [0, 0, 0, 0], sizes = [4, 1, 4, 32], strides = [1, 1, 1, 1]} : vector<4x2x4x32xf32> to vector<4x1x4x32xf32>
    %206 = vector.shape_cast %205 : vector<4x1x4x32xf32> to vector<4x4x32xf32>
    %c2_284 = arith.constant 2 : index
    %c2_285 = arith.constant 2 : index
    %c0_286 = arith.constant 0 : index
    %207 = tpu.strided_load %arg22[%c2_284, %c2_285, %c0_286] {strides = array<i32: 1, 2, 1>} : memref<10x10x32xf32, #tpu.memory_space<vmem>>, vector<8x4x32xf32>
    %208 = vector.shape_cast %207 : vector<8x4x32xf32> to vector<4x2x4x32xf32>
    %209 = vector.extract_strided_slice %208 {offsets = [0, 0, 0, 0], sizes = [4, 1, 4, 32], strides = [1, 1, 1, 1]} : vector<4x2x4x32xf32> to vector<4x1x4x32xf32>
    %210 = vector.shape_cast %209 : vector<4x1x4x32xf32> to vector<4x4x32xf32>
    %211 = tpu.concatenate %178, %182, %186, %190, %194, %198, %202, %206, %210 in 2 : vector<4x4x32xf32>, vector<4x4x32xf32>, vector<4x4x32xf32>, vector<4x4x32xf32>, vector<4x4x32xf32>, vector<4x4x32xf32>, vector<4x4x32xf32>, vector<4x4x32xf32>, vector<4x4x32xf32> -> vector<4x4x288xf32>
    %212 = vector.extract_strided_slice %211 {offsets = [0, 0, 0], sizes = [1, 4, 288], strides = [1, 1, 1]} : vector<4x4x288xf32> to vector<1x4x288xf32>
    %213 = vector.shape_cast %212 : vector<1x4x288xf32> to vector<4x288xf32>
    %214 = vector.extract_strided_slice %211 {offsets = [1, 0, 0], sizes = [1, 4, 288], strides = [1, 1, 1]} : vector<4x4x288xf32> to vector<1x4x288xf32>
    %215 = vector.shape_cast %214 : vector<1x4x288xf32> to vector<4x288xf32>
    %216 = vector.extract_strided_slice %211 {offsets = [2, 0, 0], sizes = [1, 4, 288], strides = [1, 1, 1]} : vector<4x4x288xf32> to vector<1x4x288xf32>
    %217 = vector.shape_cast %216 : vector<1x4x288xf32> to vector<4x288xf32>
    %218 = vector.extract_strided_slice %211 {offsets = [3, 0, 0], sizes = [1, 4, 288], strides = [1, 1, 1]} : vector<4x4x288xf32> to vector<1x4x288xf32>
    %219 = vector.shape_cast %218 : vector<1x4x288xf32> to vector<4x288xf32>
    %220 = tpu.concatenate %213, %215, %217, %219 in 0 : vector<4x288xf32>, vector<4x288xf32>, vector<4x288xf32>, vector<4x288xf32> -> vector<16x288xf32>
    %221 = arith.truncf %220 : vector<16x288xf32> to vector<16x288xbf16>
    %c0_287 = arith.constant 0 : index
    %c0_288 = arith.constant 0 : index
    %222 = vector.load %arg10[%c0_287, %c0_288] : memref<288x64xbf16, #tpu.memory_space<vmem>>, vector<288x64xbf16>
    %cst_289 = arith.constant dense<0.000000e+00> : vector<16x64xf32>
    %223 = tpu.matmul %221, %222, %cst_289 {dimension_numbers = #tpu.dot_dimension_numbers<[1], [0], [0], [1], [0, 0, 1, 1], [], []>} : vector<16x288xbf16>, vector<288x64xbf16>, vector<16x64xf32> -> vector<16x64xf32>
    %c0_290 = arith.constant 0 : index
    %c0_291 = arith.constant 0 : index
    %224 = vector.load %arg11[%c0_290, %c0_291] : memref<1x64xf32, #tpu.memory_space<vmem>>, vector<1x64xf32>
    %225 = vector.broadcast %224 : vector<1x64xf32> to vector<16x64xf32>
    %226 = arith.addf %223, %225 : vector<16x64xf32>
    %cst_292 = arith.constant 0.000000e+00 : f32
    %227 = vector.broadcast %cst_292 : f32 to vector<16x64xf32>
    %228 = arith.maximumf %226, %227 : vector<16x64xf32>
    %cst_293 = arith.constant 0.000000e+00 : f32
    %229 = vector.broadcast %cst_293 : f32 to vector<1x6x64xf32>
    %c0_294 = arith.constant 0 : index
    %c0_295 = arith.constant 0 : index
    %c0_296 = arith.constant 0 : index
    %230 = vector.load %arg23[%c0_294, %c0_295, %c0_296] : memref<6x6x64xf32, #tpu.memory_space<vmem>>, vector<1x6x64xf32>
    tpu.vector_store %arg23[%c0_294, %c0_295, %c0_296], %229 {strides = array<i32>} : memref<6x6x64xf32, #tpu.memory_space<vmem>>, vector<1x6x64xf32>,
    %cst_297 = arith.constant 0.000000e+00 : f32
    %231 = vector.broadcast %cst_297 : f32 to vector<1x6x64xf32>
    %c5 = arith.constant 5 : index
    %c0_298 = arith.constant 0 : index
    %c0_299 = arith.constant 0 : index
    %232 = vector.load %arg23[%c5, %c0_298, %c0_299] : memref<6x6x64xf32, #tpu.memory_space<vmem>>, vector<1x6x64xf32>
    tpu.vector_store %arg23[%c5, %c0_298, %c0_299], %231 {strides = array<i32>} : memref<6x6x64xf32, #tpu.memory_space<vmem>>, vector<1x6x64xf32>,
    %cst_300 = arith.constant 0.000000e+00 : f32
    %233 = vector.broadcast %cst_300 : f32 to vector<6x1x64xf32>
    %c0_301 = arith.constant 0 : index
    %c0_302 = arith.constant 0 : index
    %c0_303 = arith.constant 0 : index
    %234 = vector.load %arg23[%c0_301, %c0_302, %c0_303] : memref<6x6x64xf32, #tpu.memory_space<vmem>>, vector<6x1x64xf32>
    tpu.vector_store %arg23[%c0_301, %c0_302, %c0_303], %233 {strides = array<i32>} : memref<6x6x64xf32, #tpu.memory_space<vmem>>, vector<6x1x64xf32>,
    %cst_304 = arith.constant 0.000000e+00 : f32
    %235 = vector.broadcast %cst_304 : f32 to vector<6x1x64xf32>
    %c0_305 = arith.constant 0 : index
    %c5_306 = arith.constant 5 : index
    %c0_307 = arith.constant 0 : index
    %236 = vector.load %arg23[%c0_305, %c5_306, %c0_307] : memref<6x6x64xf32, #tpu.memory_space<vmem>>, vector<6x1x64xf32>
    tpu.vector_store %arg23[%c0_305, %c5_306, %c0_307], %235 {strides = array<i32>} : memref<6x6x64xf32, #tpu.memory_space<vmem>>, vector<6x1x64xf32>,
    %237 = vector.extract_strided_slice %228 {offsets = [0, 0], sizes = [4, 64], strides = [1, 1]} : vector<16x64xf32> to vector<4x64xf32>
    %c1_308 = arith.constant 1 : index
    %c1_309 = arith.constant 1 : index
    %c0_310 = arith.constant 0 : index
    %238 = vector.load %arg23[%c1_308, %c1_309, %c0_310] : memref<6x6x64xf32, #tpu.memory_space<vmem>>, vector<1x4x64xf32>
    %239 = vector.shape_cast %238 : vector<1x4x64xf32> to vector<4x64xf32>
    %240 = vector.shape_cast %237 : vector<4x64xf32> to vector<1x4x64xf32>
    tpu.vector_store %arg23[%c1_308, %c1_309, %c0_310], %240 {strides = array<i32>} : memref<6x6x64xf32, #tpu.memory_space<vmem>>, vector<1x4x64xf32>,
    %241 = vector.extract_strided_slice %228 {offsets = [4, 0], sizes = [4, 64], strides = [1, 1]} : vector<16x64xf32> to vector<4x64xf32>
    %c2_311 = arith.constant 2 : index
    %c1_312 = arith.constant 1 : index
    %c0_313 = arith.constant 0 : index
    %242 = vector.load %arg23[%c2_311, %c1_312, %c0_313] : memref<6x6x64xf32, #tpu.memory_space<vmem>>, vector<1x4x64xf32>
    %243 = vector.shape_cast %242 : vector<1x4x64xf32> to vector<4x64xf32>
    %244 = vector.shape_cast %241 : vector<4x64xf32> to vector<1x4x64xf32>
    tpu.vector_store %arg23[%c2_311, %c1_312, %c0_313], %244 {strides = array<i32>} : memref<6x6x64xf32, #tpu.memory_space<vmem>>, vector<1x4x64xf32>,
    %245 = vector.extract_strided_slice %228 {offsets = [8, 0], sizes = [4, 64], strides = [1, 1]} : vector<16x64xf32> to vector<4x64xf32>
    %c3 = arith.constant 3 : index
    %c1_314 = arith.constant 1 : index
    %c0_315 = arith.constant 0 : index
    %246 = vector.load %arg23[%c3, %c1_314, %c0_315] : memref<6x6x64xf32, #tpu.memory_space<vmem>>, vector<1x4x64xf32>
    %247 = vector.shape_cast %246 : vector<1x4x64xf32> to vector<4x64xf32>
    %248 = vector.shape_cast %245 : vector<4x64xf32> to vector<1x4x64xf32>
    tpu.vector_store %arg23[%c3, %c1_314, %c0_315], %248 {strides = array<i32>} : memref<6x6x64xf32, #tpu.memory_space<vmem>>, vector<1x4x64xf32>,
    %249 = vector.extract_strided_slice %228 {offsets = [12, 0], sizes = [4, 64], strides = [1, 1]} : vector<16x64xf32> to vector<4x64xf32>
    %c4 = arith.constant 4 : index
    %c1_316 = arith.constant 1 : index
    %c0_317 = arith.constant 0 : index
    %250 = vector.load %arg23[%c4, %c1_316, %c0_317] : memref<6x6x64xf32, #tpu.memory_space<vmem>>, vector<1x4x64xf32>
    %251 = vector.shape_cast %250 : vector<1x4x64xf32> to vector<4x64xf32>
    %252 = vector.shape_cast %249 : vector<4x64xf32> to vector<1x4x64xf32>
    tpu.vector_store %arg23[%c4, %c1_316, %c0_317], %252 {strides = array<i32>} : memref<6x6x64xf32, #tpu.memory_space<vmem>>, vector<1x4x64xf32>,
    %c0_318 = arith.constant 0 : index
    %c0_319 = arith.constant 0 : index
    %c0_320 = arith.constant 0 : index
    %253 = vector.load %arg23[%c0_318, %c0_319, %c0_320] : memref<6x6x64xf32, #tpu.memory_space<vmem>>, vector<4x4x64xf32>
    %c0_321 = arith.constant 0 : index
    %c1_322 = arith.constant 1 : index
    %c0_323 = arith.constant 0 : index
    %254 = vector.load %arg23[%c0_321, %c1_322, %c0_323] : memref<6x6x64xf32, #tpu.memory_space<vmem>>, vector<4x4x64xf32>
    %c0_324 = arith.constant 0 : index
    %c2_325 = arith.constant 2 : index
    %c0_326 = arith.constant 0 : index
    %255 = vector.load %arg23[%c0_324, %c2_325, %c0_326] : memref<6x6x64xf32, #tpu.memory_space<vmem>>, vector<4x4x64xf32>
    %c1_327 = arith.constant 1 : index
    %c0_328 = arith.constant 0 : index
    %c0_329 = arith.constant 0 : index
    %256 = vector.load %arg23[%c1_327, %c0_328, %c0_329] : memref<6x6x64xf32, #tpu.memory_space<vmem>>, vector<4x4x64xf32>
    %c1_330 = arith.constant 1 : index
    %c1_331 = arith.constant 1 : index
    %c0_332 = arith.constant 0 : index
    %257 = vector.load %arg23[%c1_330, %c1_331, %c0_332] : memref<6x6x64xf32, #tpu.memory_space<vmem>>, vector<4x4x64xf32>
    %c1_333 = arith.constant 1 : index
    %c2_334 = arith.constant 2 : index
    %c0_335 = arith.constant 0 : index
    %258 = vector.load %arg23[%c1_333, %c2_334, %c0_335] : memref<6x6x64xf32, #tpu.memory_space<vmem>>, vector<4x4x64xf32>
    %c2_336 = arith.constant 2 : index
    %c0_337 = arith.constant 0 : index
    %c0_338 = arith.constant 0 : index
    %259 = vector.load %arg23[%c2_336, %c0_337, %c0_338] : memref<6x6x64xf32, #tpu.memory_space<vmem>>, vector<4x4x64xf32>
    %c2_339 = arith.constant 2 : index
    %c1_340 = arith.constant 1 : index
    %c0_341 = arith.constant 0 : index
    %260 = vector.load %arg23[%c2_339, %c1_340, %c0_341] : memref<6x6x64xf32, #tpu.memory_space<vmem>>, vector<4x4x64xf32>
    %c2_342 = arith.constant 2 : index
    %c2_343 = arith.constant 2 : index
    %c0_344 = arith.constant 0 : index
    %261 = vector.load %arg23[%c2_342, %c2_343, %c0_344] : memref<6x6x64xf32, #tpu.memory_space<vmem>>, vector<4x4x64xf32>
    %262 = tpu.concatenate %253, %254, %255, %256, %257, %258, %259, %260, %261 in 2 : vector<4x4x64xf32>, vector<4x4x64xf32>, vector<4x4x64xf32>, vector<4x4x64xf32>, vector<4x4x64xf32>, vector<4x4x64xf32>, vector<4x4x64xf32>, vector<4x4x64xf32>, vector<4x4x64xf32> -> vector<4x4x576xf32>
    %263 = vector.extract_strided_slice %262 {offsets = [0, 0, 0], sizes = [1, 4, 576], strides = [1, 1, 1]} : vector<4x4x576xf32> to vector<1x4x576xf32>
    %264 = vector.shape_cast %263 : vector<1x4x576xf32> to vector<4x576xf32>
    %265 = vector.extract_strided_slice %262 {offsets = [1, 0, 0], sizes = [1, 4, 576], strides = [1, 1, 1]} : vector<4x4x576xf32> to vector<1x4x576xf32>
    %266 = vector.shape_cast %265 : vector<1x4x576xf32> to vector<4x576xf32>
    %267 = vector.extract_strided_slice %262 {offsets = [2, 0, 0], sizes = [1, 4, 576], strides = [1, 1, 1]} : vector<4x4x576xf32> to vector<1x4x576xf32>
    %268 = vector.shape_cast %267 : vector<1x4x576xf32> to vector<4x576xf32>
    %269 = vector.extract_strided_slice %262 {offsets = [3, 0, 0], sizes = [1, 4, 576], strides = [1, 1, 1]} : vector<4x4x576xf32> to vector<1x4x576xf32>
    %270 = vector.shape_cast %269 : vector<1x4x576xf32> to vector<4x576xf32>
    %271 = tpu.concatenate %264, %266, %268, %270 in 0 : vector<4x576xf32>, vector<4x576xf32>, vector<4x576xf32>, vector<4x576xf32> -> vector<16x576xf32>
    %272 = arith.truncf %271 : vector<16x576xf32> to vector<16x576xbf16>
    %c0_345 = arith.constant 0 : index
    %c0_346 = arith.constant 0 : index
    %273 = vector.load %arg14[%c0_345, %c0_346] : memref<576x32xbf16, #tpu.memory_space<vmem>>, vector<576x32xbf16>
    %cst_347 = arith.constant dense<0.000000e+00> : vector<16x32xf32>
    %274 = tpu.matmul %272, %273, %cst_347 {dimension_numbers = #tpu.dot_dimension_numbers<[1], [0], [0], [1], [0, 0, 1, 1], [], []>} : vector<16x576xbf16>, vector<576x32xbf16>, vector<16x32xf32> -> vector<16x32xf32>
    %c0_348 = arith.constant 0 : index
    %c0_349 = arith.constant 0 : index
    %275 = vector.load %arg15[%c0_348, %c0_349] : memref<1x32xf32, #tpu.memory_space<vmem>>, vector<1x32xf32>
    %276 = vector.broadcast %275 : vector<1x32xf32> to vector<16x32xf32>
    %277 = arith.addf %274, %276 : vector<16x32xf32>
    %c0_350 = arith.constant 0 : index
    %c0_351 = arith.constant 0 : index
    %c0_352 = arith.constant 0 : index
    %278 = vector.load %arg17[%c0_350, %c0_351, %c0_352] : memref<1x16x32xf32, #tpu.memory_space<vmem>>, vector<1x16x32xf32>
    %279 = vector.shape_cast %278 : vector<1x16x32xf32> to vector<16x32xf32>
    %280 = vector.shape_cast %277 : vector<16x32xf32> to vector<1x16x32xf32>
    tpu.vector_store %arg17[%c0_350, %c0_351, %c0_352], %280 {strides = array<i32>} : memref<1x16x32xf32, #tpu.memory_space<vmem>>, vector<1x16x32xf32>,
    return
  }
  func.func @transform_0(%arg0: i32) -> (i32, i32, i32, i32) {
    %c0_i32 = arith.constant 0 : i32
    %c0_i32_0 = arith.constant 0 : i32
    %c0_i32_1 = arith.constant 0 : i32
    %c0_i32_2 = arith.constant 0 : i32
    return %arg0, %c0_i32, %c0_i32_0, %c0_i32_1 : i32, i32, i32, i32
  }
  func.func @transform_1(%arg0: i32) -> (i32, i32) {
    %c0_i32 = arith.constant 0 : i32
    %c0_i32_0 = arith.constant 0 : i32
    %c0_i32_1 = arith.constant 0 : i32
    return %c0_i32, %c0_i32_0 : i32, i32
  }
  func.func @transform_2(%arg0: i32) -> (i32, i32) {
    %c0_i32 = arith.constant 0 : i32
    %c0_i32_0 = arith.constant 0 : i32
    %c0_i32_1 = arith.constant 0 : i32
    return %c0_i32, %c0_i32_0 : i32, i32
  }
  func.func @transform_3(%arg0: i32) -> (i32, i32) {
    %c0_i32 = arith.constant 0 : i32
    %c0_i32_0 = arith.constant 0 : i32
    %c0_i32_1 = arith.constant 0 : i32
    return %c0_i32, %c0_i32_0 : i32, i32
  }
  func.func @transform_4(%arg0: i32) -> (i32, i32) {
    %c0_i32 = arith.constant 0 : i32
    %c0_i32_0 = arith.constant 0 : i32
    %c0_i32_1 = arith.constant 0 : i32
    return %c0_i32, %c0_i32_0 : i32, i32
  }
  func.func @transform_5(%arg0: i32) -> (i32, i32) {
    %c0_i32 = arith.constant 0 : i32
    %c0_i32_0 = arith.constant 0 : i32
    %c0_i32_1 = arith.constant 0 : i32
    return %c0_i32, %c0_i32_0 : i32, i32
  }
  func.func @transform_6(%arg0: i32) -> (i32, i32) {
    %c0_i32 = arith.constant 0 : i32
    %c0_i32_0 = arith.constant 0 : i32
    %c0_i32_1 = arith.constant 0 : i32
    return %c0_i32, %c0_i32_0 : i32, i32
  }
  func.func @transform_7(%arg0: i32) -> (i32, i32) {
    %c0_i32 = arith.constant 0 : i32
    %c0_i32_0 = arith.constant 0 : i32
    %c0_i32_1 = arith.constant 0 : i32
    return %c0_i32, %c0_i32_0 : i32, i32
  }
  func.func @transform_8(%arg0: i32) -> (i32, i32) {
    %c0_i32 = arith.constant 0 : i32
    %c0_i32_0 = arith.constant 0 : i32
    %c0_i32_1 = arith.constant 0 : i32
    return %c0_i32, %c0_i32_0 : i32, i32
  }
  func.func @transform_9(%arg0: i32) -> (i32, i32) {
    %c0_i32 = arith.constant 0 : i32
    %c0_i32_0 = arith.constant 0 : i32
    %c0_i32_1 = arith.constant 0 : i32
    return %c0_i32, %c0_i32_0 : i32, i32
  }
  func.func @transform_10(%arg0: i32) -> (i32, i32) {
    %c0_i32 = arith.constant 0 : i32
    %c0_i32_0 = arith.constant 0 : i32
    %c0_i32_1 = arith.constant 0 : i32
    return %c0_i32, %c0_i32_0 : i32, i32
  }
  func.func @transform_11(%arg0: i32) -> (i32, i32) {
    %c0_i32 = arith.constant 0 : i32
    %c0_i32_0 = arith.constant 0 : i32
    %c0_i32_1 = arith.constant 0 : i32
    return %c0_i32, %c0_i32_0 : i32, i32
  }
  func.func @transform_12(%arg0: i32) -> (i32, i32) {
    %c0_i32 = arith.constant 0 : i32
    %c0_i32_0 = arith.constant 0 : i32
    %c0_i32_1 = arith.constant 0 : i32
    return %c0_i32, %c0_i32_0 : i32, i32
  }
  func.func @transform_13(%arg0: i32) -> (i32, i32) {
    %c0_i32 = arith.constant 0 : i32
    %c0_i32_0 = arith.constant 0 : i32
    %c0_i32_1 = arith.constant 0 : i32
    return %c0_i32, %c0_i32_0 : i32, i32
  }
  func.func @transform_14(%arg0: i32) -> (i32, i32) {
    %c0_i32 = arith.constant 0 : i32
    %c0_i32_0 = arith.constant 0 : i32
    %c0_i32_1 = arith.constant 0 : i32
    return %c0_i32, %c0_i32_0 : i32, i32
  }
  func.func @transform_15(%arg0: i32) -> (i32, i32, i32) {
    %c0_i32 = arith.constant 0 : i32
    %c0_i32_0 = arith.constant 0 : i32
    %c0_i32_1 = arith.constant 0 : i32
    return %arg0, %c0_i32, %c0_i32_0 : i32, i32, i32
  }
  func.func @transform_16(%arg0: i32) -> (i32, i32, i32) {
    %c0_i32 = arith.constant 0 : i32
    %c0_i32_0 = arith.constant 0 : i32
    %c0_i32_1 = arith.constant 0 : i32
    return %arg0, %c0_i32, %c0_i32_0 : i32, i32, i32
  }
}

</mosaic_0001>

<llo_original>
// kernel: ssd_resnet_forward.1
$region0: #{ssd_resnet_forward.1}
  #allocation0 [shape = 'u32[]', space=smem, size = 0x4, offset = 0x4, fixed_abs, tag = 'smem constant byte address 0x4 - core index']
  #allocation1 [shape = 'u32[72,128]{1,0:T(1,128)}', space=vmem, size = 0x9000, scoped, tag = 'internal scratch']
  #allocation2 [shape = 'f32[18,18,4]{2,1,0:T(8,128)}', space=vmem, size = 0x36000, scoped, tag = 'scratch operand']
  #allocation3 [shape = 'f32[18,18,16]{2,1,0:T(8,128)}', space=vmem, size = 0x36000, scoped, tag = 'scratch operand']
  #allocation4 [shape = 'f32[10,10,32]{2,1,0:T(8,128)}', space=vmem, size = 0x14000, scoped, tag = 'scratch operand']
  #allocation5 [shape = 'f32[10,10,32]{2,1,0:T(8,128)}', space=vmem, size = 0x14000, scoped, tag = 'scratch operand']
  #allocation6 [shape = 'f32[10,10,32]{2,1,0:T(8,128)}', space=vmem, size = 0x14000, scoped, tag = 'scratch operand']
  #allocation7 [shape = 'f32[6,6,64]{2,1,0:T(8,128)}', space=vmem, size = 0x6000, scoped, tag = 'scratch operand']
  %s0 = inlined_call_operand.vmem [shape: f32[2,16,16,4], index: 0, kind: input, shape index: {}]
  %s1 = inlined_call_operand.vmem [shape: bf16[36,16], index: 1, kind: input, shape index: {}]
  %s2 = inlined_call_operand.vmem [shape: f32[1,16], index: 2, kind: input, shape index: {}]
  %s3 = inlined_call_operand.vmem [shape: bf16[144,32], index: 3, kind: input, shape index: {}]
  %s4 = inlined_call_operand.vmem [shape: f32[1,32], index: 4, kind: input, shape index: {}]
  %s5 = inlined_call_operand.vmem [shape: bf16[288,32], index: 5, kind: input, shape index: {}]
  %s6 = inlined_call_operand.vmem [shape: f32[1,32], index: 6, kind: input, shape index: {}]
  %s7 = inlined_call_operand.vmem [shape: bf16[288,32], index: 7, kind: input, shape index: {}]
  %s8 = inlined_call_operand.vmem [shape: f32[1,32], index: 8, kind: input, shape index: {}]
  %s9 = inlined_call_operand.vmem [shape: bf16[288,64], index: 9, kind: input, shape index: {}]
  %s10 = inlined_call_operand.vmem [shape: f32[1,64], index: 10, kind: input, shape index: {}]
  %s11 = inlined_call_operand.vmem [shape: bf16[288,32], index: 11, kind: input, shape index: {}]
  %s12 = inlined_call_operand.vmem [shape: f32[1,32], index: 12, kind: input, shape index: {}]
  %s13 = inlined_call_operand.vmem [shape: bf16[576,32], index: 13, kind: input, shape index: {}]
  %s14 = inlined_call_operand.vmem [shape: f32[1,32], index: 14, kind: input, shape index: {}]
  %s15 = inlined_call_operand.vmem [shape: f32[2,64,32], index: 15, kind: output, shape index: {0}]
  %s16 = inlined_call_operand.vmem [shape: f32[2,16,32], index: 16, kind: output, shape index: {1}]
  %17 = xla_tuple %s15, %s16
  %s18 = sld [smem:[#allocation0]]
  $region101: #{ssd_resnet_forward.1} parent=0
    _
  %s20 = ssub.s32 1, %s18
  %s21 = scalar_select 0, %s20, %s18
  loop: start=0, step=1, limit=4
  $region2: #{ssd_resnet_forward.1} parent=0 // loop_pre_header
    _
  $region3: #{ssd_resnet_forward.1} parent=0 // loop_header
    %s23 = sphi 0, %s27
    %p24 = scmp.ge.s32.totalorder %s23, 4
    %s33 = sphi 0, %s35
    %s36 = sphi 0, %s33
    %s37 = sphi 0, %s36
    %s53 = sphi 0, %s37
    %s57 = sphi 0, %s57
    %s59 = sphi 0, %s57
    %s60 = sphi 0, %s59
    %s74 = sphi 0, %s60
    %s78 = sphi 0, %s78
    %s80 = sphi 0, %s78
    %s81 = sphi 0, %s80
    %s95 = sphi 0, %s81
    %s99 = sphi 0, %s99
    %s101 = sphi 0, %s99
    %s102 = sphi 0, %s101
    %s116 = sphi 0, %s102
    %s120 = sphi 0, %s120
    %s122 = sphi 0, %s120
    %s123 = sphi 0, %s122
    %s137 = sphi 0, %s123
    %s141 = sphi 0, %s141
    %s143 = sphi 0, %s141
    %s144 = sphi 0, %s143
    %s158 = sphi 0, %s144
    %s162 = sphi 0, %s162
    %s164 = sphi 0, %s162
    %s165 = sphi 0, %s164
    %s179 = sphi 0, %s165
    %s183 = sphi 0, %s183
    %s185 = sphi 0, %s183
    %s186 = sphi 0, %s185
    %s200 = sphi 0, %s186
    %s204 = sphi 0, %s204
    %s206 = sphi 0, %s204
    %s207 = sphi 0, %s206
    %s221 = sphi 0, %s207
    %s225 = sphi 0, %s225
    %s227 = sphi 0, %s225
    %s228 = sphi 0, %s227
    %s242 = sphi 0, %s228
    %s246 = sphi 0, %s246
    %s248 = sphi 0, %s246
    %s249 = sphi 0, %s248
    %s263 = sphi 0, %s249
    %s267 = sphi 0, %s267
    %s269 = sphi 0, %s267
    %s270 = sphi 0, %s269
    %s284 = sphi 0, %s270
    %s288 = sphi 0, %s288
    %s290 = sphi 0, %s288
    %s291 = sphi 0, %s290
    %s305 = sphi 0, %s291
    %s309 = sphi 0, %s309
    %s311 = sphi 0, %s309
    %s312 = sphi 0, %s311
    %s326 = sphi 0, %s312
    %s330 = sphi 0, %s330
    %s332 = sphi 0, %s330
    %s333 = sphi 0, %s332
    %s347 = sphi 0, %s333
    %s353 = sphi 0, %s355
    %s356 = sphi 0, %s353
    %s357 = sphi 0, %s356
    %s373 = sphi 0, %s357
    %s379 = sphi 0, %s381
    %s382 = sphi 0, %s379
    %s383 = sphi 0, %s382
    %s399 = sphi 0, %s383
  $region4: #{ssd_resnet_forward.1} parent=0 // loop_header_branch
    %26 = sbr.rel (%p24) target = $region8
  $region5: #{ssd_resnet_forward.1} parent=0 // loop_body
    %s28 = ssub.s32 %s23, 1
    %s29 = ssub.s32 %s23, 2
    %s30 = sadd.s32 %s23, 1
    %s31 = ssub.s32 %s23, %s30
    %p32 = scmp.eq.s32.totalorder %s31, 0
    %s34 = sadd.s32 %s33, 1
    %s35 = scalar_select %p32, %s33, %s34
    %p38 = pneg %p32
    %p39 = scmp.eq.s32.totalorder %s23, 1
    %p40 = por %p38, %p39
    %p41 = scmp.ne.s32.totalorder %s33, %s36
    %p42 = scmp.eq.s32.totalorder %s23, 0
    %p43 = por %p41, %p42
    %p44 = scmp.ne.s32.totalorder %s33, %s36
    %p45 = scmp.eq.s32.totalorder %s28, 1
    %p46 = por %p44, %p45
    %p47 = scmp.ne.s32.totalorder %s36, %s37
    %p48 = scmp.eq.s32.totalorder %s28, 0
    %p49 = por %p47, %p48
    %p50 = scmp.ne.s32.totalorder %s36, %s37
    %p51 = scmp.eq.s32.totalorder %s29, 1
    %p52 = por %p50, %p51
    %p54 = scmp.ne.s32.totalorder %s37, %s53
    %p55 = scmp.eq.s32.totalorder %s29, 0
    %p56 = por %p54, %p55
    %s58 = sadd.s32 %s57, 1
    %p61 = scmp.eq.s32.totalorder %s23, 1
    %p62 = scmp.ne.s32.totalorder %s57, %s59
    %p63 = scmp.eq.s32.totalorder %s23, 0
    %p64 = por %p62, %p63
    %p65 = scmp.ne.s32.totalorder %s57, %s59
    %p66 = scmp.eq.s32.totalorder %s28, 1
    %p67 = por %p65, %p66
    %p68 = scmp.ne.s32.totalorder %s59, %s60
    %p69 = scmp.eq.s32.totalorder %s28, 0
    %p70 = por %p68, %p69
    %p71 = scmp.ne.s32.totalorder %s59, %s60
    %p72 = scmp.eq.s32.totalorder %s29, 1
    %p73 = por %p71, %p72
    %p75 = scmp.ne.s32.totalorder %s60, %s74
    %p76 = scmp.eq.s32.totalorder %s29, 0
    %p77 = por %p75, %p76
    %s79 = sadd.s32 %s78, 1
    %p82 = scmp.eq.s32.totalorder %s23, 1
    %p83 = scmp.ne.s32.totalorder %s78, %s80
    %p84 = scmp.eq.s32.totalorder %s23, 0
    %p85 = por %p83, %p84
    %p86 = scmp.ne.s32.totalorder %s78, %s80
    %p87 = scmp.eq.s32.totalorder %s28, 1
    %p88 = por %p86, %p87
    %p89 = scmp.ne.s32.totalorder %s80, %s81
    %p90 = scmp.eq.s32.totalorder %s28, 0
    %p91 = por %p89, %p90
    %p92 = scmp.ne.s32.totalorder %s80, %s81
    %p93 = scmp.eq.s32.totalorder %s29, 1
    %p94 = por %p92, %p93
    %p96 = scmp.ne.s32.totalorder %s81, %s95
    %p97 = scmp.eq.s32.totalorder %s29, 0
    %p98 = por %p96, %p97
    %s100 = sadd.s32 %s99, 1
    %p103 = scmp.eq.s32.totalorder %s23, 1
    %p104 = scmp.ne.s32.totalorder %s99, %s101
    %p105 = scmp.eq.s32.totalorder %s23, 0
    %p106 = por %p104, %p105
    %p107 = scmp.ne.s32.totalorder %s99, %s101
    %p108 = scmp.eq.s32.totalorder %s28, 1
    %p109 = por %p107, %p108
    %p110 = scmp.ne.s32.totalorder %s101, %s102
    %p111 = scmp.eq.s32.totalorder %s28, 0
    %p112 = por %p110, %p111
    %p113 = scmp.ne.s32.totalorder %s101, %s102
    %p114 = scmp.eq.s32.totalorder %s29, 1
    %p115 = por %p113, %p114
    %p117 = scmp.ne.s32.totalorder %s102, %s116
    %p118 = scmp.eq.s32.totalorder %s29, 0
    %p119 = por %p117, %p118
    %s121 = sadd.s32 %s120, 1
    %p124 = scmp.eq.s32.totalorder %s23, 1
    %p125 = scmp.ne.s32.totalorder %s120, %s122
    %p126 = scmp.eq.s32.totalorder %s23, 0
    %p127 = por %p125, %p126
    %p128 = scmp.ne.s32.totalorder %s120, %s122
    %p129 = scmp.eq.s32.totalorder %s28, 1
    %p130 = por %p128, %p129
    %p131 = scmp.ne.s32.totalorder %s122, %s123
    %p132 = scmp.eq.s32.totalorder %s28, 0
    %p133 = por %p131, %p132
    %p134 = scmp.ne.s32.totalorder %s122, %s123
    %p135 = scmp.eq.s32.totalorder %s29, 1
    %p136 = por %p134, %p135
    %p138 = scmp.ne.s32.totalorder %s123, %s137
    %p139 = scmp.eq.s32.totalorder %s29, 0
    %p140 = por %p138, %p139
    %s142 = sadd.s32 %s141, 1
    %p145 = scmp.eq.s32.totalorder %s23, 1
    %p146 = scmp.ne.s32.totalorder %s141, %s143
    %p147 = scmp.eq.s32.totalorder %s23, 0
    %p148 = por %p146, %p147
    %p149 = scmp.ne.s32.totalorder %s141, %s143
    %p150 = scmp.eq.s32.totalorder %s28, 1
    %p151 = por %p149, %p150
    %p152 = scmp.ne.s32.totalorder %s143, %s144
    %p153 = scmp.eq.s32.totalorder %s28, 0
    %p154 = por %p152, %p153
    %p155 = scmp.ne.s32.totalorder %s143, %s144
    %p156 = scmp.eq.s32.totalorder %s29, 1
    %p157 = por %p155, %p156
    %p159 = scmp.ne.s32.totalorder %s144, %s158
    %p160 = scmp.eq.s32.totalorder %s29, 0
    %p161 = por %p159, %p160
    %s163 = sadd.s32 %s162, 1
    %p166 = scmp.eq.s32.totalorder %s23, 1
    %p167 = scmp.ne.s32.totalorder %s162, %s164
    %p168 = scmp.eq.s32.totalorder %s23, 0
    %p169 = por %p167, %p168
    %p170 = scmp.ne.s32.totalorder %s162, %s164
    %p171 = scmp.eq.s32.totalorder %s28, 1
    %p172 = por %p170, %p171
    %p173 = scmp.ne.s32.totalorder %s164, %s165
    %p174 = scmp.eq.s32.totalorder %s28, 0
    %p175 = por %p173, %p174
    %p176 = scmp.ne.s32.totalorder %s164, %s165
    %p177 = scmp.eq.s32.totalorder %s29, 1
    %p178 = por %p176, %p177
    %p180 = scmp.ne.s32.totalorder %s165, %s179
    %p181 = scmp.eq.s32.totalorder %s29, 0
    %p182 = por %p180, %p181
    %s184 = sadd.s32 %s183, 1
    %p187 = scmp.eq.s32.totalorder %s23, 1
    %p188 = scmp.ne.s32.totalorder %s183, %s185
    %p189 = scmp.eq.s32.totalorder %s23, 0
    %p190 = por %p188, %p189
    %p191 = scmp.ne.s32.totalorder %s183, %s185
    %p192 = scmp.eq.s32.totalorder %s28, 1
    %p193 = por %p191, %p192
    %p194 = scmp.ne.s32.totalorder %s185, %s186
    %p195 = scmp.eq.s32.totalorder %s28, 0
    %p196 = por %p194, %p195
    %p197 = scmp.ne.s32.totalorder %s185, %s186
    %p198 = scmp.eq.s32.totalorder %s29, 1
    %p199 = por %p197, %p198
    %p201 = scmp.ne.s32.totalorder %s186, %s200
    %p202 = scmp.eq.s32.totalorder %s29, 0
    %p203 = por %p201, %p202
    %s205 = sadd.s32 %s204, 1
    %p208 = scmp.eq.s32.totalorder %s23, 1
    %p209 = scmp.ne.s32.totalorder %s204, %s206
    %p210 = scmp.eq.s32.totalorder %s23, 0
    %p211 = por %p209, %p210
    %p212 = scmp.ne.s32.totalorder %s204, %s206
    %p213 = scmp.eq.s32.totalorder %s28, 1
    %p214 = por %p212, %p213
    %p215 = scmp.ne.s32.totalorder %s206, %s207
    %p216 = scmp.eq.s32.totalorder %s28, 0
    %p217 = por %p215, %p216
    %p218 = scmp.ne.s32.totalorder %s206, %s207
    %p219 = scmp.eq.s32.totalorder %s29, 1
    %p220 = por %p218, %p219
    %p222 = scmp.ne.s32.totalorder %s207, %s221
    %p223 = scmp.eq.s32.totalorder %s29, 0
    %p224 = por %p222, %p223
    %s226 = sadd.s32 %s225, 1
    %p229 = scmp.eq.s32.totalorder %s23, 1
    %p230 = scmp.ne.s32.totalorder %s225, %s227
    %p231 = scmp.eq.s32.totalorder %s23, 0
    %p232 = por %p230, %p231
    %p233 = scmp.ne.s32.totalorder %s225, %s227
    %p234 = scmp.eq.s32.totalorder %s28, 1
    %p235 = por %p233, %p234
    %p236 = scmp.ne.s32.totalorder %s227, %s228
    %p237 = scmp.eq.s32.totalorder %s28, 0
    %p238 = por %p236, %p237
    %p239 = scmp.ne.s32.totalorder %s227, %s228
    %p240 = scmp.eq.s32.totalorder %s29, 1
    %p241 = por %p239, %p240
    %p243 = scmp.ne.s32.totalorder %s228, %s242
    %p244 = scmp.eq.s32.totalorder %s29, 0
    %p245 = por %p243, %p244
    %s247 = sadd.s32 %s246, 1
    %p250 = scmp.eq.s32.totalorder %s23, 1
    %p251 = scmp.ne.s32.totalorder %s246, %s248
    %p252 = scmp.eq.s32.totalorder %s23, 0
    %p253 = por %p251, %p252
    %p254 = scmp.ne.s32.totalorder %s246, %s248
    %p255 = scmp.eq.s32.totalorder %s28, 1
    %p256 = por %p254, %p255
    %p257 = scmp.ne.s32.totalorder %s248, %s249
    %p258 = scmp.eq.s32.totalorder %s28, 0
    %p259 = por %p257, %p258
    %p260 = scmp.ne.s32.totalorder %s248, %s249
    %p261 = scmp.eq.s32.totalorder %s29, 1
    %p262 = por %p260, %p261
    %p264 = scmp.ne.s32.totalorder %s249, %s263
    %p265 = scmp.eq.s32.totalorder %s29, 0
    %p266 = por %p264, %p265
    %s268 = sadd.s32 %s267, 1
    %p271 = scmp.eq.s32.totalorder %s23, 1
    %p272 = scmp.ne.s32.totalorder %s267, %s269
    %p273 = scmp.eq.s32.totalorder %s23, 0
    %p274 = por %p272, %p273
    %p275 = scmp.ne.s32.totalorder %s267, %s269
    %p276 = scmp.eq.s32.totalorder %s28, 1
    %p277 = por %p275, %p276
    %p278 = scmp.ne.s32.totalorder %s269, %s270
    %p279 = scmp.eq.s32.totalorder %s28, 0
    %p280 = por %p278, %p279
    %p281 = scmp.ne.s32.totalorder %s269, %s270
    %p282 = scmp.eq.s32.totalorder %s29, 1
    %p283 = por %p281, %p282
    %p285 = scmp.ne.s32.totalorder %s270, %s284
    %p286 = scmp.eq.s32.totalorder %s29, 0
    %p287 = por %p285, %p286
    %s289 = sadd.s32 %s288, 1
    %p292 = scmp.eq.s32.totalorder %s23, 1
    %p293 = scmp.ne.s32.totalorder %s288, %s290
    %p294 = scmp.eq.s32.totalorder %s23, 0
    %p295 = por %p293, %p294
    %p296 = scmp.ne.s32.totalorder %s288, %s290
    %p297 = scmp.eq.s32.totalorder %s28, 1
    %p298 = por %p296, %p297
    %p299 = scmp.ne.s32.totalorder %s290, %s291
    %p300 = scmp.eq.s32.totalorder %s28, 0
    %p301 = por %p299, %p300
    %p302 = scmp.ne.s32.totalorder %s290, %s291
    %p303 = scmp.eq.s32.totalorder %s29, 1
    %p304 = por %p302, %p303
    %p306 = scmp.ne.s32.totalorder %s291, %s305
    %p307 = scmp.eq.s32.totalorder %s29, 0
    %p308 = por %p306, %p307
    %s310 = sadd.s32 %s309, 1
    %p313 = scmp.eq.s32.totalorder %s23, 1
    %p314 = scmp.ne.s32.totalorder %s309, %s311
    %p315 = scmp.eq.s32.totalorder %s23, 0
    %p316 = por %p314, %p315
    %p317 = scmp.ne.s32.totalorder %s309, %s311
    %p318 = scmp.eq.s32.totalorder %s28, 1
    %p319 = por %p317, %p318
    %p320 = scmp.ne.s32.totalorder %s311, %s312
    %p321 = scmp.eq.s32.totalorder %s28, 0
    %p322 = por %p320, %p321
    %p323 = scmp.ne.s32.totalorder %s311, %s312
    %p324 = scmp.eq.s32.totalorder %s29, 1
    %p325 = por %p323, %p324
    %p327 = scmp.ne.s32.totalorder %s312, %s326
    %p328 = scmp.eq.s32.totalorder %s29, 0
    %p329 = por %p327, %p328
    %s331 = sadd.s32 %s330, 1
    %p334 = scmp.eq.s32.totalorder %s23, 1
    %p335 = scmp.ne.s32.totalorder %s330, %s332
    %p336 = scmp.eq.s32.totalorder %s23, 0
    %p337 = por %p335, %p336
    %p338 = scmp.ne.s32.totalorder %s330, %s332
    %p339 = scmp.eq.s32.totalorder %s28, 1
    %p340 = por %p338, %p339
    %p341 = scmp.ne.s32.totalorder %s332, %s333
    %p342 = scmp.eq.s32.totalorder %s28, 0
    %p343 = por %p341, %p342
    %p344 = scmp.ne.s32.totalorder %s332, %s333
    %p345 = scmp.eq.s32.totalorder %s29, 1
    %p346 = por %p344, %p345
    %p348 = scmp.ne.s32.totalorder %s333, %s347
    %p349 = scmp.eq.s32.totalorder %s29, 0
    %p350 = por %p348, %p349
    %s351 = ssub.s32 %s23, %s30
    %p352 = scmp.eq.s32.totalorder %s351, 0
    %s354 = sadd.s32 %s353, 1
    %s355 = scalar_select %p352, %s353, %s354
    %p358 = pneg %p352
    %p359 = scmp.eq.s32.totalorder %s23, 1
    %p360 = por %p358, %p359
    %p361 = scmp.ne.s32.totalorder %s353, %s356
    %p362 = scmp.eq.s32.totalorder %s23, 0
    %p363 = por %p361, %p362
    %p364 = scmp.ne.s32.totalorder %s353, %s356
    %p365 = scmp.eq.s32.totalorder %s28, 1
    %p366 = por %p364, %p365
    %p367 = scmp.ne.s32.totalorder %s356, %s357
    %p368 = scmp.eq.s32.totalorder %s28, 0
    %p369 = por %p367, %p368
    %p370 = scmp.ne.s32.totalorder %s356, %s357
    %p371 = scmp.eq.s32.totalorder %s29, 1
    %p372 = por %p370, %p371
    %p374 = scmp.ne.s32.totalorder %s357, %s373
    %p375 = scmp.eq.s32.totalorder %s29, 0
    %p376 = por %p374, %p375
    %s377 = ssub.s32 %s23, %s30
    %p378 = scmp.eq.s32.totalorder %s377, 0
    %s380 = sadd.s32 %s379, 1
    %s381 = scalar_select %p378, %s379, %s380
    %p384 = pneg %p378
    %p385 = scmp.eq.s32.totalorder %s23, 1
    %p386 = por %p384, %p385
    %p387 = scmp.ne.s32.totalorder %s379, %s382
    %p388 = scmp.eq.s32.totalorder %s23, 0
    %p389 = por %p387, %p388
    %p390 = scmp.ne.s32.totalorder %s379, %s382
    %p391 = scmp.eq.s32.totalorder %s28, 1
    %p392 = por %p390, %p391
    %p393 = scmp.ne.s32.totalorder %s382, %s383
    %p394 = scmp.eq.s32.totalorder %s28, 0
    %p395 = por %p393, %p394
    %p396 = scmp.ne.s32.totalorder %s382, %s383
    %p397 = scmp.eq.s32.totalorder %s29, 1
    %p398 = por %p396, %p397
    %p400 = scmp.ne.s32.totalorder %s383, %s399
    %p401 = scmp.eq.s32.totalorder %s29, 0
    %p402 = por %p400, %p401
    %p403 = scmp.le.s32.totalorder 1, %s23
    %p404 = scmp.lt.s32.totalorder %s23, 3
    %p405 = pnand %p403, %p404
    %p406 = pneg %p405
    // Predicated region
    $region9: #{ssd_resnet_forward.1} parent=5 // pred_check
      _
    $region10: #{ssd_resnet_forward.1} parent=5 // pred_check_branch
      %408 = sbr.rel (%p405) target = $region12
    $region11: #{ssd_resnet_forward.1} parent=5 // pred_region
      %s409 = ssub.s32 %s23, 1
      // Predicated region
      $region13: #{ssd_resnet_forward.1} parent=11 // pred_check
        %p410 = pneg %p70
      $region14: #{ssd_resnet_forward.1} parent=11 // pred_check_branch
        %412 = sbr.rel (%p410) target = $region16
      $region15: #{ssd_resnet_forward.1} parent=11 // pred_region
        _
      $region16: #{ssd_resnet_forward.1} parent=11 // pred_fallthru
        _
      // Predicated region
      $region17: #{ssd_resnet_forward.1} parent=11 // pred_check
        %p413 = pneg %p91
      $region18: #{ssd_resnet_forward.1} parent=11 // pred_check_branch
        %415 = sbr.rel (%p413) target = $region20
      $region19: #{ssd_resnet_forward.1} parent=11 // pred_region
        _
      $region20: #{ssd_resnet_forward.1} parent=11 // pred_fallthru
        _
      // Predicated region
      $region21: #{ssd_resnet_forward.1} parent=11 // pred_check
        %p416 = pneg %p112
      $region22: #{ssd_resnet_forward.1} parent=11 // pred_check_branch
        %418 = sbr.rel (%p416) target = $region24
      $region23: #{ssd_resnet_forward.1} parent=11 // pred_region
        _
      $region24: #{ssd_resnet_forward.1} parent=11 // pred_fallthru
        _
      // Predicated region
      $region25: #{ssd_resnet_forward.1} parent=11 // pred_check
        %p419 = pneg %p133
      $region26: #{ssd_resnet_forward.1} parent=11 // pred_check_branch
        %421 = sbr.rel (%p419) target = $region28
      $region27: #{ssd_resnet_forward.1} parent=11 // pred_region
        _
      $region28: #{ssd_resnet_forward.1} parent=11 // pred_fallthru
        _
      // Predicated region
      $region29: #{ssd_resnet_forward.1} parent=11 // pred_check
        %p422 = pneg %p154
      $region30: #{ssd_resnet_forward.1} parent=11 // pred_check_branch
        %424 = sbr.rel (%p422) target = $region32
      $region31: #{ssd_resnet_forward.1} parent=11 // pred_region
        _
      $region32: #{ssd_resnet_forward.1} parent=11 // pred_fallthru
        _
      // Predicated region
      $region33: #{ssd_resnet_forward.1} parent=11 // pred_check
        %p425 = pneg %p175
      $region34: #{ssd_resnet_forward.1} parent=11 // pred_check_branch
        %427 = sbr.rel (%p425) target = $region36
      $region35: #{ssd_resnet_forward.1} parent=11 // pred_region
        _
      $region36: #{ssd_resnet_forward.1} parent=11 // pred_fallthru
        _
      // Predicated region
      $region37: #{ssd_resnet_forward.1} parent=11 // pred_check
        %p428 = pneg %p196
      $region38: #{ssd_resnet_forward.1} parent=11 // pred_check_branch
        %430 = sbr.rel (%p428) target = $region40
      $region39: #{ssd_resnet_forward.1} parent=11 // pred_region
        _
      $region40: #{ssd_resnet_forward.1} parent=11 // pred_fallthru
        _
      // Predicated region
      $region41: #{ssd_resnet_forward.1} parent=11 // pred_check
        %p431 = pneg %p217
      $region42: #{ssd_resnet_forward.1} parent=11 // pred_check_branch
        %433 = sbr.rel (%p431) target = $region44
      $region43: #{ssd_resnet_forward.1} parent=11 // pred_region
        _
      $region44: #{ssd_resnet_forward.1} parent=11 // pred_fallthru
        _
      // Predicated region
      $region45: #{ssd_resnet_forward.1} parent=11 // pred_check
        %p434 = pneg %p238
      $region46: #{ssd_resnet_forward.1} parent=11 // pred_check_branch
        %436 = sbr.rel (%p434) target = $region48
      $region47: #{ssd_resnet_forward.1} parent=11 // pred_region
        _
      $region48: #{ssd_resnet_forward.1} parent=11 // pred_fallthru
        _
      // Predicated region
      $region49: #{ssd_resnet_forward.1} parent=11 // pred_check
        %p437 = pneg %p259
      $region50: #{ssd_resnet_forward.1} parent=11 // pred_check_branch
        %439 = sbr.rel (%p437) target = $region52
      $region51: #{ssd_resnet_forward.1} parent=11 // pred_region
        _
      $region52: #{ssd_resnet_forward.1} parent=11 // pred_fallthru
        _
      // Predicated region
      $region53: #{ssd_resnet_forward.1} parent=11 // pred_check
        %p440 = pneg %p280
      $region54: #{ssd_resnet_forward.1} parent=11 // pred_check_branch
        %442 = sbr.rel (%p440) target = $region56
      $region55: #{ssd_resnet_forward.1} parent=11 // pred_region
        _
      $region56: #{ssd_resnet_forward.1} parent=11 // pred_fallthru
        _
      // Predicated region
      $region57: #{ssd_resnet_forward.1} parent=11 // pred_check
        %p443 = pneg %p301
      $region58: #{ssd_resnet_forward.1} parent=11 // pred_check_branch
        %445 = sbr.rel (%p443) target = $region60
      $region59: #{ssd_resnet_forward.1} parent=11 // pred_region
        _
      $region60: #{ssd_resnet_forward.1} parent=11 // pred_fallthru
        _
      // Predicated region
      $region61: #{ssd_resnet_forward.1} parent=11 // pred_check
        %p446 = pneg %p322
      $region62: #{ssd_resnet_forward.1} parent=11 // pred_check_branch
        %448 = sbr.rel (%p446) target = $region64
      $region63: #{ssd_resnet_forward.1} parent=11 // pred_region
        _
      $region64: #{ssd_resnet_forward.1} parent=11 // pred_fallthru
        _
      // Predicated region
      $region65: #{ssd_resnet_forward.1} parent=11 // pred_check
        %p449 = pneg %p343
      $region66: #{ssd_resnet_forward.1} parent=11 // pred_check_branch
        %451 = sbr.rel (%p449) target = $region68
      $region67: #{ssd_resnet_forward.1} parent=11 // pred_region
        _
      $region68: #{ssd_resnet_forward.1} parent=11 // pred_fallthru
        _
    $region12: #{ssd_resnet_forward.1} parent=5 // pred_fallthru
      _
    %p452 = scmp.lt.s32.totalorder %s23, 2
    // Predicated region
    $region69: #{ssd_resnet_forward.1} parent=5 // pred_check
      %p453 = pneg %p452
    $region70: #{ssd_resnet_forward.1} parent=5 // pred_check_branch
      %455 = sbr.rel (%p453) target = $region72
    $region71: #{ssd_resnet_forward.1} parent=5 // pred_region
      // Predicated region
      $region73: #{ssd_resnet_forward.1} parent=71 // pred_check
        %p456 = pneg %p43
      $region74: #{ssd_resnet_forward.1} parent=71 // pred_check_branch
        %458 = sbr.rel (%p456) target = $region76
      $region75: #{ssd_resnet_forward.1} parent=71 // pred_region
        %p459 = scmp.lt.s32.totalorder %s23, 1
        %s460 = scalar_select %p459, %s23, 1
        %s461 = smul.addr %s460, 32
        %s462 = smul.addr %s461, 8
        %s463 = scalar_lea.vmem %s0, %s462
      $region76: #{ssd_resnet_forward.1} parent=71 // pred_fallthru
        _
    $region72: #{ssd_resnet_forward.1} parent=5 // pred_fallthru
      _
    %p464 = scmp.le.s32.totalorder 1, %s23
    %p465 = scmp.lt.s32.totalorder %s23, 3
    %p466 = pnand %p464, %p465
    %p467 = pneg %p466
    // Predicated region
    $region77: #{ssd_resnet_forward.1} parent=5 // pred_check
      _
    $region78: #{ssd_resnet_forward.1} parent=5 // pred_check_branch
      %469 = sbr.rel (%p466) target = $region80
    $region79: #{ssd_resnet_forward.1} parent=5 // pred_region
      %s470 = ssub.s32 %s23, 1
      %p471 = scmp.lt.s32.totalorder %s28, 1
      %s472 = scalar_select %p471, %s28, 1
      %s473 = smul.addr %s472, 32
      %s474 = smul.addr %s473, 8
      %s475 = scalar_lea.vmem %s0, %s474
      %p476 = pneg %p49
      %p477 = pneg %p46
      %p478 = pneg %p70
      %p479 = pneg %p67
      %p480 = pneg %p91
      %p481 = pneg %p88
      %p482 = pneg %p112
      %p483 = pneg %p109
      %p484 = pneg %p133
      %p485 = pneg %p130
      %p486 = pneg %p154
      %p487 = pneg %p151
      %p488 = pneg %p175
      %p489 = pneg %p172
      %p490 = pneg %p196
      %p491 = pneg %p193
      %p492 = pneg %p217
      %p493 = pneg %p214
      %p494 = pneg %p238
      %p495 = pneg %p235
      %p496 = pneg %p259
      %p497 = pneg %p256
      %p498 = pneg %p280
      %p499 = pneg %p277
      %p500 = pneg %p301
      %p501 = pneg %p298
      %p502 = pneg %p322
      %p503 = pneg %p319
      %p504 = pneg %p343
      %p505 = pneg %p340
      %p506 = pneg %p369
      %p507 = pneg %p366
      %p508 = scmp.lt.s32.totalorder %s28, 1
      %s509 = scalar_select %p508, %s28, 1
      %s510 = smul.addr %s509, 8
      %s511 = smul.addr %s510, 8
      %s512 = scalar_lea.vmem %s15, %s511
      %p513 = pneg %p395
      %p514 = pneg %p392
      %p515 = scmp.lt.s32.totalorder %s28, 1
      %s516 = scalar_select %p515, %s28, 1
      %s517 = smul.addr %s516, 2
      %s518 = smul.addr %s517, 8
      %s519 = scalar_lea.vmem %s16, %s518
      %p520 = scmp.lt.s32.totalorder %s28, 1
      %s521 = scalar_select %p520, %s28, 1
      %s522 = smul.addr %s521, 32
      %s523 = smul.addr %s522, 8
      %s524 = scalar_lea.vmem %s0, %s523
      %p525 = scmp.lt.s32.totalorder %s28, 1
      %s526 = scalar_select %p525, %s28, 1
      %s527 = smul.addr %s526, 8
      %s528 = smul.addr %s527, 8
      %s529 = scalar_lea.vmem %s15, %s528
      %p530 = scmp.lt.s32.totalorder %s28, 1
      %s531 = scalar_select %p530, %s28, 1
      %s532 = smul.addr %s531, 2
      %s533 = smul.addr %s532, 8
      %s534 = scalar_lea.vmem %s16, %s533
      %vm536 = vcmask 31744
      %537 = vst.msk [vmem:[#allocation2] sm:$0xff] %vm536, 0.0
      %538 = vst.msk [vmem:[#allocation2 + $0x8] sm:$0xff] %vm536, 0.0
      %vm539 = vcmask 25600
      %540 = vst.msk [vmem:[#allocation2 + $0x10] sm:$0x3] %vm539, 0.0
      %s541 = scalar_lea.vmem [#allocation2], 408
      %542 = vst.msk [vmem:[%s541] sm:$0xff] %vm536, 0.0
      %543 = vst.msk [vmem:[%s541 + $0x8] sm:$0xff] %vm536, 0.0
      %544 = vst.msk [vmem:[%s541 + $0x10] sm:$0x3] %vm539, 0.0
      %vm545 = vcmask 24576
      %546 = vst.msk [vmem:[#allocation2] sm:$0x1] %vm545, 0.0
      %547 = vst.msk [vmem:[#allocation2 + $0x18] sm:$0x1] %vm545, 0.0
      %548 = vst.msk [vmem:[#allocation2 + $0x30] sm:$0x1] %vm545, 0.0
      %549 = vst.msk [vmem:[#allocation2 + $0x48] sm:$0x1] %vm545, 0.0
      %550 = vst.msk [vmem:[#allocation2 + $0x60] sm:$0x1] %vm545, 0.0
      %551 = vst.msk [vmem:[#allocation2 + $0x78] sm:$0x1] %vm545, 0.0
      %552 = vst.msk [vmem:[#allocation2 + $0x90] sm:$0x1] %vm545, 0.0
      %553 = vst.msk [vmem:[#allocation2 + $0xa8] sm:$0x1] %vm545, 0.0
      %554 = vst.msk [vmem:[#allocation2 + $0xc0] sm:$0x1] %vm545, 0.0
      %555 = vst.msk [vmem:[#allocation2 + $0xd8] sm:$0x1] %vm545, 0.0
      %556 = vst.msk [vmem:[#allocation2 + $0xf0] sm:$0x1] %vm545, 0.0
      %557 = vst.msk [vmem:[#allocation2 + $0x108] sm:$0x1] %vm545, 0.0
      %558 = vst.msk [vmem:[#allocation2 + $0x120] sm:$0x1] %vm545, 0.0
      %559 = vst.msk [vmem:[#allocation2 + $0x138] sm:$0x1] %vm545, 0.0
      %560 = vst.msk [vmem:[#allocation2 + $0x150] sm:$0x1] %vm545, 0.0
      %561 = vst.msk [vmem:[#allocation2 + $0x168] sm:$0x1] %vm545, 0.0
      %562 = vst.msk [vmem:[#allocation2 + $0x180] sm:$0x1] %vm545, 0.0
      %563 = vst.msk [vmem:[#allocation2 + $0x198] sm:$0x1] %vm545, 0.0
      %564 = vst.msk [vmem:[#allocation2 + $0x11] sm:$0x1] %vm545, 0.0
      %565 = vst.msk [vmem:[#allocation2 + $0x29] sm:$0x1] %vm545, 0.0
      %566 = vst.msk [vmem:[#allocation2 + $0x41] sm:$0x1] %vm545, 0.0
      %567 = vst.msk [vmem:[#allocation2 + $0x59] sm:$0x1] %vm545, 0.0
      %568 = vst.msk [vmem:[#allocation2 + $0x71] sm:$0x1] %vm545, 0.0
      %569 = vst.msk [vmem:[#allocation2 + $0x89] sm:$0x1] %vm545, 0.0
      %570 = vst.msk [vmem:[#allocation2 + $0xa1] sm:$0x1] %vm545, 0.0
      %571 = vst.msk [vmem:[#allocation2 + $0xb9] sm:$0x1] %vm545, 0.0
      %572 = vst.msk [vmem:[#allocation2 + $0xd1] sm:$0x1] %vm545, 0.0
      %573 = vst.msk [vmem:[#allocation2 + $0xe9] sm:$0x1] %vm545, 0.0
      %574 = vst.msk [vmem:[#allocation2 + $0x101] sm:$0x1] %vm545, 0.0
      %575 = vst.msk [vmem:[#allocation2 + $0x119] sm:$0x1] %vm545, 0.0
      %576 = vst.msk [vmem:[#allocation2 + $0x131] sm:$0x1] %vm545, 0.0
      %577 = vst.msk [vmem:[#allocation2 + $0x149] sm:$0x1] %vm545, 0.0
      %578 = vst.msk [vmem:[#allocation2 + $0x161] sm:$0x1] %vm545, 0.0
      %579 = vst.msk [vmem:[#allocation2 + $0x179] sm:$0x1] %vm545, 0.0
      %580 = vst.msk [vmem:[#allocation2 + $0x191] sm:$0x1] %vm545, 0.0
      %581 = vst.msk [vmem:[#allocation2 + $0x1a9] sm:$0x1] %vm545, 0.0
      %v582 = vld [vmem:[%s524] sm:$0xff]
      %v583 = vld [vmem:[%s524 + $0x8] sm:$0xff]
      %v584 = vld [vmem:[%s524 + $0x10] sm:$0xff]
      %v585 = vld [vmem:[%s524 + $0x18] sm:$0xff]
      %v586 = vld [vmem:[%s524 + $0x20] sm:$0xff]
      %v587 = vld [vmem:[%s524 + $0x28] sm:$0xff]
      %v588 = vld [vmem:[%s524 + $0x30] sm:$0xff]
      %v589 = vld [vmem:[%s524 + $0x38] sm:$0xff]
      %v590 = vld [vmem:[%s524 + $0x40] sm:$0xff]
      %v591 = vld [vmem:[%s524 + $0x48] sm:$0xff]
      %v592 = vld [vmem:[%s524 + $0x50] sm:$0xff]
      %v593 = vld [vmem:[%s524 + $0x58] sm:$0xff]
      %v594 = vld [vmem:[%s524 + $0x60] sm:$0xff]
      %v595 = vld [vmem:[%s524 + $0x68] sm:$0xff]
      %v596 = vld [vmem:[%s524 + $0x70] sm:$0xff]
      %v597 = vld [vmem:[%s524 + $0x78] sm:$0xff]
      %v598 = vld [vmem:[%s524 + $0x80] sm:$0xff]
      %v599 = vld [vmem:[%s524 + $0x88] sm:$0xff]
      %v600 = vld [vmem:[%s524 + $0x90] sm:$0xff]
      %v601 = vld [vmem:[%s524 + $0x98] sm:$0xff]
      %v602 = vld [vmem:[%s524 + $0xa0] sm:$0xff]
      %v603 = vld [vmem:[%s524 + $0xa8] sm:$0xff]
      %v604 = vld [vmem:[%s524 + $0xb0] sm:$0xff]
      %v605 = vld [vmem:[%s524 + $0xb8] sm:$0xff]
      %v606 = vld [vmem:[%s524 + $0xc0] sm:$0xff]
      %v607 = vld [vmem:[%s524 + $0xc8] sm:$0xff]
      %v608 = vld [vmem:[%s524 + $0xd0] sm:$0xff]
      %v609 = vld [vmem:[%s524 + $0xd8] sm:$0xff]
      %v610 = vld [vmem:[%s524 + $0xe0] sm:$0xff]
      %v611 = vld [vmem:[%s524 + $0xe8] sm:$0xff]
      %v612 = vld [vmem:[%s524 + $0xf0] sm:$0xff]
      %v613 = vld [vmem:[%s524 + $0xf8] sm:$0xff]
      %s614 = scalar_lea.vmem [#allocation2], 24
      %615 = vst.msk [vmem:[%s614 + $0x1] sm:$0xff] %vm536, %v582
      %616 = vst.msk [vmem:[%s614 + $0x9] sm:$0xff] %vm536, %v583
      %617 = vst.msk [vmem:[%s614 + $0x19] sm:$0xff] %vm536, %v584
      %618 = vst.msk [vmem:[%s614 + $0x21] sm:$0xff] %vm536, %v585
      %619 = vst.msk [vmem:[%s614 + $0x31] sm:$0xff] %vm536, %v586
      %620 = vst.msk [vmem:[%s614 + $0x39] sm:$0xff] %vm536, %v587
      %621 = vst.msk [vmem:[%s614 + $0x49] sm:$0xff] %vm536, %v588
      %622 = vst.msk [vmem:[%s614 + $0x51] sm:$0xff] %vm536, %v589
      %623 = vst.msk [vmem:[%s614 + $0x61] sm:$0xff] %vm536, %v590
      %624 = vst.msk [vmem:[%s614 + $0x69] sm:$0xff] %vm536, %v591
      %625 = vst.msk [vmem:[%s614 + $0x79] sm:$0xff] %vm536, %v592
      %626 = vst.msk [vmem:[%s614 + $0x81] sm:$0xff] %vm536, %v593
      %627 = vst.msk [vmem:[%s614 + $0x91] sm:$0xff] %vm536, %v594
      %628 = vst.msk [vmem:[%s614 + $0x99] sm:$0xff] %vm536, %v595
      %629 = vst.msk [vmem:[%s614 + $0xa9] sm:$0xff] %vm536, %v596
      %630 = vst.msk [vmem:[%s614 + $0xb1] sm:$0xff] %vm536, %v597
      %631 = vst.msk [vmem:[%s614 + $0xc1] sm:$0xff] %vm536, %v598
      %632 = vst.msk [vmem:[%s614 + $0xc9] sm:$0xff] %vm536, %v599
      %633 = vst.msk [vmem:[%s614 + $0xd9] sm:$0xff] %vm536, %v600
      %634 = vst.msk [vmem:[%s614 + $0xe1] sm:$0xff] %vm536, %v601
      %635 = vst.msk [vmem:[%s614 + $0xf1] sm:$0xff] %vm536, %v602
      %636 = vst.msk [vmem:[%s614 + $0xf9] sm:$0xff] %vm536, %v603
      %637 = vst.msk [vmem:[%s614 + $0x109] sm:$0xff] %vm536, %v604
      %638 = vst.msk [vmem:[%s614 + $0x111] sm:$0xff] %vm536, %v605
      %639 = vst.msk [vmem:[%s614 + $0x121] sm:$0xff] %vm536, %v606
      %640 = vst.msk [vmem:[%s614 + $0x129] sm:$0xff] %vm536, %v607
      %641 = vst.msk [vmem:[%s614 + $0x139] sm:$0xff] %vm536, %v608
      %642 = vst.msk [vmem:[%s614 + $0x141] sm:$0xff] %vm536, %v609
      %643 = vst.msk [vmem:[%s614 + $0x151] sm:$0xff] %vm536, %v610
      %644 = vst.msk [vmem:[%s614 + $0x159] sm:$0xff] %vm536, %v611
      %645 = vst.msk [vmem:[%s614 + $0x169] sm:$0xff] %vm536, %v612
      %646 = vst.msk [vmem:[%s614 + $0x171] sm:$0xff] %vm536, %v613
      %v647 = vld [vmem:[#allocation2] sm:$0xff]
      %v648 = vld [vmem:[#allocation2 + $0x8] sm:$0xff]
      %v649 = vld [vmem:[#allocation2 + $0x18] sm:$0xff]
      %v650 = vld [vmem:[#allocation2 + $0x20] sm:$0xff]
      %v651 = vld [vmem:[#allocation2 + $0x30] sm:$0xff]
      %v652 = vld [vmem:[#allocation2 + $0x38] sm:$0xff]
      %v653 = vld [vmem:[#allocation2 + $0x48] sm:$0xff]
      %v654 = vld [vmem:[#allocation2 + $0x50] sm:$0xff]
      %v655 = vld [vmem:[#allocation2 + $0x60] sm:$0xff]
      %v656 = vld [vmem:[#allocation2 + $0x68] sm:$0xff]
      %v657 = vld [vmem:[#allocation2 + $0x78] sm:$0xff]
      %v658 = vld [vmem:[#allocation2 + $0x80] sm:$0xff]
      %v659 = vld [vmem:[#allocation2 + $0x90] sm:$0xff]
      %v660 = vld [vmem:[#allocation2 + $0x98] sm:$0xff]
      %v661 = vld [vmem:[#allocation2 + $0xa8] sm:$0xff]
      %v662 = vld [vmem:[#allocation2 + $0xb0] sm:$0xff]
      %v663 = vld [vmem:[#allocation2 + $0xc0] sm:$0xff]
      %v664 = vld [vmem:[#allocation2 + $0xc8] sm:$0xff]
      %v665 = vld [vmem:[#allocation2 + $0xd8] sm:$0xff]
      %v666 = vld [vmem:[#allocation2 + $0xe0] sm:$0xff]
      %v667 = vld [vmem:[#allocation2 + $0xf0] sm:$0xff]
      %v668 = vld [vmem:[#allocation2 + $0xf8] sm:$0xff]
      %v669 = vld [vmem:[#allocation2 + $0x108] sm:$0xff]
      %v670 = vld [vmem:[#allocation2 + $0x110] sm:$0xff]
      %v671 = vld [vmem:[#allocation2 + $0x120] sm:$0xff]
      %v672 = vld [vmem:[#allocation2 + $0x128] sm:$0xff]
      %v673 = vld [vmem:[#allocation2 + $0x138] sm:$0xff]
      %v674 = vld [vmem:[#allocation2 + $0x140] sm:$0xff]
      %v675 = vld [vmem:[#allocation2 + $0x150] sm:$0xff]
      %v676 = vld [vmem:[#allocation2 + $0x158] sm:$0xff]
      %v677 = vld [vmem:[#allocation2 + $0x168] sm:$0xff]
      %v678 = vld [vmem:[#allocation2 + $0x170] sm:$0xff]
      %v679 = vld [vmem:[#allocation2 + $0x1] sm:$0xff]
      %v680 = vld [vmem:[#allocation2 + $0x9] sm:$0xff]
      %v681 = vld [vmem:[#allocation2 + $0x19] sm:$0xff]
      %v682 = vld [vmem:[#allocation2 + $0x21] sm:$0xff]
      %v683 = vld [vmem:[#allocation2 + $0x31] sm:$0xff]
      %v684 = vld [vmem:[#allocation2 + $0x39] sm:$0xff]
      %v685 = vld [vmem:[#allocation2 + $0x49] sm:$0xff]
      %v686 = vld [vmem:[#allocation2 + $0x51] sm:$0xff]
      %v687 = vld [vmem:[#allocation2 + $0x61] sm:$0xff]
      %v688 = vld [vmem:[#allocation2 + $0x69] sm:$0xff]
      %v689 = vld [vmem:[#allocation2 + $0x79] sm:$0xff]
      %v690 = vld [vmem:[#allocation2 + $0x81] sm:$0xff]
      %v691 = vld [vmem:[#allocation2 + $0x91] sm:$0xff]
      %v692 = vld [vmem:[#allocation2 + $0x99] sm:$0xff]
      %v693 = vld [vmem:[#allocation2 + $0xa9] sm:$0xff]
      %v694 = vld [vmem:[#allocation2 + $0xb1] sm:$0xff]
      %v695 = vld [vmem:[#allocation2 + $0xc1] sm:$0xff]
      %v696 = vld [vmem:[#allocation2 + $0xc9] sm:$0xff]
      %v697 = vld [vmem:[#allocation2 + $0xd9] sm:$0xff]
      %v698 = vld [vmem:[#allocation2 + $0xe1] sm:$0xff]
      %v699 = vld [vmem:[#allocation2 + $0xf1] sm:$0xff]
      %v700 = vld [vmem:[#allocation2 + $0xf9] sm:$0xff]
      %v701 = vld [vmem:[#allocation2 + $0x109] sm:$0xff]
      %v702 = vld [vmem:[#allocation2 + $0x111] sm:$0xff]
      %v703 = vld [vmem:[#allocation2 + $0x121] sm:$0xff]
      %v704 = vld [vmem:[#allocation2 + $0x129] sm:$0xff]
      %v705 = vld [vmem:[#allocation2 + $0x139] sm:$0xff]
      %v706 = vld [vmem:[#allocation2 + $0x141] sm:$0xff]
      %v707 = vld [vmem:[#allocation2 + $0x151] sm:$0xff]
      %v708 = vld [vmem:[#allocation2 + $0x159] sm:$0xff]
      %v709 = vld [vmem:[#allocation2 + $0x169] sm:$0xff]
      %v710 = vld [vmem:[#allocation2 + $0x171] sm:$0xff]
      %v711 = vld [vmem:[#allocation2 + $0x2] sm:$0xff]
      %v712 = vld [vmem:[#allocation2 + $0xa] sm:$0xff]
      %v713 = vld [vmem:[#allocation2 + $0x1a] sm:$0xff]
      %v714 = vld [vmem:[#allocation2 + $0x22] sm:$0xff]
      %v715 = vld [vmem:[#allocation2 + $0x32] sm:$0xff]
      %v716 = vld [vmem:[#allocation2 + $0x3a] sm:$0xff]
      %v717 = vld [vmem:[#allocation2 + $0x4a] sm:$0xff]
      %v718 = vld [vmem:[#allocation2 + $0x52] sm:$0xff]
      %v719 = vld [vmem:[#allocation2 + $0x62] sm:$0xff]
      %v720 = vld [vmem:[#allocation2 + $0x6a] sm:$0xff]
      %v721 = vld [vmem:[#allocation2 + $0x7a] sm:$0xff]
      %v722 = vld [vmem:[#allocation2 + $0x82] sm:$0xff]
      %v723 = vld [vmem:[#allocation2 + $0x92] sm:$0xff]
      %v724 = vld [vmem:[#allocation2 + $0x9a] sm:$0xff]
      %v725 = vld [vmem:[#allocation2 + $0xaa] sm:$0xff]
      %v726 = vld [vmem:[#allocation2 + $0xb2] sm:$0xff]
      %v727 = vld [vmem:[#allocation2 + $0xc2] sm:$0xff]
      %v728 = vld [vmem:[#allocation2 + $0xca] sm:$0xff]
      %v729 = vld [vmem:[#allocation2 + $0xda] sm:$0xff]
      %v730 = vld [vmem:[#allocation2 + $0xe2] sm:$0xff]
      %v731 = vld [vmem:[#allocation2 + $0xf2] sm:$0xff]
      %v732 = vld [vmem:[#allocation2 + $0xfa] sm:$0xff]
      %v733 = vld [vmem:[#allocation2 + $0x10a] sm:$0xff]
      %v734 = vld [vmem:[#allocation2 + $0x112] sm:$0xff]
      %v735 = vld [vmem:[#allocation2 + $0x122] sm:$0xff]
      %v736 = vld [vmem:[#allocation2 + $0x12a] sm:$0xff]
      %v737 = vld [vmem:[#allocation2 + $0x13a] sm:$0xff]
      %v738 = vld [vmem:[#allocation2 + $0x142] sm:$0xff]
      %v739 = vld [vmem:[#allocation2 + $0x152] sm:$0xff]
      %v740 = vld [vmem:[#allocation2 + $0x15a] sm:$0xff]
      %v741 = vld [vmem:[#allocation2 + $0x16a] sm:$0xff]
      %v742 = vld [vmem:[#allocation2 + $0x172] sm:$0xff]
      %v743 = vld [vmem:[%s614] sm:$0xff]
      %v744 = vld [vmem:[%s614 + $0x8] sm:$0xff]
      %v745 = vld [vmem:[%s614 + $0x18] sm:$0xff]
      %v746 = vld [vmem:[%s614 + $0x20] sm:$0xff]
      %v747 = vld [vmem:[%s614 + $0x30] sm:$0xff]
      %v748 = vld [vmem:[%s614 + $0x38] sm:$0xff]
      %v749 = vld [vmem:[%s614 + $0x48] sm:$0xff]
      %v750 = vld [vmem:[%s614 + $0x50] sm:$0xff]
      %v751 = vld [vmem:[%s614 + $0x60] sm:$0xff]
      %v752 = vld [vmem:[%s614 + $0x68] sm:$0xff]
      %v753 = vld [vmem:[%s614 + $0x78] sm:$0xff]
      %v754 = vld [vmem:[%s614 + $0x80] sm:$0xff]
      %v755 = vld [vmem:[%s614 + $0x90] sm:$0xff]
      %v756 = vld [vmem:[%s614 + $0x98] sm:$0xff]
      %v757 = vld [vmem:[%s614 + $0xa8] sm:$0xff]
      %v758 = vld [vmem:[%s614 + $0xb0] sm:$0xff]
      %v759 = vld [vmem:[%s614 + $0xc0] sm:$0xff]
      %v760 = vld [vmem:[%s614 + $0xc8] sm:$0xff]
      %v761 = vld [vmem:[%s614 + $0xd8] sm:$0xff]
      %v762 = vld [vmem:[%s614 + $0xe0] sm:$0xff]
      %v763 = vld [vmem:[%s614 + $0xf0] sm:$0xff]
      %v764 = vld [vmem:[%s614 + $0xf8] sm:$0xff]
      %v765 = vld [vmem:[%s614 + $0x108] sm:$0xff]
      %v766 = vld [vmem:[%s614 + $0x110] sm:$0xff]
      %v767 = vld [vmem:[%s614 + $0x120] sm:$0xff]
      %v768 = vld [vmem:[%s614 + $0x128] sm:$0xff]
      %v769 = vld [vmem:[%s614 + $0x138] sm:$0xff]
      %v770 = vld [vmem:[%s614 + $0x140] sm:$0xff]
      %v771 = vld [vmem:[%s614 + $0x150] sm:$0xff]
      %v772 = vld [vmem:[%s614 + $0x158] sm:$0xff]
      %v773 = vld [vmem:[%s614 + $0x168] sm:$0xff]
      %v774 = vld [vmem:[%s614 + $0x170] sm:$0xff]
      %v775 = vld [vmem:[%s614 + $0x1] sm:$0xff]
      %v776 = vld [vmem:[%s614 + $0x9] sm:$0xff]
      %v777 = vld [vmem:[%s614 + $0x19] sm:$0xff]
      %v778 = vld [vmem:[%s614 + $0x21] sm:$0xff]
      %v779 = vld [vmem:[%s614 + $0x31] sm:$0xff]
      %v780 = vld [vmem:[%s614 + $0x39] sm:$0xff]
      %v781 = vld [vmem:[%s614 + $0x49] sm:$0xff]
      %v782 = vld [vmem:[%s614 + $0x51] sm:$0xff]
      %v783 = vld [vmem:[%s614 + $0x61] sm:$0xff]
      %v784 = vld [vmem:[%s614 + $0x69] sm:$0xff]
      %v785 = vld [vmem:[%s614 + $0x79] sm:$0xff]
      %v786 = vld [vmem:[%s614 + $0x81] sm:$0xff]
      %v787 = vld [vmem:[%s614 + $0x91] sm:$0xff]
      %v788 = vld [vmem:[%s614 + $0x99] sm:$0xff]
      %v789 = vld [vmem:[%s614 + $0xa9] sm:$0xff]
      %v790 = vld [vmem:[%s614 + $0xb1] sm:$0xff]
      %v791 = vld [vmem:[%s614 + $0xc1] sm:$0xff]
      %v792 = vld [vmem:[%s614 + $0xc9] sm:$0xff]
      %v793 = vld [vmem:[%s614 + $0xd9] sm:$0xff]
      %v794 = vld [vmem:[%s614 + $0xe1] sm:$0xff]
      %v795 = vld [vmem:[%s614 + $0xf1] sm:$0xff]
      %v796 = vld [vmem:[%s614 + $0xf9] sm:$0xff]
      %v797 = vld [vmem:[%s614 + $0x109] sm:$0xff]
      %v798 = vld [vmem:[%s614 + $0x111] sm:$0xff]
      %v799 = vld [vmem:[%s614 + $0x121] sm:$0xff]
      %v800 = vld [vmem:[%s614 + $0x129] sm:$0xff]
      %v801 = vld [vmem:[%s614 + $0x139] sm:$0xff]
      %v802 = vld [vmem:[%s614 + $0x141] sm:$0xff]
      %v803 = vld [vmem:[%s614 + $0x151] sm:$0xff]
      %v804 = vld [vmem:[%s614 + $0x159] sm:$0xff]
      %v805 = vld [vmem:[%s614 + $0x169] sm:$0xff]
      %v806 = vld [vmem:[%s614 + $0x171] sm:$0xff]
      %v807 = vld [vmem:[%s614 + $0x2] sm:$0xff]
      %v808 = vld [vmem:[%s614 + $0xa] sm:$0xff]
      %v809 = vld [vmem:[%s614 + $0x1a] sm:$0xff]
      %v810 = vld [vmem:[%s614 + $0x22] sm:$0xff]
      %v811 = vld [vmem:[%s614 + $0x32] sm:$0xff]
      %v812 = vld [vmem:[%s614 + $0x3a] sm:$0xff]
      %v813 = vld [vmem:[%s614 + $0x4a] sm:$0xff]
      %v814 = vld [vmem:[%s614 + $0x52] sm:$0xff]
      %v815 = vld [vmem:[%s614 + $0x62] sm:$0xff]
      %v816 = vld [vmem:[%s614 + $0x6a] sm:$0xff]
      %v817 = vld [vmem:[%s614 + $0x7a] sm:$0xff]
      %v818 = vld [vmem:[%s614 + $0x82] sm:$0xff]
      %v819 = vld [vmem:[%s614 + $0x92] sm:$0xff]
      %v820 = vld [vmem:[%s614 + $0x9a] sm:$0xff]
      %v821 = vld [vmem:[%s614 + $0xaa] sm:$0xff]
      %v822 = vld [vmem:[%s614 + $0xb2] sm:$0xff]
      %v823 = vld [vmem:[%s614 + $0xc2] sm:$0xff]
      %v824 = vld [vmem:[%s614 + $0xca] sm:$0xff]
      %v825 = vld [vmem:[%s614 + $0xda] sm:$0xff]
      %v826 = vld [vmem:[%s614 + $0xe2] sm:$0xff]
      %v827 = vld [vmem:[%s614 + $0xf2] sm:$0xff]
      %v828 = vld [vmem:[%s614 + $0xfa] sm:$0xff]
      %v829 = vld [vmem:[%s614 + $0x10a] sm:$0xff]
      %v830 = vld [vmem:[%s614 + $0x112] sm:$0xff]
      %v831 = vld [vmem:[%s614 + $0x122] sm:$0xff]
      %v832 = vld [vmem:[%s614 + $0x12a] sm:$0xff]
      %v833 = vld [vmem:[%s614 + $0x13a] sm:$0xff]
      %v834 = vld [vmem:[%s614 + $0x142] sm:$0xff]
      %v835 = vld [vmem:[%s614 + $0x152] sm:$0xff]
      %v836 = vld [vmem:[%s614 + $0x15a] sm:$0xff]
      %v837 = vld [vmem:[%s614 + $0x16a] sm:$0xff]
      %v838 = vld [vmem:[%s614 + $0x172] sm:$0xff]
      %s839 = scalar_lea.vmem [#allocation2], 48
      %v840 = vld [vmem:[%s839] sm:$0xff]
      %v841 = vld [vmem:[%s839 + $0x8] sm:$0xff]
      %v842 = vld [vmem:[%s839 + $0x18] sm:$0xff]
      %v843 = vld [vmem:[%s839 + $0x20] sm:$0xff]
      %v844 = vld [vmem:[%s839 + $0x30] sm:$0xff]
      %v845 = vld [vmem:[%s839 + $0x38] sm:$0xff]
      %v846 = vld [vmem:[%s839 + $0x48] sm:$0xff]
      %v847 = vld [vmem:[%s839 + $0x50] sm:$0xff]
      %v848 = vld [vmem:[%s839 + $0x60] sm:$0xff]
      %v849 = vld [vmem:[%s839 + $0x68] sm:$0xff]
      %v850 = vld [vmem:[%s839 + $0x78] sm:$0xff]
      %v851 = vld [vmem:[%s839 + $0x80] sm:$0xff]
      %v852 = vld [vmem:[%s839 + $0x90] sm:$0xff]
      %v853 = vld [vmem:[%s839 + $0x98] sm:$0xff]
      %v854 = vld [vmem:[%s839 + $0xa8] sm:$0xff]
      %v855 = vld [vmem:[%s839 + $0xb0] sm:$0xff]
      %v856 = vld [vmem:[%s839 + $0xc0] sm:$0xff]
      %v857 = vld [vmem:[%s839 + $0xc8] sm:$0xff]
      %v858 = vld [vmem:[%s839 + $0xd8] sm:$0xff]
      %v859 = vld [vmem:[%s839 + $0xe0] sm:$0xff]
      %v860 = vld [vmem:[%s839 + $0xf0] sm:$0xff]
      %v861 = vld [vmem:[%s839 + $0xf8] sm:$0xff]
      %v862 = vld [vmem:[%s839 + $0x108] sm:$0xff]
      %v863 = vld [vmem:[%s839 + $0x110] sm:$0xff]
      %v864 = vld [vmem:[%s839 + $0x120] sm:$0xff]
      %v865 = vld [vmem:[%s839 + $0x128] sm:$0xff]
      %v866 = vld [vmem:[%s839 + $0x138] sm:$0xff]
      %v867 = vld [vmem:[%s839 + $0x140] sm:$0xff]
      %v868 = vld [vmem:[%s839 + $0x150] sm:$0xff]
      %v869 = vld [vmem:[%s839 + $0x158] sm:$0xff]
      %v870 = vld [vmem:[%s839 + $0x168] sm:$0xff]
      %v871 = vld [vmem:[%s839 + $0x170] sm:$0xff]
      %v872 = vld [vmem:[%s839 + $0x1] sm:$0xff]
      %v873 = vld [vmem:[%s839 + $0x9] sm:$0xff]
      %v874 = vld [vmem:[%s839 + $0x19] sm:$0xff]
      %v875 = vld [vmem:[%s839 + $0x21] sm:$0xff]
      %v876 = vld [vmem:[%s839 + $0x31] sm:$0xff]
      %v877 = vld [vmem:[%s839 + $0x39] sm:$0xff]
      %v878 = vld [vmem:[%s839 + $0x49] sm:$0xff]
      %v879 = vld [vmem:[%s839 + $0x51] sm:$0xff]
      %v880 = vld [vmem:[%s839 + $0x61] sm:$0xff]
      %v881 = vld [vmem:[%s839 + $0x69] sm:$0xff]
      %v882 = vld [vmem:[%s839 + $0x79] sm:$0xff]
      %v883 = vld [vmem:[%s839 + $0x81] sm:$0xff]
      %v884 = vld [vmem:[%s839 + $0x91] sm:$0xff]
      %v885 = vld [vmem:[%s839 + $0x99] sm:$0xff]
      %v886 = vld [vmem:[%s839 + $0xa9] sm:$0xff]
      %v887 = vld [vmem:[%s839 + $0xb1] sm:$0xff]
      %v888 = vld [vmem:[%s839 + $0xc1] sm:$0xff]
      %v889 = vld [vmem:[%s839 + $0xc9] sm:$0xff]
      %v890 = vld [vmem:[%s839 + $0xd9] sm:$0xff]
      %v891 = vld [vmem:[%s839 + $0xe1] sm:$0xff]
      %v892 = vld [vmem:[%s839 + $0xf1] sm:$0xff]
      %v893 = vld [vmem:[%s839 + $0xf9] sm:$0xff]
      %v894 = vld [vmem:[%s839 + $0x109] sm:$0xff]
      %v895 = vld [vmem:[%s839 + $0x111] sm:$0xff]
      %v896 = vld [vmem:[%s839 + $0x121] sm:$0xff]
      %v897 = vld [vmem:[%s839 + $0x129] sm:$0xff]
      %v898 = vld [vmem:[%s839 + $0x139] sm:$0xff]
      %v899 = vld [vmem:[%s839 + $0x141] sm:$0xff]
      %v900 = vld [vmem:[%s839 + $0x151] sm:$0xff]
      %v901 = vld [vmem:[%s839 + $0x159] sm:$0xff]
      %v902 = vld [vmem:[%s839 + $0x169] sm:$0xff]
      %v903 = vld [vmem:[%s839 + $0x171] sm:$0xff]
      %v904 = vld [vmem:[%s839 + $0x2] sm:$0xff]
      %v905 = vld [vmem:[%s839 + $0xa] sm:$0xff]
      %v906 = vld [vmem:[%s839 + $0x1a] sm:$0xff]
      %v907 = vld [vmem:[%s839 + $0x22] sm:$0xff]
      %v908 = vld [vmem:[%s839 + $0x32] sm:$0xff]
      %v909 = vld [vmem:[%s839 + $0x3a] sm:$0xff]
      %v910 = vld [vmem:[%s839 + $0x4a] sm:$0xff]
      %v911 = vld [vmem:[%s839 + $0x52] sm:$0xff]
      %v912 = vld [vmem:[%s839 + $0x62] sm:$0xff]
      %v913 = vld [vmem:[%s839 + $0x6a] sm:$0xff]
      %v914 = vld [vmem:[%s839 + $0x7a] sm:$0xff]
      %v915 = vld [vmem:[%s839 + $0x82] sm:$0xff]
      %v916 = vld [vmem:[%s839 + $0x92] sm:$0xff]
      %v917 = vld [vmem:[%s839 + $0x9a] sm:$0xff]
      %v918 = vld [vmem:[%s839 + $0xaa] sm:$0xff]
      %v919 = vld [vmem:[%s839 + $0xb2] sm:$0xff]
      %v920 = vld [vmem:[%s839 + $0xc2] sm:$0xff]
      %v921 = vld [vmem:[%s839 + $0xca] sm:$0xff]
      %v922 = vld [vmem:[%s839 + $0xda] sm:$0xff]
      %v923 = vld [vmem:[%s839 + $0xe2] sm:$0xff]
      %v924 = vld [vmem:[%s839 + $0xf2] sm:$0xff]
      %v925 = vld [vmem:[%s839 + $0xfa] sm:$0xff]
      %v926 = vld [vmem:[%s839 + $0x10a] sm:$0xff]
      %v927 = vld [vmem:[%s839 + $0x112] sm:$0xff]
      %v928 = vld [vmem:[%s839 + $0x122] sm:$0xff]
      %v929 = vld [vmem:[%s839 + $0x12a] sm:$0xff]
      %v930 = vld [vmem:[%s839 + $0x13a] sm:$0xff]
      %v931 = vld [vmem:[%s839 + $0x142] sm:$0xff]
      %v932 = vld [vmem:[%s839 + $0x152] sm:$0xff]
      %v933 = vld [vmem:[%s839 + $0x15a] sm:$0xff]
      %v934 = vld [vmem:[%s839 + $0x16a] sm:$0xff]
      %v935 = vld [vmem:[%s839 + $0x172] sm:$0xff]
      %968 = vrot.lane.b32.xlu0 %v679, 4
      %v969 = vpop.permute.xlu0 %968
      %970 = vrot.lane.b32.xlu0 %v680, 4
      %v971 = vpop.permute.xlu0 %970
      %972 = vrot.lane.b32.xlu0 %v681, 4
      %v973 = vpop.permute.xlu0 %972
      %974 = vrot.lane.b32.xlu0 %v682, 4
      %v975 = vpop.permute.xlu0 %974
      %976 = vrot.lane.b32.xlu0 %v683, 4
      %v977 = vpop.permute.xlu0 %976
      %978 = vrot.lane.b32.xlu0 %v684, 4
      %v979 = vpop.permute.xlu0 %978
      %980 = vrot.lane.b32.xlu0 %v685, 4
      %v981 = vpop.permute.xlu0 %980
      %982 = vrot.lane.b32.xlu0 %v686, 4
      %v983 = vpop.permute.xlu0 %982
      %984 = vrot.lane.b32.xlu0 %v687, 4
      %v985 = vpop.permute.xlu0 %984
      %986 = vrot.lane.b32.xlu0 %v688, 4
      %v987 = vpop.permute.xlu0 %986
      %988 = vrot.lane.b32.xlu0 %v689, 4
      %v989 = vpop.permute.xlu0 %988
      %990 = vrot.lane.b32.xlu0 %v690, 4
      %v991 = vpop.permute.xlu0 %990
      %992 = vrot.lane.b32.xlu0 %v691, 4
      %v993 = vpop.permute.xlu0 %992
      %994 = vrot.lane.b32.xlu0 %v692, 4
      %v995 = vpop.permute.xlu0 %994
      %996 = vrot.lane.b32.xlu0 %v693, 4
      %v997 = vpop.permute.xlu0 %996
      %998 = vrot.lane.b32.xlu0 %v694, 4
      %v999 = vpop.permute.xlu0 %998
      %1000 = vrot.lane.b32.xlu0 %v695, 4
      %v1001 = vpop.permute.xlu0 %1000
      %1002 = vrot.lane.b32.xlu0 %v696, 4
      %v1003 = vpop.permute.xlu0 %1002
      %1004 = vrot.lane.b32.xlu0 %v697, 4
      %v1005 = vpop.permute.xlu0 %1004
      %1006 = vrot.lane.b32.xlu0 %v698, 4
      %v1007 = vpop.permute.xlu0 %1006
      %1008 = vrot.lane.b32.xlu0 %v699, 4
      %v1009 = vpop.permute.xlu0 %1008
      %1010 = vrot.lane.b32.xlu0 %v700, 4
      %v1011 = vpop.permute.xlu0 %1010
      %1012 = vrot.lane.b32.xlu0 %v701, 4
      %v1013 = vpop.permute.xlu0 %1012
      %1014 = vrot.lane.b32.xlu0 %v702, 4
      %v1015 = vpop.permute.xlu0 %1014
      %1016 = vrot.lane.b32.xlu0 %v703, 4
      %v1017 = vpop.permute.xlu0 %1016
      %1018 = vrot.lane.b32.xlu0 %v704, 4
      %v1019 = vpop.permute.xlu0 %1018
      %1020 = vrot.lane.b32.xlu0 %v705, 4
      %v1021 = vpop.permute.xlu0 %1020
      %1022 = vrot.lane.b32.xlu0 %v706, 4
      %v1023 = vpop.permute.xlu0 %1022
      %1024 = vrot.lane.b32.xlu0 %v707, 4
      %v1025 = vpop.permute.xlu0 %1024
      %1026 = vrot.lane.b32.xlu0 %v708, 4
      %v1027 = vpop.permute.xlu0 %1026
      %1028 = vrot.lane.b32.xlu0 %v709, 4
      %v1029 = vpop.permute.xlu0 %1028
      %1030 = vrot.lane.b32.xlu0 %v710, 4
      %v1031 = vpop.permute.xlu0 %1030
      %1096 = vrot.lane.b32.xlu0 %v711, 8
      %v1097 = vpop.permute.xlu0 %1096
      %1098 = vrot.lane.b32.xlu0 %v712, 8
      %v1099 = vpop.permute.xlu0 %1098
      %1100 = vrot.lane.b32.xlu0 %v713, 8
      %v1101 = vpop.permute.xlu0 %1100
      %1102 = vrot.lane.b32.xlu0 %v714, 8
      %v1103 = vpop.permute.xlu0 %1102
      %1104 = vrot.lane.b32.xlu0 %v715, 8
      %v1105 = vpop.permute.xlu0 %1104
      %1106 = vrot.lane.b32.xlu0 %v716, 8
      %v1107 = vpop.permute.xlu0 %1106
      %1108 = vrot.lane.b32.xlu0 %v717, 8
      %v1109 = vpop.permute.xlu0 %1108
      %1110 = vrot.lane.b32.xlu0 %v718, 8
      %v1111 = vpop.permute.xlu0 %1110
      %1112 = vrot.lane.b32.xlu0 %v719, 8
      %v1113 = vpop.permute.xlu0 %1112
      %1114 = vrot.lane.b32.xlu0 %v720, 8
      %v1115 = vpop.permute.xlu0 %1114
      %1116 = vrot.lane.b32.xlu0 %v721, 8
      %v1117 = vpop.permute.xlu0 %1116
      %1118 = vrot.lane.b32.xlu0 %v722, 8
      %v1119 = vpop.permute.xlu0 %1118
      %1120 = vrot.lane.b32.xlu0 %v723, 8
      %v1121 = vpop.permute.xlu0 %1120
      %1122 = vrot.lane.b32.xlu0 %v724, 8
      %v1123 = vpop.permute.xlu0 %1122
      %1124 = vrot.lane.b32.xlu0 %v725, 8
      %v1125 = vpop.permute.xlu0 %1124
      %1126 = vrot.lane.b32.xlu0 %v726, 8
      %v1127 = vpop.permute.xlu0 %1126
      %1128 = vrot.lane.b32.xlu0 %v727, 8
      %v1129 = vpop.permute.xlu0 %1128
      %1130 = vrot.lane.b32.xlu0 %v728, 8
      %v1131 = vpop.permute.xlu0 %1130
      %1132 = vrot.lane.b32.xlu0 %v729, 8
      %v1133 = vpop.permute.xlu0 %1132
      %1134 = vrot.lane.b32.xlu0 %v730, 8
      %v1135 = vpop.permute.xlu0 %1134
      %1136 = vrot.lane.b32.xlu0 %v731, 8
      %v1137 = vpop.permute.xlu0 %1136
      %1138 = vrot.lane.b32.xlu0 %v732, 8
      %v1139 = vpop.permute.xlu0 %1138
      %1140 = vrot.lane.b32.xlu0 %v733, 8
      %v1141 = vpop.permute.xlu0 %1140
      %1142 = vrot.lane.b32.xlu0 %v734, 8
      %v1143 = vpop.permute.xlu0 %1142
      %1144 = vrot.lane.b32.xlu0 %v735, 8
      %v1145 = vpop.permute.xlu0 %1144
      %1146 = vrot.lane.b32.xlu0 %v736, 8
      %v1147 = vpop.permute.xlu0 %1146
      %1148 = vrot.lane.b32.xlu0 %v737, 8
      %v1149 = vpop.permute.xlu0 %1148
      %1150 = vrot.lane.b32.xlu0 %v738, 8
      %v1151 = vpop.permute.xlu0 %1150
      %1152 = vrot.lane.b32.xlu0 %v739, 8
      %v1153 = vpop.permute.xlu0 %1152
      %1154 = vrot.lane.b32.xlu0 %v740, 8
      %v1155 = vpop.permute.xlu0 %1154
      %1156 = vrot.lane.b32.xlu0 %v741, 8
      %v1157 = vpop.permute.xlu0 %1156
      %1158 = vrot.lane.b32.xlu0 %v742, 8
      %v1159 = vpop.permute.xlu0 %1158
      %1224 = vrot.lane.b32.xlu0 %v743, 12
      %v1225 = vpop.permute.xlu0 %1224
      %1226 = vrot.lane.b32.xlu0 %v744, 12
      %v1227 = vpop.permute.xlu0 %1226
      %1228 = vrot.lane.b32.xlu0 %v745, 12
      %v1229 = vpop.permute.xlu0 %1228
      %1230 = vrot.lane.b32.xlu0 %v746, 12
      %v1231 = vpop.permute.xlu0 %1230
      %1232 = vrot.lane.b32.xlu0 %v747, 12
      %v1233 = vpop.permute.xlu0 %1232
      %1234 = vrot.lane.b32.xlu0 %v748, 12
      %v1235 = vpop.permute.xlu0 %1234
      %1236 = vrot.lane.b32.xlu0 %v749, 12
      %v1237 = vpop.permute.xlu0 %1236
      %1238 = vrot.lane.b32.xlu0 %v750, 12
      %v1239 = vpop.permute.xlu0 %1238
      %1240 = vrot.lane.b32.xlu0 %v751, 12
      %v1241 = vpop.permute.xlu0 %1240
      %1242 = vrot.lane.b32.xlu0 %v752, 12
      %v1243 = vpop.permute.xlu0 %1242
      %1244 = vrot.lane.b32.xlu0 %v753, 12
      %v1245 = vpop.permute.xlu0 %1244
      %1246 = vrot.lane.b32.xlu0 %v754, 12
      %v1247 = vpop.permute.xlu0 %1246
      %1248 = vrot.lane.b32.xlu0 %v755, 12
      %v1249 = vpop.permute.xlu0 %1248
      %1250 = vrot.lane.b32.xlu0 %v756, 12
      %v1251 = vpop.permute.xlu0 %1250
      %1252 = vrot.lane.b32.xlu0 %v757, 12
      %v1253 = vpop.permute.xlu0 %1252
      %1254 = vrot.lane.b32.xlu0 %v758, 12
      %v1255 = vpop.permute.xlu0 %1254
      %1256 = vrot.lane.b32.xlu0 %v759, 12
      %v1257 = vpop.permute.xlu0 %1256
      %1258 = vrot.lane.b32.xlu0 %v760, 12
      %v1259 = vpop.permute.xlu0 %1258
      %1260 = vrot.lane.b32.xlu0 %v761, 12
      %v1261 = vpop.permute.xlu0 %1260
      %1262 = vrot.lane.b32.xlu0 %v762, 12
      %v1263 = vpop.permute.xlu0 %1262
      %1264 = vrot.lane.b32.xlu0 %v763, 12
      %v1265 = vpop.permute.xlu0 %1264
      %1266 = vrot.lane.b32.xlu0 %v764, 12
      %v1267 = vpop.permute.xlu0 %1266
      %1268 = vrot.lane.b32.xlu0 %v765, 12
      %v1269 = vpop.permute.xlu0 %1268
      %1270 = vrot.lane.b32.xlu0 %v766, 12
      %v1271 = vpop.permute.xlu0 %1270
      %1272 = vrot.lane.b32.xlu0 %v767, 12
      %v1273 = vpop.permute.xlu0 %1272
      %1274 = vrot.lane.b32.xlu0 %v768, 12
      %v1275 = vpop.permute.xlu0 %1274
      %1276 = vrot.lane.b32.xlu0 %v769, 12
      %v1277 = vpop.permute.xlu0 %1276
      %1278 = vrot.lane.b32.xlu0 %v770, 12
      %v1279 = vpop.permute.xlu0 %1278
      %1280 = vrot.lane.b32.xlu0 %v771, 12
      %v1281 = vpop.permute.xlu0 %1280
      %1282 = vrot.lane.b32.xlu0 %v772, 12
      %v1283 = vpop.permute.xlu0 %1282
      %1284 = vrot.lane.b32.xlu0 %v773, 12
      %v1285 = vpop.permute.xlu0 %1284
      %1286 = vrot.lane.b32.xlu0 %v774, 12
      %v1287 = vpop.permute.xlu0 %1286
      %1352 = vrot.lane.b32.xlu0 %v775, 16
      %v1353 = vpop.permute.xlu0 %1352
      %1354 = vrot.lane.b32.xlu0 %v776, 16
      %v1355 = vpop.permute.xlu0 %1354
      %1356 = vrot.lane.b32.xlu0 %v777, 16
      %v1357 = vpop.permute.xlu0 %1356
      %1358 = vrot.lane.b32.xlu0 %v778, 16
      %v1359 = vpop.permute.xlu0 %1358
      %1360 = vrot.lane.b32.xlu0 %v779, 16
      %v1361 = vpop.permute.xlu0 %1360
      %1362 = vrot.lane.b32.xlu0 %v780, 16
      %v1363 = vpop.permute.xlu0 %1362
      %1364 = vrot.lane.b32.xlu0 %v781, 16
      %v1365 = vpop.permute.xlu0 %1364
      %1366 = vrot.lane.b32.xlu0 %v782, 16
      %v1367 = vpop.permute.xlu0 %1366
      %1368 = vrot.lane.b32.xlu0 %v783, 16
      %v1369 = vpop.permute.xlu0 %1368
      %1370 = vrot.lane.b32.xlu0 %v784, 16
      %v1371 = vpop.permute.xlu0 %1370
      %1372 = vrot.lane.b32.xlu0 %v785, 16
      %v1373 = vpop.permute.xlu0 %1372
      %1374 = vrot.lane.b32.xlu0 %v786, 16
      %v1375 = vpop.permute.xlu0 %1374
      %1376 = vrot.lane.b32.xlu0 %v787, 16
      %v1377 = vpop.permute.xlu0 %1376
      %1378 = vrot.lane.b32.xlu0 %v788, 16
      %v1379 = vpop.permute.xlu0 %1378
      %1380 = vrot.lane.b32.xlu0 %v789, 16
      %v1381 = vpop.permute.xlu0 %1380
      %1382 = vrot.lane.b32.xlu0 %v790, 16
      %v1383 = vpop.permute.xlu0 %1382
      %1384 = vrot.lane.b32.xlu0 %v791, 16
      %v1385 = vpop.permute.xlu0 %1384
      %1386 = vrot.lane.b32.xlu0 %v792, 16
      %v1387 = vpop.permute.xlu0 %1386
      %1388 = vrot.lane.b32.xlu0 %v793, 16
      %v1389 = vpop.permute.xlu0 %1388
      %1390 = vrot.lane.b32.xlu0 %v794, 16
      %v1391 = vpop.permute.xlu0 %1390
      %1392 = vrot.lane.b32.xlu0 %v795, 16
      %v1393 = vpop.permute.xlu0 %1392
      %1394 = vrot.lane.b32.xlu0 %v796, 16
      %v1395 = vpop.permute.xlu0 %1394
      %1396 = vrot.lane.b32.xlu0 %v797, 16
      %v1397 = vpop.permute.xlu0 %1396
      %1398 = vrot.lane.b32.xlu0 %v798, 16
      %v1399 = vpop.permute.xlu0 %1398
      %1400 = vrot.lane.b32.xlu0 %v799, 16
      %v1401 = vpop.permute.xlu0 %1400
      %1402 = vrot.lane.b32.xlu0 %v800, 16
      %v1403 = vpop.permute.xlu0 %1402
      %1404 = vrot.lane.b32.xlu0 %v801, 16
      %v1405 = vpop.permute.xlu0 %1404
      %1406 = vrot.lane.b32.xlu0 %v802, 16
      %v1407 = vpop.permute.xlu0 %1406
      %1408 = vrot.lane.b32.xlu0 %v803, 16
      %v1409 = vpop.permute.xlu0 %1408
      %1410 = vrot.lane.b32.xlu0 %v804, 16
      %v1411 = vpop.permute.xlu0 %1410
      %1412 = vrot.lane.b32.xlu0 %v805, 16
      %v1413 = vpop.permute.xlu0 %1412
      %1414 = vrot.lane.b32.xlu0 %v806, 16
      %v1415 = vpop.permute.xlu0 %1414
      %1480 = vrot.lane.b32.xlu0 %v807, 20
      %v1481 = vpop.permute.xlu0 %1480
      %1482 = vrot.lane.b32.xlu0 %v808, 20
      %v1483 = vpop.permute.xlu0 %1482
      %1484 = vrot.lane.b32.xlu0 %v809, 20
      %v1485 = vpop.permute.xlu0 %1484
      %1486 = vrot.lane.b32.xlu0 %v810, 20
      %v1487 = vpop.permute.xlu0 %1486
      %1488 = vrot.lane.b32.xlu0 %v811, 20
      %v1489 = vpop.permute.xlu0 %1488
      %1490 = vrot.lane.b32.xlu0 %v812, 20
      %v1491 = vpop.permute.xlu0 %1490
      %1492 = vrot.lane.b32.xlu0 %v813, 20
      %v1493 = vpop.permute.xlu0 %1492
      %1494 = vrot.lane.b32.xlu0 %v814, 20
      %v1495 = vpop.permute.xlu0 %1494
      %1496 = vrot.lane.b32.xlu0 %v815, 20
      %v1497 = vpop.permute.xlu0 %1496
      %1498 = vrot.lane.b32.xlu0 %v816, 20
      %v1499 = vpop.permute.xlu0 %1498
      %1500 = vrot.lane.b32.xlu0 %v817, 20
      %v1501 = vpop.permute.xlu0 %1500
      %1502 = vrot.lane.b32.xlu0 %v818, 20
      %v1503 = vpop.permute.xlu0 %1502
      %1504 = vrot.lane.b32.xlu0 %v819, 20
      %v1505 = vpop.permute.xlu0 %1504
      %1506 = vrot.lane.b32.xlu0 %v820, 20
      %v1507 = vpop.permute.xlu0 %1506
      %1508 = vrot.lane.b32.xlu0 %v821, 20
      %v1509 = vpop.permute.xlu0 %1508
      %1510 = vrot.lane.b32.xlu0 %v822, 20
      %v1511 = vpop.permute.xlu0 %1510
      %1512 = vrot.lane.b32.xlu0 %v823, 20
      %v1513 = vpop.permute.xlu0 %1512
      %1514 = vrot.lane.b32.xlu0 %v824, 20
      %v1515 = vpop.permute.xlu0 %1514
      %1516 = vrot.lane.b32.xlu0 %v825, 20
      %v1517 = vpop.permute.xlu0 %1516
      %1518 = vrot.lane.b32.xlu0 %v826, 20
      %v1519 = vpop.permute.xlu0 %1518
      %1520 = vrot.lane.b32.xlu0 %v827, 20
      %v1521 = vpop.permute.xlu0 %1520
      %1522 = vrot.lane.b32.xlu0 %v828, 20
      %v1523 = vpop.permute.xlu0 %1522
      %1524 = vrot.lane.b32.xlu0 %v829, 20
      %v1525 = vpop.permute.xlu0 %1524
      %1526 = vrot.lane.b32.xlu0 %v830, 20
      %v1527 = vpop.permute.xlu0 %1526
      %1528 = vrot.lane.b32.xlu0 %v831, 20
      %v1529 = vpop.permute.xlu0 %1528
      %1530 = vrot.lane.b32.xlu0 %v832, 20
      %v1531 = vpop.permute.xlu0 %1530
      %1532 = vrot.lane.b32.xlu0 %v833, 20
      %v1533 = vpop.permute.xlu0 %1532
      %1534 = vrot.lane.b32.xlu0 %v834, 20
      %v1535 = vpop.permute.xlu0 %1534
      %1536 = vrot.lane.b32.xlu0 %v835, 20
      %v1537 = vpop.permute.xlu0 %1536
      %1538 = vrot.lane.b32.xlu0 %v836, 20
      %v1539 = vpop.permute.xlu0 %1538
      %1540 = vrot.lane.b32.xlu0 %v837, 20
      %v1541 = vpop.permute.xlu0 %1540
      %1542 = vrot.lane.b32.xlu0 %v838, 20
      %v1543 = vpop.permute.xlu0 %1542
      %1608 = vrot.lane.b32.xlu0 %v840, 24
      %v1609 = vpop.permute.xlu0 %1608
      %1610 = vrot.lane.b32.xlu0 %v841, 24
      %v1611 = vpop.permute.xlu0 %1610
      %1612 = vrot.lane.b32.xlu0 %v842, 24
      %v1613 = vpop.permute.xlu0 %1612
      %1614 = vrot.lane.b32.xlu0 %v843, 24
      %v1615 = vpop.permute.xlu0 %1614
      %1616 = vrot.lane.b32.xlu0 %v844, 24
      %v1617 = vpop.permute.xlu0 %1616
      %1618 = vrot.lane.b32.xlu0 %v845, 24
      %v1619 = vpop.permute.xlu0 %1618
      %1620 = vrot.lane.b32.xlu0 %v846, 24
      %v1621 = vpop.permute.xlu0 %1620
      %1622 = vrot.lane.b32.xlu0 %v847, 24
      %v1623 = vpop.permute.xlu0 %1622
      %1624 = vrot.lane.b32.xlu0 %v848, 24
      %v1625 = vpop.permute.xlu0 %1624
      %1626 = vrot.lane.b32.xlu0 %v849, 24
      %v1627 = vpop.permute.xlu0 %1626
      %1628 = vrot.lane.b32.xlu0 %v850, 24
      %v1629 = vpop.permute.xlu0 %1628
      %1630 = vrot.lane.b32.xlu0 %v851, 24
      %v1631 = vpop.permute.xlu0 %1630
      %1632 = vrot.lane.b32.xlu0 %v852, 24
      %v1633 = vpop.permute.xlu0 %1632
      %1634 = vrot.lane.b32.xlu0 %v853, 24
      %v1635 = vpop.permute.xlu0 %1634
      %1636 = vrot.lane.b32.xlu0 %v854, 24
      %v1637 = vpop.permute.xlu0 %1636
      %1638 = vrot.lane.b32.xlu0 %v855, 24
      %v1639 = vpop.permute.xlu0 %1638
      %1640 = vrot.lane.b32.xlu0 %v856, 24
      %v1641 = vpop.permute.xlu0 %1640
      %1642 = vrot.lane.b32.xlu0 %v857, 24
      %v1643 = vpop.permute.xlu0 %1642
      %1644 = vrot.lane.b32.xlu0 %v858, 24
      %v1645 = vpop.permute.xlu0 %1644
      %1646 = vrot.lane.b32.xlu0 %v859, 24
      %v1647 = vpop.permute.xlu0 %1646
      %1648 = vrot.lane.b32.xlu0 %v860, 24
      %v1649 = vpop.permute.xlu0 %1648
      %1650 = vrot.lane.b32.xlu0 %v861, 24
      %v1651 = vpop.permute.xlu0 %1650
      %1652 = vrot.lane.b32.xlu0 %v862, 24
      %v1653 = vpop.permute.xlu0 %1652
      %1654 = vrot.lane.b32.xlu0 %v863, 24
      %v1655 = vpop.permute.xlu0 %1654
      %1656 = vrot.lane.b32.xlu0 %v864, 24
      %v1657 = vpop.permute.xlu0 %1656
      %1658 = vrot.lane.b32.xlu0 %v865, 24
      %v1659 = vpop.permute.xlu0 %1658
      %1660 = vrot.lane.b32.xlu0 %v866, 24
      %v1661 = vpop.permute.xlu0 %1660
      %1662 = vrot.lane.b32.xlu0 %v867, 24
      %v1663 = vpop.permute.xlu0 %1662
      %1664 = vrot.lane.b32.xlu0 %v868, 24
      %v1665 = vpop.permute.xlu0 %1664
      %1666 = vrot.lane.b32.xlu0 %v869, 24
      %v1667 = vpop.permute.xlu0 %1666
      %1668 = vrot.lane.b32.xlu0 %v870, 24
      %v1669 = vpop.permute.xlu0 %1668
      %1670 = vrot.lane.b32.xlu0 %v871, 24
      %v1671 = vpop.permute.xlu0 %1670
      %1736 = vrot.lane.b32.xlu0 %v872, 28
      %v1737 = vpop.permute.xlu0 %1736
      %1738 = vrot.lane.b32.xlu0 %v873, 28
      %v1739 = vpop.permute.xlu0 %1738
      %1740 = vrot.lane.b32.xlu0 %v874, 28
      %v1741 = vpop.permute.xlu0 %1740
      %1742 = vrot.lane.b32.xlu0 %v875, 28
      %v1743 = vpop.permute.xlu0 %1742
      %1744 = vrot.lane.b32.xlu0 %v876, 28
      %v1745 = vpop.permute.xlu0 %1744
      %1746 = vrot.lane.b32.xlu0 %v877, 28
      %v1747 = vpop.permute.xlu0 %1746
      %1748 = vrot.lane.b32.xlu0 %v878, 28
      %v1749 = vpop.permute.xlu0 %1748
      %1750 = vrot.lane.b32.xlu0 %v879, 28
      %v1751 = vpop.permute.xlu0 %1750
      %1752 = vrot.lane.b32.xlu0 %v880, 28
      %v1753 = vpop.permute.xlu0 %1752
      %1754 = vrot.lane.b32.xlu0 %v881, 28
      %v1755 = vpop.permute.xlu0 %1754
      %1756 = vrot.lane.b32.xlu0 %v882, 28
      %v1757 = vpop.permute.xlu0 %1756
      %1758 = vrot.lane.b32.xlu0 %v883, 28
      %v1759 = vpop.permute.xlu0 %1758
      %1760 = vrot.lane.b32.xlu0 %v884, 28
      %v1761 = vpop.permute.xlu0 %1760
      %1762 = vrot.lane.b32.xlu0 %v885, 28
      %v1763 = vpop.permute.xlu0 %1762
      %1764 = vrot.lane.b32.xlu0 %v886, 28
      %v1765 = vpop.permute.xlu0 %1764
      %1766 = vrot.lane.b32.xlu0 %v887, 28
      %v1767 = vpop.permute.xlu0 %1766
      %1768 = vrot.lane.b32.xlu0 %v888, 28
      %v1769 = vpop.permute.xlu0 %1768
      %1770 = vrot.lane.b32.xlu0 %v889, 28
      %v1771 = vpop.permute.xlu0 %1770
      %1772 = vrot.lane.b32.xlu0 %v890, 28
      %v1773 = vpop.permute.xlu0 %1772
      %1774 = vrot.lane.b32.xlu0 %v891, 28
      %v1775 = vpop.permute.xlu0 %1774
      %1776 = vrot.lane.b32.xlu0 %v892, 28
      %v1777 = vpop.permute.xlu0 %1776
      %1778 = vrot.lane.b32.xlu0 %v893, 28
      %v1779 = vpop.permute.xlu0 %1778
      %1780 = vrot.lane.b32.xlu0 %v894, 28
      %v1781 = vpop.permute.xlu0 %1780
      %1782 = vrot.lane.b32.xlu0 %v895, 28
      %v1783 = vpop.permute.xlu0 %1782
      %1784 = vrot.lane.b32.xlu0 %v896, 28
      %v1785 = vpop.permute.xlu0 %1784
      %1786 = vrot.lane.b32.xlu0 %v897, 28
      %v1787 = vpop.permute.xlu0 %1786
      %1788 = vrot.lane.b32.xlu0 %v898, 28
      %v1789 = vpop.permute.xlu0 %1788
      %1790 = vrot.lane.b32.xlu0 %v899, 28
      %v1791 = vpop.permute.xlu0 %1790
      %1792 = vrot.lane.b32.xlu0 %v900, 28
      %v1793 = vpop.permute.xlu0 %1792
      %1794 = vrot.lane.b32.xlu0 %v901, 28
      %v1795 = vpop.permute.xlu0 %1794
      %1796 = vrot.lane.b32.xlu0 %v902, 28
      %v1797 = vpop.permute.xlu0 %1796
      %1798 = vrot.lane.b32.xlu0 %v903, 28
      %v1799 = vpop.permute.xlu0 %1798
      %1864 = vrot.lane.b32.xlu0 %v904, 32
      %v1865 = vpop.permute.xlu0 %1864
      %1866 = vrot.lane.b32.xlu0 %v905, 32
      %v1867 = vpop.permute.xlu0 %1866
      %1868 = vrot.lane.b32.xlu0 %v906, 32
      %v1869 = vpop.permute.xlu0 %1868
      %1870 = vrot.lane.b32.xlu0 %v907, 32
      %v1871 = vpop.permute.xlu0 %1870
      %1872 = vrot.lane.b32.xlu0 %v908, 32
      %v1873 = vpop.permute.xlu0 %1872
      %1874 = vrot.lane.b32.xlu0 %v909, 32
      %v1875 = vpop.permute.xlu0 %1874
      %1876 = vrot.lane.b32.xlu0 %v910, 32
      %v1877 = vpop.permute.xlu0 %1876
      %1878 = vrot.lane.b32.xlu0 %v911, 32
      %v1879 = vpop.permute.xlu0 %1878
      %1880 = vrot.lane.b32.xlu0 %v912, 32
      %v1881 = vpop.permute.xlu0 %1880
      %1882 = vrot.lane.b32.xlu0 %v913, 32
      %v1883 = vpop.permute.xlu0 %1882
      %1884 = vrot.lane.b32.xlu0 %v914, 32
      %v1885 = vpop.permute.xlu0 %1884
      %1886 = vrot.lane.b32.xlu0 %v915, 32
      %v1887 = vpop.permute.xlu0 %1886
      %1888 = vrot.lane.b32.xlu0 %v916, 32
      %v1889 = vpop.permute.xlu0 %1888
      %1890 = vrot.lane.b32.xlu0 %v917, 32
      %v1891 = vpop.permute.xlu0 %1890
      %1892 = vrot.lane.b32.xlu0 %v918, 32
      %v1893 = vpop.permute.xlu0 %1892
      %1894 = vrot.lane.b32.xlu0 %v919, 32
      %v1895 = vpop.permute.xlu0 %1894
      %1896 = vrot.lane.b32.xlu0 %v920, 32
      %v1897 = vpop.permute.xlu0 %1896
      %1898 = vrot.lane.b32.xlu0 %v921, 32
      %v1899 = vpop.permute.xlu0 %1898
      %1900 = vrot.lane.b32.xlu0 %v922, 32
      %v1901 = vpop.permute.xlu0 %1900
      %1902 = vrot.lane.b32.xlu0 %v923, 32
      %v1903 = vpop.permute.xlu0 %1902
      %1904 = vrot.lane.b32.xlu0 %v924, 32
      %v1905 = vpop.permute.xlu0 %1904
      %1906 = vrot.lane.b32.xlu0 %v925, 32
      %v1907 = vpop.permute.xlu0 %1906
      %1908 = vrot.lane.b32.xlu0 %v926, 32
      %v1909 = vpop.permute.xlu0 %1908
      %1910 = vrot.lane.b32.xlu0 %v927, 32
      %v1911 = vpop.permute.xlu0 %1910
      %1912 = vrot.lane.b32.xlu0 %v928, 32
      %v1913 = vpop.permute.xlu0 %1912
      %1914 = vrot.lane.b32.xlu0 %v929, 32
      %v1915 = vpop.permute.xlu0 %1914
      %1916 = vrot.lane.b32.xlu0 %v930, 32
      %v1917 = vpop.permute.xlu0 %1916
      %1918 = vrot.lane.b32.xlu0 %v931, 32
      %v1919 = vpop.permute.xlu0 %1918
      %1920 = vrot.lane.b32.xlu0 %v932, 32
      %v1921 = vpop.permute.xlu0 %1920
      %1922 = vrot.lane.b32.xlu0 %v933, 32
      %v1923 = vpop.permute.xlu0 %1922
      %1924 = vrot.lane.b32.xlu0 %v934, 32
      %v1925 = vpop.permute.xlu0 %1924
      %1926 = vrot.lane.b32.xlu0 %v935, 32
      %v1927 = vpop.permute.xlu0 %1926
      %v1960 = vsel %vm536, %v647, %v969
      %v1961 = vsel %vm536, %v648, %v971
      %v1962 = vsel %vm536, %v649, %v973
      %v1963 = vsel %vm536, %v650, %v975
      %v1964 = vsel %vm536, %v651, %v977
      %v1965 = vsel %vm536, %v652, %v979
      %v1966 = vsel %vm536, %v653, %v981
      %v1967 = vsel %vm536, %v654, %v983
      %v1968 = vsel %vm536, %v655, %v985
      %v1969 = vsel %vm536, %v656, %v987
      %v1970 = vsel %vm536, %v657, %v989
      %v1971 = vsel %vm536, %v658, %v991
      %v1972 = vsel %vm536, %v659, %v993
      %v1973 = vsel %vm536, %v660, %v995
      %v1974 = vsel %vm536, %v661, %v997
      %v1975 = vsel %vm536, %v662, %v999
      %v1976 = vsel %vm536, %v663, %v1001
      %v1977 = vsel %vm536, %v664, %v1003
      %v1978 = vsel %vm536, %v665, %v1005
      %v1979 = vsel %vm536, %v666, %v1007
      %v1980 = vsel %vm536, %v667, %v1009
      %v1981 = vsel %vm536, %v668, %v1011
      %v1982 = vsel %vm536, %v669, %v1013
      %v1983 = vsel %vm536, %v670, %v1015
      %v1984 = vsel %vm536, %v671, %v1017
      %v1985 = vsel %vm536, %v672, %v1019
      %v1986 = vsel %vm536, %v673, %v1021
      %v1987 = vsel %vm536, %v674, %v1023
      %v1988 = vsel %vm536, %v675, %v1025
      %v1989 = vsel %vm536, %v676, %v1027
      %v1990 = vsel %vm536, %v677, %v1029
      %v1991 = vsel %vm536, %v678, %v1031
      %vm1992 = vcmask 64512
      %v1993 = vsel %vm1992, %v1960, %v1097
      %v1994 = vsel %vm1992, %v1961, %v1099
      %v1995 = vsel %vm1992, %v1962, %v1101
      %v1996 = vsel %vm1992, %v1963, %v1103
      %v1997 = vsel %vm1992, %v1964, %v1105
      %v1998 = vsel %vm1992, %v1965, %v1107
      %v1999 = vsel %vm1992, %v1966, %v1109
      %v2000 = vsel %vm1992, %v1967, %v1111
      %v2001 = vsel %vm1992, %v1968, %v1113
      %v2002 = vsel %vm1992, %v1969, %v1115
      %v2003 = vsel %vm1992, %v1970, %v1117
      %v2004 = vsel %vm1992, %v1971, %v1119
      %v2005 = vsel %vm1992, %v1972, %v1121
      %v2006 = vsel %vm1992, %v1973, %v1123
      %v2007 = vsel %vm1992, %v1974, %v1125
      %v2008 = vsel %vm1992, %v1975, %v1127
      %v2009 = vsel %vm1992, %v1976, %v1129
      %v2010 = vsel %vm1992, %v1977, %v1131
      %v2011 = vsel %vm1992, %v1978, %v1133
      %v2012 = vsel %vm1992, %v1979, %v1135
      %v2013 = vsel %vm1992, %v1980, %v1137
      %v2014 = vsel %vm1992, %v1981, %v1139
      %v2015 = vsel %vm1992, %v1982, %v1141
      %v2016 = vsel %vm1992, %v1983, %v1143
      %v2017 = vsel %vm1992, %v1984, %v1145
      %v2018 = vsel %vm1992, %v1985, %v1147
      %v2019 = vsel %vm1992, %v1986, %v1149
      %v2020 = vsel %vm1992, %v1987, %v1151
      %v2021 = vsel %vm1992, %v1988, %v1153
      %v2022 = vsel %vm1992, %v1989, %v1155
      %v2023 = vsel %vm1992, %v1990, %v1157
      %v2024 = vsel %vm1992, %v1991, %v1159
      %vm2025 = vcmask 97280
      %v2026 = vsel %vm2025, %v1993, %v1225
      %v2027 = vsel %vm2025, %v1994, %v1227
      %v2028 = vsel %vm2025, %v1995, %v1229
      %v2029 = vsel %vm2025, %v1996, %v1231
      %v2030 = vsel %vm2025, %v1997, %v1233
      %v2031 = vsel %vm2025, %v1998, %v1235
      %v2032 = vsel %vm2025, %v1999, %v1237
      %v2033 = vsel %vm2025, %v2000, %v1239
      %v2034 = vsel %vm2025, %v2001, %v1241
      %v2035 = vsel %vm2025, %v2002, %v1243
      %v2036 = vsel %vm2025, %v2003, %v1245
      %v2037 = vsel %vm2025, %v2004, %v1247
      %v2038 = vsel %vm2025, %v2005, %v1249
      %v2039 = vsel %vm2025, %v2006, %v1251
      %v2040 = vsel %vm2025, %v2007, %v1253
      %v2041 = vsel %vm2025, %v2008, %v1255
      %v2042 = vsel %vm2025, %v2009, %v1257
      %v2043 = vsel %vm2025, %v2010, %v1259
      %v2044 = vsel %vm2025, %v2011, %v1261
      %v2045 = vsel %vm2025, %v2012, %v1263
      %v2046 = vsel %vm2025, %v2013, %v1265
      %v2047 = vsel %vm2025, %v2014, %v1267
      %v2048 = vsel %vm2025, %v2015, %v1269
      %v2049 = vsel %vm2025, %v2016, %v1271
      %v2050 = vsel %vm2025, %v2017, %v1273
      %v2051 = vsel %vm2025, %v2018, %v1275
      %v2052 = vsel %vm2025, %v2019, %v1277
      %v2053 = vsel %vm2025, %v2020, %v1279
      %v2054 = vsel %vm2025, %v2021, %v1281
      %v2055 = vsel %vm2025, %v2022, %v1283
      %v2056 = vsel %vm2025, %v2023, %v1285
      %v2057 = vsel %vm2025, %v2024, %v1287
      %vm2058 = vcmask 130048
      %v2059 = vsel %vm2058, %v2026, %v1353
      %v2060 = vsel %vm2058, %v2027, %v1355
      %v2061 = vsel %vm2058, %v2028, %v1357
      %v2062 = vsel %vm2058, %v2029, %v1359
      %v2063 = vsel %vm2058, %v2030, %v1361
      %v2064 = vsel %vm2058, %v2031, %v1363
      %v2065 = vsel %vm2058, %v2032, %v1365
      %v2066 = vsel %vm2058, %v2033, %v1367
      %v2067 = vsel %vm2058, %v2034, %v1369
      %v2068 = vsel %vm2058, %v2035, %v1371
      %v2069 = vsel %vm2058, %v2036, %v1373
      %v2070 = vsel %vm2058, %v2037, %v1375
      %v2071 = vsel %vm2058, %v2038, %v1377
      %v2072 = vsel %vm2058, %v2039, %v1379
      %v2073 = vsel %vm2058, %v2040, %v1381
      %v2074 = vsel %vm2058, %v2041, %v1383
      %v2075 = vsel %vm2058, %v2042, %v1385
      %v2076 = vsel %vm2058, %v2043, %v1387
      %v2077 = vsel %vm2058, %v2044, %v1389
      %v2078 = vsel %vm2058, %v2045, %v1391
      %v2079 = vsel %vm2058, %v2046, %v1393
      %v2080 = vsel %vm2058, %v2047, %v1395
      %v2081 = vsel %vm2058, %v2048, %v1397
      %v2082 = vsel %vm2058, %v2049, %v1399
      %v2083 = vsel %vm2058, %v2050, %v1401
      %v2084 = vsel %vm2058, %v2051, %v1403
      %v2085 = vsel %vm2058, %v2052, %v1405
      %v2086 = vsel %vm2058, %v2053, %v1407
      %v2087 = vsel %vm2058, %v2054, %v1409
      %v2088 = vsel %vm2058, %v2055, %v1411
      %v2089 = vsel %vm2058, %v2056, %v1413
      %v2090 = vsel %vm2058, %v2057, %v1415
      %vm2091 = vcmask 162816
      %v2092 = vsel %vm2091, %v2059, %v1481
      %v2093 = vsel %vm2091, %v2060, %v1483
      %v2094 = vsel %vm2091, %v2061, %v1485
      %v2095 = vsel %vm2091, %v2062, %v1487
      %v2096 = vsel %vm2091, %v2063, %v1489
      %v2097 = vsel %vm2091, %v2064, %v1491
      %v2098 = vsel %vm2091, %v2065, %v1493
      %v2099 = vsel %vm2091, %v2066, %v1495
      %v2100 = vsel %vm2091, %v2067, %v1497
      %v2101 = vsel %vm2091, %v2068, %v1499
      %v2102 = vsel %vm2091, %v2069, %v1501
      %v2103 = vsel %vm2091, %v2070, %v1503
      %v2104 = vsel %vm2091, %v2071, %v1505
      %v2105 = vsel %vm2091, %v2072, %v1507
      %v2106 = vsel %vm2091, %v2073, %v1509
      %v2107 = vsel %vm2091, %v2074, %v1511
      %v2108 = vsel %vm2091, %v2075, %v1513
      %v2109 = vsel %vm2091, %v2076, %v1515
      %v2110 = vsel %vm2091, %v2077, %v1517
      %v2111 = vsel %vm2091, %v2078, %v1519
      %v2112 = vsel %vm2091, %v2079, %v1521
      %v2113 = vsel %vm2091, %v2080, %v1523
      %v2114 = vsel %vm2091, %v2081, %v1525
      %v2115 = vsel %vm2091, %v2082, %v1527
      %v2116 = vsel %vm2091, %v2083, %v1529
      %v2117 = vsel %vm2091, %v2084, %v1531
      %v2118 = vsel %vm2091, %v2085, %v1533
      %v2119 = vsel %vm2091, %v2086, %v1535
      %v2120 = vsel %vm2091, %v2087, %v1537
      %v2121 = vsel %vm2091, %v2088, %v1539
      %v2122 = vsel %vm2091, %v2089, %v1541
      %v2123 = vsel %vm2091, %v2090, %v1543
      %vm2124 = vcmask 195584
      %v2125 = vsel %vm2124, %v2092, %v1609
      %v2126 = vsel %vm2124, %v2093, %v1611
      %v2127 = vsel %vm2124, %v2094, %v1613
      %v2128 = vsel %vm2124, %v2095, %v1615
      %v2129 = vsel %vm2124, %v2096, %v1617
      %v2130 = vsel %vm2124, %v2097, %v1619
      %v2131 = vsel %vm2124, %v2098, %v1621
      %v2132 = vsel %vm2124, %v2099, %v1623
      %v2133 = vsel %vm2124, %v2100, %v1625
      %v2134 = vsel %vm2124, %v2101, %v1627
      %v2135 = vsel %vm2124, %v2102, %v1629
      %v2136 = vsel %vm2124, %v2103, %v1631
      %v2137 = vsel %vm2124, %v2104, %v1633
      %v2138 = vsel %vm2124, %v2105, %v1635
      %v2139 = vsel %vm2124, %v2106, %v1637
      %v2140 = vsel %vm2124, %v2107, %v1639
      %v2141 = vsel %vm2124, %v2108, %v1641
      %v2142 = vsel %vm2124, %v2109, %v1643
      %v2143 = vsel %vm2124, %v2110, %v1645
      %v2144 = vsel %vm2124, %v2111, %v1647
      %v2145 = vsel %vm2124, %v2112, %v1649
      %v2146 = vsel %vm2124, %v2113, %v1651
      %v2147 = vsel %vm2124, %v2114, %v1653
      %v2148 = vsel %vm2124, %v2115, %v1655
      %v2149 = vsel %vm2124, %v2116, %v1657
      %v2150 = vsel %vm2124, %v2117, %v1659
      %v2151 = vsel %vm2124, %v2118, %v1661
      %v2152 = vsel %vm2124, %v2119, %v1663
      %v2153 = vsel %vm2124, %v2120, %v1665
      %v2154 = vsel %vm2124, %v2121, %v1667
      %v2155 = vsel %vm2124, %v2122, %v1669
      %v2156 = vsel %vm2124, %v2123, %v1671
      %vm2157 = vcmask 228352
      %v2158 = vsel %vm2157, %v2125, %v1737
      %v2159 = vsel %vm2157, %v2126, %v1739
      %v2160 = vsel %vm2157, %v2127, %v1741
      %v2161 = vsel %vm2157, %v2128, %v1743
      %v2162 = vsel %vm2157, %v2129, %v1745
      %v2163 = vsel %vm2157, %v2130, %v1747
      %v2164 = vsel %vm2157, %v2131, %v1749
      %v2165 = vsel %vm2157, %v2132, %v1751
      %v2166 = vsel %vm2157, %v2133, %v1753
      %v2167 = vsel %vm2157, %v2134, %v1755
      %v2168 = vsel %vm2157, %v2135, %v1757
      %v2169 = vsel %vm2157, %v2136, %v1759
      %v2170 = vsel %vm2157, %v2137, %v1761
      %v2171 = vsel %vm2157, %v2138, %v1763
      %v2172 = vsel %vm2157, %v2139, %v1765
      %v2173 = vsel %vm2157, %v2140, %v1767
      %v2174 = vsel %vm2157, %v2141, %v1769
      %v2175 = vsel %vm2157, %v2142, %v1771
      %v2176 = vsel %vm2157, %v2143, %v1773
      %v2177 = vsel %vm2157, %v2144, %v1775
      %v2178 = vsel %vm2157, %v2145, %v1777
      %v2179 = vsel %vm2157, %v2146, %v1779
      %v2180 = vsel %vm2157, %v2147, %v1781
      %v2181 = vsel %vm2157, %v2148, %v1783
      %v2182 = vsel %vm2157, %v2149, %v1785
      %v2183 = vsel %vm2157, %v2150, %v1787
      %v2184 = vsel %vm2157, %v2151, %v1789
      %v2185 = vsel %vm2157, %v2152, %v1791
      %v2186 = vsel %vm2157, %v2153, %v1793
      %v2187 = vsel %vm2157, %v2154, %v1795
      %v2188 = vsel %vm2157, %v2155, %v1797
      %v2189 = vsel %vm2157, %v2156, %v1799
      %vm2190 = vcmask 261120
      %v2191 = vsel %vm2190, %v2158, %v1865
      %v2192 = vsel %vm2190, %v2159, %v1867
      %v2193 = vsel %vm2190, %v2160, %v1869
      %v2194 = vsel %vm2190, %v2161, %v1871
      %v2195 = vsel %vm2190, %v2162, %v1873
      %v2196 = vsel %vm2190, %v2163, %v1875
      %v2197 = vsel %vm2190, %v2164, %v1877
      %v2198 = vsel %vm2190, %v2165, %v1879
      %v2199 = vsel %vm2190, %v2166, %v1881
      %v2200 = vsel %vm2190, %v2167, %v1883
      %v2201 = vsel %vm2190, %v2168, %v1885
      %v2202 = vsel %vm2190, %v2169, %v1887
      %v2203 = vsel %vm2190, %v2170, %v1889
      %v2204 = vsel %vm2190, %v2171, %v1891
      %v2205 = vsel %vm2190, %v2172, %v1893
      %v2206 = vsel %vm2190, %v2173, %v1895
      %v2207 = vsel %vm2190, %v2174, %v1897
      %v2208 = vsel %vm2190, %v2175, %v1899
      %v2209 = vsel %vm2190, %v2176, %v1901
      %v2210 = vsel %vm2190, %v2177, %v1903
      %v2211 = vsel %vm2190, %v2178, %v1905
      %v2212 = vsel %vm2190, %v2179, %v1907
      %v2213 = vsel %vm2190, %v2180, %v1909
      %v2214 = vsel %vm2190, %v2181, %v1911
      %v2215 = vsel %vm2190, %v2182, %v1913
      %v2216 = vsel %vm2190, %v2183, %v1915
      %v2217 = vsel %vm2190, %v2184, %v1917
      %v2218 = vsel %vm2190, %v2185, %v1919
      %v2219 = vsel %vm2190, %v2186, %v1921
      %v2220 = vsel %vm2190, %v2187, %v1923
      %v2221 = vsel %vm2190, %v2188, %v1925
      %v2222 = vsel %vm2190, %v2189, %v1927
      %v2223 = vpack.c.bf16 %v2192, %v2191
      %v2224 = vpack.c.bf16 %v2194, %v2193
      %v2225 = vpack.c.bf16 %v2196, %v2195
      %v2226 = vpack.c.bf16 %v2198, %v2197
      %v2227 = vpack.c.bf16 %v2200, %v2199
      %v2228 = vpack.c.bf16 %v2202, %v2201
      %v2229 = vpack.c.bf16 %v2204, %v2203
      %v2230 = vpack.c.bf16 %v2206, %v2205
      %v2231 = vpack.c.bf16 %v2208, %v2207
      %v2232 = vpack.c.bf16 %v2210, %v2209
      %v2233 = vpack.c.bf16 %v2212, %v2211
      %v2234 = vpack.c.bf16 %v2214, %v2213
      %v2235 = vpack.c.bf16 %v2216, %v2215
      %v2236 = vpack.c.bf16 %v2218, %v2217
      %v2237 = vpack.c.bf16 %v2220, %v2219
      %v2238 = vpack.c.bf16 %v2222, %v2221
      %v2239 = vld [vmem:[%s1] sm:$0xf]
      %v2240 = vld [vmem:[%s1 + $0x4] sm:$0xf]
      %v2241 = vld [vmem:[%s1 + $0x8] sm:$0xf]
      %v2242 = vld [vmem:[%s1 + $0xc] sm:$0xf]
      %v2243 = vld [vmem:[%s1 + $0x10] sm:$0x3]
      %v2244 = vld [vmem:[%s2] sm:$0x1]
      %v2246 = vperm.slane %v2244, 0
      %v2253 = vunpack.c.l.b16 %v2239
      %v2254 = vunpack.c.l.b16 %v2240
      %v2255 = vunpack.c.l.b16 %v2241
      %v2256 = vunpack.c.l.b16 %v2242
      %v2257 = vunpack.c.l.b16 %v2243
      %v2258 = vpack.c.b16 %v2254, %v2253
      %v2259 = vpack.c.b16 %v2256, %v2255
      %v2260 = vpack.c.b16 %v2257, %v2257
      %vm2263 = vcmask 293888
      %v2265 = vsel %vm2263, %v2223, 0
      %v2268 = vsel %vm2263, %v2224, 0
      %v2271 = vsel %vm2263, %v2225, 0
      %v2274 = vsel %vm2263, %v2226, 0
      %v2277 = vsel %vm2263, %v2227, 0
      %v2280 = vsel %vm2263, %v2228, 0
      %v2283 = vsel %vm2263, %v2229, 0
      %v2286 = vsel %vm2263, %v2230, 0
      %v2289 = vsel %vm2263, %v2231, 0
      %v2292 = vsel %vm2263, %v2232, 0
      %v2295 = vsel %vm2263, %v2233, 0
      %v2298 = vsel %vm2263, %v2234, 0
      %v2301 = vsel %vm2263, %v2235, 0
      %v2304 = vsel %vm2263, %v2236, 0
      %v2307 = vsel %vm2263, %v2237, 0
      %v2310 = vsel %vm2263, %v2238, 0
      %vm2312 = vcmask 1041408
      %v2314 = vsel %vm2312, %v2260, 0
      %2316 = vmatpush.bf16.msra.mxu0 0
      %2317 = vmatpush.bf16.msra.mxu0 0
      %2318 = vmatpush.bf16.msra.mxu0 0
      %2319 = vmatpush.bf16.msra.mxu0 0
      %2320 = vmatpush.bf16.msra.mxu0 0
      %2321 = vmatpush.bf16.msra.mxu0 %v2314
      %2322 = vmatpush.bf16.msra.mxu0 %v2259
      %2323 = vmatpush.bf16.msra.mxu0 %v2258
      %2324 = vmatmul.bf16.gmra.mxu0 %v2265
      %v2325 = vpop.f32.mrf.mxu0
      %v2326 = vadd.f32 %v2246, %v2325
      %v2327 = vpop.f32.mrf.mxu0
      %v2328 = vadd.f32 %v2246, %v2327
      %2329 = vmatmul.bf16.gmra.mxu0 %v2268
      %v2330 = vpop.f32.mrf.mxu0
      %v2331 = vadd.f32 %v2246, %v2330
      %v2332 = vpop.f32.mrf.mxu0
      %v2333 = vadd.f32 %v2246, %v2332
      %2334 = vmatmul.bf16.gmra.mxu0 %v2271
      %v2335 = vpop.f32.mrf.mxu0
      %v2336 = vadd.f32 %v2246, %v2335
      %v2337 = vpop.f32.mrf.mxu0
      %v2338 = vadd.f32 %v2246, %v2337
      %2339 = vmatmul.bf16.gmra.mxu0 %v2274
      %v2340 = vpop.f32.mrf.mxu0
      %v2341 = vadd.f32 %v2246, %v2340
      %v2342 = vpop.f32.mrf.mxu0
      %v2343 = vadd.f32 %v2246, %v2342
      %2344 = vmatmul.bf16.gmra.mxu0 %v2277
      %v2345 = vpop.f32.mrf.mxu0
      %v2346 = vadd.f32 %v2246, %v2345
      %v2347 = vpop.f32.mrf.mxu0
      %v2348 = vadd.f32 %v2246, %v2347
      %2349 = vmatmul.bf16.gmra.mxu0 %v2280
      %v2350 = vpop.f32.mrf.mxu0
      %v2351 = vadd.f32 %v2246, %v2350
      %v2352 = vpop.f32.mrf.mxu0
      %v2353 = vadd.f32 %v2246, %v2352
      %2354 = vmatmul.bf16.gmra.mxu0 %v2283
      %v2355 = vpop.f32.mrf.mxu0
      %v2356 = vadd.f32 %v2246, %v2355
      %v2357 = vpop.f32.mrf.mxu0
      %v2358 = vadd.f32 %v2246, %v2357
      %2359 = vmatmul.bf16.gmra.mxu0 %v2286
      %v2360 = vpop.f32.mrf.mxu0
      %v2361 = vadd.f32 %v2246, %v2360
      %v2362 = vpop.f32.mrf.mxu0
      %v2363 = vadd.f32 %v2246, %v2362
      %2364 = vmatmul.bf16.gmra.mxu0 %v2289
      %v2365 = vpop.f32.mrf.mxu0
      %v2366 = vadd.f32 %v2246, %v2365
      %v2367 = vpop.f32.mrf.mxu0
      %v2368 = vadd.f32 %v2246, %v2367
      %2369 = vmatmul.bf16.gmra.mxu0 %v2292
      %v2370 = vpop.f32.mrf.mxu0
      %v2371 = vadd.f32 %v2246, %v2370
      %v2372 = vpop.f32.mrf.mxu0
      %v2373 = vadd.f32 %v2246, %v2372
      %2374 = vmatmul.bf16.gmra.mxu0 %v2295
      %v2375 = vpop.f32.mrf.mxu0
      %v2376 = vadd.f32 %v2246, %v2375
      %v2377 = vpop.f32.mrf.mxu0
      %v2378 = vadd.f32 %v2246, %v2377
      %2379 = vmatmul.bf16.gmra.mxu0 %v2298
      %v2380 = vpop.f32.mrf.mxu0
      %v2381 = vadd.f32 %v2246, %v2380
      %v2382 = vpop.f32.mrf.mxu0
      %v2383 = vadd.f32 %v2246, %v2382
      %2384 = vmatmul.bf16.gmra.mxu0 %v2301
      %v2385 = vpop.f32.mrf.mxu0
      %v2386 = vadd.f32 %v2246, %v2385
      %v2387 = vpop.f32.mrf.mxu0
      %v2388 = vadd.f32 %v2246, %v2387
      %2389 = vmatmul.bf16.gmra.mxu0 %v2304
      %v2390 = vpop.f32.mrf.mxu0
      %v2391 = vadd.f32 %v2246, %v2390
      %v2392 = vpop.f32.mrf.mxu0
      %v2393 = vadd.f32 %v2246, %v2392
      %2394 = vmatmul.bf16.gmra.mxu0 %v2307
      %v2395 = vpop.f32.mrf.mxu0
      %v2396 = vadd.f32 %v2246, %v2395
      %v2397 = vpop.f32.mrf.mxu0
      %v2398 = vadd.f32 %v2246, %v2397
      %2399 = vmatmul.bf16.gmra.mxu0 %v2310
      %v2400 = vpop.f32.mrf.mxu0
      %v2401 = vadd.f32 %v2246, %v2400
      %v2402 = vpop.f32.mrf.mxu0
      %v2403 = vadd.f32 %v2246, %v2402
      %2404 = vdwg.mxu0
      %v2405 = vmax.f32 %v2326, 0.0
      %v2406 = vmax.f32 %v2328, 0.0
      %v2407 = vmax.f32 %v2331, 0.0
      %v2408 = vmax.f32 %v2333, 0.0
      %v2409 = vmax.f32 %v2336, 0.0
      %v2410 = vmax.f32 %v2338, 0.0
      %v2411 = vmax.f32 %v2341, 0.0
      %v2412 = vmax.f32 %v2343, 0.0
      %v2413 = vmax.f32 %v2346, 0.0
      %v2414 = vmax.f32 %v2348, 0.0
      %v2415 = vmax.f32 %v2351, 0.0
      %v2416 = vmax.f32 %v2353, 0.0
      %v2417 = vmax.f32 %v2356, 0.0
      %v2418 = vmax.f32 %v2358, 0.0
      %v2419 = vmax.f32 %v2361, 0.0
      %v2420 = vmax.f32 %v2363, 0.0
      %v2421 = vmax.f32 %v2366, 0.0
      %v2422 = vmax.f32 %v2368, 0.0
      %v2423 = vmax.f32 %v2371, 0.0
      %v2424 = vmax.f32 %v2373, 0.0
      %v2425 = vmax.f32 %v2376, 0.0
      %v2426 = vmax.f32 %v2378, 0.0
      %v2427 = vmax.f32 %v2381, 0.0
      %v2428 = vmax.f32 %v2383, 0.0
      %v2429 = vmax.f32 %v2386, 0.0
      %v2430 = vmax.f32 %v2388, 0.0
      %v2431 = vmax.f32 %v2391, 0.0
      %v2432 = vmax.f32 %v2393, 0.0
      %v2433 = vmax.f32 %v2396, 0.0
      %v2434 = vmax.f32 %v2398, 0.0
      %v2435 = vmax.f32 %v2401, 0.0
      %v2436 = vmax.f32 %v2403, 0.0
      %2437 = vst.msk [vmem:[#allocation3] sm:$0xff] %vm2058, 0.0
      %2438 = vst.msk [vmem:[#allocation3 + $0x8] sm:$0xff] %vm2058, 0.0
      %vm2439 = vcmask 123904
      %2440 = vst.msk [vmem:[#allocation3 + $0x10] sm:$0x3] %vm2439, 0.0
      %s2441 = scalar_lea.vmem [#allocation3], 408
      %2442 = vst.msk [vmem:[%s2441] sm:$0xff] %vm2058, 0.0
      %2443 = vst.msk [vmem:[%s2441 + $0x8] sm:$0xff] %vm2058, 0.0
      %2444 = vst.msk [vmem:[%s2441 + $0x10] sm:$0x3] %vm2439, 0.0
      %vm2445 = vcmask 122880
      %2446 = vst.msk [vmem:[#allocation3] sm:$0x1] %vm2445, 0.0
      %2447 = vst.msk [vmem:[#allocation3 + $0x18] sm:$0x1] %vm2445, 0.0
      %2448 = vst.msk [vmem:[#allocation3 + $0x30] sm:$0x1] %vm2445, 0.0
      %2449 = vst.msk [vmem:[#allocation3 + $0x48] sm:$0x1] %vm2445, 0.0
      %2450 = vst.msk [vmem:[#allocation3 + $0x60] sm:$0x1] %vm2445, 0.0
      %2451 = vst.msk [vmem:[#allocation3 + $0x78] sm:$0x1] %vm2445, 0.0
      %2452 = vst.msk [vmem:[#allocation3 + $0x90] sm:$0x1] %vm2445, 0.0
      %2453 = vst.msk [vmem:[#allocation3 + $0xa8] sm:$0x1] %vm2445, 0.0
      %2454 = vst.msk [vmem:[#allocation3 + $0xc0] sm:$0x1] %vm2445, 0.0
      %2455 = vst.msk [vmem:[#allocation3 + $0xd8] sm:$0x1] %vm2445, 0.0
      %2456 = vst.msk [vmem:[#allocation3 + $0xf0] sm:$0x1] %vm2445, 0.0
      %2457 = vst.msk [vmem:[#allocation3 + $0x108] sm:$0x1] %vm2445, 0.0
      %2458 = vst.msk [vmem:[#allocation3 + $0x120] sm:$0x1] %vm2445, 0.0
      %2459 = vst.msk [vmem:[#allocation3 + $0x138] sm:$0x1] %vm2445, 0.0
      %2460 = vst.msk [vmem:[#allocation3 + $0x150] sm:$0x1] %vm2445, 0.0
      %2461 = vst.msk [vmem:[#allocation3 + $0x168] sm:$0x1] %vm2445, 0.0
      %2462 = vst.msk [vmem:[#allocation3 + $0x180] sm:$0x1] %vm2445, 0.0
      %2463 = vst.msk [vmem:[#allocation3 + $0x198] sm:$0x1] %vm2445, 0.0
      %2464 = vst.msk [vmem:[#allocation3 + $0x11] sm:$0x1] %vm2445, 0.0
      %2465 = vst.msk [vmem:[#allocation3 + $0x29] sm:$0x1] %vm2445, 0.0
      %2466 = vst.msk [vmem:[#allocation3 + $0x41] sm:$0x1] %vm2445, 0.0
      %2467 = vst.msk [vmem:[#allocation3 + $0x59] sm:$0x1] %vm2445, 0.0
      %2468 = vst.msk [vmem:[#allocation3 + $0x71] sm:$0x1] %vm2445, 0.0
      %2469 = vst.msk [vmem:[#allocation3 + $0x89] sm:$0x1] %vm2445, 0.0
      %2470 = vst.msk [vmem:[#allocation3 + $0xa1] sm:$0x1] %vm2445, 0.0
      %2471 = vst.msk [vmem:[#allocation3 + $0xb9] sm:$0x1] %vm2445, 0.0
      %2472 = vst.msk [vmem:[#allocation3 + $0xd1] sm:$0x1] %vm2445, 0.0
      %2473 = vst.msk [vmem:[#allocation3 + $0xe9] sm:$0x1] %vm2445, 0.0
      %2474 = vst.msk [vmem:[#allocation3 + $0x101] sm:$0x1] %vm2445, 0.0
      %2475 = vst.msk [vmem:[#allocation3 + $0x119] sm:$0x1] %vm2445, 0.0
      %2476 = vst.msk [vmem:[#allocation3 + $0x131] sm:$0x1] %vm2445, 0.0
      %2477 = vst.msk [vmem:[#allocation3 + $0x149] sm:$0x1] %vm2445, 0.0
      %2478 = vst.msk [vmem:[#allocation3 + $0x161] sm:$0x1] %vm2445, 0.0
      %2479 = vst.msk [vmem:[#allocation3 + $0x179] sm:$0x1] %vm2445, 0.0
      %2480 = vst.msk [vmem:[#allocation3 + $0x191] sm:$0x1] %vm2445, 0.0
      %2481 = vst.msk [vmem:[#allocation3 + $0x1a9] sm:$0x1] %vm2445, 0.0
      %s2482 = scalar_lea.vmem [#allocation3], 24
      %2483 = vst.msk [vmem:[%s2482 + $0x1] sm:$0xff] %vm2058, %v2405
      %2484 = vst.msk [vmem:[%s2482 + $0x9] sm:$0xff] %vm2058, %v2406
      %2485 = vst.msk [vmem:[%s2482 + $0x19] sm:$0xff] %vm2058, %v2407
      %2486 = vst.msk [vmem:[%s2482 + $0x21] sm:$0xff] %vm2058, %v2408
      %2487 = vst.msk [vmem:[%s2482 + $0x31] sm:$0xff] %vm2058, %v2409
      %2488 = vst.msk [vmem:[%s2482 + $0x39] sm:$0xff] %vm2058, %v2410
      %2489 = vst.msk [vmem:[%s2482 + $0x49] sm:$0xff] %vm2058, %v2411
      %2490 = vst.msk [vmem:[%s2482 + $0x51] sm:$0xff] %vm2058, %v2412
      %2491 = vst.msk [vmem:[%s2482 + $0x61] sm:$0xff] %vm2058, %v2413
      %2492 = vst.msk [vmem:[%s2482 + $0x69] sm:$0xff] %vm2058, %v2414
      %2493 = vst.msk [vmem:[%s2482 + $0x79] sm:$0xff] %vm2058, %v2415
      %2494 = vst.msk [vmem:[%s2482 + $0x81] sm:$0xff] %vm2058, %v2416
      %2495 = vst.msk [vmem:[%s2482 + $0x91] sm:$0xff] %vm2058, %v2417
      %2496 = vst.msk [vmem:[%s2482 + $0x99] sm:$0xff] %vm2058, %v2418
      %2497 = vst.msk [vmem:[%s2482 + $0xa9] sm:$0xff] %vm2058, %v2419
      %2498 = vst.msk [vmem:[%s2482 + $0xb1] sm:$0xff] %vm2058, %v2420
      %2499 = vst.msk [vmem:[%s2482 + $0xc1] sm:$0xff] %vm2058, %v2421
      %2500 = vst.msk [vmem:[%s2482 + $0xc9] sm:$0xff] %vm2058, %v2422
      %2501 = vst.msk [vmem:[%s2482 + $0xd9] sm:$0xff] %vm2058, %v2423
      %2502 = vst.msk [vmem:[%s2482 + $0xe1] sm:$0xff] %vm2058, %v2424
      %2503 = vst.msk [vmem:[%s2482 + $0xf1] sm:$0xff] %vm2058, %v2425
      %2504 = vst.msk [vmem:[%s2482 + $0xf9] sm:$0xff] %vm2058, %v2426
      %2505 = vst.msk [vmem:[%s2482 + $0x109] sm:$0xff] %vm2058, %v2427
      %2506 = vst.msk [vmem:[%s2482 + $0x111] sm:$0xff] %vm2058, %v2428
      %2507 = vst.msk [vmem:[%s2482 + $0x121] sm:$0xff] %vm2058, %v2429
      %2508 = vst.msk [vmem:[%s2482 + $0x129] sm:$0xff] %vm2058, %v2430
      %2509 = vst.msk [vmem:[%s2482 + $0x139] sm:$0xff] %vm2058, %v2431
      %2510 = vst.msk [vmem:[%s2482 + $0x141] sm:$0xff] %vm2058, %v2432
      %2511 = vst.msk [vmem:[%s2482 + $0x151] sm:$0xff] %vm2058, %v2433
      %2512 = vst.msk [vmem:[%s2482 + $0x159] sm:$0xff] %vm2058, %v2434
      %2513 = vst.msk [vmem:[%s2482 + $0x169] sm:$0xff] %vm2058, %v2435
      %2514 = vst.msk [vmem:[%s2482 + $0x171] sm:$0xff] %vm2058, %v2436
      %v2515 = vld [vmem:[#allocation3] ss:$2 sm:$0xff]
      %s2516 = scalar_lea.vmem [#allocation3], 48
      %v2517 = vld [vmem:[%s2516] ss:$2 sm:$0xff]
      %s2518 = scalar_lea.vmem [#allocation3], 96
      %v2519 = vld [vmem:[%s2518] ss:$2 sm:$0xff]
      %s2520 = scalar_lea.vmem [#allocation3], 144
      %v2521 = vld [vmem:[%s2520] ss:$2 sm:$0xff]
      %s2522 = scalar_lea.vmem [#allocation3], 192
      %v2523 = vld [vmem:[%s2522] ss:$2 sm:$0xff]
      %s2524 = scalar_lea.vmem [#allocation3], 240
      %v2525 = vld [vmem:[%s2524] ss:$2 sm:$0xff]
      %s2526 = scalar_lea.vmem [#allocation3], 288
      %v2527 = vld [vmem:[%s2526] ss:$2 sm:$0xff]
      %s2528 = scalar_lea.vmem [#allocation3], 336
      %v2529 = vld [vmem:[%s2528] ss:$2 sm:$0xff]
      %s2530 = scalar_lea.vmem [#allocation3], 1
      %v2531 = vld [vmem:[%s2530] ss:$2 sm:$0xff]
      %s2532 = scalar_lea.vmem [#allocation3], 49
      %v2533 = vld [vmem:[%s2532] ss:$2 sm:$0xff]
      %s2534 = scalar_lea.vmem [#allocation3], 97
      %v2535 = vld [vmem:[%s2534] ss:$2 sm:$0xff]
      %s2536 = scalar_lea.vmem [#allocation3], 145
      %v2537 = vld [vmem:[%s2536] ss:$2 sm:$0xff]
      %s2538 = scalar_lea.vmem [#allocation3], 193
      %v2539 = vld [vmem:[%s2538] ss:$2 sm:$0xff]
      %s2540 = scalar_lea.vmem [#allocation3], 241
      %v2541 = vld [vmem:[%s2540] ss:$2 sm:$0xff]
      %s2542 = scalar_lea.vmem [#allocation3], 289
      %v2543 = vld [vmem:[%s2542] ss:$2 sm:$0xff]
      %s2544 = scalar_lea.vmem [#allocation3], 337
      %v2545 = vld [vmem:[%s2544] ss:$2 sm:$0xff]
      %s2546 = scalar_lea.vmem [#allocation3], 2
      %v2547 = vld [vmem:[%s2546] ss:$2 sm:$0xff]
      %s2548 = scalar_lea.vmem [#allocation3], 50
      %v2549 = vld [vmem:[%s2548] ss:$2 sm:$0xff]
      %s2550 = scalar_lea.vmem [#allocation3], 98
      %v2551 = vld [vmem:[%s2550] ss:$2 sm:$0xff]
      %s2552 = scalar_lea.vmem [#allocation3], 146
      %v2553 = vld [vmem:[%s2552] ss:$2 sm:$0xff]
      %s2554 = scalar_lea.vmem [#allocation3], 194
      %v2555 = vld [vmem:[%s2554] ss:$2 sm:$0xff]
      %s2556 = scalar_lea.vmem [#allocation3], 242
      %v2557 = vld [vmem:[%s2556] ss:$2 sm:$0xff]
      %s2558 = scalar_lea.vmem [#allocation3], 290
      %v2559 = vld [vmem:[%s2558] ss:$2 sm:$0xff]
      %s2560 = scalar_lea.vmem [#allocation3], 338
      %v2561 = vld [vmem:[%s2560] ss:$2 sm:$0xff]
      %v2562 = vld [vmem:[%s2482] ss:$2 sm:$0xff]
      %s2563 = scalar_lea.vmem %s2482, 48 [#allocation3]
      %v2564 = vld [vmem:[%s2563] ss:$2 sm:$0xff]
      %s2565 = scalar_lea.vmem %s2482, 96 [#allocation3]
      %v2566 = vld [vmem:[%s2565] ss:$2 sm:$0xff]
      %s2567 = scalar_lea.vmem %s2482, 144 [#allocation3]
      %v2568 = vld [vmem:[%s2567] ss:$2 sm:$0xff]
      %s2569 = scalar_lea.vmem %s2482, 192 [#allocation3]
      %v2570 = vld [vmem:[%s2569] ss:$2 sm:$0xff]
      %s2571 = scalar_lea.vmem %s2482, 240 [#allocation3]
      %v2572 = vld [vmem:[%s2571] ss:$2 sm:$0xff]
      %s2573 = scalar_lea.vmem %s2482, 288 [#allocation3]
      %v2574 = vld [vmem:[%s2573] ss:$2 sm:$0xff]
      %s2575 = scalar_lea.vmem %s2482, 336 [#allocation3]
      %v2576 = vld [vmem:[%s2575] ss:$2 sm:$0xff]
      %s2577 = scalar_lea.vmem %s2482, 1 [#allocation3]
      %v2578 = vld [vmem:[%s2577] ss:$2 sm:$0xff]
      %s2579 = scalar_lea.vmem %s2482, 49 [#allocation3]
      %v2580 = vld [vmem:[%s2579] ss:$2 sm:$0xff]
      %s2581 = scalar_lea.vmem %s2482, 97 [#allocation3]
      %v2582 = vld [vmem:[%s2581] ss:$2 sm:$0xff]
      %s2583 = scalar_lea.vmem %s2482, 145 [#allocation3]
      %v2584 = vld [vmem:[%s2583] ss:$2 sm:$0xff]
      %s2585 = scalar_lea.vmem %s2482, 193 [#allocation3]
      %v2586 = vld [vmem:[%s2585] ss:$2 sm:$0xff]
      %s2587 = scalar_lea.vmem %s2482, 241 [#allocation3]
      %v2588 = vld [vmem:[%s2587] ss:$2 sm:$0xff]
      %s2589 = scalar_lea.vmem %s2482, 289 [#allocation3]
      %v2590 = vld [vmem:[%s2589] ss:$2 sm:$0xff]
      %s2591 = scalar_lea.vmem %s2482, 337 [#allocation3]
      %v2592 = vld [vmem:[%s2591] ss:$2 sm:$0xff]
      %s2593 = scalar_lea.vmem %s2482, 2 [#allocation3]
      %v2594 = vld [vmem:[%s2593] ss:$2 sm:$0xff]
      %s2595 = scalar_lea.vmem %s2482, 50 [#allocation3]
      %v2596 = vld [vmem:[%s2595] ss:$2 sm:$0xff]
      %s2597 = scalar_lea.vmem %s2482, 98 [#allocation3]
      %v2598 = vld [vmem:[%s2597] ss:$2 sm:$0xff]
      %s2599 = scalar_lea.vmem %s2482, 146 [#allocation3]
      %v2600 = vld [vmem:[%s2599] ss:$2 sm:$0xff]
      %s2601 = scalar_lea.vmem %s2482, 194 [#allocation3]
      %v2602 = vld [vmem:[%s2601] ss:$2 sm:$0xff]
      %s2603 = scalar_lea.vmem %s2482, 242 [#allocation3]
      %v2604 = vld [vmem:[%s2603] ss:$2 sm:$0xff]
      %s2605 = scalar_lea.vmem %s2482, 290 [#allocation3]
      %v2606 = vld [vmem:[%s2605] ss:$2 sm:$0xff]
      %s2607 = scalar_lea.vmem %s2482, 338 [#allocation3]
      %v2608 = vld [vmem:[%s2607] ss:$2 sm:$0xff]
      %s2609 = scalar_lea.vmem [#allocation3], 48
      %v2610 = vld [vmem:[%s2609] ss:$2 sm:$0xff]
      %s2611 = scalar_lea.vmem %s2609, 48 [#allocation3]
      %v2612 = vld [vmem:[%s2611] ss:$2 sm:$0xff]
      %s2613 = scalar_lea.vmem %s2609, 96 [#allocation3]
      %v2614 = vld [vmem:[%s2613] ss:$2 sm:$0xff]
      %s2615 = scalar_lea.vmem %s2609, 144 [#allocation3]
      %v2616 = vld [vmem:[%s2615] ss:$2 sm:$0xff]
      %s2617 = scalar_lea.vmem %s2609, 192 [#allocation3]
      %v2618 = vld [vmem:[%s2617] ss:$2 sm:$0xff]
      %s2619 = scalar_lea.vmem %s2609, 240 [#allocation3]
      %v2620 = vld [vmem:[%s2619] ss:$2 sm:$0xff]
      %s2621 = scalar_lea.vmem %s2609, 288 [#allocation3]
      %v2622 = vld [vmem:[%s2621] ss:$2 sm:$0xff]
      %s2623 = scalar_lea.vmem %s2609, 336 [#allocation3]
      %v2624 = vld [vmem:[%s2623] ss:$2 sm:$0xff]
      %s2625 = scalar_lea.vmem %s2609, 1 [#allocation3]
      %v2626 = vld [vmem:[%s2625] ss:$2 sm:$0xff]
      %s2627 = scalar_lea.vmem %s2609, 49 [#allocation3]
      %v2628 = vld [vmem:[%s2627] ss:$2 sm:$0xff]
      %s2629 = scalar_lea.vmem %s2609, 97 [#allocation3]
      %v2630 = vld [vmem:[%s2629] ss:$2 sm:$0xff]
      %s2631 = scalar_lea.vmem %s2609, 145 [#allocation3]
      %v2632 = vld [vmem:[%s2631] ss:$2 sm:$0xff]
      %s2633 = scalar_lea.vmem %s2609, 193 [#allocation3]
      %v2634 = vld [vmem:[%s2633] ss:$2 sm:$0xff]
      %s2635 = scalar_lea.vmem %s2609, 241 [#allocation3]
      %v2636 = vld [vmem:[%s2635] ss:$2 sm:$0xff]
      %s2637 = scalar_lea.vmem %s2609, 289 [#allocation3]
      %v2638 = vld [vmem:[%s2637] ss:$2 sm:$0xff]
      %s2639 = scalar_lea.vmem %s2609, 337 [#allocation3]
      %v2640 = vld [vmem:[%s2639] ss:$2 sm:$0xff]
      %s2641 = scalar_lea.vmem %s2609, 2 [#allocation3]
      %v2642 = vld [vmem:[%s2641] ss:$2 sm:$0xff]
      %s2643 = scalar_lea.vmem %s2609, 50 [#allocation3]
      %v2644 = vld [vmem:[%s2643] ss:$2 sm:$0xff]
      %s2645 = scalar_lea.vmem %s2609, 98 [#allocation3]
      %v2646 = vld [vmem:[%s2645] ss:$2 sm:$0xff]
      %s2647 = scalar_lea.vmem %s2609, 146 [#allocation3]
      %v2648 = vld [vmem:[%s2647] ss:$2 sm:$0xff]
      %s2649 = scalar_lea.vmem %s2609, 194 [#allocation3]
      %v2650 = vld [vmem:[%s2649] ss:$2 sm:$0xff]
      %s2651 = scalar_lea.vmem %s2609, 242 [#allocation3]
      %v2652 = vld [vmem:[%s2651] ss:$2 sm:$0xff]
      %s2653 = scalar_lea.vmem %s2609, 290 [#allocation3]
      %v2654 = vld [vmem:[%s2653] ss:$2 sm:$0xff]
      %s2655 = scalar_lea.vmem %s2609, 338 [#allocation3]
      %v2656 = vld [vmem:[%s2655] ss:$2 sm:$0xff]
      %2665 = vrot.lane.b32.xlu0 %v2531, 16
      %v2666 = vpop.permute.xlu0 %2665
      %2667 = vrot.lane.b32.xlu0 %v2533, 16
      %v2668 = vpop.permute.xlu0 %2667
      %2669 = vrot.lane.b32.xlu0 %v2535, 16
      %v2670 = vpop.permute.xlu0 %2669
      %2671 = vrot.lane.b32.xlu0 %v2537, 16
      %v2672 = vpop.permute.xlu0 %2671
      %2673 = vrot.lane.b32.xlu0 %v2539, 16
      %v2674 = vpop.permute.xlu0 %2673
      %2675 = vrot.lane.b32.xlu0 %v2541, 16
      %v2676 = vpop.permute.xlu0 %2675
      %2677 = vrot.lane.b32.xlu0 %v2543, 16
      %v2678 = vpop.permute.xlu0 %2677
      %2679 = vrot.lane.b32.xlu0 %v2545, 16
      %v2680 = vpop.permute.xlu0 %2679
      %2697 = vrot.lane.b32.xlu0 %v2547, 32
      %v2698 = vpop.permute.xlu0 %2697
      %2699 = vrot.lane.b32.xlu0 %v2549, 32
      %v2700 = vpop.permute.xlu0 %2699
      %2701 = vrot.lane.b32.xlu0 %v2551, 32
      %v2702 = vpop.permute.xlu0 %2701
      %2703 = vrot.lane.b32.xlu0 %v2553, 32
      %v2704 = vpop.permute.xlu0 %2703
      %2705 = vrot.lane.b32.xlu0 %v2555, 32
      %v2706 = vpop.permute.xlu0 %2705
      %2707 = vrot.lane.b32.xlu0 %v2557, 32
      %v2708 = vpop.permute.xlu0 %2707
      %2709 = vrot.lane.b32.xlu0 %v2559, 32
      %v2710 = vpop.permute.xlu0 %2709
      %2711 = vrot.lane.b32.xlu0 %v2561, 32
      %v2712 = vpop.permute.xlu0 %2711
      %2729 = vrot.lane.b32.xlu0 %v2562, 48
      %v2730 = vpop.permute.xlu0 %2729
      %2731 = vrot.lane.b32.xlu0 %v2564, 48
      %v2732 = vpop.permute.xlu0 %2731
      %2733 = vrot.lane.b32.xlu0 %v2566, 48
      %v2734 = vpop.permute.xlu0 %2733
      %2735 = vrot.lane.b32.xlu0 %v2568, 48
      %v2736 = vpop.permute.xlu0 %2735
      %2737 = vrot.lane.b32.xlu0 %v2570, 48
      %v2738 = vpop.permute.xlu0 %2737
      %2739 = vrot.lane.b32.xlu0 %v2572, 48
      %v2740 = vpop.permute.xlu0 %2739
      %2741 = vrot.lane.b32.xlu0 %v2574, 48
      %v2742 = vpop.permute.xlu0 %2741
      %2743 = vrot.lane.b32.xlu0 %v2576, 48
      %v2744 = vpop.permute.xlu0 %2743
      %2761 = vrot.lane.b32.xlu0 %v2578, 64
      %v2762 = vpop.permute.xlu0 %2761
      %2763 = vrot.lane.b32.xlu0 %v2580, 64
      %v2764 = vpop.permute.xlu0 %2763
      %2765 = vrot.lane.b32.xlu0 %v2582, 64
      %v2766 = vpop.permute.xlu0 %2765
      %2767 = vrot.lane.b32.xlu0 %v2584, 64
      %v2768 = vpop.permute.xlu0 %2767
      %2769 = vrot.lane.b32.xlu0 %v2586, 64
      %v2770 = vpop.permute.xlu0 %2769
      %2771 = vrot.lane.b32.xlu0 %v2588, 64
      %v2772 = vpop.permute.xlu0 %2771
      %2773 = vrot.lane.b32.xlu0 %v2590, 64
      %v2774 = vpop.permute.xlu0 %2773
      %2775 = vrot.lane.b32.xlu0 %v2592, 64
      %v2776 = vpop.permute.xlu0 %2775
      %2793 = vrot.lane.b32.xlu0 %v2594, 80
      %v2794 = vpop.permute.xlu0 %2793
      %2795 = vrot.lane.b32.xlu0 %v2596, 80
      %v2796 = vpop.permute.xlu0 %2795
      %2797 = vrot.lane.b32.xlu0 %v2598, 80
      %v2798 = vpop.permute.xlu0 %2797
      %2799 = vrot.lane.b32.xlu0 %v2600, 80
      %v2800 = vpop.permute.xlu0 %2799
      %2801 = vrot.lane.b32.xlu0 %v2602, 80
      %v2802 = vpop.permute.xlu0 %2801
      %2803 = vrot.lane.b32.xlu0 %v2604, 80
      %v2804 = vpop.permute.xlu0 %2803
      %2805 = vrot.lane.b32.xlu0 %v2606, 80
      %v2806 = vpop.permute.xlu0 %2805
      %2807 = vrot.lane.b32.xlu0 %v2608, 80
      %v2808 = vpop.permute.xlu0 %2807
      %2825 = vrot.lane.b32.xlu0 %v2610, 96
      %v2826 = vpop.permute.xlu0 %2825
      %2827 = vrot.lane.b32.xlu0 %v2612, 96
      %v2828 = vpop.permute.xlu0 %2827
      %2829 = vrot.lane.b32.xlu0 %v2614, 96
      %v2830 = vpop.permute.xlu0 %2829
      %2831 = vrot.lane.b32.xlu0 %v2616, 96
      %v2832 = vpop.permute.xlu0 %2831
      %2833 = vrot.lane.b32.xlu0 %v2618, 96
      %v2834 = vpop.permute.xlu0 %2833
      %2835 = vrot.lane.b32.xlu0 %v2620, 96
      %v2836 = vpop.permute.xlu0 %2835
      %2837 = vrot.lane.b32.xlu0 %v2622, 96
      %v2838 = vpop.permute.xlu0 %2837
      %2839 = vrot.lane.b32.xlu0 %v2624, 96
      %v2840 = vpop.permute.xlu0 %2839
      %2857 = vrot.lane.b32.xlu0 %v2626, 112
      %v2858 = vpop.permute.xlu0 %2857
      %2859 = vrot.lane.b32.xlu0 %v2628, 112
      %v2860 = vpop.permute.xlu0 %2859
      %2861 = vrot.lane.b32.xlu0 %v2630, 112
      %v2862 = vpop.permute.xlu0 %2861
      %2863 = vrot.lane.b32.xlu0 %v2632, 112
      %v2864 = vpop.permute.xlu0 %2863
      %2865 = vrot.lane.b32.xlu0 %v2634, 112
      %v2866 = vpop.permute.xlu0 %2865
      %2867 = vrot.lane.b32.xlu0 %v2636, 112
      %v2868 = vpop.permute.xlu0 %2867
      %2869 = vrot.lane.b32.xlu0 %v2638, 112
      %v2870 = vpop.permute.xlu0 %2869
      %2871 = vrot.lane.b32.xlu0 %v2640, 112
      %v2872 = vpop.permute.xlu0 %2871
      %v2881 = vsel %vm2058, %v2515, %v2666
      %v2882 = vsel %vm2058, %v2517, %v2668
      %v2883 = vsel %vm2058, %v2519, %v2670
      %v2884 = vsel %vm2058, %v2521, %v2672
      %v2885 = vsel %vm2058, %v2523, %v2674
      %v2886 = vsel %vm2058, %v2525, %v2676
      %v2887 = vsel %vm2058, %v2527, %v2678
      %v2888 = vsel %vm2058, %v2529, %v2680
      %v2889 = vsel %vm2190, %v2881, %v2698
      %v2890 = vsel %vm2190, %v2882, %v2700
      %v2891 = vsel %vm2190, %v2883, %v2702
      %v2892 = vsel %vm2190, %v2884, %v2704
      %v2893 = vsel %vm2190, %v2885, %v2706
      %v2894 = vsel %vm2190, %v2886, %v2708
      %v2895 = vsel %vm2190, %v2887, %v2710
      %v2896 = vsel %vm2190, %v2888, %v2712
      %vm2897 = vcmask 392192
      %v2898 = vsel %vm2897, %v2889, %v2730
      %v2899 = vsel %vm2897, %v2890, %v2732
      %v2900 = vsel %vm2897, %v2891, %v2734
      %v2901 = vsel %vm2897, %v2892, %v2736
      %v2902 = vsel %vm2897, %v2893, %v2738
      %v2903 = vsel %vm2897, %v2894, %v2740
      %v2904 = vsel %vm2897, %v2895, %v2742
      %v2905 = vsel %vm2897, %v2896, %v2744
      %vm2906 = vcmask 523264
      %v2907 = vsel %vm2906, %v2898, %v2762
      %v2908 = vsel %vm2906, %v2899, %v2764
      %v2909 = vsel %vm2906, %v2900, %v2766
      %v2910 = vsel %vm2906, %v2901, %v2768
      %v2911 = vsel %vm2906, %v2902, %v2770
      %v2912 = vsel %vm2906, %v2903, %v2772
      %v2913 = vsel %vm2906, %v2904, %v2774
      %v2914 = vsel %vm2906, %v2905, %v2776
      %vm2915 = vcmask 654336
      %v2916 = vsel %vm2915, %v2907, %v2794
      %v2917 = vsel %vm2915, %v2908, %v2796
      %v2918 = vsel %vm2915, %v2909, %v2798
      %v2919 = vsel %vm2915, %v2910, %v2800
      %v2920 = vsel %vm2915, %v2911, %v2802
      %v2921 = vsel %vm2915, %v2912, %v2804
      %v2922 = vsel %vm2915, %v2913, %v2806
      %v2923 = vsel %vm2915, %v2914, %v2808
      %vm2924 = vcmask 785408
      %v2925 = vsel %vm2924, %v2916, %v2826
      %v2926 = vsel %vm2924, %v2917, %v2828
      %v2927 = vsel %vm2924, %v2918, %v2830
      %v2928 = vsel %vm2924, %v2919, %v2832
      %v2929 = vsel %vm2924, %v2920, %v2834
      %v2930 = vsel %vm2924, %v2921, %v2836
      %v2931 = vsel %vm2924, %v2922, %v2838
      %v2932 = vsel %vm2924, %v2923, %v2840
      %vm2933 = vcmask 916480
      %v2934 = vsel %vm2933, %v2925, %v2858
      %v2935 = vsel %vm2933, %v2926, %v2860
      %v2936 = vsel %vm2933, %v2927, %v2862
      %v2937 = vsel %vm2933, %v2928, %v2864
      %v2938 = vsel %vm2933, %v2929, %v2866
      %v2939 = vsel %vm2933, %v2930, %v2868
      %v2940 = vsel %vm2933, %v2931, %v2870
      %v2941 = vsel %vm2933, %v2932, %v2872
      %v2942 = vpack.c.bf16 %v2935, %v2934
      %v2943 = vpack.c.bf16 %v2644, %v2642
      %v2944 = vpack.c.bf16 %v2937, %v2936
      %v2945 = vpack.c.bf16 %v2648, %v2646
      %v2946 = vpack.c.bf16 %v2939, %v2938
      %v2947 = vpack.c.bf16 %v2652, %v2650
      %v2948 = vpack.c.bf16 %v2941, %v2940
      %v2949 = vpack.c.bf16 %v2656, %v2654
      %v2950 = vld [vmem:[%s3] sm:$0xf]
      %v2951 = vld [vmem:[%s3 + $0x4] sm:$0xf]
      %v2952 = vld [vmem:[%s3 + $0x8] sm:$0xf]
      %v2953 = vld [vmem:[%s3 + $0xc] sm:$0xf]
      %v2954 = vld [vmem:[%s3 + $0x10] sm:$0xf]
      %v2955 = vld [vmem:[%s3 + $0x14] sm:$0xf]
      %v2956 = vld [vmem:[%s3 + $0x18] sm:$0xf]
      %v2957 = vld [vmem:[%s3 + $0x1c] sm:$0xf]
      %v2958 = vld [vmem:[%s3 + $0x20] sm:$0xf]
      %v2959 = vld [vmem:[%s3 + $0x24] sm:$0xf]
      %v2960 = vld [vmem:[%s3 + $0x28] sm:$0xf]
      %v2961 = vld [vmem:[%s3 + $0x2c] sm:$0xf]
      %v2962 = vld [vmem:[%s3 + $0x30] sm:$0xf]
      %v2963 = vld [vmem:[%s3 + $0x34] sm:$0xf]
      %v2964 = vld [vmem:[%s3 + $0x38] sm:$0xf]
      %v2965 = vld [vmem:[%s3 + $0x3c] sm:$0xf]
      %v2966 = vld [vmem:[%s3 + $0x40] sm:$0xf]
      %v2967 = vld [vmem:[%s3 + $0x44] sm:$0xf]
      %v2968 = vld [vmem:[%s4] sm:$0x1]
      %v2970 = vperm.slane %v2968, 0
      %v2990 = vunpack.c.l.b16 %v2950
      %v2991 = vunpack.c.l.b16 %v2951
      %v2992 = vunpack.c.l.b16 %v2952
      %v2993 = vunpack.c.l.b16 %v2953
      %v2994 = vunpack.c.l.b16 %v2954
      %v2995 = vunpack.c.l.b16 %v2955
      %v2996 = vunpack.c.l.b16 %v2956
      %v2997 = vunpack.c.l.b16 %v2957
      %v2998 = vunpack.c.l.b16 %v2958
      %v2999 = vunpack.c.l.b16 %v2959
      %v3000 = vunpack.c.l.b16 %v2960
      %v3001 = vunpack.c.l.b16 %v2961
      %v3002 = vunpack.c.l.b16 %v2962
      %v3003 = vunpack.c.l.b16 %v2963
      %v3004 = vunpack.c.l.b16 %v2964
      %v3005 = vunpack.c.l.b16 %v2965
      %v3006 = vunpack.c.l.b16 %v2966
      %v3007 = vunpack.c.l.b16 %v2967
      %v3008 = vpack.c.b16 %v2991, %v2990
      %v3009 = vpack.c.b16 %v2993, %v2992
      %v3010 = vpack.c.b16 %v2995, %v2994
      %v3011 = vpack.c.b16 %v2997, %v2996
      %v3012 = vpack.c.b16 %v2999, %v2998
      %v3013 = vpack.c.b16 %v3001, %v3000
      %v3014 = vpack.c.b16 %v3003, %v3002
      %v3015 = vpack.c.b16 %v3005, %v3004
      %v3016 = vpack.c.b16 %v3007, %v3006
      %v3027 = vsel %vm2058, %v2943, 0
      %v3030 = vsel %vm2058, %v2945, 0
      %v3033 = vsel %vm2058, %v2947, 0
      %v3036 = vsel %vm2058, %v2949, 0
      %3038 = vmatpush.bf16.msra.mxu0 %v3015
      %3039 = vmatpush.bf16.msra.mxu0 %v3014
      %3040 = vmatpush.bf16.msra.mxu0 %v3013
      %3041 = vmatpush.bf16.msra.mxu0 %v3012
      %3042 = vmatpush.bf16.msra.mxu0 %v3011
      %3043 = vmatpush.bf16.msra.mxu0 %v3010
      %3044 = vmatpush.bf16.msra.mxu0 %v3009
      %3045 = vmatpush.bf16.msra.mxu0 %v3008
      %3046 = vmatmul.bf16.gmra.mxu0 %v2942
      %v3047 = vpop.f32.mrf.mxu0
      %v3048 = vadd.f32 %v2970, %v3047
      %v3049 = vpop.f32.mrf.mxu0
      %v3050 = vadd.f32 %v2970, %v3049
      %3051 = vmatmul.bf16.gmra.mxu0 %v2944
      %v3052 = vpop.f32.mrf.mxu0
      %v3053 = vadd.f32 %v2970, %v3052
      %v3054 = vpop.f32.mrf.mxu0
      %v3055 = vadd.f32 %v2970, %v3054
      %3056 = vmatmul.bf16.gmra.mxu0 %v2946
      %v3057 = vpop.f32.mrf.mxu0
      %v3058 = vadd.f32 %v2970, %v3057
      %v3059 = vpop.f32.mrf.mxu0
      %v3060 = vadd.f32 %v2970, %v3059
      %3061 = vmatmul.bf16.gmra.mxu0 %v2948
      %v3062 = vpop.f32.mrf.mxu0
      %v3063 = vadd.f32 %v2970, %v3062
      %v3064 = vpop.f32.mrf.mxu0
      %v3065 = vadd.f32 %v2970, %v3064
      %3066 = vdwg.mxu0
      %3067 = vmatpush.bf16.msra.mxu0 0
      %3068 = vmatpush.bf16.msra.mxu0 0
      %3069 = vmatpush.bf16.msra.mxu0 0
      %3070 = vmatpush.bf16.msra.mxu0 0
      %3071 = vmatpush.bf16.msra.mxu0 0
      %3072 = vmatpush.bf16.msra.mxu0 0
      %3073 = vmatpush.bf16.msra.mxu0 0
      %3074 = vmatpush.bf16.msra.mxu0 %v3016
      %3075 = vmatmul.bf16.gmra.mxu0 %v3027
      %v3076 = vpop.f32.mrf.mxu0
      %v3077 = vadd.f32 %v3048, %v3076
      %v3078 = vpop.f32.mrf.mxu0
      %v3079 = vadd.f32 %v3050, %v3078
      %3080 = vmatmul.bf16.gmra.mxu0 %v3030
      %v3081 = vpop.f32.mrf.mxu0
      %v3082 = vadd.f32 %v3053, %v3081
      %v3083 = vpop.f32.mrf.mxu0
      %v3084 = vadd.f32 %v3055, %v3083
      %3085 = vmatmul.bf16.gmra.mxu0 %v3033
      %v3086 = vpop.f32.mrf.mxu0
      %v3087 = vadd.f32 %v3058, %v3086
      %v3088 = vpop.f32.mrf.mxu0
      %v3089 = vadd.f32 %v3060, %v3088
      %3090 = vmatmul.bf16.gmra.mxu0 %v3036
      %v3091 = vpop.f32.mrf.mxu0
      %v3092 = vadd.f32 %v3063, %v3091
      %v3093 = vpop.f32.mrf.mxu0
      %v3094 = vadd.f32 %v3065, %v3093
      %3095 = vdwg.mxu0
      %v3096 = vmax.f32 %v3077, 0.0
      %v3097 = vmax.f32 %v3079, 0.0
      %v3098 = vmax.f32 %v3082, 0.0
      %v3099 = vmax.f32 %v3084, 0.0
      %v3100 = vmax.f32 %v3087, 0.0
      %v3101 = vmax.f32 %v3089, 0.0
      %v3102 = vmax.f32 %v3092, 0.0
      %v3103 = vmax.f32 %v3094, 0.0
      %3104 = vst.msk [vmem:[#allocation4] sm:$0xff] %vm2190, 0.0
      %vm3105 = vcmask 254976
      %3106 = vst.msk [vmem:[#allocation4 + $0x8] sm:$0x3] %vm3105, 0.0
      %s3107 = scalar_lea.vmem [#allocation4], 144
      %3108 = vst.msk [vmem:[%s3107] sm:$0xff] %vm2190, 0.0
      %3109 = vst.msk [vmem:[%s3107 + $0x8] sm:$0x3] %vm3105, 0.0
      %vm3110 = vcmask 253952
      %3111 = vst.msk [vmem:[#allocation4] sm:$0x1] %vm3110, 0.0
      %3112 = vst.msk [vmem:[#allocation4 + $0x10] sm:$0x1] %vm3110, 0.0
      %3113 = vst.msk [vmem:[#allocation4 + $0x20] sm:$0x1] %vm3110, 0.0
      %3114 = vst.msk [vmem:[#allocation4 + $0x30] sm:$0x1] %vm3110, 0.0
      %3115 = vst.msk [vmem:[#allocation4 + $0x40] sm:$0x1] %vm3110, 0.0
      %3116 = vst.msk [vmem:[#allocation4 + $0x50] sm:$0x1] %vm3110, 0.0
      %3117 = vst.msk [vmem:[#allocation4 + $0x60] sm:$0x1] %vm3110, 0.0
      %3118 = vst.msk [vmem:[#allocation4 + $0x70] sm:$0x1] %vm3110, 0.0
      %3119 = vst.msk [vmem:[#allocation4 + $0x80] sm:$0x1] %vm3110, 0.0
      %3120 = vst.msk [vmem:[#allocation4 + $0x90] sm:$0x1] %vm3110, 0.0
      %3121 = vst.msk [vmem:[#allocation4 + $0x9] sm:$0x1] %vm3110, 0.0
      %3122 = vst.msk [vmem:[#allocation4 + $0x19] sm:$0x1] %vm3110, 0.0
      %3123 = vst.msk [vmem:[#allocation4 + $0x29] sm:$0x1] %vm3110, 0.0
      %3124 = vst.msk [vmem:[#allocation4 + $0x39] sm:$0x1] %vm3110, 0.0
      %3125 = vst.msk [vmem:[#allocation4 + $0x49] sm:$0x1] %vm3110, 0.0
      %3126 = vst.msk [vmem:[#allocation4 + $0x59] sm:$0x1] %vm3110, 0.0
      %3127 = vst.msk [vmem:[#allocation4 + $0x69] sm:$0x1] %vm3110, 0.0
      %3128 = vst.msk [vmem:[#allocation4 + $0x79] sm:$0x1] %vm3110, 0.0
      %3129 = vst.msk [vmem:[#allocation4 + $0x89] sm:$0x1] %vm3110, 0.0
      %3130 = vst.msk [vmem:[#allocation4 + $0x99] sm:$0x1] %vm3110, 0.0
      %s3131 = scalar_lea.vmem [#allocation4], 16
      %3132 = vst.msk [vmem:[%s3131 + $0x1] sm:$0xff] %vm2190, %v3096
      %3133 = vst.msk [vmem:[%s3131 + $0x11] sm:$0xff] %vm2190, %v3097
      %3134 = vst.msk [vmem:[%s3131 + $0x21] sm:$0xff] %vm2190, %v3098
      %3135 = vst.msk [vmem:[%s3131 + $0x31] sm:$0xff] %vm2190, %v3099
      %3136 = vst.msk [vmem:[%s3131 + $0x41] sm:$0xff] %vm2190, %v3100
      %3137 = vst.msk [vmem:[%s3131 + $0x51] sm:$0xff] %vm2190, %v3101
      %3138 = vst.msk [vmem:[%s3131 + $0x61] sm:$0xff] %vm2190, %v3102
      %3139 = vst.msk [vmem:[%s3131 + $0x71] sm:$0xff] %vm2190, %v3103
      %v3140 = vld [vmem:[#allocation4] sm:$0xff]
      %v3141 = vld [vmem:[#allocation4 + $0x10] sm:$0xff]
      %v3142 = vld [vmem:[#allocation4 + $0x20] sm:$0xff]
      %v3143 = vld [vmem:[#allocation4 + $0x30] sm:$0xff]
      %v3144 = vld [vmem:[#allocation4 + $0x40] sm:$0xff]
      %v3145 = vld [vmem:[#allocation4 + $0x50] sm:$0xff]
      %v3146 = vld [vmem:[#allocation4 + $0x60] sm:$0xff]
      %v3147 = vld [vmem:[#allocation4 + $0x70] sm:$0xff]
      %v3148 = vld [vmem:[#allocation4 + $0x1] sm:$0xff]
      %v3149 = vld [vmem:[#allocation4 + $0x11] sm:$0xff]
      %v3150 = vld [vmem:[#allocation4 + $0x21] sm:$0xff]
      %v3151 = vld [vmem:[#allocation4 + $0x31] sm:$0xff]
      %v3152 = vld [vmem:[#allocation4 + $0x41] sm:$0xff]
      %v3153 = vld [vmem:[#allocation4 + $0x51] sm:$0xff]
      %v3154 = vld [vmem:[#allocation4 + $0x61] sm:$0xff]
      %v3155 = vld [vmem:[#allocation4 + $0x71] sm:$0xff]
      %v3156 = vld [vmem:[#allocation4 + $0x2] sm:$0xff]
      %v3157 = vld [vmem:[#allocation4 + $0x12] sm:$0xff]
      %v3158 = vld [vmem:[#allocation4 + $0x22] sm:$0xff]
      %v3159 = vld [vmem:[#allocation4 + $0x32] sm:$0xff]
      %v3160 = vld [vmem:[#allocation4 + $0x42] sm:$0xff]
      %v3161 = vld [vmem:[#allocation4 + $0x52] sm:$0xff]
      %v3162 = vld [vmem:[#allocation4 + $0x62] sm:$0xff]
      %v3163 = vld [vmem:[#allocation4 + $0x72] sm:$0xff]
      %v3164 = vld [vmem:[%s3131] sm:$0xff]
      %v3165 = vld [vmem:[%s3131 + $0x10] sm:$0xff]
      %v3166 = vld [vmem:[%s3131 + $0x20] sm:$0xff]
      %v3167 = vld [vmem:[%s3131 + $0x30] sm:$0xff]
      %v3168 = vld [vmem:[%s3131 + $0x40] sm:$0xff]
      %v3169 = vld [vmem:[%s3131 + $0x50] sm:$0xff]
      %v3170 = vld [vmem:[%s3131 + $0x60] sm:$0xff]
      %v3171 = vld [vmem:[%s3131 + $0x70] sm:$0xff]
      %v3172 = vld [vmem:[%s3131 + $0x1] sm:$0xff]
      %v3173 = vld [vmem:[%s3131 + $0x11] sm:$0xff]
      %v3174 = vld [vmem:[%s3131 + $0x21] sm:$0xff]
      %v3175 = vld [vmem:[%s3131 + $0x31] sm:$0xff]
      %v3176 = vld [vmem:[%s3131 + $0x41] sm:$0xff]
      %v3177 = vld [vmem:[%s3131 + $0x51] sm:$0xff]
      %v3178 = vld [vmem:[%s3131 + $0x61] sm:$0xff]
      %v3179 = vld [vmem:[%s3131 + $0x71] sm:$0xff]
      %v3180 = vld [vmem:[%s3131 + $0x2] sm:$0xff]
      %v3181 = vld [vmem:[%s3131 + $0x12] sm:$0xff]
      %v3182 = vld [vmem:[%s3131 + $0x22] sm:$0xff]
      %v3183 = vld [vmem:[%s3131 + $0x32] sm:$0xff]
      %v3184 = vld [vmem:[%s3131 + $0x42] sm:$0xff]
      %v3185 = vld [vmem:[%s3131 + $0x52] sm:$0xff]
      %v3186 = vld [vmem:[%s3131 + $0x62] sm:$0xff]
      %v3187 = vld [vmem:[%s3131 + $0x72] sm:$0xff]
      %s3188 = scalar_lea.vmem [#allocation4], 32
      %v3189 = vld [vmem:[%s3188] sm:$0xff]
      %v3190 = vld [vmem:[%s3188 + $0x10] sm:$0xff]
      %v3191 = vld [vmem:[%s3188 + $0x20] sm:$0xff]
      %v3192 = vld [vmem:[%s3188 + $0x30] sm:$0xff]
      %v3193 = vld [vmem:[%s3188 + $0x40] sm:$0xff]
      %v3194 = vld [vmem:[%s3188 + $0x50] sm:$0xff]
      %v3195 = vld [vmem:[%s3188 + $0x60] sm:$0xff]
      %v3196 = vld [vmem:[%s3188 + $0x70] sm:$0xff]
      %v3197 = vld [vmem:[%s3188 + $0x1] sm:$0xff]
      %v3198 = vld [vmem:[%s3188 + $0x11] sm:$0xff]
      %v3199 = vld [vmem:[%s3188 + $0x21] sm:$0xff]
      %v3200 = vld [vmem:[%s3188 + $0x31] sm:$0xff]
      %v3201 = vld [vmem:[%s3188 + $0x41] sm:$0xff]
      %v3202 = vld [vmem:[%s3188 + $0x51] sm:$0xff]
      %v3203 = vld [vmem:[%s3188 + $0x61] sm:$0xff]
      %v3204 = vld [vmem:[%s3188 + $0x71] sm:$0xff]
      %v3205 = vld [vmem:[%s3188 + $0x2] sm:$0xff]
      %v3206 = vld [vmem:[%s3188 + $0x12] sm:$0xff]
      %v3207 = vld [vmem:[%s3188 + $0x22] sm:$0xff]
      %v3208 = vld [vmem:[%s3188 + $0x32] sm:$0xff]
      %v3209 = vld [vmem:[%s3188 + $0x42] sm:$0xff]
      %v3210 = vld [vmem:[%s3188 + $0x52] sm:$0xff]
      %v3211 = vld [vmem:[%s3188 + $0x62] sm:$0xff]
      %v3212 = vld [vmem:[%s3188 + $0x72] sm:$0xff]
      %3221 = vrot.lane.b32.xlu0 %v3148, 32
      %v3222 = vpop.permute.xlu0 %3221
      %3223 = vrot.lane.b32.xlu0 %v3149, 32
      %v3224 = vpop.permute.xlu0 %3223
      %3225 = vrot.lane.b32.xlu0 %v3150, 32
      %v3226 = vpop.permute.xlu0 %3225
      %3227 = vrot.lane.b32.xlu0 %v3151, 32
      %v3228 = vpop.permute.xlu0 %3227
      %3229 = vrot.lane.b32.xlu0 %v3152, 32
      %v3230 = vpop.permute.xlu0 %3229
      %3231 = vrot.lane.b32.xlu0 %v3153, 32
      %v3232 = vpop.permute.xlu0 %3231
      %3233 = vrot.lane.b32.xlu0 %v3154, 32
      %v3234 = vpop.permute.xlu0 %3233
      %3235 = vrot.lane.b32.xlu0 %v3155, 32
      %v3236 = vpop.permute.xlu0 %3235
      %3253 = vrot.lane.b32.xlu0 %v3156, 64
      %v3254 = vpop.permute.xlu0 %3253
      %3255 = vrot.lane.b32.xlu0 %v3157, 64
      %v3256 = vpop.permute.xlu0 %3255
      %3257 = vrot.lane.b32.xlu0 %v3158, 64
      %v3258 = vpop.permute.xlu0 %3257
      %3259 = vrot.lane.b32.xlu0 %v3159, 64
      %v3260 = vpop.permute.xlu0 %3259
      %3261 = vrot.lane.b32.xlu0 %v3160, 64
      %v3262 = vpop.permute.xlu0 %3261
      %3263 = vrot.lane.b32.xlu0 %v3161, 64
      %v3264 = vpop.permute.xlu0 %3263
      %3265 = vrot.lane.b32.xlu0 %v3162, 64
      %v3266 = vpop.permute.xlu0 %3265
      %3267 = vrot.lane.b32.xlu0 %v3163, 64
      %v3268 = vpop.permute.xlu0 %3267
      %3285 = vrot.lane.b32.xlu0 %v3164, 96
      %v3286 = vpop.permute.xlu0 %3285
      %3287 = vrot.lane.b32.xlu0 %v3165, 96
      %v3288 = vpop.permute.xlu0 %3287
      %3289 = vrot.lane.b32.xlu0 %v3166, 96
      %v3290 = vpop.permute.xlu0 %3289
      %3291 = vrot.lane.b32.xlu0 %v3167, 96
      %v3292 = vpop.permute.xlu0 %3291
      %3293 = vrot.lane.b32.xlu0 %v3168, 96
      %v3294 = vpop.permute.xlu0 %3293
      %3295 = vrot.lane.b32.xlu0 %v3169, 96
      %v3296 = vpop.permute.xlu0 %3295
      %3297 = vrot.lane.b32.xlu0 %v3170, 96
      %v3298 = vpop.permute.xlu0 %3297
      %3299 = vrot.lane.b32.xlu0 %v3171, 96
      %v3300 = vpop.permute.xlu0 %3299
      %3317 = vrot.lane.b32.xlu0 %v3180, 32
      %v3318 = vpop.permute.xlu0 %3317
      %3319 = vrot.lane.b32.xlu0 %v3181, 32
      %v3320 = vpop.permute.xlu0 %3319
      %3321 = vrot.lane.b32.xlu0 %v3182, 32
      %v3322 = vpop.permute.xlu0 %3321
      %3323 = vrot.lane.b32.xlu0 %v3183, 32
      %v3324 = vpop.permute.xlu0 %3323
      %3325 = vrot.lane.b32.xlu0 %v3184, 32
      %v3326 = vpop.permute.xlu0 %3325
      %3327 = vrot.lane.b32.xlu0 %v3185, 32
      %v3328 = vpop.permute.xlu0 %3327
      %3329 = vrot.lane.b32.xlu0 %v3186, 32
      %v3330 = vpop.permute.xlu0 %3329
      %3331 = vrot.lane.b32.xlu0 %v3187, 32
      %v3332 = vpop.permute.xlu0 %3331
      %3349 = vrot.lane.b32.xlu0 %v3189, 64
      %v3350 = vpop.permute.xlu0 %3349
      %3351 = vrot.lane.b32.xlu0 %v3190, 64
      %v3352 = vpop.permute.xlu0 %3351
      %3353 = vrot.lane.b32.xlu0 %v3191, 64
      %v3354 = vpop.permute.xlu0 %3353
      %3355 = vrot.lane.b32.xlu0 %v3192, 64
      %v3356 = vpop.permute.xlu0 %3355
      %3357 = vrot.lane.b32.xlu0 %v3193, 64
      %v3358 = vpop.permute.xlu0 %3357
      %3359 = vrot.lane.b32.xlu0 %v3194, 64
      %v3360 = vpop.permute.xlu0 %3359
      %3361 = vrot.lane.b32.xlu0 %v3195, 64
      %v3362 = vpop.permute.xlu0 %3361
      %3363 = vrot.lane.b32.xlu0 %v3196, 64
      %v3364 = vpop.permute.xlu0 %3363
      %3381 = vrot.lane.b32.xlu0 %v3197, 96
      %v3382 = vpop.permute.xlu0 %3381
      %3383 = vrot.lane.b32.xlu0 %v3198, 96
      %v3384 = vpop.permute.xlu0 %3383
      %3385 = vrot.lane.b32.xlu0 %v3199, 96
      %v3386 = vpop.permute.xlu0 %3385
      %3387 = vrot.lane.b32.xlu0 %v3200, 96
      %v3388 = vpop.permute.xlu0 %3387
      %3389 = vrot.lane.b32.xlu0 %v3201, 96
      %v3390 = vpop.permute.xlu0 %3389
      %3391 = vrot.lane.b32.xlu0 %v3202, 96
      %v3392 = vpop.permute.xlu0 %3391
      %3393 = vrot.lane.b32.xlu0 %v3203, 96
      %v3394 = vpop.permute.xlu0 %3393
      %3395 = vrot.lane.b32.xlu0 %v3204, 96
      %v3396 = vpop.permute.xlu0 %3395
      %v3405 = vsel %vm2190, %v3140, %v3222
      %v3406 = vsel %vm2190, %v3141, %v3224
      %v3407 = vsel %vm2190, %v3142, %v3226
      %v3408 = vsel %vm2190, %v3143, %v3228
      %v3409 = vsel %vm2190, %v3144, %v3230
      %v3410 = vsel %vm2190, %v3145, %v3232
      %v3411 = vsel %vm2190, %v3146, %v3234
      %v3412 = vsel %vm2190, %v3147, %v3236
      %v3413 = vsel %vm2906, %v3405, %v3254
      %v3414 = vsel %vm2906, %v3406, %v3256
      %v3415 = vsel %vm2906, %v3407, %v3258
      %v3416 = vsel %vm2906, %v3408, %v3260
      %v3417 = vsel %vm2906, %v3409, %v3262
      %v3418 = vsel %vm2906, %v3410, %v3264
      %v3419 = vsel %vm2906, %v3411, %v3266
      %v3420 = vsel %vm2906, %v3412, %v3268
      %v3421 = vsel %vm2924, %v3413, %v3286
      %v3422 = vsel %vm2924, %v3414, %v3288
      %v3423 = vsel %vm2924, %v3415, %v3290
      %v3424 = vsel %vm2924, %v3416, %v3292
      %v3425 = vsel %vm2924, %v3417, %v3294
      %v3426 = vsel %vm2924, %v3418, %v3296
      %v3427 = vsel %vm2924, %v3419, %v3298
      %v3428 = vsel %vm2924, %v3420, %v3300
      %v3429 = vsel %vm2190, %v3172, %v3318
      %v3430 = vsel %vm2190, %v3173, %v3320
      %v3431 = vsel %vm2190, %v3174, %v3322
      %v3432 = vsel %vm2190, %v3175, %v3324
      %v3433 = vsel %vm2190, %v3176, %v3326
      %v3434 = vsel %vm2190, %v3177, %v3328
      %v3435 = vsel %vm2190, %v3178, %v3330
      %v3436 = vsel %vm2190, %v3179, %v3332
      %v3437 = vsel %vm2906, %v3429, %v3350
      %v3438 = vsel %vm2906, %v3430, %v3352
      %v3439 = vsel %vm2906, %v3431, %v3354
      %v3440 = vsel %vm2906, %v3432, %v3356
      %v3441 = vsel %vm2906, %v3433, %v3358
      %v3442 = vsel %vm2906, %v3434, %v3360
      %v3443 = vsel %vm2906, %v3435, %v3362
      %v3444 = vsel %vm2906, %v3436, %v3364
      %v3445 = vsel %vm2924, %v3437, %v3382
      %v3446 = vsel %vm2924, %v3438, %v3384
      %v3447 = vsel %vm2924, %v3439, %v3386
      %v3448 = vsel %vm2924, %v3440, %v3388
      %v3449 = vsel %vm2924, %v3441, %v3390
      %v3450 = vsel %vm2924, %v3442, %v3392
      %v3451 = vsel %vm2924, %v3443, %v3394
      %v3452 = vsel %vm2924, %v3444, %v3396
      %v3453 = vpack.c.bf16 %v3422, %v3421
      %v3454 = vpack.c.bf16 %v3446, %v3445
      %v3455 = vpack.c.bf16 %v3206, %v3205
      %v3456 = vpack.c.bf16 %v3424, %v3423
      %v3457 = vpack.c.bf16 %v3448, %v3447
      %v3458 = vpack.c.bf16 %v3208, %v3207
      %v3459 = vpack.c.bf16 %v3426, %v3425
      %v3460 = vpack.c.bf16 %v3450, %v3449
      %v3461 = vpack.c.bf16 %v3210, %v3209
      %v3462 = vpack.c.bf16 %v3428, %v3427
      %v3463 = vpack.c.bf16 %v3452, %v3451
      %v3464 = vpack.c.bf16 %v3212, %v3211
      %v3465 = vld [vmem:[%s5] sm:$0xf]
      %v3466 = vld [vmem:[%s5 + $0x4] sm:$0xf]
      %v3467 = vld [vmem:[%s5 + $0x8] sm:$0xf]
      %v3468 = vld [vmem:[%s5 + $0xc] sm:$0xf]
      %v3469 = vld [vmem:[%s5 + $0x10] sm:$0xf]
      %v3470 = vld [vmem:[%s5 + $0x14] sm:$0xf]
      %v3471 = vld [vmem:[%s5 + $0x18] sm:$0xf]
      %v3472 = vld [vmem:[%s5 + $0x1c] sm:$0xf]
      %v3473 = vld [vmem:[%s5 + $0x20] sm:$0xf]
      %v3474 = vld [vmem:[%s5 + $0x24] sm:$0xf]
      %v3475 = vld [vmem:[%s5 + $0x28] sm:$0xf]
      %v3476 = vld [vmem:[%s5 + $0x2c] sm:$0xf]
      %v3477 = vld [vmem:[%s5 + $0x30] sm:$0xf]
      %v3478 = vld [vmem:[%s5 + $0x34] sm:$0xf]
      %v3479 = vld [vmem:[%s5 + $0x38] sm:$0xf]
      %v3480 = vld [vmem:[%s5 + $0x3c] sm:$0xf]
      %v3481 = vld [vmem:[%s5 + $0x40] sm:$0xf]
      %v3482 = vld [vmem:[%s5 + $0x44] sm:$0xf]
      %v3483 = vld [vmem:[%s5 + $0x48] sm:$0xf]
      %v3484 = vld [vmem:[%s5 + $0x4c] sm:$0xf]
      %v3485 = vld [vmem:[%s5 + $0x50] sm:$0xf]
      %v3486 = vld [vmem:[%s5 + $0x54] sm:$0xf]
      %v3487 = vld [vmem:[%s5 + $0x58] sm:$0xf]
      %v3488 = vld [vmem:[%s5 + $0x5c] sm:$0xf]
      %v3489 = vld [vmem:[%s5 + $0x60] sm:$0xf]
      %v3490 = vld [vmem:[%s5 + $0x64] sm:$0xf]
      %v3491 = vld [vmem:[%s5 + $0x68] sm:$0xf]
      %v3492 = vld [vmem:[%s5 + $0x6c] sm:$0xf]
      %v3493 = vld [vmem:[%s5 + $0x70] sm:$0xf]
      %v3494 = vld [vmem:[%s5 + $0x74] sm:$0xf]
      %v3495 = vld [vmem:[%s5 + $0x78] sm:$0xf]
      %v3496 = vld [vmem:[%s5 + $0x7c] sm:$0xf]
      %v3497 = vld [vmem:[%s5 + $0x80] sm:$0xf]
      %v3498 = vld [vmem:[%s5 + $0x84] sm:$0xf]
      %v3499 = vld [vmem:[%s5 + $0x88] sm:$0xf]
      %v3500 = vld [vmem:[%s5 + $0x8c] sm:$0xf]
      %v3501 = vld [vmem:[%s6] sm:$0x1]
      %v3503 = vperm.slane %v3501, 0
      %v3541 = vunpack.c.l.b16 %v3465
      %v3542 = vunpack.c.l.b16 %v3466
      %v3543 = vunpack.c.l.b16 %v3467
      %v3544 = vunpack.c.l.b16 %v3468
      %v3545 = vunpack.c.l.b16 %v3469
      %v3546 = vunpack.c.l.b16 %v3470
      %v3547 = vunpack.c.l.b16 %v3471
      %v3548 = vunpack.c.l.b16 %v3472
      %v3549 = vunpack.c.l.b16 %v3473
      %v3550 = vunpack.c.l.b16 %v3474
      %v3551 = vunpack.c.l.b16 %v3475
      %v3552 = vunpack.c.l.b16 %v3476
      %v3553 = vunpack.c.l.b16 %v3477
      %v3554 = vunpack.c.l.b16 %v3478
      %v3555 = vunpack.c.l.b16 %v3479
      %v3556 = vunpack.c.l.b16 %v3480
      %v3557 = vunpack.c.l.b16 %v3481
      %v3558 = vunpack.c.l.b16 %v3482
      %v3559 = vunpack.c.l.b16 %v3483
      %v3560 = vunpack.c.l.b16 %v3484
      %v3561 = vunpack.c.l.b16 %v3485
      %v3562 = vunpack.c.l.b16 %v3486
      %v3563 = vunpack.c.l.b16 %v3487
      %v3564 = vunpack.c.l.b16 %v3488
      %v3565 = vunpack.c.l.b16 %v3489
      %v3566 = vunpack.c.l.b16 %v3490
      %v3567 = vunpack.c.l.b16 %v3491
      %v3568 = vunpack.c.l.b16 %v3492
      %v3569 = vunpack.c.l.b16 %v3493
      %v3570 = vunpack.c.l.b16 %v3494
      %v3571 = vunpack.c.l.b16 %v3495
      %v3572 = vunpack.c.l.b16 %v3496
      %v3573 = vunpack.c.l.b16 %v3497
      %v3574 = vunpack.c.l.b16 %v3498
      %v3575 = vunpack.c.l.b16 %v3499
      %v3576 = vunpack.c.l.b16 %v3500
      %v3577 = vpack.c.b16 %v3542, %v3541
      %v3578 = vpack.c.b16 %v3544, %v3543
      %v3579 = vpack.c.b16 %v3546, %v3545
      %v3580 = vpack.c.b16 %v3548, %v3547
      %v3581 = vpack.c.b16 %v3550, %v3549
      %v3582 = vpack.c.b16 %v3552, %v3551
      %v3583 = vpack.c.b16 %v3554, %v3553
      %v3584 = vpack.c.b16 %v3556, %v3555
      %v3585 = vpack.c.b16 %v3558, %v3557
      %v3586 = vpack.c.b16 %v3560, %v3559
      %v3587 = vpack.c.b16 %v3562, %v3561
      %v3588 = vpack.c.b16 %v3564, %v3563
      %v3589 = vpack.c.b16 %v3566, %v3565
      %v3590 = vpack.c.b16 %v3568, %v3567
      %v3591 = vpack.c.b16 %v3570, %v3569
      %v3592 = vpack.c.b16 %v3572, %v3571
      %v3593 = vpack.c.b16 %v3574, %v3573
      %v3594 = vpack.c.b16 %v3576, %v3575
      %v3614 = vsel %vm2190, %v3455, 0
      %v3617 = vsel %vm2190, %v3458, 0
      %v3620 = vsel %vm2190, %v3461, 0
      %v3623 = vsel %vm2190, %v3464, 0
      %3625 = vmatpush.bf16.msra.mxu0 %v3584
      %3626 = vmatpush.bf16.msra.mxu0 %v3583
      %3627 = vmatpush.bf16.msra.mxu0 %v3582
      %3628 = vmatpush.bf16.msra.mxu0 %v3581
      %3629 = vmatpush.bf16.msra.mxu0 %v3580
      %3630 = vmatpush.bf16.msra.mxu0 %v3579
      %3631 = vmatpush.bf16.msra.mxu0 %v3578
      %3632 = vmatpush.bf16.msra.mxu0 %v3577
      %3633 = vmatmul.bf16.gmra.mxu0 %v3453
      %v3634 = vpop.f32.mrf.mxu0
      %v3635 = vadd.f32 %v3503, %v3634
      %v3636 = vpop.f32.mrf.mxu0
      %v3637 = vadd.f32 %v3503, %v3636
      %3638 = vmatmul.bf16.gmra.mxu0 %v3456
      %v3639 = vpop.f32.mrf.mxu0
      %v3640 = vadd.f32 %v3503, %v3639
      %v3641 = vpop.f32.mrf.mxu0
      %v3642 = vadd.f32 %v3503, %v3641
      %3643 = vmatmul.bf16.gmra.mxu0 %v3459
      %v3644 = vpop.f32.mrf.mxu0
      %v3645 = vadd.f32 %v3503, %v3644
      %v3646 = vpop.f32.mrf.mxu0
      %v3647 = vadd.f32 %v3503, %v3646
      %3648 = vmatmul.bf16.gmra.mxu0 %v3462
      %v3649 = vpop.f32.mrf.mxu0
      %v3650 = vadd.f32 %v3503, %v3649
      %v3651 = vpop.f32.mrf.mxu0
      %v3652 = vadd.f32 %v3503, %v3651
      %3653 = vdwg.mxu0
      %3654 = vmatpush.bf16.msra.mxu0 %v3592
      %3655 = vmatpush.bf16.msra.mxu0 %v3591
      %3656 = vmatpush.bf16.msra.mxu0 %v3590
      %3657 = vmatpush.bf16.msra.mxu0 %v3589
      %3658 = vmatpush.bf16.msra.mxu0 %v3588
      %3659 = vmatpush.bf16.msra.mxu0 %v3587
      %3660 = vmatpush.bf16.msra.mxu0 %v3586
      %3661 = vmatpush.bf16.msra.mxu0 %v3585
      %3662 = vmatmul.bf16.gmra.mxu0 %v3454
      %v3663 = vpop.f32.mrf.mxu0
      %v3664 = vadd.f32 %v3635, %v3663
      %v3665 = vpop.f32.mrf.mxu0
      %v3666 = vadd.f32 %v3637, %v3665
      %3667 = vmatmul.bf16.gmra.mxu0 %v3457
      %v3668 = vpop.f32.mrf.mxu0
      %v3669 = vadd.f32 %v3640, %v3668
      %v3670 = vpop.f32.mrf.mxu0
      %v3671 = vadd.f32 %v3642, %v3670
      %3672 = vmatmul.bf16.gmra.mxu0 %v3460
      %v3673 = vpop.f32.mrf.mxu0
      %v3674 = vadd.f32 %v3645, %v3673
      %v3675 = vpop.f32.mrf.mxu0
      %v3676 = vadd.f32 %v3647, %v3675
      %3677 = vmatmul.bf16.gmra.mxu0 %v3463
      %v3678 = vpop.f32.mrf.mxu0
      %v3679 = vadd.f32 %v3650, %v3678
      %v3680 = vpop.f32.mrf.mxu0
      %v3681 = vadd.f32 %v3652, %v3680
      %3682 = vdwg.mxu0
      %3683 = vmatpush.bf16.msra.mxu0 0
      %3684 = vmatpush.bf16.msra.mxu0 0
      %3685 = vmatpush.bf16.msra.mxu0 0
      %3686 = vmatpush.bf16.msra.mxu0 0
      %3687 = vmatpush.bf16.msra.mxu0 0
      %3688 = vmatpush.bf16.msra.mxu0 0
      %3689 = vmatpush.bf16.msra.mxu0 %v3594
      %3690 = vmatpush.bf16.msra.mxu0 %v3593
      %3691 = vmatmul.bf16.gmra.mxu0 %v3614
      %v3692 = vpop.f32.mrf.mxu0
      %v3693 = vadd.f32 %v3664, %v3692
      %v3694 = vpop.f32.mrf.mxu0
      %v3695 = vadd.f32 %v3666, %v3694
      %3696 = vmatmul.bf16.gmra.mxu0 %v3617
      %v3697 = vpop.f32.mrf.mxu0
      %v3698 = vadd.f32 %v3669, %v3697
      %v3699 = vpop.f32.mrf.mxu0
      %v3700 = vadd.f32 %v3671, %v3699
      %3701 = vmatmul.bf16.gmra.mxu0 %v3620
      %v3702 = vpop.f32.mrf.mxu0
      %v3703 = vadd.f32 %v3674, %v3702
      %v3704 = vpop.f32.mrf.mxu0
      %v3705 = vadd.f32 %v3676, %v3704
      %3706 = vmatmul.bf16.gmra.mxu0 %v3623
      %v3707 = vpop.f32.mrf.mxu0
      %v3708 = vadd.f32 %v3679, %v3707
      %v3709 = vpop.f32.mrf.mxu0
      %v3710 = vadd.f32 %v3681, %v3709
      %3711 = vdwg.mxu0
      %v3712 = vmax.f32 %v3693, 0.0
      %v3713 = vmax.f32 %v3695, 0.0
      %v3714 = vmax.f32 %v3698, 0.0
      %v3715 = vmax.f32 %v3700, 0.0
      %v3716 = vmax.f32 %v3703, 0.0
      %v3717 = vmax.f32 %v3705, 0.0
      %v3718 = vmax.f32 %v3708, 0.0
      %v3719 = vmax.f32 %v3710, 0.0
      %3720 = vst.msk [vmem:[#allocation5] sm:$0xff] %vm2190, 0.0
      %3721 = vst.msk [vmem:[#allocation5 + $0x8] sm:$0x3] %vm3105, 0.0
      %s3722 = scalar_lea.vmem [#allocation5], 144
      %3723 = vst.msk [vmem:[%s3722] sm:$0xff] %vm2190, 0.0
      %3724 = vst.msk [vmem:[%s3722 + $0x8] sm:$0x3] %vm3105, 0.0
      %3725 = vst.msk [vmem:[#allocation5] sm:$0x1] %vm3110, 0.0
      %3726 = vst.msk [vmem:[#allocation5 + $0x10] sm:$0x1] %vm3110, 0.0
      %3727 = vst.msk [vmem:[#allocation5 + $0x20] sm:$0x1] %vm3110, 0.0
      %3728 = vst.msk [vmem:[#allocation5 + $0x30] sm:$0x1] %vm3110, 0.0
      %3729 = vst.msk [vmem:[#allocation5 + $0x40] sm:$0x1] %vm3110, 0.0
      %3730 = vst.msk [vmem:[#allocation5 + $0x50] sm:$0x1] %vm3110, 0.0
      %3731 = vst.msk [vmem:[#allocation5 + $0x60] sm:$0x1] %vm3110, 0.0
      %3732 = vst.msk [vmem:[#allocation5 + $0x70] sm:$0x1] %vm3110, 0.0
      %3733 = vst.msk [vmem:[#allocation5 + $0x80] sm:$0x1] %vm3110, 0.0
      %3734 = vst.msk [vmem:[#allocation5 + $0x90] sm:$0x1] %vm3110, 0.0
      %3735 = vst.msk [vmem:[#allocation5 + $0x9] sm:$0x1] %vm3110, 0.0
      %3736 = vst.msk [vmem:[#allocation5 + $0x19] sm:$0x1] %vm3110, 0.0
      %3737 = vst.msk [vmem:[#allocation5 + $0x29] sm:$0x1] %vm3110, 0.0
      %3738 = vst.msk [vmem:[#allocation5 + $0x39] sm:$0x1] %vm3110, 0.0
      %3739 = vst.msk [vmem:[#allocation5 + $0x49] sm:$0x1] %vm3110, 0.0
      %3740 = vst.msk [vmem:[#allocation5 + $0x59] sm:$0x1] %vm3110, 0.0
      %3741 = vst.msk [vmem:[#allocation5 + $0x69] sm:$0x1] %vm3110, 0.0
      %3742 = vst.msk [vmem:[#allocation5 + $0x79] sm:$0x1] %vm3110, 0.0
      %3743 = vst.msk [vmem:[#allocation5 + $0x89] sm:$0x1] %vm3110, 0.0
      %3744 = vst.msk [vmem:[#allocation5 + $0x99] sm:$0x1] %vm3110, 0.0
      %s3745 = scalar_lea.vmem [#allocation5], 16
      %3746 = vst.msk [vmem:[%s3745 + $0x1] sm:$0xff] %vm2190, %v3712
      %3747 = vst.msk [vmem:[%s3745 + $0x11] sm:$0xff] %vm2190, %v3713
      %3748 = vst.msk [vmem:[%s3745 + $0x21] sm:$0xff] %vm2190, %v3714
      %3749 = vst.msk [vmem:[%s3745 + $0x31] sm:$0xff] %vm2190, %v3715
      %3750 = vst.msk [vmem:[%s3745 + $0x41] sm:$0xff] %vm2190, %v3716
      %3751 = vst.msk [vmem:[%s3745 + $0x51] sm:$0xff] %vm2190, %v3717
      %3752 = vst.msk [vmem:[%s3745 + $0x61] sm:$0xff] %vm2190, %v3718
      %3753 = vst.msk [vmem:[%s3745 + $0x71] sm:$0xff] %vm2190, %v3719
      %v3754 = vld [vmem:[#allocation5] sm:$0xff]
      %v3755 = vld [vmem:[#allocation5 + $0x10] sm:$0xff]
      %v3756 = vld [vmem:[#allocation5 + $0x20] sm:$0xff]
      %v3757 = vld [vmem:[#allocation5 + $0x30] sm:$0xff]
      %v3758 = vld [vmem:[#allocation5 + $0x40] sm:$0xff]
      %v3759 = vld [vmem:[#allocation5 + $0x50] sm:$0xff]
      %v3760 = vld [vmem:[#allocation5 + $0x60] sm:$0xff]
      %v3761 = vld [vmem:[#allocation5 + $0x70] sm:$0xff]
      %v3762 = vld [vmem:[#allocation5 + $0x1] sm:$0xff]
      %v3763 = vld [vmem:[#allocation5 + $0x11] sm:$0xff]
      %v3764 = vld [vmem:[#allocation5 + $0x21] sm:$0xff]
      %v3765 = vld [vmem:[#allocation5 + $0x31] sm:$0xff]
      %v3766 = vld [vmem:[#allocation5 + $0x41] sm:$0xff]
      %v3767 = vld [vmem:[#allocation5 + $0x51] sm:$0xff]
      %v3768 = vld [vmem:[#allocation5 + $0x61] sm:$0xff]
      %v3769 = vld [vmem:[#allocation5 + $0x71] sm:$0xff]
      %v3770 = vld [vmem:[#allocation5 + $0x2] sm:$0xff]
      %v3771 = vld [vmem:[#allocation5 + $0x12] sm:$0xff]
      %v3772 = vld [vmem:[#allocation5 + $0x22] sm:$0xff]
      %v3773 = vld [vmem:[#allocation5 + $0x32] sm:$0xff]
      %v3774 = vld [vmem:[#allocation5 + $0x42] sm:$0xff]
      %v3775 = vld [vmem:[#allocation5 + $0x52] sm:$0xff]
      %v3776 = vld [vmem:[#allocation5 + $0x62] sm:$0xff]
      %v3777 = vld [vmem:[#allocation5 + $0x72] sm:$0xff]
      %v3778 = vld [vmem:[%s3745] sm:$0xff]
      %v3779 = vld [vmem:[%s3745 + $0x10] sm:$0xff]
      %v3780 = vld [vmem:[%s3745 + $0x20] sm:$0xff]
      %v3781 = vld [vmem:[%s3745 + $0x30] sm:$0xff]
      %v3782 = vld [vmem:[%s3745 + $0x40] sm:$0xff]
      %v3783 = vld [vmem:[%s3745 + $0x50] sm:$0xff]
      %v3784 = vld [vmem:[%s3745 + $0x60] sm:$0xff]
      %v3785 = vld [vmem:[%s3745 + $0x70] sm:$0xff]
      %v3786 = vld [vmem:[%s3745 + $0x1] sm:$0xff]
      %v3787 = vld [vmem:[%s3745 + $0x11] sm:$0xff]
      %v3788 = vld [vmem:[%s3745 + $0x21] sm:$0xff]
      %v3789 = vld [vmem:[%s3745 + $0x31] sm:$0xff]
      %v3790 = vld [vmem:[%s3745 + $0x41] sm:$0xff]
      %v3791 = vld [vmem:[%s3745 + $0x51] sm:$0xff]
      %v3792 = vld [vmem:[%s3745 + $0x61] sm:$0xff]
      %v3793 = vld [vmem:[%s3745 + $0x71] sm:$0xff]
      %v3794 = vld [vmem:[%s3745 + $0x2] sm:$0xff]
      %v3795 = vld [vmem:[%s3745 + $0x12] sm:$0xff]
      %v3796 = vld [vmem:[%s3745 + $0x22] sm:$0xff]
      %v3797 = vld [vmem:[%s3745 + $0x32] sm:$0xff]
      %v3798 = vld [vmem:[%s3745 + $0x42] sm:$0xff]
      %v3799 = vld [vmem:[%s3745 + $0x52] sm:$0xff]
      %v3800 = vld [vmem:[%s3745 + $0x62] sm:$0xff]
      %v3801 = vld [vmem:[%s3745 + $0x72] sm:$0xff]
      %s3802 = scalar_lea.vmem [#allocation5], 32
      %v3803 = vld [vmem:[%s3802] sm:$0xff]
      %v3804 = vld [vmem:[%s3802 + $0x10] sm:$0xff]
      %v3805 = vld [vmem:[%s3802 + $0x20] sm:$0xff]
      %v3806 = vld [vmem:[%s3802 + $0x30] sm:$0xff]
      %v3807 = vld [vmem:[%s3802 + $0x40] sm:$0xff]
      %v3808 = vld [vmem:[%s3802 + $0x50] sm:$0xff]
      %v3809 = vld [vmem:[%s3802 + $0x60] sm:$0xff]
      %v3810 = vld [vmem:[%s3802 + $0x70] sm:$0xff]
      %v3811 = vld [vmem:[%s3802 + $0x1] sm:$0xff]
      %v3812 = vld [vmem:[%s3802 + $0x11] sm:$0xff]
      %v3813 = vld [vmem:[%s3802 + $0x21] sm:$0xff]
      %v3814 = vld [vmem:[%s3802 + $0x31] sm:$0xff]
      %v3815 = vld [vmem:[%s3802 + $0x41] sm:$0xff]
      %v3816 = vld [vmem:[%s3802 + $0x51] sm:$0xff]
      %v3817 = vld [vmem:[%s3802 + $0x61] sm:$0xff]
      %v3818 = vld [vmem:[%s3802 + $0x71] sm:$0xff]
      %v3819 = vld [vmem:[%s3802 + $0x2] sm:$0xff]
      %v3820 = vld [vmem:[%s3802 + $0x12] sm:$0xff]
      %v3821 = vld [vmem:[%s3802 + $0x22] sm:$0xff]
      %v3822 = vld [vmem:[%s3802 + $0x32] sm:$0xff]
      %v3823 = vld [vmem:[%s3802 + $0x42] sm:$0xff]
      %v3824 = vld [vmem:[%s3802 + $0x52] sm:$0xff]
      %v3825 = vld [vmem:[%s3802 + $0x62] sm:$0xff]
      %v3826 = vld [vmem:[%s3802 + $0x72] sm:$0xff]
      %3835 = vrot.lane.b32.xlu0 %v3762, 32
      %v3836 = vpop.permute.xlu0 %3835
      %3837 = vrot.lane.b32.xlu0 %v3763, 32
      %v3838 = vpop.permute.xlu0 %3837
      %3839 = vrot.lane.b32.xlu0 %v3764, 32
      %v3840 = vpop.permute.xlu0 %3839
      %3841 = vrot.lane.b32.xlu0 %v3765, 32
      %v3842 = vpop.permute.xlu0 %3841
      %3843 = vrot.lane.b32.xlu0 %v3766, 32
      %v3844 = vpop.permute.xlu0 %3843
      %3845 = vrot.lane.b32.xlu0 %v3767, 32
      %v3846 = vpop.permute.xlu0 %3845
      %3847 = vrot.lane.b32.xlu0 %v3768, 32
      %v3848 = vpop.permute.xlu0 %3847
      %3849 = vrot.lane.b32.xlu0 %v3769, 32
      %v3850 = vpop.permute.xlu0 %3849
      %3867 = vrot.lane.b32.xlu0 %v3770, 64
      %v3868 = vpop.permute.xlu0 %3867
      %3869 = vrot.lane.b32.xlu0 %v3771, 64
      %v3870 = vpop.permute.xlu0 %3869
      %3871 = vrot.lane.b32.xlu0 %v3772, 64
      %v3872 = vpop.permute.xlu0 %3871
      %3873 = vrot.lane.b32.xlu0 %v3773, 64
      %v3874 = vpop.permute.xlu0 %3873
      %3875 = vrot.lane.b32.xlu0 %v3774, 64
      %v3876 = vpop.permute.xlu0 %3875
      %3877 = vrot.lane.b32.xlu0 %v3775, 64
      %v3878 = vpop.permute.xlu0 %3877
      %3879 = vrot.lane.b32.xlu0 %v3776, 64
      %v3880 = vpop.permute.xlu0 %3879
      %3881 = vrot.lane.b32.xlu0 %v3777, 64
      %v3882 = vpop.permute.xlu0 %3881
      %3899 = vrot.lane.b32.xlu0 %v3778, 96
      %v3900 = vpop.permute.xlu0 %3899
      %3901 = vrot.lane.b32.xlu0 %v3779, 96
      %v3902 = vpop.permute.xlu0 %3901
      %3903 = vrot.lane.b32.xlu0 %v3780, 96
      %v3904 = vpop.permute.xlu0 %3903
      %3905 = vrot.lane.b32.xlu0 %v3781, 96
      %v3906 = vpop.permute.xlu0 %3905
      %3907 = vrot.lane.b32.xlu0 %v3782, 96
      %v3908 = vpop.permute.xlu0 %3907
      %3909 = vrot.lane.b32.xlu0 %v3783, 96
      %v3910 = vpop.permute.xlu0 %3909
      %3911 = vrot.lane.b32.xlu0 %v3784, 96
      %v3912 = vpop.permute.xlu0 %3911
      %3913 = vrot.lane.b32.xlu0 %v3785, 96
      %v3914 = vpop.permute.xlu0 %3913
      %3931 = vrot.lane.b32.xlu0 %v3794, 32
      %v3932 = vpop.permute.xlu0 %3931
      %3933 = vrot.lane.b32.xlu0 %v3795, 32
      %v3934 = vpop.permute.xlu0 %3933
      %3935 = vrot.lane.b32.xlu0 %v3796, 32
      %v3936 = vpop.permute.xlu0 %3935
      %3937 = vrot.lane.b32.xlu0 %v3797, 32
      %v3938 = vpop.permute.xlu0 %3937
      %3939 = vrot.lane.b32.xlu0 %v3798, 32
      %v3940 = vpop.permute.xlu0 %3939
      %3941 = vrot.lane.b32.xlu0 %v3799, 32
      %v3942 = vpop.permute.xlu0 %3941
      %3943 = vrot.lane.b32.xlu0 %v3800, 32
      %v3944 = vpop.permute.xlu0 %3943
      %3945 = vrot.lane.b32.xlu0 %v3801, 32
      %v3946 = vpop.permute.xlu0 %3945
      %3963 = vrot.lane.b32.xlu0 %v3803, 64
      %v3964 = vpop.permute.xlu0 %3963
      %3965 = vrot.lane.b32.xlu0 %v3804, 64
      %v3966 = vpop.permute.xlu0 %3965
      %3967 = vrot.lane.b32.xlu0 %v3805, 64
      %v3968 = vpop.permute.xlu0 %3967
      %3969 = vrot.lane.b32.xlu0 %v3806, 64
      %v3970 = vpop.permute.xlu0 %3969
      %3971 = vrot.lane.b32.xlu0 %v3807, 64
      %v3972 = vpop.permute.xlu0 %3971
      %3973 = vrot.lane.b32.xlu0 %v3808, 64
      %v3974 = vpop.permute.xlu0 %3973
      %3975 = vrot.lane.b32.xlu0 %v3809, 64
      %v3976 = vpop.permute.xlu0 %3975
      %3977 = vrot.lane.b32.xlu0 %v3810, 64
      %v3978 = vpop.permute.xlu0 %3977
      %3995 = vrot.lane.b32.xlu0 %v3811, 96
      %v3996 = vpop.permute.xlu0 %3995
      %3997 = vrot.lane.b32.xlu0 %v3812, 96
      %v3998 = vpop.permute.xlu0 %3997
      %3999 = vrot.lane.b32.xlu0 %v3813, 96
      %v4000 = vpop.permute.xlu0 %3999
      %4001 = vrot.lane.b32.xlu0 %v3814, 96
      %v4002 = vpop.permute.xlu0 %4001
      %4003 = vrot.lane.b32.xlu0 %v3815, 96
      %v4004 = vpop.permute.xlu0 %4003
      %4005 = vrot.lane.b32.xlu0 %v3816, 96
      %v4006 = vpop.permute.xlu0 %4005
      %4007 = vrot.lane.b32.xlu0 %v3817, 96
      %v4008 = vpop.permute.xlu0 %4007
      %4009 = vrot.lane.b32.xlu0 %v3818, 96
      %v4010 = vpop.permute.xlu0 %4009
      %v4019 = vsel %vm2190, %v3754, %v3836
      %v4020 = vsel %vm2190, %v3755, %v3838
      %v4021 = vsel %vm2190, %v3756, %v3840
      %v4022 = vsel %vm2190, %v3757, %v3842
      %v4023 = vsel %vm2190, %v3758, %v3844
      %v4024 = vsel %vm2190, %v3759, %v3846
      %v4025 = vsel %vm2190, %v3760, %v3848
      %v4026 = vsel %vm2190, %v3761, %v3850
      %v4027 = vsel %vm2906, %v4019, %v3868
      %v4028 = vsel %vm2906, %v4020, %v3870
      %v4029 = vsel %vm2906, %v4021, %v3872
      %v4030 = vsel %vm2906, %v4022, %v3874
      %v4031 = vsel %vm2906, %v4023, %v3876
      %v4032 = vsel %vm2906, %v4024, %v3878
      %v4033 = vsel %vm2906, %v4025, %v3880
      %v4034 = vsel %vm2906, %v4026, %v3882
      %v4035 = vsel %vm2924, %v4027, %v3900
      %v4036 = vsel %vm2924, %v4028, %v3902
      %v4037 = vsel %vm2924, %v4029, %v3904
      %v4038 = vsel %vm2924, %v4030, %v3906
      %v4039 = vsel %vm2924, %v4031, %v3908
      %v4040 = vsel %vm2924, %v4032, %v3910
      %v4041 = vsel %vm2924, %v4033, %v3912
      %v4042 = vsel %vm2924, %v4034, %v3914
      %v4043 = vsel %vm2190, %v3786, %v3932
      %v4044 = vsel %vm2190, %v3787, %v3934
      %v4045 = vsel %vm2190, %v3788, %v3936
      %v4046 = vsel %vm2190, %v3789, %v3938
      %v4047 = vsel %vm2190, %v3790, %v3940
      %v4048 = vsel %vm2190, %v3791, %v3942
      %v4049 = vsel %vm2190, %v3792, %v3944
      %v4050 = vsel %vm2190, %v3793, %v3946
      %v4051 = vsel %vm2906, %v4043, %v3964
      %v4052 = vsel %vm2906, %v4044, %v3966
      %v4053 = vsel %vm2906, %v4045, %v3968
      %v4054 = vsel %vm2906, %v4046, %v3970
      %v4055 = vsel %vm2906, %v4047, %v3972
      %v4056 = vsel %vm2906, %v4048, %v3974
      %v4057 = vsel %vm2906, %v4049, %v3976
      %v4058 = vsel %vm2906, %v4050, %v3978
      %v4059 = vsel %vm2924, %v4051, %v3996
      %v4060 = vsel %vm2924, %v4052, %v3998
      %v4061 = vsel %vm2924, %v4053, %v4000
      %v4062 = vsel %vm2924, %v4054, %v4002
      %v4063 = vsel %vm2924, %v4055, %v4004
      %v4064 = vsel %vm2924, %v4056, %v4006
      %v4065 = vsel %vm2924, %v4057, %v4008
      %v4066 = vsel %vm2924, %v4058, %v4010
      %v4067 = vpack.c.bf16 %v4036, %v4035
      %v4068 = vpack.c.bf16 %v4060, %v4059
      %v4069 = vpack.c.bf16 %v3820, %v3819
      %v4070 = vpack.c.bf16 %v4038, %v4037
      %v4071 = vpack.c.bf16 %v4062, %v4061
      %v4072 = vpack.c.bf16 %v3822, %v3821
      %v4073 = vpack.c.bf16 %v4040, %v4039
      %v4074 = vpack.c.bf16 %v4064, %v4063
      %v4075 = vpack.c.bf16 %v3824, %v3823
      %v4076 = vpack.c.bf16 %v4042, %v4041
      %v4077 = vpack.c.bf16 %v4066, %v4065
      %v4078 = vpack.c.bf16 %v3826, %v3825
      %v4079 = vld [vmem:[%s7] sm:$0xf]
      %v4080 = vld [vmem:[%s7 + $0x4] sm:$0xf]
      %v4081 = vld [vmem:[%s7 + $0x8] sm:$0xf]
      %v4082 = vld [vmem:[%s7 + $0xc] sm:$0xf]
      %v4083 = vld [vmem:[%s7 + $0x10] sm:$0xf]
      %v4084 = vld [vmem:[%s7 + $0x14] sm:$0xf]
      %v4085 = vld [vmem:[%s7 + $0x18] sm:$0xf]
      %v4086 = vld [vmem:[%s7 + $0x1c] sm:$0xf]
      %v4087 = vld [vmem:[%s7 + $0x20] sm:$0xf]
      %v4088 = vld [vmem:[%s7 + $0x24] sm:$0xf]
      %v4089 = vld [vmem:[%s7 + $0x28] sm:$0xf]
      %v4090 = vld [vmem:[%s7 + $0x2c] sm:$0xf]
      %v4091 = vld [vmem:[%s7 + $0x30] sm:$0xf]
      %v4092 = vld [vmem:[%s7 + $0x34] sm:$0xf]
      %v4093 = vld [vmem:[%s7 + $0x38] sm:$0xf]
      %v4094 = vld [vmem:[%s7 + $0x3c] sm:$0xf]
      %v4095 = vld [vmem:[%s7 + $0x40] sm:$0xf]
      %v4096 = vld [vmem:[%s7 + $0x44] sm:$0xf]
      %v4097 = vld [vmem:[%s7 + $0x48] sm:$0xf]
      %v4098 = vld [vmem:[%s7 + $0x4c] sm:$0xf]
      %v4099 = vld [vmem:[%s7 + $0x50] sm:$0xf]
      %v4100 = vld [vmem:[%s7 + $0x54] sm:$0xf]
      %v4101 = vld [vmem:[%s7 + $0x58] sm:$0xf]
      %v4102 = vld [vmem:[%s7 + $0x5c] sm:$0xf]
      %v4103 = vld [vmem:[%s7 + $0x60] sm:$0xf]
      %v4104 = vld [vmem:[%s7 + $0x64] sm:$0xf]
      %v4105 = vld [vmem:[%s7 + $0x68] sm:$0xf]
      %v4106 = vld [vmem:[%s7 + $0x6c] sm:$0xf]
      %v4107 = vld [vmem:[%s7 + $0x70] sm:$0xf]
      %v4108 = vld [vmem:[%s7 + $0x74] sm:$0xf]
      %v4109 = vld [vmem:[%s7 + $0x78] sm:$0xf]
      %v4110 = vld [vmem:[%s7 + $0x7c] sm:$0xf]
      %v4111 = vld [vmem:[%s7 + $0x80] sm:$0xf]
      %v4112 = vld [vmem:[%s7 + $0x84] sm:$0xf]
      %v4113 = vld [vmem:[%s7 + $0x88] sm:$0xf]
      %v4114 = vld [vmem:[%s7 + $0x8c] sm:$0xf]
      %v4115 = vld [vmem:[%s8] sm:$0x1]
      %v4117 = vperm.slane %v4115, 0
      %v4155 = vunpack.c.l.b16 %v4079
      %v4156 = vunpack.c.l.b16 %v4080
      %v4157 = vunpack.c.l.b16 %v4081
      %v4158 = vunpack.c.l.b16 %v4082
      %v4159 = vunpack.c.l.b16 %v4083
      %v4160 = vunpack.c.l.b16 %v4084
      %v4161 = vunpack.c.l.b16 %v4085
      %v4162 = vunpack.c.l.b16 %v4086
      %v4163 = vunpack.c.l.b16 %v4087
      %v4164 = vunpack.c.l.b16 %v4088
      %v4165 = vunpack.c.l.b16 %v4089
      %v4166 = vunpack.c.l.b16 %v4090
      %v4167 = vunpack.c.l.b16 %v4091
      %v4168 = vunpack.c.l.b16 %v4092
      %v4169 = vunpack.c.l.b16 %v4093
      %v4170 = vunpack.c.l.b16 %v4094
      %v4171 = vunpack.c.l.b16 %v4095
      %v4172 = vunpack.c.l.b16 %v4096
      %v4173 = vunpack.c.l.b16 %v4097
      %v4174 = vunpack.c.l.b16 %v4098
      %v4175 = vunpack.c.l.b16 %v4099
      %v4176 = vunpack.c.l.b16 %v4100
      %v4177 = vunpack.c.l.b16 %v4101
      %v4178 = vunpack.c.l.b16 %v4102
      %v4179 = vunpack.c.l.b16 %v4103
      %v4180 = vunpack.c.l.b16 %v4104
      %v4181 = vunpack.c.l.b16 %v4105
      %v4182 = vunpack.c.l.b16 %v4106
      %v4183 = vunpack.c.l.b16 %v4107
      %v4184 = vunpack.c.l.b16 %v4108
      %v4185 = vunpack.c.l.b16 %v4109
      %v4186 = vunpack.c.l.b16 %v4110
      %v4187 = vunpack.c.l.b16 %v4111
      %v4188 = vunpack.c.l.b16 %v4112
      %v4189 = vunpack.c.l.b16 %v4113
      %v4190 = vunpack.c.l.b16 %v4114
      %v4191 = vpack.c.b16 %v4156, %v4155
      %v4192 = vpack.c.b16 %v4158, %v4157
      %v4193 = vpack.c.b16 %v4160, %v4159
      %v4194 = vpack.c.b16 %v4162, %v4161
      %v4195 = vpack.c.b16 %v4164, %v4163
      %v4196 = vpack.c.b16 %v4166, %v4165
      %v4197 = vpack.c.b16 %v4168, %v4167
      %v4198 = vpack.c.b16 %v4170, %v4169
      %v4199 = vpack.c.b16 %v4172, %v4171
      %v4200 = vpack.c.b16 %v4174, %v4173
      %v4201 = vpack.c.b16 %v4176, %v4175
      %v4202 = vpack.c.b16 %v4178, %v4177
      %v4203 = vpack.c.b16 %v4180, %v4179
      %v4204 = vpack.c.b16 %v4182, %v4181
      %v4205 = vpack.c.b16 %v4184, %v4183
      %v4206 = vpack.c.b16 %v4186, %v4185
      %v4207 = vpack.c.b16 %v4188, %v4187
      %v4208 = vpack.c.b16 %v4190, %v4189
      %v4228 = vsel %vm2190, %v4069, 0
      %v4231 = vsel %vm2190, %v4072, 0
      %v4234 = vsel %vm2190, %v4075, 0
      %v4237 = vsel %vm2190, %v4078, 0
      %4239 = vmatpush.bf16.msra.mxu0 %v4198
      %4240 = vmatpush.bf16.msra.mxu0 %v4197
      %4241 = vmatpush.bf16.msra.mxu0 %v4196
      %4242 = vmatpush.bf16.msra.mxu0 %v4195
      %4243 = vmatpush.bf16.msra.mxu0 %v4194
      %4244 = vmatpush.bf16.msra.mxu0 %v4193
      %4245 = vmatpush.bf16.msra.mxu0 %v4192
      %4246 = vmatpush.bf16.msra.mxu0 %v4191
      %4247 = vmatmul.bf16.gmra.mxu0 %v4067
      %v4248 = vpop.f32.mrf.mxu0
      %v4249 = vadd.f32 %v4117, %v4248
      %v4250 = vpop.f32.mrf.mxu0
      %v4251 = vadd.f32 %v4117, %v4250
      %4252 = vmatmul.bf16.gmra.mxu0 %v4070
      %v4253 = vpop.f32.mrf.mxu0
      %v4254 = vadd.f32 %v4117, %v4253
      %v4255 = vpop.f32.mrf.mxu0
      %v4256 = vadd.f32 %v4117, %v4255
      %4257 = vmatmul.bf16.gmra.mxu0 %v4073
      %v4258 = vpop.f32.mrf.mxu0
      %v4259 = vadd.f32 %v4117, %v4258
      %v4260 = vpop.f32.mrf.mxu0
      %v4261 = vadd.f32 %v4117, %v4260
      %4262 = vmatmul.bf16.gmra.mxu0 %v4076
      %v4263 = vpop.f32.mrf.mxu0
      %v4264 = vadd.f32 %v4117, %v4263
      %v4265 = vpop.f32.mrf.mxu0
      %v4266 = vadd.f32 %v4117, %v4265
      %4267 = vdwg.mxu0
      %4268 = vmatpush.bf16.msra.mxu0 %v4206
      %4269 = vmatpush.bf16.msra.mxu0 %v4205
      %4270 = vmatpush.bf16.msra.mxu0 %v4204
      %4271 = vmatpush.bf16.msra.mxu0 %v4203
      %4272 = vmatpush.bf16.msra.mxu0 %v4202
      %4273 = vmatpush.bf16.msra.mxu0 %v4201
      %4274 = vmatpush.bf16.msra.mxu0 %v4200
      %4275 = vmatpush.bf16.msra.mxu0 %v4199
      %4276 = vmatmul.bf16.gmra.mxu0 %v4068
      %v4277 = vpop.f32.mrf.mxu0
      %v4278 = vadd.f32 %v4249, %v4277
      %v4279 = vpop.f32.mrf.mxu0
      %v4280 = vadd.f32 %v4251, %v4279
      %4281 = vmatmul.bf16.gmra.mxu0 %v4071
      %v4282 = vpop.f32.mrf.mxu0
      %v4283 = vadd.f32 %v4254, %v4282
      %v4284 = vpop.f32.mrf.mxu0
      %v4285 = vadd.f32 %v4256, %v4284
      %4286 = vmatmul.bf16.gmra.mxu0 %v4074
      %v4287 = vpop.f32.mrf.mxu0
      %v4288 = vadd.f32 %v4259, %v4287
      %v4289 = vpop.f32.mrf.mxu0
      %v4290 = vadd.f32 %v4261, %v4289
      %4291 = vmatmul.bf16.gmra.mxu0 %v4077
      %v4292 = vpop.f32.mrf.mxu0
      %v4293 = vadd.f32 %v4264, %v4292
      %v4294 = vpop.f32.mrf.mxu0
      %v4295 = vadd.f32 %v4266, %v4294
      %4296 = vdwg.mxu0
      %4297 = vmatpush.bf16.msra.mxu0 0
      %4298 = vmatpush.bf16.msra.mxu0 0
      %4299 = vmatpush.bf16.msra.mxu0 0
      %4300 = vmatpush.bf16.msra.mxu0 0
      %4301 = vmatpush.bf16.msra.mxu0 0
      %4302 = vmatpush.bf16.msra.mxu0 0
      %4303 = vmatpush.bf16.msra.mxu0 %v4208
      %4304 = vmatpush.bf16.msra.mxu0 %v4207
      %4305 = vmatmul.bf16.gmra.mxu0 %v4228
      %v4306 = vpop.f32.mrf.mxu0
      %v4307 = vadd.f32 %v4278, %v4306
      %v4308 = vpop.f32.mrf.mxu0
      %v4309 = vadd.f32 %v4280, %v4308
      %4310 = vmatmul.bf16.gmra.mxu0 %v4231
      %v4311 = vpop.f32.mrf.mxu0
      %v4312 = vadd.f32 %v4283, %v4311
      %v4313 = vpop.f32.mrf.mxu0
      %v4314 = vadd.f32 %v4285, %v4313
      %4315 = vmatmul.bf16.gmra.mxu0 %v4234
      %v4316 = vpop.f32.mrf.mxu0
      %v4317 = vadd.f32 %v4288, %v4316
      %v4318 = vpop.f32.mrf.mxu0
      %v4319 = vadd.f32 %v4290, %v4318
      %4320 = vmatmul.bf16.gmra.mxu0 %v4237
      %v4321 = vpop.f32.mrf.mxu0
      %v4322 = vadd.f32 %v4293, %v4321
      %v4323 = vpop.f32.mrf.mxu0
      %v4324 = vadd.f32 %v4295, %v4323
      %4325 = vdwg.mxu0
      %v4326 = vadd.f32 %v4307, %v3096
      %v4327 = vadd.f32 %v4309, %v3097
      %v4328 = vadd.f32 %v4312, %v3098
      %v4329 = vadd.f32 %v4314, %v3099
      %v4330 = vadd.f32 %v4317, %v3100
      %v4331 = vadd.f32 %v4319, %v3101
      %v4332 = vadd.f32 %v4322, %v3102
      %v4333 = vadd.f32 %v4324, %v3103
      %v4334 = vmax.f32 %v4326, 0.0
      %v4335 = vmax.f32 %v4327, 0.0
      %v4336 = vmax.f32 %v4328, 0.0
      %v4337 = vmax.f32 %v4329, 0.0
      %v4338 = vmax.f32 %v4330, 0.0
      %v4339 = vmax.f32 %v4331, 0.0
      %v4340 = vmax.f32 %v4332, 0.0
      %v4341 = vmax.f32 %v4333, 0.0
      %4342 = vst.msk [vmem:[#allocation6] sm:$0xff] %vm2190, 0.0
      %4343 = vst.msk [vmem:[#allocation6 + $0x8] sm:$0x3] %vm3105, 0.0
      %s4344 = scalar_lea.vmem [#allocation6], 144
      %4345 = vst.msk [vmem:[%s4344] sm:$0xff] %vm2190, 0.0
      %4346 = vst.msk [vmem:[%s4344 + $0x8] sm:$0x3] %vm3105, 0.0
      %4347 = vst.msk [vmem:[#allocation6] sm:$0x1] %vm3110, 0.0
      %4348 = vst.msk [vmem:[#allocation6 + $0x10] sm:$0x1] %vm3110, 0.0
      %4349 = vst.msk [vmem:[#allocation6 + $0x20] sm:$0x1] %vm3110, 0.0
      %4350 = vst.msk [vmem:[#allocation6 + $0x30] sm:$0x1] %vm3110, 0.0
      %4351 = vst.msk [vmem:[#allocation6 + $0x40] sm:$0x1] %vm3110, 0.0
      %4352 = vst.msk [vmem:[#allocation6 + $0x50] sm:$0x1] %vm3110, 0.0
      %4353 = vst.msk [vmem:[#allocation6 + $0x60] sm:$0x1] %vm3110, 0.0
      %4354 = vst.msk [vmem:[#allocation6 + $0x70] sm:$0x1] %vm3110, 0.0
      %4355 = vst.msk [vmem:[#allocation6 + $0x80] sm:$0x1] %vm3110, 0.0
      %4356 = vst.msk [vmem:[#allocation6 + $0x90] sm:$0x1] %vm3110, 0.0
      %4357 = vst.msk [vmem:[#allocation6 + $0x9] sm:$0x1] %vm3110, 0.0
      %4358 = vst.msk [vmem:[#allocation6 + $0x19] sm:$0x1] %vm3110, 0.0
      %4359 = vst.msk [vmem:[#allocation6 + $0x29] sm:$0x1] %vm3110, 0.0
      %4360 = vst.msk [vmem:[#allocation6 + $0x39] sm:$0x1] %vm3110, 0.0
      %4361 = vst.msk [vmem:[#allocation6 + $0x49] sm:$0x1] %vm3110, 0.0
      %4362 = vst.msk [vmem:[#allocation6 + $0x59] sm:$0x1] %vm3110, 0.0
      %4363 = vst.msk [vmem:[#allocation6 + $0x69] sm:$0x1] %vm3110, 0.0
      %4364 = vst.msk [vmem:[#allocation6 + $0x79] sm:$0x1] %vm3110, 0.0
      %4365 = vst.msk [vmem:[#allocation6 + $0x89] sm:$0x1] %vm3110, 0.0
      %4366 = vst.msk [vmem:[#allocation6 + $0x99] sm:$0x1] %vm3110, 0.0
      %s4367 = scalar_lea.vmem [#allocation6], 16
      %4368 = vst.msk [vmem:[%s4367 + $0x1] sm:$0xff] %vm2190, %v4334
      %4369 = vst.msk [vmem:[%s4367 + $0x11] sm:$0xff] %vm2190, %v4335
      %4370 = vst.msk [vmem:[%s4367 + $0x21] sm:$0xff] %vm2190, %v4336
      %4371 = vst.msk [vmem:[%s4367 + $0x31] sm:$0xff] %vm2190, %v4337
      %4372 = vst.msk [vmem:[%s4367 + $0x41] sm:$0xff] %vm2190, %v4338
      %4373 = vst.msk [vmem:[%s4367 + $0x51] sm:$0xff] %vm2190, %v4339
      %4374 = vst.msk [vmem:[%s4367 + $0x61] sm:$0xff] %vm2190, %v4340
      %4375 = vst.msk [vmem:[%s4367 + $0x71] sm:$0xff] %vm2190, %v4341
      %v4376 = vld [vmem:[#allocation6] sm:$0xff]
      %v4377 = vld [vmem:[#allocation6 + $0x10] sm:$0xff]
      %v4378 = vld [vmem:[#allocation6 + $0x20] sm:$0xff]
      %v4379 = vld [vmem:[#allocation6 + $0x30] sm:$0xff]
      %v4380 = vld [vmem:[#allocation6 + $0x40] sm:$0xff]
      %v4381 = vld [vmem:[#allocation6 + $0x50] sm:$0xff]
      %v4382 = vld [vmem:[#allocation6 + $0x60] sm:$0xff]
      %v4383 = vld [vmem:[#allocation6 + $0x70] sm:$0xff]
      %v4384 = vld [vmem:[#allocation6 + $0x1] sm:$0xff]
      %v4385 = vld [vmem:[#allocation6 + $0x11] sm:$0xff]
      %v4386 = vld [vmem:[#allocation6 + $0x21] sm:$0xff]
      %v4387 = vld [vmem:[#allocation6 + $0x31] sm:$0xff]
      %v4388 = vld [vmem:[#allocation6 + $0x41] sm:$0xff]
      %v4389 = vld [vmem:[#allocation6 + $0x51] sm:$0xff]
      %v4390 = vld [vmem:[#allocation6 + $0x61] sm:$0xff]
      %v4391 = vld [vmem:[#allocation6 + $0x71] sm:$0xff]
      %v4392 = vld [vmem:[#allocation6 + $0x2] sm:$0xff]
      %v4393 = vld [vmem:[#allocation6 + $0x12] sm:$0xff]
      %v4394 = vld [vmem:[#allocation6 + $0x22] sm:$0xff]
      %v4395 = vld [vmem:[#allocation6 + $0x32] sm:$0xff]
      %v4396 = vld [vmem:[#allocation6 + $0x42] sm:$0xff]
      %v4397 = vld [vmem:[#allocation6 + $0x52] sm:$0xff]
      %v4398 = vld [vmem:[#allocation6 + $0x62] sm:$0xff]
      %v4399 = vld [vmem:[#allocation6 + $0x72] sm:$0xff]
      %v4400 = vld [vmem:[%s4367] sm:$0xff]
      %v4401 = vld [vmem:[%s4367 + $0x10] sm:$0xff]
      %v4402 = vld [vmem:[%s4367 + $0x20] sm:$0xff]
      %v4403 = vld [vmem:[%s4367 + $0x30] sm:$0xff]
      %v4404 = vld [vmem:[%s4367 + $0x40] sm:$0xff]
      %v4405 = vld [vmem:[%s4367 + $0x50] sm:$0xff]
      %v4406 = vld [vmem:[%s4367 + $0x60] sm:$0xff]
      %v4407 = vld [vmem:[%s4367 + $0x70] sm:$0xff]
      %v4408 = vld [vmem:[%s4367 + $0x1] sm:$0xff]
      %v4409 = vld [vmem:[%s4367 + $0x11] sm:$0xff]
      %v4410 = vld [vmem:[%s4367 + $0x21] sm:$0xff]
      %v4411 = vld [vmem:[%s4367 + $0x31] sm:$0xff]
      %v4412 = vld [vmem:[%s4367 + $0x41] sm:$0xff]
      %v4413 = vld [vmem:[%s4367 + $0x51] sm:$0xff]
      %v4414 = vld [vmem:[%s4367 + $0x61] sm:$0xff]
      %v4415 = vld [vmem:[%s4367 + $0x71] sm:$0xff]
      %v4416 = vld [vmem:[%s4367 + $0x2] sm:$0xff]
      %v4417 = vld [vmem:[%s4367 + $0x12] sm:$0xff]
      %v4418 = vld [vmem:[%s4367 + $0x22] sm:$0xff]
      %v4419 = vld [vmem:[%s4367 + $0x32] sm:$0xff]
      %v4420 = vld [vmem:[%s4367 + $0x42] sm:$0xff]
      %v4421 = vld [vmem:[%s4367 + $0x52] sm:$0xff]
      %v4422 = vld [vmem:[%s4367 + $0x62] sm:$0xff]
      %v4423 = vld [vmem:[%s4367 + $0x72] sm:$0xff]
      %s4424 = scalar_lea.vmem [#allocation6], 32
      %v4425 = vld [vmem:[%s4424] sm:$0xff]
      %v4426 = vld [vmem:[%s4424 + $0x10] sm:$0xff]
      %v4427 = vld [vmem:[%s4424 + $0x20] sm:$0xff]
      %v4428 = vld [vmem:[%s4424 + $0x30] sm:$0xff]
      %v4429 = vld [vmem:[%s4424 + $0x40] sm:$0xff]
      %v4430 = vld [vmem:[%s4424 + $0x50] sm:$0xff]
      %v4431 = vld [vmem:[%s4424 + $0x60] sm:$0xff]
      %v4432 = vld [vmem:[%s4424 + $0x70] sm:$0xff]
      %v4433 = vld [vmem:[%s4424 + $0x1] sm:$0xff]
      %v4434 = vld [vmem:[%s4424 + $0x11] sm:$0xff]
      %v4435 = vld [vmem:[%s4424 + $0x21] sm:$0xff]
      %v4436 = vld [vmem:[%s4424 + $0x31] sm:$0xff]
      %v4437 = vld [vmem:[%s4424 + $0x41] sm:$0xff]
      %v4438 = vld [vmem:[%s4424 + $0x51] sm:$0xff]
      %v4439 = vld [vmem:[%s4424 + $0x61] sm:$0xff]
      %v4440 = vld [vmem:[%s4424 + $0x71] sm:$0xff]
      %v4441 = vld [vmem:[%s4424 + $0x2] sm:$0xff]
      %v4442 = vld [vmem:[%s4424 + $0x12] sm:$0xff]
      %v4443 = vld [vmem:[%s4424 + $0x22] sm:$0xff]
      %v4444 = vld [vmem:[%s4424 + $0x32] sm:$0xff]
      %v4445 = vld [vmem:[%s4424 + $0x42] sm:$0xff]
      %v4446 = vld [vmem:[%s4424 + $0x52] sm:$0xff]
      %v4447 = vld [vmem:[%s4424 + $0x62] sm:$0xff]
      %v4448 = vld [vmem:[%s4424 + $0x72] sm:$0xff]
      %4457 = vrot.lane.b32.xlu0 %v4384, 32
      %v4458 = vpop.permute.xlu0 %4457
      %4459 = vrot.lane.b32.xlu0 %v4385, 32
      %v4460 = vpop.permute.xlu0 %4459
      %4461 = vrot.lane.b32.xlu0 %v4386, 32
      %v4462 = vpop.permute.xlu0 %4461
      %4463 = vrot.lane.b32.xlu0 %v4387, 32
      %v4464 = vpop.permute.xlu0 %4463
      %4465 = vrot.lane.b32.xlu0 %v4388, 32
      %v4466 = vpop.permute.xlu0 %4465
      %4467 = vrot.lane.b32.xlu0 %v4389, 32
      %v4468 = vpop.permute.xlu0 %4467
      %4469 = vrot.lane.b32.xlu0 %v4390, 32
      %v4470 = vpop.permute.xlu0 %4469
      %4471 = vrot.lane.b32.xlu0 %v4391, 32
      %v4472 = vpop.permute.xlu0 %4471
      %4489 = vrot.lane.b32.xlu0 %v4392, 64
      %v4490 = vpop.permute.xlu0 %4489
      %4491 = vrot.lane.b32.xlu0 %v4393, 64
      %v4492 = vpop.permute.xlu0 %4491
      %4493 = vrot.lane.b32.xlu0 %v4394, 64
      %v4494 = vpop.permute.xlu0 %4493
      %4495 = vrot.lane.b32.xlu0 %v4395, 64
      %v4496 = vpop.permute.xlu0 %4495
      %4497 = vrot.lane.b32.xlu0 %v4396, 64
      %v4498 = vpop.permute.xlu0 %4497
      %4499 = vrot.lane.b32.xlu0 %v4397, 64
      %v4500 = vpop.permute.xlu0 %4499
      %4501 = vrot.lane.b32.xlu0 %v4398, 64
      %v4502 = vpop.permute.xlu0 %4501
      %4503 = vrot.lane.b32.xlu0 %v4399, 64
      %v4504 = vpop.permute.xlu0 %4503
      %4521 = vrot.lane.b32.xlu0 %v4400, 96
      %v4522 = vpop.permute.xlu0 %4521
      %4523 = vrot.lane.b32.xlu0 %v4401, 96
      %v4524 = vpop.permute.xlu0 %4523
      %4525 = vrot.lane.b32.xlu0 %v4402, 96
      %v4526 = vpop.permute.xlu0 %4525
      %4527 = vrot.lane.b32.xlu0 %v4403, 96
      %v4528 = vpop.permute.xlu0 %4527
      %4529 = vrot.lane.b32.xlu0 %v4404, 96
      %v4530 = vpop.permute.xlu0 %4529
      %4531 = vrot.lane.b32.xlu0 %v4405, 96
      %v4532 = vpop.permute.xlu0 %4531
      %4533 = vrot.lane.b32.xlu0 %v4406, 96
      %v4534 = vpop.permute.xlu0 %4533
      %4535 = vrot.lane.b32.xlu0 %v4407, 96
      %v4536 = vpop.permute.xlu0 %4535
      %4553 = vrot.lane.b32.xlu0 %v4416, 32
      %v4554 = vpop.permute.xlu0 %4553
      %4555 = vrot.lane.b32.xlu0 %v4417, 32
      %v4556 = vpop.permute.xlu0 %4555
      %4557 = vrot.lane.b32.xlu0 %v4418, 32
      %v4558 = vpop.permute.xlu0 %4557
      %4559 = vrot.lane.b32.xlu0 %v4419, 32
      %v4560 = vpop.permute.xlu0 %4559
      %4561 = vrot.lane.b32.xlu0 %v4420, 32
      %v4562 = vpop.permute.xlu0 %4561
      %4563 = vrot.lane.b32.xlu0 %v4421, 32
      %v4564 = vpop.permute.xlu0 %4563
      %4565 = vrot.lane.b32.xlu0 %v4422, 32
      %v4566 = vpop.permute.xlu0 %4565
      %4567 = vrot.lane.b32.xlu0 %v4423, 32
      %v4568 = vpop.permute.xlu0 %4567
      %4585 = vrot.lane.b32.xlu0 %v4425, 64
      %v4586 = vpop.permute.xlu0 %4585
      %4587 = vrot.lane.b32.xlu0 %v4426, 64
      %v4588 = vpop.permute.xlu0 %4587
      %4589 = vrot.lane.b32.xlu0 %v4427, 64
      %v4590 = vpop.permute.xlu0 %4589
      %4591 = vrot.lane.b32.xlu0 %v4428, 64
      %v4592 = vpop.permute.xlu0 %4591
      %4593 = vrot.lane.b32.xlu0 %v4429, 64
      %v4594 = vpop.permute.xlu0 %4593
      %4595 = vrot.lane.b32.xlu0 %v4430, 64
      %v4596 = vpop.permute.xlu0 %4595
      %4597 = vrot.lane.b32.xlu0 %v4431, 64
      %v4598 = vpop.permute.xlu0 %4597
      %4599 = vrot.lane.b32.xlu0 %v4432, 64
      %v4600 = vpop.permute.xlu0 %4599
      %4617 = vrot.lane.b32.xlu0 %v4433, 96
      %v4618 = vpop.permute.xlu0 %4617
      %4619 = vrot.lane.b32.xlu0 %v4434, 96
      %v4620 = vpop.permute.xlu0 %4619
      %4621 = vrot.lane.b32.xlu0 %v4435, 96
      %v4622 = vpop.permute.xlu0 %4621
      %4623 = vrot.lane.b32.xlu0 %v4436, 96
      %v4624 = vpop.permute.xlu0 %4623
      %4625 = vrot.lane.b32.xlu0 %v4437, 96
      %v4626 = vpop.permute.xlu0 %4625
      %4627 = vrot.lane.b32.xlu0 %v4438, 96
      %v4628 = vpop.permute.xlu0 %4627
      %4629 = vrot.lane.b32.xlu0 %v4439, 96
      %v4630 = vpop.permute.xlu0 %4629
      %4631 = vrot.lane.b32.xlu0 %v4440, 96
      %v4632 = vpop.permute.xlu0 %4631
      %v4641 = vsel %vm2190, %v4376, %v4458
      %v4642 = vsel %vm2190, %v4377, %v4460
      %v4643 = vsel %vm2190, %v4378, %v4462
      %v4644 = vsel %vm2190, %v4379, %v4464
      %v4645 = vsel %vm2190, %v4380, %v4466
      %v4646 = vsel %vm2190, %v4381, %v4468
      %v4647 = vsel %vm2190, %v4382, %v4470
      %v4648 = vsel %vm2190, %v4383, %v4472
      %v4649 = vsel %vm2906, %v4641, %v4490
      %v4650 = vsel %vm2906, %v4642, %v4492
      %v4651 = vsel %vm2906, %v4643, %v4494
      %v4652 = vsel %vm2906, %v4644, %v4496
      %v4653 = vsel %vm2906, %v4645, %v4498
      %v4654 = vsel %vm2906, %v4646, %v4500
      %v4655 = vsel %vm2906, %v4647, %v4502
      %v4656 = vsel %vm2906, %v4648, %v4504
      %v4657 = vsel %vm2924, %v4649, %v4522
      %v4658 = vsel %vm2924, %v4650, %v4524
      %v4659 = vsel %vm2924, %v4651, %v4526
      %v4660 = vsel %vm2924, %v4652, %v4528
      %v4661 = vsel %vm2924, %v4653, %v4530
      %v4662 = vsel %vm2924, %v4654, %v4532
      %v4663 = vsel %vm2924, %v4655, %v4534
      %v4664 = vsel %vm2924, %v4656, %v4536
      %v4665 = vsel %vm2190, %v4408, %v4554
      %v4666 = vsel %vm2190, %v4409, %v4556
      %v4667 = vsel %vm2190, %v4410, %v4558
      %v4668 = vsel %vm2190, %v4411, %v4560
      %v4669 = vsel %vm2190, %v4412, %v4562
      %v4670 = vsel %vm2190, %v4413, %v4564
      %v4671 = vsel %vm2190, %v4414, %v4566
      %v4672 = vsel %vm2190, %v4415, %v4568
      %v4673 = vsel %vm2906, %v4665, %v4586
      %v4674 = vsel %vm2906, %v4666, %v4588
      %v4675 = vsel %vm2906, %v4667, %v4590
      %v4676 = vsel %vm2906, %v4668, %v4592
      %v4677 = vsel %vm2906, %v4669, %v4594
      %v4678 = vsel %vm2906, %v4670, %v4596
      %v4679 = vsel %vm2906, %v4671, %v4598
      %v4680 = vsel %vm2906, %v4672, %v4600
      %v4681 = vsel %vm2924, %v4673, %v4618
      %v4682 = vsel %vm2924, %v4674, %v4620
      %v4683 = vsel %vm2924, %v4675, %v4622
      %v4684 = vsel %vm2924, %v4676, %v4624
      %v4685 = vsel %vm2924, %v4677, %v4626
      %v4686 = vsel %vm2924, %v4678, %v4628
      %v4687 = vsel %vm2924, %v4679, %v4630
      %v4688 = vsel %vm2924, %v4680, %v4632
      %v4689 = vpack.c.bf16 %v4658, %v4657
      %v4690 = vpack.c.bf16 %v4682, %v4681
      %v4691 = vpack.c.bf16 %v4442, %v4441
      %v4692 = vpack.c.bf16 %v4660, %v4659
      %v4693 = vpack.c.bf16 %v4684, %v4683
      %v4694 = vpack.c.bf16 %v4444, %v4443
      %v4695 = vpack.c.bf16 %v4662, %v4661
      %v4696 = vpack.c.bf16 %v4686, %v4685
      %v4697 = vpack.c.bf16 %v4446, %v4445
      %v4698 = vpack.c.bf16 %v4664, %v4663
      %v4699 = vpack.c.bf16 %v4688, %v4687
      %v4700 = vpack.c.bf16 %v4448, %v4447
      %v4701 = vld [vmem:[%s11] sm:$0xf]
      %v4702 = vld [vmem:[%s11 + $0x4] sm:$0xf]
      %v4703 = vld [vmem:[%s11 + $0x8] sm:$0xf]
      %v4704 = vld [vmem:[%s11 + $0xc] sm:$0xf]
      %v4705 = vld [vmem:[%s11 + $0x10] sm:$0xf]
      %v4706 = vld [vmem:[%s11 + $0x14] sm:$0xf]
      %v4707 = vld [vmem:[%s11 + $0x18] sm:$0xf]
      %v4708 = vld [vmem:[%s11 + $0x1c] sm:$0xf]
      %v4709 = vld [vmem:[%s11 + $0x20] sm:$0xf]
      %v4710 = vld [vmem:[%s11 + $0x24] sm:$0xf]
      %v4711 = vld [vmem:[%s11 + $0x28] sm:$0xf]
      %v4712 = vld [vmem:[%s11 + $0x2c] sm:$0xf]
      %v4713 = vld [vmem:[%s11 + $0x30] sm:$0xf]
      %v4714 = vld [vmem:[%s11 + $0x34] sm:$0xf]
      %v4715 = vld [vmem:[%s11 + $0x38] sm:$0xf]
      %v4716 = vld [vmem:[%s11 + $0x3c] sm:$0xf]
      %v4717 = vld [vmem:[%s11 + $0x40] sm:$0xf]
      %v4718 = vld [vmem:[%s11 + $0x44] sm:$0xf]
      %v4719 = vld [vmem:[%s11 + $0x48] sm:$0xf]
      %v4720 = vld [vmem:[%s11 + $0x4c] sm:$0xf]
      %v4721 = vld [vmem:[%s11 + $0x50] sm:$0xf]
      %v4722 = vld [vmem:[%s11 + $0x54] sm:$0xf]
      %v4723 = vld [vmem:[%s11 + $0x58] sm:$0xf]
      %v4724 = vld [vmem:[%s11 + $0x5c] sm:$0xf]
      %v4725 = vld [vmem:[%s11 + $0x60] sm:$0xf]
      %v4726 = vld [vmem:[%s11 + $0x64] sm:$0xf]
      %v4727 = vld [vmem:[%s11 + $0x68] sm:$0xf]
      %v4728 = vld [vmem:[%s11 + $0x6c] sm:$0xf]
      %v4729 = vld [vmem:[%s11 + $0x70] sm:$0xf]
      %v4730 = vld [vmem:[%s11 + $0x74] sm:$0xf]
      %v4731 = vld [vmem:[%s11 + $0x78] sm:$0xf]
      %v4732 = vld [vmem:[%s11 + $0x7c] sm:$0xf]
      %v4733 = vld [vmem:[%s11 + $0x80] sm:$0xf]
      %v4734 = vld [vmem:[%s11 + $0x84] sm:$0xf]
      %v4735 = vld [vmem:[%s11 + $0x88] sm:$0xf]
      %v4736 = vld [vmem:[%s11 + $0x8c] sm:$0xf]
      %v4737 = vld [vmem:[%s12] sm:$0x1]
      %v4739 = vperm.slane %v4737, 0
      %v4777 = vunpack.c.l.b16 %v4701
      %v4778 = vunpack.c.l.b16 %v4702
      %v4779 = vunpack.c.l.b16 %v4703
      %v4780 = vunpack.c.l.b16 %v4704
      %v4781 = vunpack.c.l.b16 %v4705
      %v4782 = vunpack.c.l.b16 %v4706
      %v4783 = vunpack.c.l.b16 %v4707
      %v4784 = vunpack.c.l.b16 %v4708
      %v4785 = vunpack.c.l.b16 %v4709
      %v4786 = vunpack.c.l.b16 %v4710
      %v4787 = vunpack.c.l.b16 %v4711
      %v4788 = vunpack.c.l.b16 %v4712
      %v4789 = vunpack.c.l.b16 %v4713
      %v4790 = vunpack.c.l.b16 %v4714
      %v4791 = vunpack.c.l.b16 %v4715
      %v4792 = vunpack.c.l.b16 %v4716
      %v4793 = vunpack.c.l.b16 %v4717
      %v4794 = vunpack.c.l.b16 %v4718
      %v4795 = vunpack.c.l.b16 %v4719
      %v4796 = vunpack.c.l.b16 %v4720
      %v4797 = vunpack.c.l.b16 %v4721
      %v4798 = vunpack.c.l.b16 %v4722
      %v4799 = vunpack.c.l.b16 %v4723
      %v4800 = vunpack.c.l.b16 %v4724
      %v4801 = vunpack.c.l.b16 %v4725
      %v4802 = vunpack.c.l.b16 %v4726
      %v4803 = vunpack.c.l.b16 %v4727
      %v4804 = vunpack.c.l.b16 %v4728
      %v4805 = vunpack.c.l.b16 %v4729
      %v4806 = vunpack.c.l.b16 %v4730
      %v4807 = vunpack.c.l.b16 %v4731
      %v4808 = vunpack.c.l.b16 %v4732
      %v4809 = vunpack.c.l.b16 %v4733
      %v4810 = vunpack.c.l.b16 %v4734
      %v4811 = vunpack.c.l.b16 %v4735
      %v4812 = vunpack.c.l.b16 %v4736
      %v4813 = vpack.c.b16 %v4778, %v4777
      %v4814 = vpack.c.b16 %v4780, %v4779
      %v4815 = vpack.c.b16 %v4782, %v4781
      %v4816 = vpack.c.b16 %v4784, %v4783
      %v4817 = vpack.c.b16 %v4786, %v4785
      %v4818 = vpack.c.b16 %v4788, %v4787
      %v4819 = vpack.c.b16 %v4790, %v4789
      %v4820 = vpack.c.b16 %v4792, %v4791
      %v4821 = vpack.c.b16 %v4794, %v4793
      %v4822 = vpack.c.b16 %v4796, %v4795
      %v4823 = vpack.c.b16 %v4798, %v4797
      %v4824 = vpack.c.b16 %v4800, %v4799
      %v4825 = vpack.c.b16 %v4802, %v4801
      %v4826 = vpack.c.b16 %v4804, %v4803
      %v4827 = vpack.c.b16 %v4806, %v4805
      %v4828 = vpack.c.b16 %v4808, %v4807
      %v4829 = vpack.c.b16 %v4810, %v4809
      %v4830 = vpack.c.b16 %v4812, %v4811
      %v4850 = vsel %vm2190, %v4691, 0
      %v4853 = vsel %vm2190, %v4694, 0
      %v4856 = vsel %vm2190, %v4697, 0
      %v4859 = vsel %vm2190, %v4700, 0
      %4861 = vmatpush.bf16.msra.mxu0 %v4820
      %4862 = vmatpush.bf16.msra.mxu0 %v4819
      %4863 = vmatpush.bf16.msra.mxu0 %v4818
      %4864 = vmatpush.bf16.msra.mxu0 %v4817
      %4865 = vmatpush.bf16.msra.mxu0 %v4816
      %4866 = vmatpush.bf16.msra.mxu0 %v4815
      %4867 = vmatpush.bf16.msra.mxu0 %v4814
      %4868 = vmatpush.bf16.msra.mxu0 %v4813
      %4869 = vmatmul.bf16.gmra.mxu0 %v4689
      %v4870 = vpop.f32.mrf.mxu0
      %v4871 = vadd.f32 %v4739, %v4870
      %v4872 = vpop.f32.mrf.mxu0
      %v4873 = vadd.f32 %v4739, %v4872
      %4874 = vmatmul.bf16.gmra.mxu0 %v4692
      %v4875 = vpop.f32.mrf.mxu0
      %v4876 = vadd.f32 %v4739, %v4875
      %v4877 = vpop.f32.mrf.mxu0
      %v4878 = vadd.f32 %v4739, %v4877
      %4879 = vmatmul.bf16.gmra.mxu0 %v4695
      %v4880 = vpop.f32.mrf.mxu0
      %v4881 = vadd.f32 %v4739, %v4880
      %v4882 = vpop.f32.mrf.mxu0
      %v4883 = vadd.f32 %v4739, %v4882
      %4884 = vmatmul.bf16.gmra.mxu0 %v4698
      %v4885 = vpop.f32.mrf.mxu0
      %v4886 = vadd.f32 %v4739, %v4885
      %v4887 = vpop.f32.mrf.mxu0
      %v4888 = vadd.f32 %v4739, %v4887
      %4889 = vdwg.mxu0
      %4890 = vmatpush.bf16.msra.mxu0 %v4828
      %4891 = vmatpush.bf16.msra.mxu0 %v4827
      %4892 = vmatpush.bf16.msra.mxu0 %v4826
      %4893 = vmatpush.bf16.msra.mxu0 %v4825
      %4894 = vmatpush.bf16.msra.mxu0 %v4824
      %4895 = vmatpush.bf16.msra.mxu0 %v4823
      %4896 = vmatpush.bf16.msra.mxu0 %v4822
      %4897 = vmatpush.bf16.msra.mxu0 %v4821
      %4898 = vmatmul.bf16.gmra.mxu0 %v4690
      %v4899 = vpop.f32.mrf.mxu0
      %v4900 = vadd.f32 %v4871, %v4899
      %v4901 = vpop.f32.mrf.mxu0
      %v4902 = vadd.f32 %v4873, %v4901
      %4903 = vmatmul.bf16.gmra.mxu0 %v4693
      %v4904 = vpop.f32.mrf.mxu0
      %v4905 = vadd.f32 %v4876, %v4904
      %v4906 = vpop.f32.mrf.mxu0
      %v4907 = vadd.f32 %v4878, %v4906
      %4908 = vmatmul.bf16.gmra.mxu0 %v4696
      %v4909 = vpop.f32.mrf.mxu0
      %v4910 = vadd.f32 %v4881, %v4909
      %v4911 = vpop.f32.mrf.mxu0
      %v4912 = vadd.f32 %v4883, %v4911
      %4913 = vmatmul.bf16.gmra.mxu0 %v4699
      %v4914 = vpop.f32.mrf.mxu0
      %v4915 = vadd.f32 %v4886, %v4914
      %v4916 = vpop.f32.mrf.mxu0
      %v4917 = vadd.f32 %v4888, %v4916
      %4918 = vdwg.mxu0
      %4919 = vmatpush.bf16.msra.mxu0 0
      %4920 = vmatpush.bf16.msra.mxu0 0
      %4921 = vmatpush.bf16.msra.mxu0 0
      %4922 = vmatpush.bf16.msra.mxu0 0
      %4923 = vmatpush.bf16.msra.mxu0 0
      %4924 = vmatpush.bf16.msra.mxu0 0
      %4925 = vmatpush.bf16.msra.mxu0 %v4830
      %4926 = vmatpush.bf16.msra.mxu0 %v4829
      %4927 = vmatmul.bf16.gmra.mxu0 %v4850
      %v4928 = vpop.f32.mrf.mxu0
      %v4929 = vadd.f32 %v4900, %v4928
      %v4930 = vpop.f32.mrf.mxu0
      %v4931 = vadd.f32 %v4902, %v4930
      %4932 = vmatmul.bf16.gmra.mxu0 %v4853
      %v4933 = vpop.f32.mrf.mxu0
      %v4934 = vadd.f32 %v4905, %v4933
      %v4935 = vpop.f32.mrf.mxu0
      %v4936 = vadd.f32 %v4907, %v4935
      %4937 = vmatmul.bf16.gmra.mxu0 %v4856
      %v4938 = vpop.f32.mrf.mxu0
      %v4939 = vadd.f32 %v4910, %v4938
      %v4940 = vpop.f32.mrf.mxu0
      %v4941 = vadd.f32 %v4912, %v4940
      %4942 = vmatmul.bf16.gmra.mxu0 %v4859
      %v4943 = vpop.f32.mrf.mxu0
      %v4944 = vadd.f32 %v4915, %v4943
      %v4945 = vpop.f32.mrf.mxu0
      %v4946 = vadd.f32 %v4917, %v4945
      %4947 = vdwg.mxu0
      %4948 = vst.msk [vmem:[%s529] sm:$0xff] %vm2190, %v4929
      %4949 = vst.msk [vmem:[%s529 + $0x8] sm:$0xff] %vm2190, %v4931
      %4950 = vst.msk [vmem:[%s529 + $0x10] sm:$0xff] %vm2190, %v4934
      %4951 = vst.msk [vmem:[%s529 + $0x18] sm:$0xff] %vm2190, %v4936
      %4952 = vst.msk [vmem:[%s529 + $0x20] sm:$0xff] %vm2190, %v4939
      %4953 = vst.msk [vmem:[%s529 + $0x28] sm:$0xff] %vm2190, %v4941
      %4954 = vst.msk [vmem:[%s529 + $0x30] sm:$0xff] %vm2190, %v4944
      %4955 = vst.msk [vmem:[%s529 + $0x38] sm:$0xff] %vm2190, %v4946
      %v4956 = vld [vmem:[#allocation6] ss:$2 sm:$0xf]
      %s4957 = scalar_lea.vmem [#allocation6], 32
      %v4958 = vld [vmem:[%s4957] ss:$2 sm:$0xf]
      %s4959 = scalar_lea.vmem [#allocation6], 64
      %v4960 = vld [vmem:[%s4959] ss:$2 sm:$0xf]
      %s4961 = scalar_lea.vmem [#allocation6], 96
      %v4962 = vld [vmem:[%s4961] ss:$2 sm:$0xf]
      %s4963 = scalar_lea.vmem [#allocation6], 1
      %v4964 = vld [vmem:[%s4963] ss:$2 sm:$0xf]
      %s4965 = scalar_lea.vmem [#allocation6], 33
      %v4966 = vld [vmem:[%s4965] ss:$2 sm:$0xf]
      %s4967 = scalar_lea.vmem [#allocation6], 65
      %v4968 = vld [vmem:[%s4967] ss:$2 sm:$0xf]
      %s4969 = scalar_lea.vmem [#allocation6], 97
      %v4970 = vld [vmem:[%s4969] ss:$2 sm:$0xf]
      %s4971 = scalar_lea.vmem [#allocation6], 2
      %v4972 = vld [vmem:[%s4971] ss:$2 sm:$0xf]
      %s4973 = scalar_lea.vmem [#allocation6], 34
      %v4974 = vld [vmem:[%s4973] ss:$2 sm:$0xf]
      %s4975 = scalar_lea.vmem [#allocation6], 66
      %v4976 = vld [vmem:[%s4975] ss:$2 sm:$0xf]
      %s4977 = scalar_lea.vmem [#allocation6], 98
      %v4978 = vld [vmem:[%s4977] ss:$2 sm:$0xf]
      %v4979 = vld [vmem:[%s4367] ss:$2 sm:$0xf]
      %s4980 = scalar_lea.vmem %s4367, 32 [#allocation6]
      %v4981 = vld [vmem:[%s4980] ss:$2 sm:$0xf]
      %s4982 = scalar_lea.vmem %s4367, 64 [#allocation6]
      %v4983 = vld [vmem:[%s4982] ss:$2 sm:$0xf]
      %s4984 = scalar_lea.vmem %s4367, 96 [#allocation6]
      %v4985 = vld [vmem:[%s4984] ss:$2 sm:$0xf]
      %s4986 = scalar_lea.vmem %s4367, 1 [#allocation6]
      %v4987 = vld [vmem:[%s4986] ss:$2 sm:$0xf]
      %s4988 = scalar_lea.vmem %s4367, 33 [#allocation6]
      %v4989 = vld [vmem:[%s4988] ss:$2 sm:$0xf]
      %s4990 = scalar_lea.vmem %s4367, 65 [#allocation6]
      %v4991 = vld [vmem:[%s4990] ss:$2 sm:$0xf]
      %s4992 = scalar_lea.vmem %s4367, 97 [#allocation6]
      %v4993 = vld [vmem:[%s4992] ss:$2 sm:$0xf]
      %s4994 = scalar_lea.vmem %s4367, 2 [#allocation6]
      %v4995 = vld [vmem:[%s4994] ss:$2 sm:$0xf]
      %s4996 = scalar_lea.vmem %s4367, 34 [#allocation6]
      %v4997 = vld [vmem:[%s4996] ss:$2 sm:$0xf]
      %s4998 = scalar_lea.vmem %s4367, 66 [#allocation6]
      %v4999 = vld [vmem:[%s4998] ss:$2 sm:$0xf]
      %s5000 = scalar_lea.vmem %s4367, 98 [#allocation6]
      %v5001 = vld [vmem:[%s5000] ss:$2 sm:$0xf]
      %v5002 = vld [vmem:[%s4424] ss:$2 sm:$0xf]
      %s5003 = scalar_lea.vmem %s4424, 32 [#allocation6]
      %v5004 = vld [vmem:[%s5003] ss:$2 sm:$0xf]
      %s5005 = scalar_lea.vmem %s4424, 64 [#allocation6]
      %v5006 = vld [vmem:[%s5005] ss:$2 sm:$0xf]
      %s5007 = scalar_lea.vmem %s4424, 96 [#allocation6]
      %v5008 = vld [vmem:[%s5007] ss:$2 sm:$0xf]
      %s5009 = scalar_lea.vmem %s4424, 1 [#allocation6]
      %v5010 = vld [vmem:[%s5009] ss:$2 sm:$0xf]
      %s5011 = scalar_lea.vmem %s4424, 33 [#allocation6]
      %v5012 = vld [vmem:[%s5011] ss:$2 sm:$0xf]
      %s5013 = scalar_lea.vmem %s4424, 65 [#allocation6]
      %v5014 = vld [vmem:[%s5013] ss:$2 sm:$0xf]
      %s5015 = scalar_lea.vmem %s4424, 97 [#allocation6]
      %v5016 = vld [vmem:[%s5015] ss:$2 sm:$0xf]
      %s5017 = scalar_lea.vmem %s4424, 2 [#allocation6]
      %v5018 = vld [vmem:[%s5017] ss:$2 sm:$0xf]
      %s5019 = scalar_lea.vmem %s4424, 34 [#allocation6]
      %v5020 = vld [vmem:[%s5019] ss:$2 sm:$0xf]
      %s5021 = scalar_lea.vmem %s4424, 66 [#allocation6]
      %v5022 = vld [vmem:[%s5021] ss:$2 sm:$0xf]
      %s5023 = scalar_lea.vmem %s4424, 98 [#allocation6]
      %v5024 = vld [vmem:[%s5023] ss:$2 sm:$0xf]
      %5029 = vrot.lane.b32.xlu0 %v4964, 32
      %v5030 = vpop.permute.xlu0 %5029
      %5031 = vrot.lane.b32.xlu0 %v4966, 32
      %v5032 = vpop.permute.xlu0 %5031
      %5033 = vrot.lane.b32.xlu0 %v4968, 32
      %v5034 = vpop.permute.xlu0 %5033
      %5035 = vrot.lane.b32.xlu0 %v4970, 32
      %v5036 = vpop.permute.xlu0 %5035
      %5045 = vrot.lane.b32.xlu0 %v4972, 64
      %v5046 = vpop.permute.xlu0 %5045
      %5047 = vrot.lane.b32.xlu0 %v4974, 64
      %v5048 = vpop.permute.xlu0 %5047
      %5049 = vrot.lane.b32.xlu0 %v4976, 64
      %v5050 = vpop.permute.xlu0 %5049
      %5051 = vrot.lane.b32.xlu0 %v4978, 64
      %v5052 = vpop.permute.xlu0 %5051
      %5061 = vrot.lane.b32.xlu0 %v4979, 96
      %v5062 = vpop.permute.xlu0 %5061
      %5063 = vrot.lane.b32.xlu0 %v4981, 96
      %v5064 = vpop.permute.xlu0 %5063
      %5065 = vrot.lane.b32.xlu0 %v4983, 96
      %v5066 = vpop.permute.xlu0 %5065
      %5067 = vrot.lane.b32.xlu0 %v4985, 96
      %v5068 = vpop.permute.xlu0 %5067
      %5077 = vrot.lane.b32.xlu0 %v4995, 32
      %v5078 = vpop.permute.xlu0 %5077
      %5079 = vrot.lane.b32.xlu0 %v4997, 32
      %v5080 = vpop.permute.xlu0 %5079
      %5081 = vrot.lane.b32.xlu0 %v4999, 32
      %v5082 = vpop.permute.xlu0 %5081
      %5083 = vrot.lane.b32.xlu0 %v5001, 32
      %v5084 = vpop.permute.xlu0 %5083
      %5093 = vrot.lane.b32.xlu0 %v5002, 64
      %v5094 = vpop.permute.xlu0 %5093
      %5095 = vrot.lane.b32.xlu0 %v5004, 64
      %v5096 = vpop.permute.xlu0 %5095
      %5097 = vrot.lane.b32.xlu0 %v5006, 64
      %v5098 = vpop.permute.xlu0 %5097
      %5099 = vrot.lane.b32.xlu0 %v5008, 64
      %v5100 = vpop.permute.xlu0 %5099
      %5109 = vrot.lane.b32.xlu0 %v5010, 96
      %v5110 = vpop.permute.xlu0 %5109
      %5111 = vrot.lane.b32.xlu0 %v5012, 96
      %v5112 = vpop.permute.xlu0 %5111
      %5113 = vrot.lane.b32.xlu0 %v5014, 96
      %v5114 = vpop.permute.xlu0 %5113
      %5115 = vrot.lane.b32.xlu0 %v5016, 96
      %v5116 = vpop.permute.xlu0 %5115
      %v5121 = vsel %vm2190, %v4956, %v5030
      %v5122 = vsel %vm2190, %v4958, %v5032
      %v5123 = vsel %vm2190, %v4960, %v5034
      %v5124 = vsel %vm2190, %v4962, %v5036
      %v5125 = vsel %vm2906, %v5121, %v5046
      %v5126 = vsel %vm2906, %v5122, %v5048
      %v5127 = vsel %vm2906, %v5123, %v5050
      %v5128 = vsel %vm2906, %v5124, %v5052
      %v5129 = vsel %vm2924, %v5125, %v5062
      %v5130 = vsel %vm2924, %v5126, %v5064
      %v5131 = vsel %vm2924, %v5127, %v5066
      %v5132 = vsel %vm2924, %v5128, %v5068
      %v5133 = vsel %vm2190, %v4987, %v5078
      %v5134 = vsel %vm2190, %v4989, %v5080
      %v5135 = vsel %vm2190, %v4991, %v5082
      %v5136 = vsel %vm2190, %v4993, %v5084
      %v5137 = vsel %vm2906, %v5133, %v5094
      %v5138 = vsel %vm2906, %v5134, %v5096
      %v5139 = vsel %vm2906, %v5135, %v5098
      %v5140 = vsel %vm2906, %v5136, %v5100
      %v5141 = vsel %vm2924, %v5137, %v5110
      %v5142 = vsel %vm2924, %v5138, %v5112
      %v5143 = vsel %vm2924, %v5139, %v5114
      %v5144 = vsel %vm2924, %v5140, %v5116
      %v5148 = vrot.slane %v5130, 4
      %v5149 = vrot.slane %v5142, 4
      %v5150 = vrot.slane %v5020, 4
      %v5157 = vrot.slane %v5132, 4
      %v5158 = vrot.slane %v5144, 4
      %v5159 = vrot.slane %v5024, 4
      %vm5163 = vcmask 1043456
      %v5164 = vsel %vm5163, %v5129, %v5148
      %v5165 = vsel %vm5163, %v5141, %v5149
      %v5166 = vsel %vm5163, %v5018, %v5150
      %v5167 = vsel %vm5163, %v5131, %v5157
      %v5168 = vsel %vm5163, %v5143, %v5158
      %v5169 = vsel %vm5163, %v5022, %v5159
      %v5170 = vpack.c.bf16 %v5167, %v5164
      %v5171 = vpack.c.bf16 %v5168, %v5165
      %v5172 = vpack.c.bf16 %v5169, %v5166
      %v5173 = vld [vmem:[%s9] sm:$0xf]
      %v5174 = vld [vmem:[%s9 + $0x4] sm:$0xf]
      %v5175 = vld [vmem:[%s9 + $0x8] sm:$0xf]
      %v5176 = vld [vmem:[%s9 + $0xc] sm:$0xf]
      %v5177 = vld [vmem:[%s9 + $0x10] sm:$0xf]
      %v5178 = vld [vmem:[%s9 + $0x14] sm:$0xf]
      %v5179 = vld [vmem:[%s9 + $0x18] sm:$0xf]
      %v5180 = vld [vmem:[%s9 + $0x1c] sm:$0xf]
      %v5181 = vld [vmem:[%s9 + $0x20] sm:$0xf]
      %v5182 = vld [vmem:[%s9 + $0x24] sm:$0xf]
      %v5183 = vld [vmem:[%s9 + $0x28] sm:$0xf]
      %v5184 = vld [vmem:[%s9 + $0x2c] sm:$0xf]
      %v5185 = vld [vmem:[%s9 + $0x30] sm:$0xf]
      %v5186 = vld [vmem:[%s9 + $0x34] sm:$0xf]
      %v5187 = vld [vmem:[%s9 + $0x38] sm:$0xf]
      %v5188 = vld [vmem:[%s9 + $0x3c] sm:$0xf]
      %v5189 = vld [vmem:[%s9 + $0x40] sm:$0xf]
      %v5190 = vld [vmem:[%s9 + $0x44] sm:$0xf]
      %v5191 = vld [vmem:[%s9 + $0x48] sm:$0xf]
      %v5192 = vld [vmem:[%s9 + $0x4c] sm:$0xf]
      %v5193 = vld [vmem:[%s9 + $0x50] sm:$0xf]
      %v5194 = vld [vmem:[%s9 + $0x54] sm:$0xf]
      %v5195 = vld [vmem:[%s9 + $0x58] sm:$0xf]
      %v5196 = vld [vmem:[%s9 + $0x5c] sm:$0xf]
      %v5197 = vld [vmem:[%s9 + $0x60] sm:$0xf]
      %v5198 = vld [vmem:[%s9 + $0x64] sm:$0xf]
      %v5199 = vld [vmem:[%s9 + $0x68] sm:$0xf]
      %v5200 = vld [vmem:[%s9 + $0x6c] sm:$0xf]
      %v5201 = vld [vmem:[%s9 + $0x70] sm:$0xf]
      %v5202 = vld [vmem:[%s9 + $0x74] sm:$0xf]
      %v5203 = vld [vmem:[%s9 + $0x78] sm:$0xf]
      %v5204 = vld [vmem:[%s9 + $0x7c] sm:$0xf]
      %v5205 = vld [vmem:[%s9 + $0x80] sm:$0xf]
      %v5206 = vld [vmem:[%s9 + $0x84] sm:$0xf]
      %v5207 = vld [vmem:[%s9 + $0x88] sm:$0xf]
      %v5208 = vld [vmem:[%s9 + $0x8c] sm:$0xf]
      %v5209 = vld [vmem:[%s10] sm:$0x1]
      %v5211 = vperm.slane %v5209, 0
      %v5249 = vunpack.c.l.b16 %v5173
      %v5250 = vunpack.c.l.b16 %v5174
      %v5251 = vunpack.c.l.b16 %v5175
      %v5252 = vunpack.c.l.b16 %v5176
      %v5253 = vunpack.c.l.b16 %v5177
      %v5254 = vunpack.c.l.b16 %v5178
      %v5255 = vunpack.c.l.b16 %v5179
      %v5256 = vunpack.c.l.b16 %v5180
      %v5257 = vunpack.c.l.b16 %v5181
      %v5258 = vunpack.c.l.b16 %v5182
      %v5259 = vunpack.c.l.b16 %v5183
      %v5260 = vunpack.c.l.b16 %v5184
      %v5261 = vunpack.c.l.b16 %v5185
      %v5262 = vunpack.c.l.b16 %v5186
      %v5263 = vunpack.c.l.b16 %v5187
      %v5264 = vunpack.c.l.b16 %v5188
      %v5265 = vunpack.c.l.b16 %v5189
      %v5266 = vunpack.c.l.b16 %v5190
      %v5267 = vunpack.c.l.b16 %v5191
      %v5268 = vunpack.c.l.b16 %v5192
      %v5269 = vunpack.c.l.b16 %v5193
      %v5270 = vunpack.c.l.b16 %v5194
      %v5271 = vunpack.c.l.b16 %v5195
      %v5272 = vunpack.c.l.b16 %v5196
      %v5273 = vunpack.c.l.b16 %v5197
      %v5274 = vunpack.c.l.b16 %v5198
      %v5275 = vunpack.c.l.b16 %v5199
      %v5276 = vunpack.c.l.b16 %v5200
      %v5277 = vunpack.c.l.b16 %v5201
      %v5278 = vunpack.c.l.b16 %v5202
      %v5279 = vunpack.c.l.b16 %v5203
      %v5280 = vunpack.c.l.b16 %v5204
      %v5281 = vunpack.c.l.b16 %v5205
      %v5282 = vunpack.c.l.b16 %v5206
      %v5283 = vunpack.c.l.b16 %v5207
      %v5284 = vunpack.c.l.b16 %v5208
      %v5285 = vpack.c.b16 %v5250, %v5249
      %v5286 = vpack.c.b16 %v5252, %v5251
      %v5287 = vpack.c.b16 %v5254, %v5253
      %v5288 = vpack.c.b16 %v5256, %v5255
      %v5289 = vpack.c.b16 %v5258, %v5257
      %v5290 = vpack.c.b16 %v5260, %v5259
      %v5291 = vpack.c.b16 %v5262, %v5261
      %v5292 = vpack.c.b16 %v5264, %v5263
      %v5293 = vpack.c.b16 %v5266, %v5265
      %v5294 = vpack.c.b16 %v5268, %v5267
      %v5295 = vpack.c.b16 %v5270, %v5269
      %v5296 = vpack.c.b16 %v5272, %v5271
      %v5297 = vpack.c.b16 %v5274, %v5273
      %v5298 = vpack.c.b16 %v5276, %v5275
      %v5299 = vpack.c.b16 %v5278, %v5277
      %v5300 = vpack.c.b16 %v5280, %v5279
      %v5301 = vpack.c.b16 %v5282, %v5281
      %v5302 = vpack.c.b16 %v5284, %v5283
      %v5322 = vsel %vm2190, %v5172, 0
      %5324 = vmatpush.bf16.msra.mxu0 %v5292
      %5325 = vmatpush.bf16.msra.mxu0 %v5291
      %5326 = vmatpush.bf16.msra.mxu0 %v5290
      %5327 = vmatpush.bf16.msra.mxu0 %v5289
      %5328 = vmatpush.bf16.msra.mxu0 %v5288
      %5329 = vmatpush.bf16.msra.mxu0 %v5287
      %5330 = vmatpush.bf16.msra.mxu0 %v5286
      %5331 = vmatpush.bf16.msra.mxu0 %v5285
      %5332 = vmatmul.bf16.gmra.mxu0 %v5170
      %v5333 = vpop.f32.mrf.mxu0
      %v5334 = vadd.f32 %v5211, %v5333
      %v5335 = vpop.f32.mrf.mxu0
      %v5336 = vadd.f32 %v5211, %v5335
      %5337 = vdwg.mxu0
      %5338 = vmatpush.bf16.msra.mxu0 %v5300
      %5339 = vmatpush.bf16.msra.mxu0 %v5299
      %5340 = vmatpush.bf16.msra.mxu0 %v5298
      %5341 = vmatpush.bf16.msra.mxu0 %v5297
      %5342 = vmatpush.bf16.msra.mxu0 %v5296
      %5343 = vmatpush.bf16.msra.mxu0 %v5295
      %5344 = vmatpush.bf16.msra.mxu0 %v5294
      %5345 = vmatpush.bf16.msra.mxu0 %v5293
      %5346 = vmatmul.bf16.gmra.mxu0 %v5171
      %v5347 = vpop.f32.mrf.mxu0
      %v5348 = vadd.f32 %v5334, %v5347
      %v5349 = vpop.f32.mrf.mxu0
      %v5350 = vadd.f32 %v5336, %v5349
      %5351 = vdwg.mxu0
      %5352 = vmatpush.bf16.msra.mxu0 0
      %5353 = vmatpush.bf16.msra.mxu0 0
      %5354 = vmatpush.bf16.msra.mxu0 0
      %5355 = vmatpush.bf16.msra.mxu0 0
      %5356 = vmatpush.bf16.msra.mxu0 0
      %5357 = vmatpush.bf16.msra.mxu0 0
      %5358 = vmatpush.bf16.msra.mxu0 %v5302
      %5359 = vmatpush.bf16.msra.mxu0 %v5301
      %5360 = vmatmul.bf16.gmra.mxu0 %v5322
      %v5361 = vpop.f32.mrf.mxu0
      %v5362 = vadd.f32 %v5348, %v5361
      %v5363 = vpop.f32.mrf.mxu0
      %v5364 = vadd.f32 %v5350, %v5363
      %5365 = vdwg.mxu0
      %v5366 = vmax.f32 %v5362, 0.0
      %v5367 = vmax.f32 %v5364, 0.0
      %vm5368 = vcmask 521216
      %5369 = vst.msk [vmem:[#allocation7] sm:$0x3f] %vm5368, 0.0
      %s5370 = scalar_lea.vmem [#allocation7], 40
      %5371 = vst.msk [vmem:[%s5370] sm:$0x3f] %vm5368, 0.0
      %vm5372 = vcmask 516096
      %5373 = vst.msk [vmem:[#allocation7] sm:$0x1] %vm5372, 0.0
      %5374 = vst.msk [vmem:[#allocation7 + $0x8] sm:$0x1] %vm5372, 0.0
      %5375 = vst.msk [vmem:[#allocation7 + $0x10] sm:$0x1] %vm5372, 0.0
      %5376 = vst.msk [vmem:[#allocation7 + $0x18] sm:$0x1] %vm5372, 0.0
      %5377 = vst.msk [vmem:[#allocation7 + $0x20] sm:$0x1] %vm5372, 0.0
      %5378 = vst.msk [vmem:[#allocation7 + $0x28] sm:$0x1] %vm5372, 0.0
      %5379 = vst.msk [vmem:[#allocation7 + $0x5] sm:$0x1] %vm5372, 0.0
      %5380 = vst.msk [vmem:[#allocation7 + $0xd] sm:$0x1] %vm5372, 0.0
      %5381 = vst.msk [vmem:[#allocation7 + $0x15] sm:$0x1] %vm5372, 0.0
      %5382 = vst.msk [vmem:[#allocation7 + $0x1d] sm:$0x1] %vm5372, 0.0
      %5383 = vst.msk [vmem:[#allocation7 + $0x25] sm:$0x1] %vm5372, 0.0
      %5384 = vst.msk [vmem:[#allocation7 + $0x2d] sm:$0x1] %vm5372, 0.0
      %s5385 = scalar_lea.vmem [#allocation7], 8
      %vm5386 = vcmask 519168
      %5387 = vst.msk [vmem:[%s5385 + $0x1] sm:$0xf] %vm5386, %v5366
      %s5388 = scalar_lea.vmem [#allocation7], 16
      %vm5389 = vcmask 523268
      %5390 = vst.msk [vmem:[%s5388 - $0x3] sm:$0xf0] %vm5389, %v5366
      %s5391 = scalar_lea.vmem [#allocation7], 24
      %5392 = vst.msk [vmem:[%s5391 + $0x1] sm:$0xf] %vm5386, %v5367
      %s5393 = scalar_lea.vmem [#allocation7], 32
      %5394 = vst.msk [vmem:[%s5393 - $0x3] sm:$0xf0] %vm5389, %v5367
      %v5395 = vld [vmem:[#allocation7] sm:$0xf]
      %v5396 = vld [vmem:[#allocation7 + $0x8] sm:$0xf]
      %v5397 = vld [vmem:[#allocation7 + $0x10] sm:$0xf]
      %v5398 = vld [vmem:[#allocation7 + $0x18] sm:$0xf]
      %v5399 = vld [vmem:[#allocation7 + $0x1] sm:$0xf]
      %v5400 = vld [vmem:[#allocation7 + $0x9] sm:$0xf]
      %v5401 = vld [vmem:[#allocation7 + $0x11] sm:$0xf]
      %v5402 = vld [vmem:[#allocation7 + $0x19] sm:$0xf]
      %v5403 = vld [vmem:[#allocation7 + $0x2] sm:$0xf]
      %v5404 = vld [vmem:[#allocation7 + $0xa] sm:$0xf]
      %v5405 = vld [vmem:[#allocation7 + $0x12] sm:$0xf]
      %v5406 = vld [vmem:[#allocation7 + $0x1a] sm:$0xf]
      %v5407 = vld [vmem:[%s5385] sm:$0xf]
      %v5408 = vld [vmem:[%s5385 + $0x8] sm:$0xf]
      %v5409 = vld [vmem:[%s5385 + $0x10] sm:$0xf]
      %v5410 = vld [vmem:[%s5385 + $0x18] sm:$0xf]
      %v5411 = vld [vmem:[%s5385 + $0x1] sm:$0xf]
      %v5412 = vld [vmem:[%s5385 + $0x9] sm:$0xf]
      %v5413 = vld [vmem:[%s5385 + $0x11] sm:$0xf]
      %v5414 = vld [vmem:[%s5385 + $0x19] sm:$0xf]
      %v5415 = vld [vmem:[%s5385 + $0x2] sm:$0xf]
      %v5416 = vld [vmem:[%s5385 + $0xa] sm:$0xf]
      %v5417 = vld [vmem:[%s5385 + $0x12] sm:$0xf]
      %v5418 = vld [vmem:[%s5385 + $0x1a] sm:$0xf]
      %v5419 = vld [vmem:[%s5388] sm:$0xf]
      %v5420 = vld [vmem:[%s5388 + $0x8] sm:$0xf]
      %v5421 = vld [vmem:[%s5388 + $0x10] sm:$0xf]
      %v5422 = vld [vmem:[%s5388 + $0x18] sm:$0xf]
      %v5423 = vld [vmem:[%s5388 + $0x1] sm:$0xf]
      %v5424 = vld [vmem:[%s5388 + $0x9] sm:$0xf]
      %v5425 = vld [vmem:[%s5388 + $0x11] sm:$0xf]
      %v5426 = vld [vmem:[%s5388 + $0x19] sm:$0xf]
      %v5427 = vld [vmem:[%s5388 + $0x2] sm:$0xf]
      %v5428 = vld [vmem:[%s5388 + $0xa] sm:$0xf]
      %v5429 = vld [vmem:[%s5388 + $0x12] sm:$0xf]
      %v5430 = vld [vmem:[%s5388 + $0x1a] sm:$0xf]
      %5435 = vrot.lane.b32.xlu0 %v5399, 64
      %v5436 = vpop.permute.xlu0 %5435
      %5437 = vrot.lane.b32.xlu0 %v5400, 64
      %v5438 = vpop.permute.xlu0 %5437
      %5439 = vrot.lane.b32.xlu0 %v5401, 64
      %v5440 = vpop.permute.xlu0 %5439
      %5441 = vrot.lane.b32.xlu0 %v5402, 64
      %v5442 = vpop.permute.xlu0 %5441
      %5451 = vrot.lane.b32.xlu0 %v5407, 64
      %v5452 = vpop.permute.xlu0 %5451
      %5453 = vrot.lane.b32.xlu0 %v5408, 64
      %v5454 = vpop.permute.xlu0 %5453
      %5455 = vrot.lane.b32.xlu0 %v5409, 64
      %v5456 = vpop.permute.xlu0 %5455
      %5457 = vrot.lane.b32.xlu0 %v5410, 64
      %v5458 = vpop.permute.xlu0 %5457
      %5467 = vrot.lane.b32.xlu0 %v5415, 64
      %v5468 = vpop.permute.xlu0 %5467
      %5469 = vrot.lane.b32.xlu0 %v5416, 64
      %v5470 = vpop.permute.xlu0 %5469
      %5471 = vrot.lane.b32.xlu0 %v5417, 64
      %v5472 = vpop.permute.xlu0 %5471
      %5473 = vrot.lane.b32.xlu0 %v5418, 64
      %v5474 = vpop.permute.xlu0 %5473
      %5483 = vrot.lane.b32.xlu0 %v5423, 64
      %v5484 = vpop.permute.xlu0 %5483
      %5485 = vrot.lane.b32.xlu0 %v5424, 64
      %v5486 = vpop.permute.xlu0 %5485
      %5487 = vrot.lane.b32.xlu0 %v5425, 64
      %v5488 = vpop.permute.xlu0 %5487
      %5489 = vrot.lane.b32.xlu0 %v5426, 64
      %v5490 = vpop.permute.xlu0 %5489
      %v5495 = vsel %vm2906, %v5395, %v5436
      %v5496 = vsel %vm2906, %v5396, %v5438
      %v5497 = vsel %vm2906, %v5397, %v5440
      %v5498 = vsel %vm2906, %v5398, %v5442
      %v5499 = vsel %vm2906, %v5403, %v5452
      %v5500 = vsel %vm2906, %v5404, %v5454
      %v5501 = vsel %vm2906, %v5405, %v5456
      %v5502 = vsel %vm2906, %v5406, %v5458
      %v5503 = vsel %vm2906, %v5411, %v5468
      %v5504 = vsel %vm2906, %v5412, %v5470
      %v5505 = vsel %vm2906, %v5413, %v5472
      %v5506 = vsel %vm2906, %v5414, %v5474
      %v5507 = vsel %vm2906, %v5419, %v5484
      %v5508 = vsel %vm2906, %v5420, %v5486
      %v5509 = vsel %vm2906, %v5421, %v5488
      %v5510 = vsel %vm2906, %v5422, %v5490
      %v5516 = vrot.slane %v5496, 4
      %v5517 = vrot.slane %v5500, 4
      %v5518 = vrot.slane %v5504, 4
      %v5519 = vrot.slane %v5508, 4
      %v5520 = vrot.slane %v5428, 4
      %v5531 = vrot.slane %v5498, 4
      %v5532 = vrot.slane %v5502, 4
      %v5533 = vrot.slane %v5506, 4
      %v5534 = vrot.slane %v5510, 4
      %v5535 = vrot.slane %v5430, 4
      %v5541 = vsel %vm5163, %v5495, %v5516
      %v5542 = vsel %vm5163, %v5499, %v5517
      %v5543 = vsel %vm5163, %v5503, %v5518
      %v5544 = vsel %vm5163, %v5507, %v5519
      %v5545 = vsel %vm5163, %v5427, %v5520
      %v5546 = vsel %vm5163, %v5497, %v5531
      %v5547 = vsel %vm5163, %v5501, %v5532
      %v5548 = vsel %vm5163, %v5505, %v5533
      %v5549 = vsel %vm5163, %v5509, %v5534
      %v5550 = vsel %vm5163, %v5429, %v5535
      %v5551 = vpack.c.bf16 %v5546, %v5541
      %v5552 = vpack.c.bf16 %v5547, %v5542
      %v5553 = vpack.c.bf16 %v5548, %v5543
      %v5554 = vpack.c.bf16 %v5549, %v5544
      %v5555 = vpack.c.bf16 %v5550, %v5545
      %v5556 = vld [vmem:[%s13] sm:$0xf]
      %v5557 = vld [vmem:[%s13 + $0x4] sm:$0xf]
      %v5558 = vld [vmem:[%s13 + $0x8] sm:$0xf]
      %v5559 = vld [vmem:[%s13 + $0xc] sm:$0xf]
      %v5560 = vld [vmem:[%s13 + $0x10] sm:$0xf]
      %v5561 = vld [vmem:[%s13 + $0x14] sm:$0xf]
      %v5562 = vld [vmem:[%s13 + $0x18] sm:$0xf]
      %v5563 = vld [vmem:[%s13 + $0x1c] sm:$0xf]
      %v5564 = vld [vmem:[%s13 + $0x20] sm:$0xf]
      %v5565 = vld [vmem:[%s13 + $0x24] sm:$0xf]
      %v5566 = vld [vmem:[%s13 + $0x28] sm:$0xf]
      %v5567 = vld [vmem:[%s13 + $0x2c] sm:$0xf]
      %v5568 = vld [vmem:[%s13 + $0x30] sm:$0xf]
      %v5569 = vld [vmem:[%s13 + $0x34] sm:$0xf]
      %v5570 = vld [vmem:[%s13 + $0x38] sm:$0xf]
      %v5571 = vld [vmem:[%s13 + $0x3c] sm:$0xf]
      %v5572 = vld [vmem:[%s13 + $0x40] sm:$0xf]
      %v5573 = vld [vmem:[%s13 + $0x44] sm:$0xf]
      %v5574 = vld [vmem:[%s13 + $0x48] sm:$0xf]
      %v5575 = vld [vmem:[%s13 + $0x4c] sm:$0xf]
      %v5576 = vld [vmem:[%s13 + $0x50] sm:$0xf]
      %v5577 = vld [vmem:[%s13 + $0x54] sm:$0xf]
      %v5578 = vld [vmem:[%s13 + $0x58] sm:$0xf]
      %v5579 = vld [vmem:[%s13 + $0x5c] sm:$0xf]
      %v5580 = vld [vmem:[%s13 + $0x60] sm:$0xf]
      %v5581 = vld [vmem:[%s13 + $0x64] sm:$0xf]
      %v5582 = vld [vmem:[%s13 + $0x68] sm:$0xf]
      %v5583 = vld [vmem:[%s13 + $0x6c] sm:$0xf]
      %v5584 = vld [vmem:[%s13 + $0x70] sm:$0xf]
      %v5585 = vld [vmem:[%s13 + $0x74] sm:$0xf]
      %v5586 = vld [vmem:[%s13 + $0x78] sm:$0xf]
      %v5587 = vld [vmem:[%s13 + $0x7c] sm:$0xf]
      %v5588 = vld [vmem:[%s13 + $0x80] sm:$0xf]
      %v5589 = vld [vmem:[%s13 + $0x84] sm:$0xf]
      %v5590 = vld [vmem:[%s13 + $0x88] sm:$0xf]
      %v5591 = vld [vmem:[%s13 + $0x8c] sm:$0xf]
      %v5592 = vld [vmem:[%s13 + $0x90] sm:$0xf]
      %v5593 = vld [vmem:[%s13 + $0x94] sm:$0xf]
      %v5594 = vld [vmem:[%s13 + $0x98] sm:$0xf]
      %v5595 = vld [vmem:[%s13 + $0x9c] sm:$0xf]
      %v5596 = vld [vmem:[%s13 + $0xa0] sm:$0xf]
      %v5597 = vld [vmem:[%s13 + $0xa4] sm:$0xf]
      %v5598 = vld [vmem:[%s13 + $0xa8] sm:$0xf]
      %v5599 = vld [vmem:[%s13 + $0xac] sm:$0xf]
      %v5600 = vld [vmem:[%s13 + $0xb0] sm:$0xf]
      %v5601 = vld [vmem:[%s13 + $0xb4] sm:$0xf]
      %v5602 = vld [vmem:[%s13 + $0xb8] sm:$0xf]
      %v5603 = vld [vmem:[%s13 + $0xbc] sm:$0xf]
      %v5604 = vld [vmem:[%s13 + $0xc0] sm:$0xf]
      %v5605 = vld [vmem:[%s13 + $0xc4] sm:$0xf]
      %v5606 = vld [vmem:[%s13 + $0xc8] sm:$0xf]
      %v5607 = vld [vmem:[%s13 + $0xcc] sm:$0xf]
      %v5608 = vld [vmem:[%s13 + $0xd0] sm:$0xf]
      %v5609 = vld [vmem:[%s13 + $0xd4] sm:$0xf]
      %v5610 = vld [vmem:[%s13 + $0xd8] sm:$0xf]
      %v5611 = vld [vmem:[%s13 + $0xdc] sm:$0xf]
      %v5612 = vld [vmem:[%s13 + $0xe0] sm:$0xf]
      %v5613 = vld [vmem:[%s13 + $0xe4] sm:$0xf]
      %v5614 = vld [vmem:[%s13 + $0xe8] sm:$0xf]
      %v5615 = vld [vmem:[%s13 + $0xec] sm:$0xf]
      %v5616 = vld [vmem:[%s13 + $0xf0] sm:$0xf]
      %v5617 = vld [vmem:[%s13 + $0xf4] sm:$0xf]
      %v5618 = vld [vmem:[%s13 + $0xf8] sm:$0xf]
      %v5619 = vld [vmem:[%s13 + $0xfc] sm:$0xf]
      %v5620 = vld [vmem:[%s13 + $0x100] sm:$0xf]
      %v5621 = vld [vmem:[%s13 + $0x104] sm:$0xf]
      %v5622 = vld [vmem:[%s13 + $0x108] sm:$0xf]
      %v5623 = vld [vmem:[%s13 + $0x10c] sm:$0xf]
      %v5624 = vld [vmem:[%s13 + $0x110] sm:$0xf]
      %v5625 = vld [vmem:[%s13 + $0x114] sm:$0xf]
      %v5626 = vld [vmem:[%s13 + $0x118] sm:$0xf]
      %v5627 = vld [vmem:[%s13 + $0x11c] sm:$0xf]
      %v5628 = vld [vmem:[%s14] sm:$0x1]
      %v5630 = vperm.slane %v5628, 0
      %v5704 = vunpack.c.l.b16 %v5556
      %v5705 = vunpack.c.l.b16 %v5557
      %v5706 = vunpack.c.l.b16 %v5558
      %v5707 = vunpack.c.l.b16 %v5559
      %v5708 = vunpack.c.l.b16 %v5560
      %v5709 = vunpack.c.l.b16 %v5561
      %v5710 = vunpack.c.l.b16 %v5562
      %v5711 = vunpack.c.l.b16 %v5563
      %v5712 = vunpack.c.l.b16 %v5564
      %v5713 = vunpack.c.l.b16 %v5565
      %v5714 = vunpack.c.l.b16 %v5566
      %v5715 = vunpack.c.l.b16 %v5567
      %v5716 = vunpack.c.l.b16 %v5568
      %v5717 = vunpack.c.l.b16 %v5569
      %v5718 = vunpack.c.l.b16 %v5570
      %v5719 = vunpack.c.l.b16 %v5571
      %v5720 = vunpack.c.l.b16 %v5572
      %v5721 = vunpack.c.l.b16 %v5573
      %v5722 = vunpack.c.l.b16 %v5574
      %v5723 = vunpack.c.l.b16 %v5575
      %v5724 = vunpack.c.l.b16 %v5576
      %v5725 = vunpack.c.l.b16 %v5577
      %v5726 = vunpack.c.l.b16 %v5578
      %v5727 = vunpack.c.l.b16 %v5579
      %v5728 = vunpack.c.l.b16 %v5580
      %v5729 = vunpack.c.l.b16 %v5581
      %v5730 = vunpack.c.l.b16 %v5582
      %v5731 = vunpack.c.l.b16 %v5583
      %v5732 = vunpack.c.l.b16 %v5584
      %v5733 = vunpack.c.l.b16 %v5585
      %v5734 = vunpack.c.l.b16 %v5586
      %v5735 = vunpack.c.l.b16 %v5587
      %v5736 = vunpack.c.l.b16 %v5588
      %v5737 = vunpack.c.l.b16 %v5589
      %v5738 = vunpack.c.l.b16 %v5590
      %v5739 = vunpack.c.l.b16 %v5591
      %v5740 = vunpack.c.l.b16 %v5592
      %v5741 = vunpack.c.l.b16 %v5593
      %v5742 = vunpack.c.l.b16 %v5594
      %v5743 = vunpack.c.l.b16 %v5595
      %v5744 = vunpack.c.l.b16 %v5596
      %v5745 = vunpack.c.l.b16 %v5597
      %v5746 = vunpack.c.l.b16 %v5598
      %v5747 = vunpack.c.l.b16 %v5599
      %v5748 = vunpack.c.l.b16 %v5600
      %v5749 = vunpack.c.l.b16 %v5601
      %v5750 = vunpack.c.l.b16 %v5602
      %v5751 = vunpack.c.l.b16 %v5603
      %v5752 = vunpack.c.l.b16 %v5604
      %v5753 = vunpack.c.l.b16 %v5605
      %v5754 = vunpack.c.l.b16 %v5606
      %v5755 = vunpack.c.l.b16 %v5607
      %v5756 = vunpack.c.l.b16 %v5608
      %v5757 = vunpack.c.l.b16 %v5609
      %v5758 = vunpack.c.l.b16 %v5610
      %v5759 = vunpack.c.l.b16 %v5611
      %v5760 = vunpack.c.l.b16 %v5612
      %v5761 = vunpack.c.l.b16 %v5613
      %v5762 = vunpack.c.l.b16 %v5614
      %v5763 = vunpack.c.l.b16 %v5615
      %v5764 = vunpack.c.l.b16 %v5616
      %v5765 = vunpack.c.l.b16 %v5617
      %v5766 = vunpack.c.l.b16 %v5618
      %v5767 = vunpack.c.l.b16 %v5619
      %v5768 = vunpack.c.l.b16 %v5620
      %v5769 = vunpack.c.l.b16 %v5621
      %v5770 = vunpack.c.l.b16 %v5622
      %v5771 = vunpack.c.l.b16 %v5623
      %v5772 = vunpack.c.l.b16 %v5624
      %v5773 = vunpack.c.l.b16 %v5625
      %v5774 = vunpack.c.l.b16 %v5626
      %v5775 = vunpack.c.l.b16 %v5627
      %v5776 = vpack.c.b16 %v5705, %v5704
      %v5777 = vpack.c.b16 %v5707, %v5706
      %v5778 = vpack.c.b16 %v5709, %v5708
      %v5779 = vpack.c.b16 %v5711, %v5710
      %v5780 = vpack.c.b16 %v5713, %v5712
      %v5781 = vpack.c.b16 %v5715, %v5714
      %v5782 = vpack.c.b16 %v5717, %v5716
      %v5783 = vpack.c.b16 %v5719, %v5718
      %v5784 = vpack.c.b16 %v5721, %v5720
      %v5785 = vpack.c.b16 %v5723, %v5722
      %v5786 = vpack.c.b16 %v5725, %v5724
      %v5787 = vpack.c.b16 %v5727, %v5726
      %v5788 = vpack.c.b16 %v5729, %v5728
      %v5789 = vpack.c.b16 %v5731, %v5730
      %v5790 = vpack.c.b16 %v5733, %v5732
      %v5791 = vpack.c.b16 %v5735, %v5734
      %v5792 = vpack.c.b16 %v5737, %v5736
      %v5793 = vpack.c.b16 %v5739, %v5738
      %v5794 = vpack.c.b16 %v5741, %v5740
      %v5795 = vpack.c.b16 %v5743, %v5742
      %v5796 = vpack.c.b16 %v5745, %v5744
      %v5797 = vpack.c.b16 %v5747, %v5746
      %v5798 = vpack.c.b16 %v5749, %v5748
      %v5799 = vpack.c.b16 %v5751, %v5750
      %v5800 = vpack.c.b16 %v5753, %v5752
      %v5801 = vpack.c.b16 %v5755, %v5754
      %v5802 = vpack.c.b16 %v5757, %v5756
      %v5803 = vpack.c.b16 %v5759, %v5758
      %v5804 = vpack.c.b16 %v5761, %v5760
      %v5805 = vpack.c.b16 %v5763, %v5762
      %v5806 = vpack.c.b16 %v5765, %v5764
      %v5807 = vpack.c.b16 %v5767, %v5766
      %v5808 = vpack.c.b16 %v5769, %v5768
      %v5809 = vpack.c.b16 %v5771, %v5770
      %v5810 = vpack.c.b16 %v5773, %v5772
      %v5811 = vpack.c.b16 %v5775, %v5774
      %v5849 = vsel %vm2906, %v5555, 0
      %5851 = vmatpush.bf16.msra.mxu0 %v5783
      %5852 = vmatpush.bf16.msra.mxu0 %v5782
      %5853 = vmatpush.bf16.msra.mxu0 %v5781
      %5854 = vmatpush.bf16.msra.mxu0 %v5780
      %5855 = vmatpush.bf16.msra.mxu0 %v5779
      %5856 = vmatpush.bf16.msra.mxu0 %v5778
      %5857 = vmatpush.bf16.msra.mxu0 %v5777
      %5858 = vmatpush.bf16.msra.mxu0 %v5776
      %5859 = vmatmul.bf16.gmra.mxu0 %v5551
      %v5860 = vpop.f32.mrf.mxu0
      %v5861 = vadd.f32 %v5630, %v5860
      %v5862 = vpop.f32.mrf.mxu0
      %v5863 = vadd.f32 %v5630, %v5862
      %5864 = vdwg.mxu0
      %5865 = vmatpush.bf16.msra.mxu0 %v5791
      %5866 = vmatpush.bf16.msra.mxu0 %v5790
      %5867 = vmatpush.bf16.msra.mxu0 %v5789
      %5868 = vmatpush.bf16.msra.mxu0 %v5788
      %5869 = vmatpush.bf16.msra.mxu0 %v5787
      %5870 = vmatpush.bf16.msra.mxu0 %v5786
      %5871 = vmatpush.bf16.msra.mxu0 %v5785
      %5872 = vmatpush.bf16.msra.mxu0 %v5784
      %5873 = vmatmul.bf16.gmra.mxu0 %v5552
      %v5874 = vpop.f32.mrf.mxu0
      %v5875 = vadd.f32 %v5861, %v5874
      %v5876 = vpop.f32.mrf.mxu0
      %v5877 = vadd.f32 %v5863, %v5876
      %5878 = vdwg.mxu0
      %5879 = vmatpush.bf16.msra.mxu0 %v5799
      %5880 = vmatpush.bf16.msra.mxu0 %v5798
      %5881 = vmatpush.bf16.msra.mxu0 %v5797
      %5882 = vmatpush.bf16.msra.mxu0 %v5796
      %5883 = vmatpush.bf16.msra.mxu0 %v5795
      %5884 = vmatpush.bf16.msra.mxu0 %v5794
      %5885 = vmatpush.bf16.msra.mxu0 %v5793
      %5886 = vmatpush.bf16.msra.mxu0 %v5792
      %5887 = vmatmul.bf16.gmra.mxu0 %v5553
      %v5888 = vpop.f32.mrf.mxu0
      %v5889 = vadd.f32 %v5875, %v5888
      %v5890 = vpop.f32.mrf.mxu0
      %v5891 = vadd.f32 %v5877, %v5890
      %5892 = vdwg.mxu0
      %5893 = vmatpush.bf16.msra.mxu0 %v5807
      %5894 = vmatpush.bf16.msra.mxu0 %v5806
      %5895 = vmatpush.bf16.msra.mxu0 %v5805
      %5896 = vmatpush.bf16.msra.mxu0 %v5804
      %5897 = vmatpush.bf16.msra.mxu0 %v5803
      %5898 = vmatpush.bf16.msra.mxu0 %v5802
      %5899 = vmatpush.bf16.msra.mxu0 %v5801
      %5900 = vmatpush.bf16.msra.mxu0 %v5800
      %5901 = vmatmul.bf16.gmra.mxu0 %v5554
      %v5902 = vpop.f32.mrf.mxu0
      %v5903 = vadd.f32 %v5889, %v5902
      %v5904 = vpop.f32.mrf.mxu0
      %v5905 = vadd.f32 %v5891, %v5904
      %5906 = vdwg.mxu0
      %5907 = vmatpush.bf16.msra.mxu0 0
      %5908 = vmatpush.bf16.msra.mxu0 0
      %5909 = vmatpush.bf16.msra.mxu0 0
      %5910 = vmatpush.bf16.msra.mxu0 0
      %5911 = vmatpush.bf16.msra.mxu0 %v5811
      %5912 = vmatpush.bf16.msra.mxu0 %v5810
      %5913 = vmatpush.bf16.msra.mxu0 %v5809
      %5914 = vmatpush.bf16.msra.mxu0 %v5808
      %5915 = vmatmul.bf16.gmra.mxu0 %v5849
      %v5916 = vpop.f32.mrf.mxu0
      %v5917 = vadd.f32 %v5903, %v5916
      %v5918 = vpop.f32.mrf.mxu0
      %v5919 = vadd.f32 %v5905, %v5918
      %5920 = vdwg.mxu0
      %5921 = vst.msk [vmem:[%s534] sm:$0xff] %vm2190, %v5917
      %5922 = vst.msk [vmem:[%s534 + $0x8] sm:$0xff] %vm2190, %v5919
      %p5923 = scmp.lt.s32.totalorder %s28, 1
      %s5924 = scalar_select %p5923, %s28, 1
      %s5925 = smul.addr %s5924, 8
      %s5926 = smul.addr %s5925, 8
      %s5927 = scalar_lea.vmem %s15, %s5926
      %p5928 = scmp.lt.s32.totalorder %s28, 1
      %s5929 = scalar_select %p5928, %s28, 1
      %s5930 = smul.addr %s5929, 2
      %s5931 = smul.addr %s5930, 8
      %s5932 = scalar_lea.vmem %s16, %s5931
      // Predicated region
      $region81: #{ssd_resnet_forward.1} parent=79 // pred_check
        %p5933 = pneg %p366
      $region82: #{ssd_resnet_forward.1} parent=79 // pred_check_branch
        %5935 = sbr.rel (%p5933) target = $region84
      $region83: #{ssd_resnet_forward.1} parent=79 // pred_region
        _
      $region84: #{ssd_resnet_forward.1} parent=79 // pred_fallthru
        _
      // Predicated region
      $region85: #{ssd_resnet_forward.1} parent=79 // pred_check
        %p5936 = pneg %p392
      $region86: #{ssd_resnet_forward.1} parent=79 // pred_check_branch
        %5938 = sbr.rel (%p5936) target = $region88
      $region87: #{ssd_resnet_forward.1} parent=79 // pred_region
        _
      $region88: #{ssd_resnet_forward.1} parent=79 // pred_fallthru
        _
    $region80: #{ssd_resnet_forward.1} parent=5 // pred_fallthru
      _
    %p5939 = scmp.le.s32.totalorder 2, %s23
    // Predicated region
    $region89: #{ssd_resnet_forward.1} parent=5 // pred_check
      %p5940 = pneg %p5939
    $region90: #{ssd_resnet_forward.1} parent=5 // pred_check_branch
      %5942 = sbr.rel (%p5940) target = $region92
    $region91: #{ssd_resnet_forward.1} parent=5 // pred_region
      %s5943 = ssub.s32 %s23, 2
      // Predicated region
      $region93: #{ssd_resnet_forward.1} parent=91 // pred_check
        %p5944 = pneg %p372
      $region94: #{ssd_resnet_forward.1} parent=91 // pred_check_branch
        %5946 = sbr.rel (%p5944) target = $region96
      $region95: #{ssd_resnet_forward.1} parent=91 // pred_region
        %p5947 = scmp.lt.s32.totalorder %s29, 1
        %s5948 = scalar_select %p5947, %s29, 1
        %s5949 = smul.addr %s5948, 8
        %s5950 = smul.addr %s5949, 8
        %s5951 = scalar_lea.vmem %s15, %s5950
      $region96: #{ssd_resnet_forward.1} parent=91 // pred_fallthru
        _
      // Predicated region
      $region97: #{ssd_resnet_forward.1} parent=91 // pred_check
        %p5952 = pneg %p398
      $region98: #{ssd_resnet_forward.1} parent=91 // pred_check_branch
        %5954 = sbr.rel (%p5952) target = $region100
      $region99: #{ssd_resnet_forward.1} parent=91 // pred_region
        %p5955 = scmp.lt.s32.totalorder %s29, 1
        %s5956 = scalar_select %p5955, %s29, 1
        %s5957 = smul.addr %s5956, 2
        %s5958 = smul.addr %s5957, 8
        %s5959 = scalar_lea.vmem %s16, %s5958
      $region100: #{ssd_resnet_forward.1} parent=91 // pred_fallthru
        _
    $region92: #{ssd_resnet_forward.1} parent=5 // pred_fallthru
      _
  $region6: #{ssd_resnet_forward.1} parent=0 // loop_footer
    %s27 = sadd.s32 1, %s23
  $region7: #{ssd_resnet_forward.1} parent=0 // loop_footer_branch
    %22 = sbr.rel target = $region3
  $region8: #{ssd_resnet_forward.1} parent=0 // loop_exit
    _

</llo_original>
